<compile_context>
chip_gen: v5e
topology: v5e:2x2
jax: 0.10.0
libtpu: 0.0.40
codegen_flags: <defaults>
</compile_context>

<pallas_src>
import math
import functools

import jax
import jax.numpy as jnp
from jax import lax
from jax.experimental import pallas as pl
from jax.experimental.pallas import tpu as pltpu


def _griffin_lim_fused_kernel(seed_ref, bsyn_ref, bana_ref, invw_ref,
                              spec_ref, frames_ref, sig_ref):
    """One Griffin-Lim iteration per grid step; spectrum persists in spec_ref.

    seed : (T_pad, 2*F_pad) f32 = [amp*cos(ph0) | amp*sin(ph0)]
    bsyn : (2*F_pad, n_fft) bf16     bana : (n_fft, 2*F_pad) bf16
    invw : (S_pad, hop) f32 = 1 / sum(window^2)
    spec (out, carried across grid steps) : (T_pad, 2*F_pad) f32 = [real|imag]
    frames : (T_pad, n_fft) f32 scratch      sig : (S_pad, hop) f32 scratch
    """
    t_pad, f2 = seed_ref.shape
    f_pad = f2 // 2
    n_fft = frames_ref.shape[1]
    s_pad, hop = sig_ref.shape
    r = n_fft // hop

    # Seed the carried spectrum from the supplied (random) initial phase once.
    @pl.when(pl.program_id(0) == 0)
    def _():
        spec_ref[...] = seed_ref[...]

    # --- magnitude projection: (re,im) <- amp*(re,im)/|re+i*im| -----------
    # amp is recovered from the constant seed: |amp*(cos,sin)| == amp.
    re0 = seed_ref[:, :f_pad]
    im0 = seed_ref[:, f_pad:]
    amp = jnp.sqrt(re0 * re0 + im0 * im0)
    re = spec_ref[:, :f_pad]
    im = spec_ref[:, f_pad:]
    sq = re * re + im * im
    pos = sq > 1e-12                                    # eps guards inf scale
    scale = jnp.where(pos, amp * lax.rsqrt(jnp.maximum(sq, 1e-12)), 0.0)
    spec_ref[:, :f_pad] = jnp.where(pos, re * scale, amp)   # atan2(0,0)==0
    spec_ref[:, f_pad:] = im * scale                         # zero where sq~0

    # --- inverse STFT frames: one merged bf16 MXU matmul, f32 accumulation -
    frames_ref[...] = jnp.dot(spec_ref[...].astype(jnp.bfloat16), bsyn_ref[...],
                              preferred_element_type=jnp.float32)

    # --- overlap-add (signal viewed as hop-wide chunks) --------------------
    # c == 0 chunk folded into a direct store; only the tail rows are zeroed.
    # TODO(synk): the c>=1 shifted slices sit at non-8-aligned sublane
    # offsets; an XLU-roll based combine could hide this traffic under the
    # matmuls for large T.
    sig_ref[0:t_pad, :] = frames_ref[:, 0:hop]
    if s_pad > t_pad:
        sig_ref[t_pad:, :] = jnp.zeros((s_pad - t_pad, hop), jnp.float32)
    for c in range(1, r):
        sig_ref[c:c + t_pad, :] = (sig_ref[c:c + t_pad, :]
                                   + frames_ref[:, c * hop:(c + 1) * hop])

    # --- re-frame with the window^2 normalisation fused in -----------------
    for c in range(r):
        frames_ref[:, c * hop:(c + 1) * hop] = (sig_ref[c:c + t_pad, :]
                                                * invw_ref[c:c + t_pad, :])

    # --- forward STFT: raw spectrum carried to the next grid step ----------
    spec_ref[...] = jnp.dot(frames_ref[...].astype(jnp.bfloat16), bana_ref[...],
                            preferred_element_type=jnp.float32)


@functools.partial(jax.jit, static_argnames=("hop", "fft_size", "f_pad",
                                             "iteration", "single_buffer"))
def _griffin_lim(amplitude, phase, bsyn, bana, window, *,
                 hop, fft_size, f_pad, iteration, single_buffer):
    f_bin, t_bin = amplitude.shape
    n_fft = fft_size
    r = n_fft // hop
    t_pad = max(((t_bin + 7) // 8) * 8, 8)       # sublane alignment (T axis)
    s_pad = ((t_pad + r - 1 + 7) // 8) * 8       # OLA signal rows, 8-aligned
    # TODO(synk): for MXU efficiency t_pad should be >=128/256; batch several
    # spectrograms into the T axis for short clips.

    # Packed seed spectrum [amp*cos(ph) | amp*sin(ph)] in kernel layout
    # (T on sublanes, F on lanes), zero padded.
    pad = ((0, t_pad - t_bin), (0, f_pad - f_bin))
    re0 = jnp.pad((amplitude * jnp.cos(phase)).T, pad)
    im0 = jnp.pad((amplitude * jnp.sin(phase)).T, pad)
    seed = jnp.concatenate([re0, im0], axis=1).astype(jnp.float32)

    # 1 / sum_of_overlapping(window^2), precomputed once (not per iteration).
    w2 = (window * window).reshape(r, hop)
    wsq = jnp.zeros((s_pad, hop), jnp.float32)
    for c in range(r):
        wsq = wsq.at[c:c + t_bin, :].add(jnp.broadcast_to(w2[c], (t_bin, hop)))
    inv_wsq = jnp.where(wsq > 1e-8, 1.0 / wsq, 0.0)

    # VMEM budget sized against the real per-core capacity (v7x: 64 MiB).
    bufs = 1 if single_buffer else 2
    in_bytes = bufs * (4 * t_pad * 2 * f_pad            # seed spectrum (f32)
                       + 2 * (2 * f_pad * n_fft) * 2    # two bf16 bases
                       + 4 * s_pad * hop)               # 1/sum(w^2)
    out_bytes = bufs * 4 * t_pad * 2 * f_pad
    scratch_bytes = 4 * (t_pad * n_fft + s_pad * hop)
    needed = in_bytes + out_bytes + scratch_bytes + (4 << 20)
    try:
        cap = int(getattr(pltpu.get_tpu_info(), "vmem_capacity_bytes", 64 << 20))
    except Exception:
        cap = 64 << 20
    vmem_bytes = int(min(max(needed, 32 << 20), cap - (8 << 20)))
    # TODO(synk): if `needed` exceeds the cap (huge fft_size * T_bin), switch
    # to the T-tiled path described in the module docstring.

    cost = pl.CostEstimate(
        flops=int(iteration) * 2 * (2 * t_pad * (2 * f_pad) * n_fft),
        transcendentals=int(iteration) * 2 * t_pad * f_pad,
        bytes_accessed=in_bytes + out_bytes,
    )

    def _spec(shape, idx):
        if single_buffer:   # constant index_maps -> nothing to double-buffer
            return pl.BlockSpec(shape, idx, pipeline_mode=pl.Buffered(1))
        return pl.BlockSpec(shape, idx)

    grid_spec = pltpu.PrefetchScalarGridSpec(
        num_scalar_prefetch=0,
        grid=(iteration,),
        in_specs=[
            _spec((t_pad, 2 * f_pad), lambda i: (0, 0)),     # packed seed
            _spec((2 * f_pad, n_fft), lambda i: (0, 0)),     # B_syn (bf16)
            _spec((n_fft, 2 * f_pad), lambda i: (0, 0)),     # B_ana (bf16)
            _spec((s_pad, hop), lambda i: (0, 0)),           # 1/sum(w^2)
        ],
        out_specs=_spec((t_pad, 2 * f_pad), lambda i: (0, 0)),
        scratch_shapes=[pltpu.VMEM((t_pad, n_fft), jnp.float32),
                        pltpu.VMEM((s_pad, hop), jnp.float32)],
    )
    spec = pl.pallas_call(
        _griffin_lim_fused_kernel,
        grid_spec=grid_spec,
        out_shape=jax.ShapeDtypeStruct((t_pad, 2 * f_pad), jnp.float32),
        compiler_params=pltpu.CompilerParams(
            dimension_semantics=("arbitrary",),   # GL iterations are sequential
            vmem_limit_bytes=vmem_bytes),
        cost_estimate=cost,
    )(seed, bsyn, bana, inv_wsq)

    re = spec[:t_bin, :f_bin].T
    im = spec[:t_bin, f_pad:f_pad + f_bin].T
    return jnp.arctan2(im, re)          # final phase, once, in plain JAX


class GriffinLim:
    """JAX/Pallas port of the PyTorch GriffinLim module (hann window, normalize)."""

    def __init__(self, fft_size, hop_size=None, window_fn="hann"):
        if hop_size is None:
            hop_size = fft_size // 4
        assert window_fn == "hann", "only hann window implemented"
        self.fft_size = int(fft_size)
        self.hop_size = int(hop_size)
        assert self.fft_size % self.hop_size == 0, \
            "hop_size must divide fft_size for the strided overlap-add"
        # TODO(synk): hop_size < 128 makes the hop-wide signal chunks
        # lane-sparse (masked stores); pack two hops per lane row in that case.
        n_fft = self.fft_size
        self.f_bin = n_fft // 2 + 1
        # Pad frequency axis to a multiple of 128 (lane-dense, aligned matmul K).
        # TODO(synk): the Nyquist bin could be handled outside the matmul so
        # f_pad = n_fft//2 exactly, trimming zero-padded basis columns.
        self.f_pad = ((self.f_bin + 127) // 128) * 128

        n = jnp.arange(n_fft, dtype=jnp.float32)
        window = 0.5 * (1.0 - jnp.cos(2.0 * jnp.pi * n / n_fft))  # periodic hann
        f = jnp.arange(self.f_pad, dtype=jnp.float32)
        valid = (f < self.f_bin).astype(jnp.float32)              # zero padded bins
        ang = 2.0 * jnp.pi * n[:, None] * f[None, :] / n_fft      # (n_fft, F_pad)
        norm = jnp.float32(1.0 / math.sqrt(n_fft))                # normalize=True

        # analysis (forward STFT) basis, merged cos|sin: (n_fft, 2*F_pad), bf16
        bana_cos = valid[None, :] * window[:, None] * jnp.cos(ang) * norm
        bana_sin = -valid[None, :] * window[:, None] * jnp.sin(ang) * norm
        self.bana = jnp.concatenate([bana_cos, bana_sin], axis=1).astype(jnp.bfloat16)

        # synthesis (inverse one-sided STFT) basis, merged: (2*F_pad, n_fft), bf16
        c = jnp.where((f == 0) | (f == n_fft // 2), 1.0, 2.0) * valid
        bsyn_cos = (c[:, None] * window[None, :] * jnp.cos(ang).T) * norm
        bsyn_sin = (-c[:, None] * window[None, :] * jnp.sin(ang).T) * norm
        self.bsyn = jnp.concatenate([bsyn_cos, bsyn_sin], axis=0).astype(jnp.bfloat16)
        # TODO(synk): bf16 bases (f32 accumulation) -- validate reconstruction
        # quality against an f32 reference if bit-exactness matters.

        self.window = window.astype(jnp.float32)

    def __call__(self, amplitude, phase=None, iteration=10, key=None):
        f_bin, t_bin = amplitude.shape
        assert f_bin == self.f_bin
        assert int(iteration) >= 1
        amplitude = amplitude.astype(jnp.float32)
        if phase is None:
            if key is None:
                key = jax.random.PRNGKey(0)
            phase = jax.random.uniform(key, (f_bin, t_bin), jnp.float32,
                                       minval=0.0, maxval=2.0 * math.pi)
        phase = phase.astype(jnp.float32)
        kwargs = dict(hop=self.hop_size, fft_size=self.fft_size,
                      f_pad=self.f_pad, iteration=int(iteration))
        try:
            # preferred path: single-buffered constant-index operands
            out = _griffin_lim(amplitude, phase, self.bsyn, self.bana,
                               self.window, single_buffer=True, **kwargs)
            return jax.block_until_ready(out)
        except Exception:
            # fallback: default (double) buffering if Buffered(1) is rejected
            out = _griffin_lim(amplitude, phase, self.bsyn, self.bana,
                               self.window, single_buffer=False, **kwargs)
            return jax.block_until_ready(out)


if __name__ == "__main__":
    fft_size = 512                      # F_bin = 257, hop = 128 (lane-aligned)
    t_bin = 16
    f_bin = fft_size // 2 + 1

    key = jax.random.PRNGKey(0)
    k_amp, k_phase = jax.random.split(key)
    amplitude = jnp.abs(jax.random.normal(k_amp, (f_bin, t_bin), jnp.float32))

    gl = GriffinLim(fft_size)
    phase = gl(amplitude, phase=None, iteration=10, key=k_phase)
    phase = jax.block_until_ready(phase)

    assert phase.shape == (f_bin, t_bin)
    assert phase.dtype == jnp.float32
    assert bool(jnp.all(jnp.isfinite(phase)))
    print("KERNEL_OK")
</pallas_src>

<mosaic_0001>
module attributes {stable_mosaic.version = 11 : i64} {
  func.func @_griffin_lim_fused_kernel(%arg0: i32, %arg1: memref<16x768xf32, #tpu.memory_space<vmem>>, %arg2: memref<768x512xbf16, #tpu.memory_space<vmem>>, %arg3: memref<512x768xbf16, #tpu.memory_space<vmem>>, %arg4: memref<24x128xf32, #tpu.memory_space<vmem>>, %arg5: memref<16x768xf32, #tpu.memory_space<vmem>>, %arg6: memref<16x512xf32, #tpu.memory_space<vmem>>, %arg7: memref<24x128xf32, #tpu.memory_space<vmem>>) attributes {dimension_semantics = [#tpu.dimension_semantics<arbitrary>], iteration_bounds = array<i64: 10>, scalar_prefetch = 0 : i64, scratch_operands = 2 : i64, tpu.core_type = #tpu.core_type<tc>, window_params = [{pipeline_mode = #tpu.pipeline_mode<synchronous>, transform_indices = @transform_0, window_bounds = array<i64: 16, 768>}, {pipeline_mode = #tpu.pipeline_mode<synchronous>, transform_indices = @transform_1, window_bounds = array<i64: 768, 512>}, {pipeline_mode = #tpu.pipeline_mode<synchronous>, transform_indices = @transform_2, window_bounds = array<i64: 512, 768>}, {pipeline_mode = #tpu.pipeline_mode<synchronous>, transform_indices = @transform_3, window_bounds = array<i64: 24, 128>}, {pipeline_mode = #tpu.pipeline_mode<synchronous>, transform_indices = @transform_4, window_bounds = array<i64: 16, 768>}]} {
    %c0_i32 = arith.constant 0 : i32
    %0 = arith.cmpi eq, %arg0, %c0_i32 : i32
    %1 = arith.extui %0 : i1 to i32
    %c0_i32_0 = arith.constant 0 : i32
    %2 = arith.cmpi ne, %1, %c0_i32_0 : i32
    scf.if %2 {
      %c0_70 = arith.constant 0 : index
      %c0_71 = arith.constant 0 : index
      %69 = vector.load %arg1[%c0_70, %c0_71] : memref<16x768xf32, #tpu.memory_space<vmem>>, vector<16x768xf32>
      %c0_72 = arith.constant 0 : index
      %c0_73 = arith.constant 0 : index
      %70 = vector.load %arg5[%c0_72, %c0_73] : memref<16x768xf32, #tpu.memory_space<vmem>>, vector<16x768xf32>
      tpu.vector_store %arg5[%c0_72, %c0_73], %69 {strides = array<i32>} : memref<16x768xf32, #tpu.memory_space<vmem>>, vector<16x768xf32>,
    } else {
    }
    %c0 = arith.constant 0 : index
    %c0_1 = arith.constant 0 : index
    %3 = vector.load %arg1[%c0, %c0_1] : memref<16x768xf32, #tpu.memory_space<vmem>>, vector<16x384xf32>
    %c0_2 = arith.constant 0 : index
    %c384 = arith.constant 384 : index
    %4 = vector.load %arg1[%c0_2, %c384] : memref<16x768xf32, #tpu.memory_space<vmem>>, vector<16x384xf32>
    %5 = arith.mulf %3, %3 : vector<16x384xf32>
    %6 = arith.mulf %4, %4 : vector<16x384xf32>
    %7 = arith.addf %5, %6 : vector<16x384xf32>
    %8 = math.sqrt %7 : vector<16x384xf32>
    %c0_3 = arith.constant 0 : index
    %c0_4 = arith.constant 0 : index
    %9 = vector.load %arg5[%c0_3, %c0_4] : memref<16x768xf32, #tpu.memory_space<vmem>>, vector<16x384xf32>
    %c0_5 = arith.constant 0 : index
    %c384_6 = arith.constant 384 : index
    %10 = vector.load %arg5[%c0_5, %c384_6] : memref<16x768xf32, #tpu.memory_space<vmem>>, vector<16x384xf32>
    %11 = arith.mulf %9, %9 : vector<16x384xf32>
    %12 = arith.mulf %10, %10 : vector<16x384xf32>
    %13 = arith.addf %11, %12 : vector<16x384xf32>
    %cst = arith.constant 9.99999996E-13 : f32
    %14 = vector.broadcast %cst : f32 to vector<16x384xf32>
    %15 = arith.cmpf ogt, %13, %14 : vector<16x384xf32>
    %cst_7 = arith.constant 9.99999996E-13 : f32
    %16 = vector.broadcast %cst_7 : f32 to vector<16x384xf32>
    %17 = arith.maximumf %13, %16 : vector<16x384xf32>
    %18 = math.rsqrt %17 : vector<16x384xf32>
    %19 = arith.mulf %8, %18 : vector<16x384xf32>
    %cst_8 = arith.constant 0.000000e+00 : f32
    %20 = vector.broadcast %cst_8 : f32 to vector<16x384xf32>
    %21 = arith.select %15, %19, %20 : vector<16x384xi1>, vector<16x384xf32>
    %22 = arith.mulf %9, %21 : vector<16x384xf32>
    %23 = arith.select %15, %22, %8 : vector<16x384xi1>, vector<16x384xf32>
    %c0_9 = arith.constant 0 : index
    %c0_10 = arith.constant 0 : index
    %24 = vector.load %arg5[%c0_9, %c0_10] : memref<16x768xf32, #tpu.memory_space<vmem>>, vector<16x384xf32>
    tpu.vector_store %arg5[%c0_9, %c0_10], %23 {strides = array<i32>} : memref<16x768xf32, #tpu.memory_space<vmem>>, vector<16x384xf32>,
    %25 = arith.mulf %10, %21 : vector<16x384xf32>
    %c0_11 = arith.constant 0 : index
    %c384_12 = arith.constant 384 : index
    %26 = vector.load %arg5[%c0_11, %c384_12] : memref<16x768xf32, #tpu.memory_space<vmem>>, vector<16x384xf32>
    tpu.vector_store %arg5[%c0_11, %c384_12], %25 {strides = array<i32>} : memref<16x768xf32, #tpu.memory_space<vmem>>, vector<16x384xf32>,
    %c0_13 = arith.constant 0 : index
    %c0_14 = arith.constant 0 : index
    %27 = vector.load %arg5[%c0_13, %c0_14] : memref<16x768xf32, #tpu.memory_space<vmem>>, vector<16x768xf32>
    %28 = arith.truncf %27 : vector<16x768xf32> to vector<16x768xbf16>
    %c0_15 = arith.constant 0 : index
    %c0_16 = arith.constant 0 : index
    %29 = vector.load %arg2[%c0_15, %c0_16] : memref<768x512xbf16, #tpu.memory_space<vmem>>, vector<768x512xbf16>
    %cst_17 = arith.constant dense<0.000000e+00> : vector<16x512xf32>
    %30 = tpu.matmul %28, %29, %cst_17 {dimension_numbers = #tpu.dot_dimension_numbers<[1], [0], [0], [1], [0, 0, 1, 1], [], []>} : vector<16x768xbf16>, vector<768x512xbf16>, vector<16x512xf32> -> vector<16x512xf32>
    %c0_18 = arith.constant 0 : index
    %c0_19 = arith.constant 0 : index
    %31 = vector.load %arg6[%c0_18, %c0_19] : memref<16x512xf32, #tpu.memory_space<vmem>>, vector<16x512xf32>
    tpu.vector_store %arg6[%c0_18, %c0_19], %30 {strides = array<i32>} : memref<16x512xf32, #tpu.memory_space<vmem>>, vector<16x512xf32>,
    %c0_20 = arith.constant 0 : index
    %c0_21 = arith.constant 0 : index
    %32 = vector.load %arg6[%c0_20, %c0_21] : memref<16x512xf32, #tpu.memory_space<vmem>>, vector<16x128xf32>
    %c0_22 = arith.constant 0 : index
    %c0_23 = arith.constant 0 : index
    %33 = vector.load %arg7[%c0_22, %c0_23] : memref<24x128xf32, #tpu.memory_space<vmem>>, vector<16x128xf32>
    tpu.vector_store %arg7[%c0_22, %c0_23], %32 {strides = array<i32>} : memref<24x128xf32, #tpu.memory_space<vmem>>, vector<16x128xf32>,
    %cst_24 = arith.constant 0.000000e+00 : f32
    %34 = vector.broadcast %cst_24 : f32 to vector<8x128xf32>
    %c16 = arith.constant 16 : index
    %c0_25 = arith.constant 0 : index
    %35 = vector.load %arg7[%c16, %c0_25] : memref<24x128xf32, #tpu.memory_space<vmem>>, vector<8x128xf32>
    tpu.vector_store %arg7[%c16, %c0_25], %34 {strides = array<i32>} : memref<24x128xf32, #tpu.memory_space<vmem>>, vector<8x128xf32>,
    %c1 = arith.constant 1 : index
    %c0_26 = arith.constant 0 : index
    %36 = vector.load %arg7[%c1, %c0_26] : memref<24x128xf32, #tpu.memory_space<vmem>>, vector<16x128xf32>
    %c0_27 = arith.constant 0 : index
    %c128 = arith.constant 128 : index
    %37 = vector.load %arg6[%c0_27, %c128] : memref<16x512xf32, #tpu.memory_space<vmem>>, vector<16x128xf32>
    %38 = arith.addf %36, %37 : vector<16x128xf32>
    %c1_28 = arith.constant 1 : index
    %c0_29 = arith.constant 0 : index
    %39 = vector.load %arg7[%c1_28, %c0_29] : memref<24x128xf32, #tpu.memory_space<vmem>>, vector<16x128xf32>
    tpu.vector_store %arg7[%c1_28, %c0_29], %38 {strides = array<i32>} : memref<24x128xf32, #tpu.memory_space<vmem>>, vector<16x128xf32>,
    %c2 = arith.constant 2 : index
    %c0_30 = arith.constant 0 : index
    %40 = vector.load %arg7[%c2, %c0_30] : memref<24x128xf32, #tpu.memory_space<vmem>>, vector<16x128xf32>
    %c0_31 = arith.constant 0 : index
    %c256 = arith.constant 256 : index
    %41 = vector.load %arg6[%c0_31, %c256] : memref<16x512xf32, #tpu.memory_space<vmem>>, vector<16x128xf32>
    %42 = arith.addf %40, %41 : vector<16x128xf32>
    %c2_32 = arith.constant 2 : index
    %c0_33 = arith.constant 0 : index
    %43 = vector.load %arg7[%c2_32, %c0_33] : memref<24x128xf32, #tpu.memory_space<vmem>>, vector<16x128xf32>
    tpu.vector_store %arg7[%c2_32, %c0_33], %42 {strides = array<i32>} : memref<24x128xf32, #tpu.memory_space<vmem>>, vector<16x128xf32>,
    %c3 = arith.constant 3 : index
    %c0_34 = arith.constant 0 : index
    %44 = vector.load %arg7[%c3, %c0_34] : memref<24x128xf32, #tpu.memory_space<vmem>>, vector<16x128xf32>
    %c0_35 = arith.constant 0 : index
    %c384_36 = arith.constant 384 : index
    %45 = vector.load %arg6[%c0_35, %c384_36] : memref<16x512xf32, #tpu.memory_space<vmem>>, vector<16x128xf32>
    %46 = arith.addf %44, %45 : vector<16x128xf32>
    %c3_37 = arith.constant 3 : index
    %c0_38 = arith.constant 0 : index
    %47 = vector.load %arg7[%c3_37, %c0_38] : memref<24x128xf32, #tpu.memory_space<vmem>>, vector<16x128xf32>
    tpu.vector_store %arg7[%c3_37, %c0_38], %46 {strides = array<i32>} : memref<24x128xf32, #tpu.memory_space<vmem>>, vector<16x128xf32>,
    %c0_39 = arith.constant 0 : index
    %c0_40 = arith.constant 0 : index
    %48 = vector.load %arg7[%c0_39, %c0_40] : memref<24x128xf32, #tpu.memory_space<vmem>>, vector<16x128xf32>
    %c0_41 = arith.constant 0 : index
    %c0_42 = arith.constant 0 : index
    %49 = vector.load %arg4[%c0_41, %c0_42] : memref<24x128xf32, #tpu.memory_space<vmem>>, vector<16x128xf32>
    %50 = arith.mulf %48, %49 : vector<16x128xf32>
    %c0_43 = arith.constant 0 : index
    %c0_44 = arith.constant 0 : index
    %51 = vector.load %arg6[%c0_43, %c0_44] : memref<16x512xf32, #tpu.memory_space<vmem>>, vector<16x128xf32>
    tpu.vector_store %arg6[%c0_43, %c0_44], %50 {strides = array<i32>} : memref<16x512xf32, #tpu.memory_space<vmem>>, vector<16x128xf32>,
    %c1_45 = arith.constant 1 : index
    %c0_46 = arith.constant 0 : index
    %52 = vector.load %arg7[%c1_45, %c0_46] : memref<24x128xf32, #tpu.memory_space<vmem>>, vector<16x128xf32>
    %c1_47 = arith.constant 1 : index
    %c0_48 = arith.constant 0 : index
    %53 = vector.load %arg4[%c1_47, %c0_48] : memref<24x128xf32, #tpu.memory_space<vmem>>, vector<16x128xf32>
    %54 = arith.mulf %52, %53 : vector<16x128xf32>
    %c0_49 = arith.constant 0 : index
    %c128_50 = arith.constant 128 : index
    %55 = vector.load %arg6[%c0_49, %c128_50] : memref<16x512xf32, #tpu.memory_space<vmem>>, vector<16x128xf32>
    tpu.vector_store %arg6[%c0_49, %c128_50], %54 {strides = array<i32>} : memref<16x512xf32, #tpu.memory_space<vmem>>, vector<16x128xf32>,
    %c2_51 = arith.constant 2 : index
    %c0_52 = arith.constant 0 : index
    %56 = vector.load %arg7[%c2_51, %c0_52] : memref<24x128xf32, #tpu.memory_space<vmem>>, vector<16x128xf32>
    %c2_53 = arith.constant 2 : index
    %c0_54 = arith.constant 0 : index
    %57 = vector.load %arg4[%c2_53, %c0_54] : memref<24x128xf32, #tpu.memory_space<vmem>>, vector<16x128xf32>
    %58 = arith.mulf %56, %57 : vector<16x128xf32>
    %c0_55 = arith.constant 0 : index
    %c256_56 = arith.constant 256 : index
    %59 = vector.load %arg6[%c0_55, %c256_56] : memref<16x512xf32, #tpu.memory_space<vmem>>, vector<16x128xf32>
    tpu.vector_store %arg6[%c0_55, %c256_56], %58 {strides = array<i32>} : memref<16x512xf32, #tpu.memory_space<vmem>>, vector<16x128xf32>,
    %c3_57 = arith.constant 3 : index
    %c0_58 = arith.constant 0 : index
    %60 = vector.load %arg7[%c3_57, %c0_58] : memref<24x128xf32, #tpu.memory_space<vmem>>, vector<16x128xf32>
    %c3_59 = arith.constant 3 : index
    %c0_60 = arith.constant 0 : index
    %61 = vector.load %arg4[%c3_59, %c0_60] : memref<24x128xf32, #tpu.memory_space<vmem>>, vector<16x128xf32>
    %62 = arith.mulf %60, %61 : vector<16x128xf32>
    %c0_61 = arith.constant 0 : index
    %c384_62 = arith.constant 384 : index
    %63 = vector.load %arg6[%c0_61, %c384_62] : memref<16x512xf32, #tpu.memory_space<vmem>>, vector<16x128xf32>
    tpu.vector_store %arg6[%c0_61, %c384_62], %62 {strides = array<i32>} : memref<16x512xf32, #tpu.memory_space<vmem>>, vector<16x128xf32>,
    %c0_63 = arith.constant 0 : index
    %c0_64 = arith.constant 0 : index
    %64 = vector.load %arg6[%c0_63, %c0_64] : memref<16x512xf32, #tpu.memory_space<vmem>>, vector<16x512xf32>
    %65 = arith.truncf %64 : vector<16x512xf32> to vector<16x512xbf16>
    %c0_65 = arith.constant 0 : index
    %c0_66 = arith.constant 0 : index
    %66 = vector.load %arg3[%c0_65, %c0_66] : memref<512x768xbf16, #tpu.memory_space<vmem>>, vector<512x768xbf16>
    %cst_67 = arith.constant dense<0.000000e+00> : vector<16x768xf32>
    %67 = tpu.matmul %65, %66, %cst_67 {dimension_numbers = #tpu.dot_dimension_numbers<[1], [0], [0], [1], [0, 0, 1, 1], [], []>} : vector<16x512xbf16>, vector<512x768xbf16>, vector<16x768xf32> -> vector<16x768xf32>
    %c0_68 = arith.constant 0 : index
    %c0_69 = arith.constant 0 : index
    %68 = vector.load %arg5[%c0_68, %c0_69] : memref<16x768xf32, #tpu.memory_space<vmem>>, vector<16x768xf32>
    tpu.vector_store %arg5[%c0_68, %c0_69], %67 {strides = array<i32>} : memref<16x768xf32, #tpu.memory_space<vmem>>, vector<16x768xf32>,
    return
  }
  func.func @transform_0(%arg0: i32) -> (i32, i32) {
    %c0_i32 = arith.constant 0 : i32
    %c0_i32_0 = arith.constant 0 : i32
    %c0_i32_1 = arith.constant 0 : i32
    return %c0_i32, %c0_i32_0 : i32, i32
  }
  func.func @transform_1(%arg0: i32) -> (i32, i32) {
    %c0_i32 = arith.constant 0 : i32
    %c0_i32_0 = arith.constant 0 : i32
    %c0_i32_1 = arith.constant 0 : i32
    return %c0_i32, %c0_i32_0 : i32, i32
  }
  func.func @transform_2(%arg0: i32) -> (i32, i32) {
    %c0_i32 = arith.constant 0 : i32
    %c0_i32_0 = arith.constant 0 : i32
    %c0_i32_1 = arith.constant 0 : i32
    return %c0_i32, %c0_i32_0 : i32, i32
  }
  func.func @transform_3(%arg0: i32) -> (i32, i32) {
    %c0_i32 = arith.constant 0 : i32
    %c0_i32_0 = arith.constant 0 : i32
    %c0_i32_1 = arith.constant 0 : i32
    return %c0_i32, %c0_i32_0 : i32, i32
  }
  func.func @transform_4(%arg0: i32) -> (i32, i32) {
    %c0_i32 = arith.constant 0 : i32
    %c0_i32_0 = arith.constant 0 : i32
    %c0_i32_1 = arith.constant 0 : i32
    return %c0_i32, %c0_i32_0 : i32, i32
  }
}

module attributes {stable_mosaic.version = 11 : i64} {
  func.func @_griffin_lim_fused_kernel(%arg0: i32, %arg1: memref<16x768xf32, #tpu.memory_space<vmem>>, %arg2: memref<768x512xbf16, #tpu.memory_space<vmem>>, %arg3: memref<512x768xbf16, #tpu.memory_space<vmem>>, %arg4: memref<24x128xf32, #tpu.memory_space<vmem>>, %arg5: memref<16x768xf32, #tpu.memory_space<vmem>>, %arg6: memref<16x512xf32, #tpu.memory_space<vmem>>, %arg7: memref<24x128xf32, #tpu.memory_space<vmem>>) attributes {dimension_semantics = [#tpu.dimension_semantics<arbitrary>], iteration_bounds = array<i64: 10>, scalar_prefetch = 0 : i64, scratch_operands = 2 : i64, tpu.core_type = #tpu.core_type<tc>, window_params = [{pipeline_mode = #tpu.pipeline_mode<synchronous>, transform_indices = @transform_0, window_bounds = array<i64: 16, 768>}, {pipeline_mode = #tpu.pipeline_mode<synchronous>, transform_indices = @transform_1, window_bounds = array<i64: 768, 512>}, {pipeline_mode = #tpu.pipeline_mode<synchronous>, transform_indices = @transform_2, window_bounds = array<i64: 512, 768>}, {pipeline_mode = #tpu.pipeline_mode<synchronous>, transform_indices = @transform_3, window_bounds = array<i64: 24, 128>}, {pipeline_mode = #tpu.pipeline_mode<synchronous>, transform_indices = @transform_4, window_bounds = array<i64: 16, 768>}]} {
    %c0_i32 = arith.constant 0 : i32
    %0 = arith.cmpi eq, %arg0, %c0_i32 : i32
    %1 = arith.extui %0 : i1 to i32
    %c0_i32_0 = arith.constant 0 : i32
    %2 = arith.cmpi ne, %1, %c0_i32_0 : i32
    scf.if %2 {
      %c0_70 = arith.constant 0 : index
      %c0_71 = arith.constant 0 : index
      %69 = vector.load %arg1[%c0_70, %c0_71] : memref<16x768xf32, #tpu.memory_space<vmem>>, vector<16x768xf32>
      %c0_72 = arith.constant 0 : index
      %c0_73 = arith.constant 0 : index
      %70 = vector.load %arg5[%c0_72, %c0_73] : memref<16x768xf32, #tpu.memory_space<vmem>>, vector<16x768xf32>
      tpu.vector_store %arg5[%c0_72, %c0_73], %69 {strides = array<i32>} : memref<16x768xf32, #tpu.memory_space<vmem>>, vector<16x768xf32>,
    } else {
    }
    %c0 = arith.constant 0 : index
    %c0_1 = arith.constant 0 : index
    %3 = vector.load %arg1[%c0, %c0_1] : memref<16x768xf32, #tpu.memory_space<vmem>>, vector<16x384xf32>
    %c0_2 = arith.constant 0 : index
    %c384 = arith.constant 384 : index
    %4 = vector.load %arg1[%c0_2, %c384] : memref<16x768xf32, #tpu.memory_space<vmem>>, vector<16x384xf32>
    %5 = arith.mulf %3, %3 : vector<16x384xf32>
    %6 = arith.mulf %4, %4 : vector<16x384xf32>
    %7 = arith.addf %5, %6 : vector<16x384xf32>
    %8 = math.sqrt %7 : vector<16x384xf32>
    %c0_3 = arith.constant 0 : index
    %c0_4 = arith.constant 0 : index
    %9 = vector.load %arg5[%c0_3, %c0_4] : memref<16x768xf32, #tpu.memory_space<vmem>>, vector<16x384xf32>
    %c0_5 = arith.constant 0 : index
    %c384_6 = arith.constant 384 : index
    %10 = vector.load %arg5[%c0_5, %c384_6] : memref<16x768xf32, #tpu.memory_space<vmem>>, vector<16x384xf32>
    %11 = arith.mulf %9, %9 : vector<16x384xf32>
    %12 = arith.mulf %10, %10 : vector<16x384xf32>
    %13 = arith.addf %11, %12 : vector<16x384xf32>
    %cst = arith.constant 9.99999996E-13 : f32
    %14 = vector.broadcast %cst : f32 to vector<16x384xf32>
    %15 = arith.cmpf ogt, %13, %14 : vector<16x384xf32>
    %cst_7 = arith.constant 9.99999996E-13 : f32
    %16 = vector.broadcast %cst_7 : f32 to vector<16x384xf32>
    %17 = arith.maximumf %13, %16 : vector<16x384xf32>
    %18 = math.rsqrt %17 : vector<16x384xf32>
    %19 = arith.mulf %8, %18 : vector<16x384xf32>
    %cst_8 = arith.constant 0.000000e+00 : f32
    %20 = vector.broadcast %cst_8 : f32 to vector<16x384xf32>
    %21 = arith.select %15, %19, %20 : vector<16x384xi1>, vector<16x384xf32>
    %22 = arith.mulf %9, %21 : vector<16x384xf32>
    %23 = arith.select %15, %22, %8 : vector<16x384xi1>, vector<16x384xf32>
    %c0_9 = arith.constant 0 : index
    %c0_10 = arith.constant 0 : index
    %24 = vector.load %arg5[%c0_9, %c0_10] : memref<16x768xf32, #tpu.memory_space<vmem>>, vector<16x384xf32>
    tpu.vector_store %arg5[%c0_9, %c0_10], %23 {strides = array<i32>} : memref<16x768xf32, #tpu.memory_space<vmem>>, vector<16x384xf32>,
    %25 = arith.mulf %10, %21 : vector<16x384xf32>
    %c0_11 = arith.constant 0 : index
    %c384_12 = arith.constant 384 : index
    %26 = vector.load %arg5[%c0_11, %c384_12] : memref<16x768xf32, #tpu.memory_space<vmem>>, vector<16x384xf32>
    tpu.vector_store %arg5[%c0_11, %c384_12], %25 {strides = array<i32>} : memref<16x768xf32, #tpu.memory_space<vmem>>, vector<16x384xf32>,
    %c0_13 = arith.constant 0 : index
    %c0_14 = arith.constant 0 : index
    %27 = vector.load %arg5[%c0_13, %c0_14] : memref<16x768xf32, #tpu.memory_space<vmem>>, vector<16x768xf32>
    %28 = arith.truncf %27 : vector<16x768xf32> to vector<16x768xbf16>
    %c0_15 = arith.constant 0 : index
    %c0_16 = arith.constant 0 : index
    %29 = vector.load %arg2[%c0_15, %c0_16] : memref<768x512xbf16, #tpu.memory_space<vmem>>, vector<768x512xbf16>
    %cst_17 = arith.constant dense<0.000000e+00> : vector<16x512xf32>
    %30 = tpu.matmul %28, %29, %cst_17 {dimension_numbers = #tpu.dot_dimension_numbers<[1], [0], [0], [1], [0, 0, 1, 1], [], []>} : vector<16x768xbf16>, vector<768x512xbf16>, vector<16x512xf32> -> vector<16x512xf32>
    %c0_18 = arith.constant 0 : index
    %c0_19 = arith.constant 0 : index
    %31 = vector.load %arg6[%c0_18, %c0_19] : memref<16x512xf32, #tpu.memory_space<vmem>>, vector<16x512xf32>
    tpu.vector_store %arg6[%c0_18, %c0_19], %30 {strides = array<i32>} : memref<16x512xf32, #tpu.memory_space<vmem>>, vector<16x512xf32>,
    %c0_20 = arith.constant 0 : index
    %c0_21 = arith.constant 0 : index
    %32 = vector.load %arg6[%c0_20, %c0_21] : memref<16x512xf32, #tpu.memory_space<vmem>>, vector<16x128xf32>
    %c0_22 = arith.constant 0 : index
    %c0_23 = arith.constant 0 : index
    %33 = vector.load %arg7[%c0_22, %c0_23] : memref<24x128xf32, #tpu.memory_space<vmem>>, vector<16x128xf32>
    tpu.vector_store %arg7[%c0_22, %c0_23], %32 {strides = array<i32>} : memref<24x128xf32, #tpu.memory_space<vmem>>, vector<16x128xf32>,
    %cst_24 = arith.constant 0.000000e+00 : f32
    %34 = vector.broadcast %cst_24 : f32 to vector<8x128xf32>
    %c16 = arith.constant 16 : index
    %c0_25 = arith.constant 0 : index
    %35 = vector.load %arg7[%c16, %c0_25] : memref<24x128xf32, #tpu.memory_space<vmem>>, vector<8x128xf32>
    tpu.vector_store %arg7[%c16, %c0_25], %34 {strides = array<i32>} : memref<24x128xf32, #tpu.memory_space<vmem>>, vector<8x128xf32>,
    %c1 = arith.constant 1 : index
    %c0_26 = arith.constant 0 : index
    %36 = vector.load %arg7[%c1, %c0_26] : memref<24x128xf32, #tpu.memory_space<vmem>>, vector<16x128xf32>
    %c0_27 = arith.constant 0 : index
    %c128 = arith.constant 128 : index
    %37 = vector.load %arg6[%c0_27, %c128] : memref<16x512xf32, #tpu.memory_space<vmem>>, vector<16x128xf32>
    %38 = arith.addf %36, %37 : vector<16x128xf32>
    %c1_28 = arith.constant 1 : index
    %c0_29 = arith.constant 0 : index
    %39 = vector.load %arg7[%c1_28, %c0_29] : memref<24x128xf32, #tpu.memory_space<vmem>>, vector<16x128xf32>
    tpu.vector_store %arg7[%c1_28, %c0_29], %38 {strides = array<i32>} : memref<24x128xf32, #tpu.memory_space<vmem>>, vector<16x128xf32>,
    %c2 = arith.constant 2 : index
    %c0_30 = arith.constant 0 : index
    %40 = vector.load %arg7[%c2, %c0_30] : memref<24x128xf32, #tpu.memory_space<vmem>>, vector<16x128xf32>
    %c0_31 = arith.constant 0 : index
    %c256 = arith.constant 256 : index
    %41 = vector.load %arg6[%c0_31, %c256] : memref<16x512xf32, #tpu.memory_space<vmem>>, vector<16x128xf32>
    %42 = arith.addf %40, %41 : vector<16x128xf32>
    %c2_32 = arith.constant 2 : index
    %c0_33 = arith.constant 0 : index
    %43 = vector.load %arg7[%c2_32, %c0_33] : memref<24x128xf32, #tpu.memory_space<vmem>>, vector<16x128xf32>
    tpu.vector_store %arg7[%c2_32, %c0_33], %42 {strides = array<i32>} : memref<24x128xf32, #tpu.memory_space<vmem>>, vector<16x128xf32>,
    %c3 = arith.constant 3 : index
    %c0_34 = arith.constant 0 : index
    %44 = vector.load %arg7[%c3, %c0_34] : memref<24x128xf32, #tpu.memory_space<vmem>>, vector<16x128xf32>
    %c0_35 = arith.constant 0 : index
    %c384_36 = arith.constant 384 : index
    %45 = vector.load %arg6[%c0_35, %c384_36] : memref<16x512xf32, #tpu.memory_space<vmem>>, vector<16x128xf32>
    %46 = arith.addf %44, %45 : vector<16x128xf32>
    %c3_37 = arith.constant 3 : index
    %c0_38 = arith.constant 0 : index
    %47 = vector.load %arg7[%c3_37, %c0_38] : memref<24x128xf32, #tpu.memory_space<vmem>>, vector<16x128xf32>
    tpu.vector_store %arg7[%c3_37, %c0_38], %46 {strides = array<i32>} : memref<24x128xf32, #tpu.memory_space<vmem>>, vector<16x128xf32>,
    %c0_39 = arith.constant 0 : index
    %c0_40 = arith.constant 0 : index
    %48 = vector.load %arg7[%c0_39, %c0_40] : memref<24x128xf32, #tpu.memory_space<vmem>>, vector<16x128xf32>
    %c0_41 = arith.constant 0 : index
    %c0_42 = arith.constant 0 : index
    %49 = vector.load %arg4[%c0_41, %c0_42] : memref<24x128xf32, #tpu.memory_space<vmem>>, vector<16x128xf32>
    %50 = arith.mulf %48, %49 : vector<16x128xf32>
    %c0_43 = arith.constant 0 : index
    %c0_44 = arith.constant 0 : index
    %51 = vector.load %arg6[%c0_43, %c0_44] : memref<16x512xf32, #tpu.memory_space<vmem>>, vector<16x128xf32>
    tpu.vector_store %arg6[%c0_43, %c0_44], %50 {strides = array<i32>} : memref<16x512xf32, #tpu.memory_space<vmem>>, vector<16x128xf32>,
    %c1_45 = arith.constant 1 : index
    %c0_46 = arith.constant 0 : index
    %52 = vector.load %arg7[%c1_45, %c0_46] : memref<24x128xf32, #tpu.memory_space<vmem>>, vector<16x128xf32>
    %c1_47 = arith.constant 1 : index
    %c0_48 = arith.constant 0 : index
    %53 = vector.load %arg4[%c1_47, %c0_48] : memref<24x128xf32, #tpu.memory_space<vmem>>, vector<16x128xf32>
    %54 = arith.mulf %52, %53 : vector<16x128xf32>
    %c0_49 = arith.constant 0 : index
    %c128_50 = arith.constant 128 : index
    %55 = vector.load %arg6[%c0_49, %c128_50] : memref<16x512xf32, #tpu.memory_space<vmem>>, vector<16x128xf32>
    tpu.vector_store %arg6[%c0_49, %c128_50], %54 {strides = array<i32>} : memref<16x512xf32, #tpu.memory_space<vmem>>, vector<16x128xf32>,
    %c2_51 = arith.constant 2 : index
    %c0_52 = arith.constant 0 : index
    %56 = vector.load %arg7[%c2_51, %c0_52] : memref<24x128xf32, #tpu.memory_space<vmem>>, vector<16x128xf32>
    %c2_53 = arith.constant 2 : index
    %c0_54 = arith.constant 0 : index
    %57 = vector.load %arg4[%c2_53, %c0_54] : memref<24x128xf32, #tpu.memory_space<vmem>>, vector<16x128xf32>
    %58 = arith.mulf %56, %57 : vector<16x128xf32>
    %c0_55 = arith.constant 0 : index
    %c256_56 = arith.constant 256 : index
    %59 = vector.load %arg6[%c0_55, %c256_56] : memref<16x512xf32, #tpu.memory_space<vmem>>, vector<16x128xf32>
    tpu.vector_store %arg6[%c0_55, %c256_56], %58 {strides = array<i32>} : memref<16x512xf32, #tpu.memory_space<vmem>>, vector<16x128xf32>,
    %c3_57 = arith.constant 3 : index
    %c0_58 = arith.constant 0 : index
    %60 = vector.load %arg7[%c3_57, %c0_58] : memref<24x128xf32, #tpu.memory_space<vmem>>, vector<16x128xf32>
    %c3_59 = arith.constant 3 : index
    %c0_60 = arith.constant 0 : index
    %61 = vector.load %arg4[%c3_59, %c0_60] : memref<24x128xf32, #tpu.memory_space<vmem>>, vector<16x128xf32>
    %62 = arith.mulf %60, %61 : vector<16x128xf32>
    %c0_61 = arith.constant 0 : index
    %c384_62 = arith.constant 384 : index
    %63 = vector.load %arg6[%c0_61, %c384_62] : memref<16x512xf32, #tpu.memory_space<vmem>>, vector<16x128xf32>
    tpu.vector_store %arg6[%c0_61, %c384_62], %62 {strides = array<i32>} : memref<16x512xf32, #tpu.memory_space<vmem>>, vector<16x128xf32>,
    %c0_63 = arith.constant 0 : index
    %c0_64 = arith.constant 0 : index
    %64 = vector.load %arg6[%c0_63, %c0_64] : memref<16x512xf32, #tpu.memory_space<vmem>>, vector<16x512xf32>
    %65 = arith.truncf %64 : vector<16x512xf32> to vector<16x512xbf16>
    %c0_65 = arith.constant 0 : index
    %c0_66 = arith.constant 0 : index
    %66 = vector.load %arg3[%c0_65, %c0_66] : memref<512x768xbf16, #tpu.memory_space<vmem>>, vector<512x768xbf16>
    %cst_67 = arith.constant dense<0.000000e+00> : vector<16x768xf32>
    %67 = tpu.matmul %65, %66, %cst_67 {dimension_numbers = #tpu.dot_dimension_numbers<[1], [0], [0], [1], [0, 0, 1, 1], [], []>} : vector<16x512xbf16>, vector<512x768xbf16>, vector<16x768xf32> -> vector<16x768xf32>
    %c0_68 = arith.constant 0 : index
    %c0_69 = arith.constant 0 : index
    %68 = vector.load %arg5[%c0_68, %c0_69] : memref<16x768xf32, #tpu.memory_space<vmem>>, vector<16x768xf32>
    tpu.vector_store %arg5[%c0_68, %c0_69], %67 {strides = array<i32>} : memref<16x768xf32, #tpu.memory_space<vmem>>, vector<16x768xf32>,
    return
  }
  func.func @transform_0(%arg0: i32) -> (i32, i32) {
    %c0_i32 = arith.constant 0 : i32
    %c0_i32_0 = arith.constant 0 : i32
    %c0_i32_1 = arith.constant 0 : i32
    return %c0_i32, %c0_i32_0 : i32, i32
  }
  func.func @transform_1(%arg0: i32) -> (i32, i32) {
    %c0_i32 = arith.constant 0 : i32
    %c0_i32_0 = arith.constant 0 : i32
    %c0_i32_1 = arith.constant 0 : i32
    return %c0_i32, %c0_i32_0 : i32, i32
  }
  func.func @transform_2(%arg0: i32) -> (i32, i32) {
    %c0_i32 = arith.constant 0 : i32
    %c0_i32_0 = arith.constant 0 : i32
    %c0_i32_1 = arith.constant 0 : i32
    return %c0_i32, %c0_i32_0 : i32, i32
  }
  func.func @transform_3(%arg0: i32) -> (i32, i32) {
    %c0_i32 = arith.constant 0 : i32
    %c0_i32_0 = arith.constant 0 : i32
    %c0_i32_1 = arith.constant 0 : i32
    return %c0_i32, %c0_i32_0 : i32, i32
  }
  func.func @transform_4(%arg0: i32) -> (i32, i32) {
    %c0_i32 = arith.constant 0 : i32
    %c0_i32_0 = arith.constant 0 : i32
    %c0_i32_1 = arith.constant 0 : i32
    return %c0_i32, %c0_i32_0 : i32, i32
  }
}

</mosaic_0001>

<llo_original>
// kernel: _griffin_lim.1
$region0: #{_griffin_lim.1}
  #allocation0 [shape = 'u32[]', space=smem, size = 0x4, offset = 0x4, fixed_abs, tag = 'smem constant byte address 0x4 - core index']
  #allocation1 [shape = 'u32[72,128]{1,0:T(1,128)}', space=vmem, size = 0x9000, scoped, tag = 'internal scratch']
  #allocation2 [shape = 'f32[16,512]{1,0:T(8,128)}', space=vmem, size = 0x8000, scoped, tag = 'scratch operand']
  #allocation3 [shape = 'f32[24,128]{1,0:T(8,128)}', space=vmem, size = 0x3000, scoped, tag = 'scratch operand']
  %s0 = inlined_call_operand.vmem [shape: f32[16,768], index: 0, kind: input, shape index: {}]
  %s1 = inlined_call_operand.hbm [shape: bf16[768,512], index: 1, kind: input, shape index: {}]
  %s2 = inlined_call_operand.hbm [shape: bf16[512,768], index: 2, kind: input, shape index: {}]
  %s3 = inlined_call_operand.vmem [shape: f32[24,128], index: 3, kind: input, shape index: {}]
  %s4 = inlined_call_operand.vmem [shape: f32[16,768], index: 4, kind: output, shape index: {}]
  %s5 = sld [smem:[#allocation0]]
  $region61: #{_griffin_lim.1} parent=0
    _
  %s7 = ssub.s32 1, %s5
  %s8 = scalar_select 0, %s7, %s5
  $region1: #{_griffin_lim.1} parent=0
    #allocation4 [shape = 'u8[786432]{0}', space=vmem, size = 0xc0000, scoped, tag = 'input window, operand 1, single buffered']
    #allocation5 [shape = 's32[2]{0}', space=sflag, size = 0x8, scoped, tag = 'scoped memory for _griffin_lim.1']
    #allocation6 [shape = 'u8[786432]{0}', space=vmem, size = 0xc0000, scoped, tag = 'input window, operand 2, single buffered']
    #allocation7 [shape = 's32[1]{0}', space=sflag, size = 0x4, scoped, tag = 'scoped memory for _griffin_lim.1']
    %9 = vsyncpa [#allocation5], 0
    %10 = vsyncpa [#allocation7], 0
    loop: start=0, step=1, limit=12
    $region2: #{_griffin_lim.1} parent=1 // loop_pre_header
      _
    $region3: #{_griffin_lim.1} parent=1 // loop_header
      %s12 = sphi 0, %s16
      %p13 = scmp.ge.s32.totalorder %s12, 12
      %s20 = sphi 0, %s20
      %s22 = sphi 0, %s20
      %s23 = sphi 0, %s22
      %s37 = sphi 0, %s23
      %s41 = sphi 0, %s41
      %s43 = sphi 0, %s41
      %s44 = sphi 0, %s43
      %s58 = sphi 0, %s44
      %s62 = sphi 0, %s62
      %s64 = sphi 0, %s62
      %s65 = sphi 0, %s64
      %s79 = sphi 0, %s65
      %s83 = sphi 0, %s83
      %s85 = sphi 0, %s83
      %s86 = sphi 0, %s85
      %s100 = sphi 0, %s86
      %s104 = sphi 0, %s104
      %s106 = sphi 0, %s104
      %s107 = sphi 0, %s106
      %s121 = sphi 0, %s107
    $region4: #{_griffin_lim.1} parent=1 // loop_header_branch
      %15 = sbr.rel (%p13) target = $region8
    $region5: #{_griffin_lim.1} parent=1 // loop_body
      %s17 = ssub.s32 %s12, 1
      %s18 = ssub.s32 %s12, 2
      %s19 = sadd.s32 %s12, 1
      %s21 = sadd.s32 %s20, 1
      %p24 = scmp.eq.s32.totalorder %s12, 9
      %p25 = scmp.ne.s32.totalorder %s20, %s22
      %p26 = scmp.eq.s32.totalorder %s12, 0
      %p27 = por %p25, %p26
      %p28 = scmp.ne.s32.totalorder %s20, %s22
      %p29 = scmp.eq.s32.totalorder %s17, 9
      %p30 = por %p28, %p29
      %p31 = scmp.ne.s32.totalorder %s22, %s23
      %p32 = scmp.eq.s32.totalorder %s17, 0
      %p33 = por %p31, %p32
      %p34 = scmp.ne.s32.totalorder %s22, %s23
      %p35 = scmp.eq.s32.totalorder %s18, 9
      %p36 = por %p34, %p35
      %p38 = scmp.ne.s32.totalorder %s23, %s37
      %p39 = scmp.eq.s32.totalorder %s18, 0
      %p40 = por %p38, %p39
      %s42 = sadd.s32 %s41, 1
      %p45 = scmp.eq.s32.totalorder %s12, 9
      %p46 = scmp.ne.s32.totalorder %s41, %s43
      %p47 = scmp.eq.s32.totalorder %s12, 0
      %p48 = por %p46, %p47
      %p49 = scmp.ne.s32.totalorder %s41, %s43
      %p50 = scmp.eq.s32.totalorder %s17, 9
      %p51 = por %p49, %p50
      %p52 = scmp.ne.s32.totalorder %s43, %s44
      %p53 = scmp.eq.s32.totalorder %s17, 0
      %p54 = por %p52, %p53
      %p55 = scmp.ne.s32.totalorder %s43, %s44
      %p56 = scmp.eq.s32.totalorder %s18, 9
      %p57 = por %p55, %p56
      %p59 = scmp.ne.s32.totalorder %s44, %s58
      %p60 = scmp.eq.s32.totalorder %s18, 0
      %p61 = por %p59, %p60
      %s63 = sadd.s32 %s62, 1
      %p66 = scmp.eq.s32.totalorder %s12, 9
      %p67 = scmp.ne.s32.totalorder %s62, %s64
      %p68 = scmp.eq.s32.totalorder %s12, 0
      %p69 = por %p67, %p68
      %p70 = scmp.ne.s32.totalorder %s62, %s64
      %p71 = scmp.eq.s32.totalorder %s17, 9
      %p72 = por %p70, %p71
      %p73 = scmp.ne.s32.totalorder %s64, %s65
      %p74 = scmp.eq.s32.totalorder %s17, 0
      %p75 = por %p73, %p74
      %p76 = scmp.ne.s32.totalorder %s64, %s65
      %p77 = scmp.eq.s32.totalorder %s18, 9
      %p78 = por %p76, %p77
      %p80 = scmp.ne.s32.totalorder %s65, %s79
      %p81 = scmp.eq.s32.totalorder %s18, 0
      %p82 = por %p80, %p81
      %s84 = sadd.s32 %s83, 1
      %p87 = scmp.eq.s32.totalorder %s12, 9
      %p88 = scmp.ne.s32.totalorder %s83, %s85
      %p89 = scmp.eq.s32.totalorder %s12, 0
      %p90 = por %p88, %p89
      %p91 = scmp.ne.s32.totalorder %s83, %s85
      %p92 = scmp.eq.s32.totalorder %s17, 9
      %p93 = por %p91, %p92
      %p94 = scmp.ne.s32.totalorder %s85, %s86
      %p95 = scmp.eq.s32.totalorder %s17, 0
      %p96 = por %p94, %p95
      %p97 = scmp.ne.s32.totalorder %s85, %s86
      %p98 = scmp.eq.s32.totalorder %s18, 9
      %p99 = por %p97, %p98
      %p101 = scmp.ne.s32.totalorder %s86, %s100
      %p102 = scmp.eq.s32.totalorder %s18, 0
      %p103 = por %p101, %p102
      %s105 = sadd.s32 %s104, 1
      %p108 = scmp.eq.s32.totalorder %s12, 9
      %p109 = scmp.ne.s32.totalorder %s104, %s106
      %p110 = scmp.eq.s32.totalorder %s12, 0
      %p111 = por %p109, %p110
      %p112 = scmp.ne.s32.totalorder %s104, %s106
      %p113 = scmp.eq.s32.totalorder %s17, 9
      %p114 = por %p112, %p113
      %p115 = scmp.ne.s32.totalorder %s106, %s107
      %p116 = scmp.eq.s32.totalorder %s17, 0
      %p117 = por %p115, %p116
      %p118 = scmp.ne.s32.totalorder %s106, %s107
      %p119 = scmp.eq.s32.totalorder %s18, 9
      %p120 = por %p118, %p119
      %p122 = scmp.ne.s32.totalorder %s107, %s121
      %p123 = scmp.eq.s32.totalorder %s18, 0
      %p124 = por %p122, %p123
      %p125 = scmp.le.s32.totalorder 1, %s12
      %p126 = scmp.lt.s32.totalorder %s12, 11
      %p127 = pnand %p125, %p126
      %p128 = pneg %p127
      // Predicated region
      $region9: #{_griffin_lim.1} parent=5 // pred_check
        _
      $region10: #{_griffin_lim.1} parent=5 // pred_check_branch
        %130 = sbr.rel (%p127) target = $region12
      $region11: #{_griffin_lim.1} parent=5 // pred_region
        %s131 = ssub.s32 %s12, 1
        // Predicated region
        $region13: #{_griffin_lim.1} parent=11 // pred_check
          %p132 = pneg %p33
        $region14: #{_griffin_lim.1} parent=11 // pred_check_branch
          %134 = sbr.rel (%p132) target = $region16
        $region15: #{_griffin_lim.1} parent=11 // pred_region
          _
        $region16: #{_griffin_lim.1} parent=11 // pred_fallthru
          _
        // Predicated region
        $region17: #{_griffin_lim.1} parent=11 // pred_check
          %p135 = pneg %p54
        $region18: #{_griffin_lim.1} parent=11 // pred_check_branch
          %137 = sbr.rel (%p135) target = $region20
        $region19: #{_griffin_lim.1} parent=11 // pred_region
          %139 = vsyncadd [#allocation5], 0
          %s140 = sshll.u32 %s1, 4
          %s141 = int_to_ptr.hbm [resolvable:$true] %s140
          %s142 = sshll.u32 [#allocation4], 4
          %s143 = int_to_ptr.vmem [resolvable:$true] %s142
          %148 = dma.hbm_to_vmem [thread:$0]  %s141, 24576, %s143, [#allocation5], 256, 256, 16
        $region20: #{_griffin_lim.1} parent=11 // pred_fallthru
          _
        // Predicated region
        $region21: #{_griffin_lim.1} parent=11 // pred_check
          %p149 = pneg %p75
        $region22: #{_griffin_lim.1} parent=11 // pred_check_branch
          %151 = sbr.rel (%p149) target = $region24
        $region23: #{_griffin_lim.1} parent=11 // pred_region
          %153 = vsyncadd [#allocation7], 0
          %s154 = sshll.u32 %s2, 4
          %s155 = int_to_ptr.hbm [resolvable:$true] %s154
          %s156 = sshll.u32 [#allocation6], 4
          %s157 = int_to_ptr.vmem [resolvable:$true] %s156
          %162 = dma.hbm_to_vmem [thread:$0]  %s155, 24576, %s157, [#allocation7], 384, 384, 24
        $region24: #{_griffin_lim.1} parent=11 // pred_fallthru
          _
        // Predicated region
        $region25: #{_griffin_lim.1} parent=11 // pred_check
          %p163 = pneg %p96
        $region26: #{_griffin_lim.1} parent=11 // pred_check_branch
          %165 = sbr.rel (%p163) target = $region28
        $region27: #{_griffin_lim.1} parent=11 // pred_region
          _
        $region28: #{_griffin_lim.1} parent=11 // pred_fallthru
          _
      $region12: #{_griffin_lim.1} parent=5 // pred_fallthru
        _
      %p166 = scmp.lt.s32.totalorder %s12, 10
      // Predicated region
      $region29: #{_griffin_lim.1} parent=5 // pred_check
        %p167 = pneg %p166
      $region30: #{_griffin_lim.1} parent=5 // pred_check_branch
        %169 = sbr.rel (%p167) target = $region32
      $region31: #{_griffin_lim.1} parent=5 // pred_region
        _
      $region32: #{_griffin_lim.1} parent=5 // pred_fallthru
        _
      %p170 = scmp.le.s32.totalorder 1, %s12
      %p171 = scmp.lt.s32.totalorder %s12, 11
      %p172 = pnand %p170, %p171
      %p173 = pneg %p172
      // Predicated region
      $region33: #{_griffin_lim.1} parent=5 // pred_check
        _
      $region34: #{_griffin_lim.1} parent=5 // pred_check_branch
        %175 = sbr.rel (%p172) target = $region36
      $region35: #{_griffin_lim.1} parent=5 // pred_region
        %s176 = ssub.s32 %s12, 1
        // Predicated region
        $region37: #{_griffin_lim.1} parent=35 // pred_check
          %p177 = pneg %p54
        $region38: #{_griffin_lim.1} parent=35 // pred_check_branch
          %179 = sbr.rel (%p177) target = $region40
        $region39: #{_griffin_lim.1} parent=35 // pred_region
          %181 = dma.done [#allocation5], 24576
        $region40: #{_griffin_lim.1} parent=35 // pred_fallthru
          _
        // Predicated region
        $region41: #{_griffin_lim.1} parent=35 // pred_check
          %p182 = pneg %p75
        $region42: #{_griffin_lim.1} parent=35 // pred_check_branch
          %184 = sbr.rel (%p182) target = $region44
        $region43: #{_griffin_lim.1} parent=35 // pred_region
          %186 = dma.done [#allocation7], 24576
        $region44: #{_griffin_lim.1} parent=35 // pred_fallthru
          _
        %p187 = pneg %p33
        %p188 = pneg %p30
        %p189 = pneg %p54
        %p190 = pneg %p51
        %p191 = pneg %p75
        %p192 = pneg %p72
        %p193 = pneg %p96
        %p194 = pneg %p93
        %p195 = pneg %p117
        %p196 = pneg %p114
        %p197 = scmp.eq.s32.totalorder %s17, 0
        // Predicated region
        $region45: #{_griffin_lim.1} parent=35 // pred_check
          %p198 = pneg %p197
        $region46: #{_griffin_lim.1} parent=35 // pred_check_branch
          %200 = sbr.rel (%p198) target = $region48
        $region47: #{_griffin_lim.1} parent=35 // pred_region
          %v201 = vld [vmem:[%s0] sm:$0xff]
          %v202 = vld [vmem:[%s0 + $0x8] sm:$0xff]
          %v203 = vld [vmem:[%s0 + $0x10] sm:$0xff]
          %v204 = vld [vmem:[%s0 + $0x18] sm:$0xff]
          %v205 = vld [vmem:[%s0 + $0x20] sm:$0xff]
          %v206 = vld [vmem:[%s0 + $0x28] sm:$0xff]
          %v207 = vld [vmem:[%s0 + $0x30] sm:$0xff]
          %v208 = vld [vmem:[%s0 + $0x38] sm:$0xff]
          %v209 = vld [vmem:[%s0 + $0x40] sm:$0xff]
          %v210 = vld [vmem:[%s0 + $0x48] sm:$0xff]
          %v211 = vld [vmem:[%s0 + $0x50] sm:$0xff]
          %v212 = vld [vmem:[%s0 + $0x58] sm:$0xff]
          %213 = vst [vmem:[%s4] sm:$0xff] %v201
          %214 = vst [vmem:[%s4 + $0x8] sm:$0xff] %v202
          %215 = vst [vmem:[%s4 + $0x10] sm:$0xff] %v203
          %216 = vst [vmem:[%s4 + $0x18] sm:$0xff] %v204
          %217 = vst [vmem:[%s4 + $0x20] sm:$0xff] %v205
          %218 = vst [vmem:[%s4 + $0x28] sm:$0xff] %v206
          %219 = vst [vmem:[%s4 + $0x30] sm:$0xff] %v207
          %220 = vst [vmem:[%s4 + $0x38] sm:$0xff] %v208
          %221 = vst [vmem:[%s4 + $0x40] sm:$0xff] %v209
          %222 = vst [vmem:[%s4 + $0x48] sm:$0xff] %v210
          %223 = vst [vmem:[%s4 + $0x50] sm:$0xff] %v211
          %224 = vst [vmem:[%s4 + $0x58] sm:$0xff] %v212
        $region48: #{_griffin_lim.1} parent=35 // pred_fallthru
          _
        %v225 = vld [vmem:[%s0] sm:$0xff]
        %v226 = vld [vmem:[%s0 + $0x8] sm:$0xff]
        %v227 = vld [vmem:[%s0 + $0x10] sm:$0xff]
        %v228 = vld [vmem:[%s0 + $0x30] sm:$0xff]
        %v229 = vld [vmem:[%s0 + $0x38] sm:$0xff]
        %v230 = vld [vmem:[%s0 + $0x40] sm:$0xff]
        %v231 = vld [vmem:[%s0 + $0x18] sm:$0xff]
        %v232 = vld [vmem:[%s0 + $0x20] sm:$0xff]
        %v233 = vld [vmem:[%s0 + $0x28] sm:$0xff]
        %v234 = vld [vmem:[%s0 + $0x48] sm:$0xff]
        %v235 = vld [vmem:[%s0 + $0x50] sm:$0xff]
        %v236 = vld [vmem:[%s0 + $0x58] sm:$0xff]
        %v237 = vmul.f32 %v225, %v225
        %v238 = vmul.f32 %v226, %v226
        %v239 = vmul.f32 %v227, %v227
        %v240 = vmul.f32 %v228, %v228
        %v241 = vmul.f32 %v229, %v229
        %v242 = vmul.f32 %v230, %v230
        %v243 = vmul.f32 %v231, %v231
        %v244 = vmul.f32 %v232, %v232
        %v245 = vmul.f32 %v233, %v233
        %v246 = vmul.f32 %v234, %v234
        %v247 = vmul.f32 %v235, %v235
        %v248 = vmul.f32 %v236, %v236
        %v249 = vadd.f32 %v237, %v243
        %v250 = vadd.f32 %v238, %v244
        %v251 = vadd.f32 %v239, %v245
        %v252 = vadd.f32 %v240, %v246
        %v253 = vadd.f32 %v241, %v247
        %v254 = vadd.f32 %v242, %v248
        %v255 = vrsqrt.pop %v249
        %v256 = vmul.f32 %v255, %v249
        %v257 = vmul.f32 %v256, %v255
        %v258 = vmul.f32 0.5, %v257
        %v259 = vsub.f32 1.5, %v258
        %v260 = vmul.f32 %v255, %v259
        %v261 = vmul.f32 %v249, %v260
        %vm262 = vcmp.eq.f32.partialorder %v249, inf
        %v263 = vsel %vm262, %v249, %v261
        %vm264 = vcmp.eq.f32.partialorder %v249, 0.0
        %v265 = vand.u32 %v249, 2147483648
        %v266 = vsel %vm264, %v265, %v263
        %v267 = vrsqrt.pop %v250
        %v268 = vmul.f32 %v267, %v250
        %v269 = vmul.f32 %v268, %v267
        %v270 = vmul.f32 0.5, %v269
        %v271 = vsub.f32 1.5, %v270
        %v272 = vmul.f32 %v267, %v271
        %v273 = vmul.f32 %v250, %v272
        %vm274 = vcmp.eq.f32.partialorder %v250, inf
        %v275 = vsel %vm274, %v250, %v273
        %vm276 = vcmp.eq.f32.partialorder %v250, 0.0
        %v277 = vand.u32 %v250, 2147483648
        %v278 = vsel %vm276, %v277, %v275
        %v279 = vrsqrt.pop %v251
        %v280 = vmul.f32 %v279, %v251
        %v281 = vmul.f32 %v280, %v279
        %v282 = vmul.f32 0.5, %v281
        %v283 = vsub.f32 1.5, %v282
        %v284 = vmul.f32 %v279, %v283
        %v285 = vmul.f32 %v251, %v284
        %vm286 = vcmp.eq.f32.partialorder %v251, inf
        %v287 = vsel %vm286, %v251, %v285
        %vm288 = vcmp.eq.f32.partialorder %v251, 0.0
        %v289 = vand.u32 %v251, 2147483648
        %v290 = vsel %vm288, %v289, %v287
        %v291 = vrsqrt.pop %v252
        %v292 = vmul.f32 %v291, %v252
        %v293 = vmul.f32 %v292, %v291
        %v294 = vmul.f32 0.5, %v293
        %v295 = vsub.f32 1.5, %v294
        %v296 = vmul.f32 %v291, %v295
        %v297 = vmul.f32 %v252, %v296
        %vm298 = vcmp.eq.f32.partialorder %v252, inf
        %v299 = vsel %vm298, %v252, %v297
        %vm300 = vcmp.eq.f32.partialorder %v252, 0.0
        %v301 = vand.u32 %v252, 2147483648
        %v302 = vsel %vm300, %v301, %v299
        %v303 = vrsqrt.pop %v253
        %v304 = vmul.f32 %v303, %v253
        %v305 = vmul.f32 %v304, %v303
        %v306 = vmul.f32 0.5, %v305
        %v307 = vsub.f32 1.5, %v306
        %v308 = vmul.f32 %v303, %v307
        %v309 = vmul.f32 %v253, %v308
        %vm310 = vcmp.eq.f32.partialorder %v253, inf
        %v311 = vsel %vm310, %v253, %v309
        %vm312 = vcmp.eq.f32.partialorder %v253, 0.0
        %v313 = vand.u32 %v253, 2147483648
        %v314 = vsel %vm312, %v313, %v311
        %v315 = vrsqrt.pop %v254
        %v316 = vmul.f32 %v315, %v254
        %v317 = vmul.f32 %v316, %v315
        %v318 = vmul.f32 0.5, %v317
        %v319 = vsub.f32 1.5, %v318
        %v320 = vmul.f32 %v315, %v319
        %v321 = vmul.f32 %v254, %v320
        %vm322 = vcmp.eq.f32.partialorder %v254, inf
        %v323 = vsel %vm322, %v254, %v321
        %vm324 = vcmp.eq.f32.partialorder %v254, 0.0
        %v325 = vand.u32 %v254, 2147483648
        %v326 = vsel %vm324, %v325, %v323
        %v327 = vld [vmem:[%s4] sm:$0xff]
        %v328 = vld [vmem:[%s4 + $0x8] sm:$0xff]
        %v329 = vld [vmem:[%s4 + $0x10] sm:$0xff]
        %v330 = vld [vmem:[%s4 + $0x30] sm:$0xff]
        %v331 = vld [vmem:[%s4 + $0x38] sm:$0xff]
        %v332 = vld [vmem:[%s4 + $0x40] sm:$0xff]
        %v333 = vld [vmem:[%s4 + $0x18] sm:$0xff]
        %v334 = vld [vmem:[%s4 + $0x20] sm:$0xff]
        %v335 = vld [vmem:[%s4 + $0x28] sm:$0xff]
        %v336 = vld [vmem:[%s4 + $0x48] sm:$0xff]
        %v337 = vld [vmem:[%s4 + $0x50] sm:$0xff]
        %v338 = vld [vmem:[%s4 + $0x58] sm:$0xff]
        %v339 = vmul.f32 %v327, %v327
        %v340 = vmul.f32 %v328, %v328
        %v341 = vmul.f32 %v329, %v329
        %v342 = vmul.f32 %v330, %v330
        %v343 = vmul.f32 %v331, %v331
        %v344 = vmul.f32 %v332, %v332
        %v345 = vmul.f32 %v333, %v333
        %v346 = vmul.f32 %v334, %v334
        %v347 = vmul.f32 %v335, %v335
        %v348 = vmul.f32 %v336, %v336
        %v349 = vmul.f32 %v337, %v337
        %v350 = vmul.f32 %v338, %v338
        %v351 = vadd.f32 %v339, %v345
        %v352 = vadd.f32 %v340, %v346
        %v353 = vadd.f32 %v341, %v347
        %v354 = vadd.f32 %v342, %v348
        %v355 = vadd.f32 %v343, %v349
        %v356 = vadd.f32 %v344, %v350
        %vm357 = vcmp.gt.f32.partialorder %v351, 1e-12
        %vm358 = vcmp.gt.f32.partialorder %v352, 1e-12
        %vm359 = vcmp.gt.f32.partialorder %v353, 1e-12
        %vm360 = vcmp.gt.f32.partialorder %v354, 1e-12
        %vm361 = vcmp.gt.f32.partialorder %v355, 1e-12
        %vm362 = vcmp.gt.f32.partialorder %v356, 1e-12
        %v363 = vmax.f32 %v351, 1e-12
        %v364 = vmax.f32 %v352, 1e-12
        %v365 = vmax.f32 %v353, 1e-12
        %v366 = vmax.f32 %v354, 1e-12
        %v367 = vmax.f32 %v355, 1e-12
        %v368 = vmax.f32 %v356, 1e-12
        %v369 = vrsqrt.pop %v363
        %v370 = vmul.f32 %v369, %v363
        %v371 = vmul.f32 %v370, %v369
        %v372 = vmul.f32 0.5, %v371
        %v373 = vsub.f32 1.5, %v372
        %v374 = vmul.f32 %v369, %v373
        %vm375 = vweird.f32 %v363
        %vm376 = vweird.f32 %v369
        %vm377 = vmor %vm375, %vm376
        %v378 = vsel %vm377, %v369, %v374
        %v379 = vrsqrt.pop %v364
        %v380 = vmul.f32 %v379, %v364
        %v381 = vmul.f32 %v380, %v379
        %v382 = vmul.f32 0.5, %v381
        %v383 = vsub.f32 1.5, %v382
        %v384 = vmul.f32 %v379, %v383
        %vm385 = vweird.f32 %v364
        %vm386 = vweird.f32 %v379
        %vm387 = vmor %vm385, %vm386
        %v388 = vsel %vm387, %v379, %v384
        %v389 = vrsqrt.pop %v365
        %v390 = vmul.f32 %v389, %v365
        %v391 = vmul.f32 %v390, %v389
        %v392 = vmul.f32 0.5, %v391
        %v393 = vsub.f32 1.5, %v392
        %v394 = vmul.f32 %v389, %v393
        %vm395 = vweird.f32 %v365
        %vm396 = vweird.f32 %v389
        %vm397 = vmor %vm395, %vm396
        %v398 = vsel %vm397, %v389, %v394
        %v399 = vrsqrt.pop %v366
        %v400 = vmul.f32 %v399, %v366
        %v401 = vmul.f32 %v400, %v399
        %v402 = vmul.f32 0.5, %v401
        %v403 = vsub.f32 1.5, %v402
        %v404 = vmul.f32 %v399, %v403
        %vm405 = vweird.f32 %v366
        %vm406 = vweird.f32 %v399
        %vm407 = vmor %vm405, %vm406
        %v408 = vsel %vm407, %v399, %v404
        %v409 = vrsqrt.pop %v367
        %v410 = vmul.f32 %v409, %v367
        %v411 = vmul.f32 %v410, %v409
        %v412 = vmul.f32 0.5, %v411
        %v413 = vsub.f32 1.5, %v412
        %v414 = vmul.f32 %v409, %v413
        %vm415 = vweird.f32 %v367
        %vm416 = vweird.f32 %v409
        %vm417 = vmor %vm415, %vm416
        %v418 = vsel %vm417, %v409, %v414
        %v419 = vrsqrt.pop %v368
        %v420 = vmul.f32 %v419, %v368
        %v421 = vmul.f32 %v420, %v419
        %v422 = vmul.f32 0.5, %v421
        %v423 = vsub.f32 1.5, %v422
        %v424 = vmul.f32 %v419, %v423
        %vm425 = vweird.f32 %v368
        %vm426 = vweird.f32 %v419
        %vm427 = vmor %vm425, %vm426
        %v428 = vsel %vm427, %v419, %v424
        %v429 = vmul.f32 %v266, %v378
        %v430 = vmul.f32 %v278, %v388
        %v431 = vmul.f32 %v290, %v398
        %v432 = vmul.f32 %v302, %v408
        %v433 = vmul.f32 %v314, %v418
        %v434 = vmul.f32 %v326, %v428
        %v435 = vsel %vm357, %v429, 0.0
        %v436 = vsel %vm358, %v430, 0.0
        %v437 = vsel %vm359, %v431, 0.0
        %v438 = vsel %vm360, %v432, 0.0
        %v439 = vsel %vm361, %v433, 0.0
        %v440 = vsel %vm362, %v434, 0.0
        %v441 = vmul.f32 %v327, %v435
        %v442 = vmul.f32 %v328, %v436
        %v443 = vmul.f32 %v329, %v437
        %v444 = vmul.f32 %v330, %v438
        %v445 = vmul.f32 %v331, %v439
        %v446 = vmul.f32 %v332, %v440
        %v447 = vsel %vm357, %v441, %v266
        %v448 = vsel %vm358, %v442, %v278
        %v449 = vsel %vm359, %v443, %v290
        %v450 = vsel %vm360, %v444, %v302
        %v451 = vsel %vm361, %v445, %v314
        %v452 = vsel %vm362, %v446, %v326
        %453 = vst [vmem:[%s4] sm:$0xff] %v447
        %454 = vst [vmem:[%s4 + $0x8] sm:$0xff] %v448
        %455 = vst [vmem:[%s4 + $0x10] sm:$0xff] %v449
        %456 = vst [vmem:[%s4 + $0x30] sm:$0xff] %v450
        %457 = vst [vmem:[%s4 + $0x38] sm:$0xff] %v451
        %458 = vst [vmem:[%s4 + $0x40] sm:$0xff] %v452
        %v459 = vmul.f32 %v333, %v435
        %v460 = vmul.f32 %v334, %v436
        %v461 = vmul.f32 %v335, %v437
        %v462 = vmul.f32 %v336, %v438
        %v463 = vmul.f32 %v337, %v439
        %v464 = vmul.f32 %v338, %v440
        %465 = vst [vmem:[%s4 + $0x18] sm:$0xff] %v459
        %466 = vst [vmem:[%s4 + $0x20] sm:$0xff] %v460
        %467 = vst [vmem:[%s4 + $0x28] sm:$0xff] %v461
        %468 = vst [vmem:[%s4 + $0x48] sm:$0xff] %v462
        %469 = vst [vmem:[%s4 + $0x50] sm:$0xff] %v463
        %470 = vst [vmem:[%s4 + $0x58] sm:$0xff] %v464
        %v471 = vld [vmem:[%s4] sm:$0xff]
        %v472 = vld [vmem:[%s4 + $0x8] sm:$0xff]
        %v473 = vld [vmem:[%s4 + $0x10] sm:$0xff]
        %v474 = vld [vmem:[%s4 + $0x18] sm:$0xff]
        %v475 = vld [vmem:[%s4 + $0x20] sm:$0xff]
        %v476 = vld [vmem:[%s4 + $0x28] sm:$0xff]
        %v477 = vld [vmem:[%s4 + $0x30] sm:$0xff]
        %v478 = vld [vmem:[%s4 + $0x38] sm:$0xff]
        %v479 = vld [vmem:[%s4 + $0x40] sm:$0xff]
        %v480 = vld [vmem:[%s4 + $0x48] sm:$0xff]
        %v481 = vld [vmem:[%s4 + $0x50] sm:$0xff]
        %v482 = vld [vmem:[%s4 + $0x58] sm:$0xff]
        %v483 = vpack.c.bf16 %v477, %v471
        %v484 = vpack.c.bf16 %v478, %v472
        %v485 = vpack.c.bf16 %v479, %v473
        %v486 = vpack.c.bf16 %v480, %v474
        %v487 = vpack.c.bf16 %v481, %v475
        %v488 = vpack.c.bf16 %v482, %v476
        %v489 = vld [vmem:[#allocation4] sm:$0xff]
        %v490 = vld [vmem:[#allocation4 + $0x8] sm:$0xff]
        %v491 = vld [vmem:[#allocation4 + $0x10] sm:$0xff]
        %v492 = vld [vmem:[#allocation4 + $0x18] sm:$0xff]
        %v493 = vld [vmem:[#allocation4 + $0x20] sm:$0xff]
        %v494 = vld [vmem:[#allocation4 + $0x28] sm:$0xff]
        %v495 = vld [vmem:[#allocation4 + $0x30] sm:$0xff]
        %v496 = vld [vmem:[#allocation4 + $0x38] sm:$0xff]
        %v497 = vld [vmem:[#allocation4 + $0x40] sm:$0xff]
        %v498 = vld [vmem:[#allocation4 + $0x48] sm:$0xff]
        %v499 = vld [vmem:[#allocation4 + $0x50] sm:$0xff]
        %v500 = vld [vmem:[#allocation4 + $0x58] sm:$0xff]
        %v501 = vld [vmem:[#allocation4 + $0x60] sm:$0xff]
        %v502 = vld [vmem:[#allocation4 + $0x68] sm:$0xff]
        %v503 = vld [vmem:[#allocation4 + $0x70] sm:$0xff]
        %v504 = vld [vmem:[#allocation4 + $0x78] sm:$0xff]
        %v505 = vld [vmem:[#allocation4 + $0x80] sm:$0xff]
        %v506 = vld [vmem:[#allocation4 + $0x88] sm:$0xff]
        %v507 = vld [vmem:[#allocation4 + $0x90] sm:$0xff]
        %v508 = vld [vmem:[#allocation4 + $0x98] sm:$0xff]
        %v509 = vld [vmem:[#allocation4 + $0xa0] sm:$0xff]
        %v510 = vld [vmem:[#allocation4 + $0xa8] sm:$0xff]
        %v511 = vld [vmem:[#allocation4 + $0xb0] sm:$0xff]
        %v512 = vld [vmem:[#allocation4 + $0xb8] sm:$0xff]
        %v513 = vld [vmem:[#allocation4 + $0xc0] sm:$0xff]
        %v514 = vld [vmem:[#allocation4 + $0xc8] sm:$0xff]
        %v515 = vld [vmem:[#allocation4 + $0xd0] sm:$0xff]
        %v516 = vld [vmem:[#allocation4 + $0xd8] sm:$0xff]
        %v517 = vld [vmem:[#allocation4 + $0xe0] sm:$0xff]
        %v518 = vld [vmem:[#allocation4 + $0xe8] sm:$0xff]
        %v519 = vld [vmem:[#allocation4 + $0xf0] sm:$0xff]
        %v520 = vld [vmem:[#allocation4 + $0xf8] sm:$0xff]
        %v521 = vld [vmem:[#allocation4 + $0x100] sm:$0xff]
        %v522 = vld [vmem:[#allocation4 + $0x108] sm:$0xff]
        %v523 = vld [vmem:[#allocation4 + $0x110] sm:$0xff]
        %v524 = vld [vmem:[#allocation4 + $0x118] sm:$0xff]
        %v525 = vld [vmem:[#allocation4 + $0x120] sm:$0xff]
        %v526 = vld [vmem:[#allocation4 + $0x128] sm:$0xff]
        %v527 = vld [vmem:[#allocation4 + $0x130] sm:$0xff]
        %v528 = vld [vmem:[#allocation4 + $0x138] sm:$0xff]
        %v529 = vld [vmem:[#allocation4 + $0x140] sm:$0xff]
        %v530 = vld [vmem:[#allocation4 + $0x148] sm:$0xff]
        %v531 = vld [vmem:[#allocation4 + $0x150] sm:$0xff]
        %v532 = vld [vmem:[#allocation4 + $0x158] sm:$0xff]
        %v533 = vld [vmem:[#allocation4 + $0x160] sm:$0xff]
        %v534 = vld [vmem:[#allocation4 + $0x168] sm:$0xff]
        %v535 = vld [vmem:[#allocation4 + $0x170] sm:$0xff]
        %v536 = vld [vmem:[#allocation4 + $0x178] sm:$0xff]
        %v537 = vld [vmem:[#allocation4 + $0x180] sm:$0xff]
        %v538 = vld [vmem:[#allocation4 + $0x188] sm:$0xff]
        %v539 = vld [vmem:[#allocation4 + $0x190] sm:$0xff]
        %v540 = vld [vmem:[#allocation4 + $0x198] sm:$0xff]
        %v541 = vld [vmem:[#allocation4 + $0x1a0] sm:$0xff]
        %v542 = vld [vmem:[#allocation4 + $0x1a8] sm:$0xff]
        %v543 = vld [vmem:[#allocation4 + $0x1b0] sm:$0xff]
        %v544 = vld [vmem:[#allocation4 + $0x1b8] sm:$0xff]
        %v545 = vld [vmem:[#allocation4 + $0x1c0] sm:$0xff]
        %v546 = vld [vmem:[#allocation4 + $0x1c8] sm:$0xff]
        %v547 = vld [vmem:[#allocation4 + $0x1d0] sm:$0xff]
        %v548 = vld [vmem:[#allocation4 + $0x1d8] sm:$0xff]
        %v549 = vld [vmem:[#allocation4 + $0x1e0] sm:$0xff]
        %v550 = vld [vmem:[#allocation4 + $0x1e8] sm:$0xff]
        %v551 = vld [vmem:[#allocation4 + $0x1f0] sm:$0xff]
        %v552 = vld [vmem:[#allocation4 + $0x1f8] sm:$0xff]
        %v553 = vld [vmem:[#allocation4 + $0x200] sm:$0xff]
        %v554 = vld [vmem:[#allocation4 + $0x208] sm:$0xff]
        %v555 = vld [vmem:[#allocation4 + $0x210] sm:$0xff]
        %v556 = vld [vmem:[#allocation4 + $0x218] sm:$0xff]
        %v557 = vld [vmem:[#allocation4 + $0x220] sm:$0xff]
        %v558 = vld [vmem:[#allocation4 + $0x228] sm:$0xff]
        %v559 = vld [vmem:[#allocation4 + $0x230] sm:$0xff]
        %v560 = vld [vmem:[#allocation4 + $0x238] sm:$0xff]
        %v561 = vld [vmem:[#allocation4 + $0x240] sm:$0xff]
        %v562 = vld [vmem:[#allocation4 + $0x248] sm:$0xff]
        %v563 = vld [vmem:[#allocation4 + $0x250] sm:$0xff]
        %v564 = vld [vmem:[#allocation4 + $0x258] sm:$0xff]
        %v565 = vld [vmem:[#allocation4 + $0x260] sm:$0xff]
        %v566 = vld [vmem:[#allocation4 + $0x268] sm:$0xff]
        %v567 = vld [vmem:[#allocation4 + $0x270] sm:$0xff]
        %v568 = vld [vmem:[#allocation4 + $0x278] sm:$0xff]
        %v569 = vld [vmem:[#allocation4 + $0x280] sm:$0xff]
        %v570 = vld [vmem:[#allocation4 + $0x288] sm:$0xff]
        %v571 = vld [vmem:[#allocation4 + $0x290] sm:$0xff]
        %v572 = vld [vmem:[#allocation4 + $0x298] sm:$0xff]
        %v573 = vld [vmem:[#allocation4 + $0x2a0] sm:$0xff]
        %v574 = vld [vmem:[#allocation4 + $0x2a8] sm:$0xff]
        %v575 = vld [vmem:[#allocation4 + $0x2b0] sm:$0xff]
        %v576 = vld [vmem:[#allocation4 + $0x2b8] sm:$0xff]
        %v577 = vld [vmem:[#allocation4 + $0x2c0] sm:$0xff]
        %v578 = vld [vmem:[#allocation4 + $0x2c8] sm:$0xff]
        %v579 = vld [vmem:[#allocation4 + $0x2d0] sm:$0xff]
        %v580 = vld [vmem:[#allocation4 + $0x2d8] sm:$0xff]
        %v581 = vld [vmem:[#allocation4 + $0x2e0] sm:$0xff]
        %v582 = vld [vmem:[#allocation4 + $0x2e8] sm:$0xff]
        %v583 = vld [vmem:[#allocation4 + $0x2f0] sm:$0xff]
        %v584 = vld [vmem:[#allocation4 + $0x2f8] sm:$0xff]
        %v585 = vld [vmem:[#allocation4 + $0x300] sm:$0xff]
        %v586 = vld [vmem:[#allocation4 + $0x308] sm:$0xff]
        %v587 = vld [vmem:[#allocation4 + $0x310] sm:$0xff]
        %v588 = vld [vmem:[#allocation4 + $0x318] sm:$0xff]
        %v589 = vld [vmem:[#allocation4 + $0x320] sm:$0xff]
        %v590 = vld [vmem:[#allocation4 + $0x328] sm:$0xff]
        %v591 = vld [vmem:[#allocation4 + $0x330] sm:$0xff]
        %v592 = vld [vmem:[#allocation4 + $0x338] sm:$0xff]
        %v593 = vld [vmem:[#allocation4 + $0x340] sm:$0xff]
        %v594 = vld [vmem:[#allocation4 + $0x348] sm:$0xff]
        %v595 = vld [vmem:[#allocation4 + $0x350] sm:$0xff]
        %v596 = vld [vmem:[#allocation4 + $0x358] sm:$0xff]
        %v597 = vld [vmem:[#allocation4 + $0x360] sm:$0xff]
        %v598 = vld [vmem:[#allocation4 + $0x368] sm:$0xff]
        %v599 = vld [vmem:[#allocation4 + $0x370] sm:$0xff]
        %v600 = vld [vmem:[#allocation4 + $0x378] sm:$0xff]
        %v601 = vld [vmem:[#allocation4 + $0x380] sm:$0xff]
        %v602 = vld [vmem:[#allocation4 + $0x388] sm:$0xff]
        %v603 = vld [vmem:[#allocation4 + $0x390] sm:$0xff]
        %v604 = vld [vmem:[#allocation4 + $0x398] sm:$0xff]
        %v605 = vld [vmem:[#allocation4 + $0x3a0] sm:$0xff]
        %v606 = vld [vmem:[#allocation4 + $0x3a8] sm:$0xff]
        %v607 = vld [vmem:[#allocation4 + $0x3b0] sm:$0xff]
        %v608 = vld [vmem:[#allocation4 + $0x3b8] sm:$0xff]
        %v609 = vld [vmem:[#allocation4 + $0x3c0] sm:$0xff]
        %v610 = vld [vmem:[#allocation4 + $0x3c8] sm:$0xff]
        %v611 = vld [vmem:[#allocation4 + $0x3d0] sm:$0xff]
        %v612 = vld [vmem:[#allocation4 + $0x3d8] sm:$0xff]
        %v613 = vld [vmem:[#allocation4 + $0x3e0] sm:$0xff]
        %v614 = vld [vmem:[#allocation4 + $0x3e8] sm:$0xff]
        %v615 = vld [vmem:[#allocation4 + $0x3f0] sm:$0xff]
        %v616 = vld [vmem:[#allocation4 + $0x3f8] sm:$0xff]
        %v617 = vld [vmem:[#allocation4 + $0x400] sm:$0xff]
        %v618 = vld [vmem:[#allocation4 + $0x408] sm:$0xff]
        %v619 = vld [vmem:[#allocation4 + $0x410] sm:$0xff]
        %v620 = vld [vmem:[#allocation4 + $0x418] sm:$0xff]
        %v621 = vld [vmem:[#allocation4 + $0x420] sm:$0xff]
        %v622 = vld [vmem:[#allocation4 + $0x428] sm:$0xff]
        %v623 = vld [vmem:[#allocation4 + $0x430] sm:$0xff]
        %v624 = vld [vmem:[#allocation4 + $0x438] sm:$0xff]
        %v625 = vld [vmem:[#allocation4 + $0x440] sm:$0xff]
        %v626 = vld [vmem:[#allocation4 + $0x448] sm:$0xff]
        %v627 = vld [vmem:[#allocation4 + $0x450] sm:$0xff]
        %v628 = vld [vmem:[#allocation4 + $0x458] sm:$0xff]
        %v629 = vld [vmem:[#allocation4 + $0x460] sm:$0xff]
        %v630 = vld [vmem:[#allocation4 + $0x468] sm:$0xff]
        %v631 = vld [vmem:[#allocation4 + $0x470] sm:$0xff]
        %v632 = vld [vmem:[#allocation4 + $0x478] sm:$0xff]
        %v633 = vld [vmem:[#allocation4 + $0x480] sm:$0xff]
        %v634 = vld [vmem:[#allocation4 + $0x488] sm:$0xff]
        %v635 = vld [vmem:[#allocation4 + $0x490] sm:$0xff]
        %v636 = vld [vmem:[#allocation4 + $0x498] sm:$0xff]
        %v637 = vld [vmem:[#allocation4 + $0x4a0] sm:$0xff]
        %v638 = vld [vmem:[#allocation4 + $0x4a8] sm:$0xff]
        %v639 = vld [vmem:[#allocation4 + $0x4b0] sm:$0xff]
        %v640 = vld [vmem:[#allocation4 + $0x4b8] sm:$0xff]
        %v641 = vld [vmem:[#allocation4 + $0x4c0] sm:$0xff]
        %v642 = vld [vmem:[#allocation4 + $0x4c8] sm:$0xff]
        %v643 = vld [vmem:[#allocation4 + $0x4d0] sm:$0xff]
        %v644 = vld [vmem:[#allocation4 + $0x4d8] sm:$0xff]
        %v645 = vld [vmem:[#allocation4 + $0x4e0] sm:$0xff]
        %v646 = vld [vmem:[#allocation4 + $0x4e8] sm:$0xff]
        %v647 = vld [vmem:[#allocation4 + $0x4f0] sm:$0xff]
        %v648 = vld [vmem:[#allocation4 + $0x4f8] sm:$0xff]
        %v649 = vld [vmem:[#allocation4 + $0x500] sm:$0xff]
        %v650 = vld [vmem:[#allocation4 + $0x508] sm:$0xff]
        %v651 = vld [vmem:[#allocation4 + $0x510] sm:$0xff]
        %v652 = vld [vmem:[#allocation4 + $0x518] sm:$0xff]
        %v653 = vld [vmem:[#allocation4 + $0x520] sm:$0xff]
        %v654 = vld [vmem:[#allocation4 + $0x528] sm:$0xff]
        %v655 = vld [vmem:[#allocation4 + $0x530] sm:$0xff]
        %v656 = vld [vmem:[#allocation4 + $0x538] sm:$0xff]
        %v657 = vld [vmem:[#allocation4 + $0x540] sm:$0xff]
        %v658 = vld [vmem:[#allocation4 + $0x548] sm:$0xff]
        %v659 = vld [vmem:[#allocation4 + $0x550] sm:$0xff]
        %v660 = vld [vmem:[#allocation4 + $0x558] sm:$0xff]
        %v661 = vld [vmem:[#allocation4 + $0x560] sm:$0xff]
        %v662 = vld [vmem:[#allocation4 + $0x568] sm:$0xff]
        %v663 = vld [vmem:[#allocation4 + $0x570] sm:$0xff]
        %v664 = vld [vmem:[#allocation4 + $0x578] sm:$0xff]
        %v665 = vld [vmem:[#allocation4 + $0x580] sm:$0xff]
        %v666 = vld [vmem:[#allocation4 + $0x588] sm:$0xff]
        %v667 = vld [vmem:[#allocation4 + $0x590] sm:$0xff]
        %v668 = vld [vmem:[#allocation4 + $0x598] sm:$0xff]
        %v669 = vld [vmem:[#allocation4 + $0x5a0] sm:$0xff]
        %v670 = vld [vmem:[#allocation4 + $0x5a8] sm:$0xff]
        %v671 = vld [vmem:[#allocation4 + $0x5b0] sm:$0xff]
        %v672 = vld [vmem:[#allocation4 + $0x5b8] sm:$0xff]
        %v673 = vld [vmem:[#allocation4 + $0x5c0] sm:$0xff]
        %v674 = vld [vmem:[#allocation4 + $0x5c8] sm:$0xff]
        %v675 = vld [vmem:[#allocation4 + $0x5d0] sm:$0xff]
        %v676 = vld [vmem:[#allocation4 + $0x5d8] sm:$0xff]
        %v677 = vld [vmem:[#allocation4 + $0x5e0] sm:$0xff]
        %v678 = vld [vmem:[#allocation4 + $0x5e8] sm:$0xff]
        %v679 = vld [vmem:[#allocation4 + $0x5f0] sm:$0xff]
        %v680 = vld [vmem:[#allocation4 + $0x5f8] sm:$0xff]
        %v873 = vunpack.c.l.b16 %v489
        %v874 = vunpack.c.h.b16 %v489
        %v875 = vunpack.c.l.b16 %v490
        %v876 = vunpack.c.h.b16 %v490
        %v877 = vunpack.c.l.b16 %v491
        %v878 = vunpack.c.h.b16 %v491
        %v879 = vunpack.c.l.b16 %v492
        %v880 = vunpack.c.h.b16 %v492
        %v881 = vunpack.c.l.b16 %v493
        %v882 = vunpack.c.h.b16 %v493
        %v883 = vunpack.c.l.b16 %v494
        %v884 = vunpack.c.h.b16 %v494
        %v885 = vunpack.c.l.b16 %v495
        %v886 = vunpack.c.h.b16 %v495
        %v887 = vunpack.c.l.b16 %v496
        %v888 = vunpack.c.h.b16 %v496
        %v889 = vunpack.c.l.b16 %v497
        %v890 = vunpack.c.h.b16 %v497
        %v891 = vunpack.c.l.b16 %v498
        %v892 = vunpack.c.h.b16 %v498
        %v893 = vunpack.c.l.b16 %v499
        %v894 = vunpack.c.h.b16 %v499
        %v895 = vunpack.c.l.b16 %v500
        %v896 = vunpack.c.h.b16 %v500
        %v897 = vunpack.c.l.b16 %v501
        %v898 = vunpack.c.h.b16 %v501
        %v899 = vunpack.c.l.b16 %v502
        %v900 = vunpack.c.h.b16 %v502
        %v901 = vunpack.c.l.b16 %v503
        %v902 = vunpack.c.h.b16 %v503
        %v903 = vunpack.c.l.b16 %v504
        %v904 = vunpack.c.h.b16 %v504
        %v905 = vunpack.c.l.b16 %v505
        %v906 = vunpack.c.h.b16 %v505
        %v907 = vunpack.c.l.b16 %v506
        %v908 = vunpack.c.h.b16 %v506
        %v909 = vunpack.c.l.b16 %v507
        %v910 = vunpack.c.h.b16 %v507
        %v911 = vunpack.c.l.b16 %v508
        %v912 = vunpack.c.h.b16 %v508
        %v913 = vunpack.c.l.b16 %v509
        %v914 = vunpack.c.h.b16 %v509
        %v915 = vunpack.c.l.b16 %v510
        %v916 = vunpack.c.h.b16 %v510
        %v917 = vunpack.c.l.b16 %v511
        %v918 = vunpack.c.h.b16 %v511
        %v919 = vunpack.c.l.b16 %v512
        %v920 = vunpack.c.h.b16 %v512
        %v921 = vunpack.c.l.b16 %v513
        %v922 = vunpack.c.h.b16 %v513
        %v923 = vunpack.c.l.b16 %v514
        %v924 = vunpack.c.h.b16 %v514
        %v925 = vunpack.c.l.b16 %v515
        %v926 = vunpack.c.h.b16 %v515
        %v927 = vunpack.c.l.b16 %v516
        %v928 = vunpack.c.h.b16 %v516
        %v929 = vunpack.c.l.b16 %v517
        %v930 = vunpack.c.h.b16 %v517
        %v931 = vunpack.c.l.b16 %v518
        %v932 = vunpack.c.h.b16 %v518
        %v933 = vunpack.c.l.b16 %v519
        %v934 = vunpack.c.h.b16 %v519
        %v935 = vunpack.c.l.b16 %v520
        %v936 = vunpack.c.h.b16 %v520
        %v937 = vunpack.c.l.b16 %v521
        %v938 = vunpack.c.h.b16 %v521
        %v939 = vunpack.c.l.b16 %v522
        %v940 = vunpack.c.h.b16 %v522
        %v941 = vunpack.c.l.b16 %v523
        %v942 = vunpack.c.h.b16 %v523
        %v943 = vunpack.c.l.b16 %v524
        %v944 = vunpack.c.h.b16 %v524
        %v945 = vunpack.c.l.b16 %v525
        %v946 = vunpack.c.h.b16 %v525
        %v947 = vunpack.c.l.b16 %v526
        %v948 = vunpack.c.h.b16 %v526
        %v949 = vunpack.c.l.b16 %v527
        %v950 = vunpack.c.h.b16 %v527
        %v951 = vunpack.c.l.b16 %v528
        %v952 = vunpack.c.h.b16 %v528
        %v953 = vunpack.c.l.b16 %v529
        %v954 = vunpack.c.h.b16 %v529
        %v955 = vunpack.c.l.b16 %v530
        %v956 = vunpack.c.h.b16 %v530
        %v957 = vunpack.c.l.b16 %v531
        %v958 = vunpack.c.h.b16 %v531
        %v959 = vunpack.c.l.b16 %v532
        %v960 = vunpack.c.h.b16 %v532
        %v961 = vunpack.c.l.b16 %v533
        %v962 = vunpack.c.h.b16 %v533
        %v963 = vunpack.c.l.b16 %v534
        %v964 = vunpack.c.h.b16 %v534
        %v965 = vunpack.c.l.b16 %v535
        %v966 = vunpack.c.h.b16 %v535
        %v967 = vunpack.c.l.b16 %v536
        %v968 = vunpack.c.h.b16 %v536
        %v969 = vunpack.c.l.b16 %v537
        %v970 = vunpack.c.h.b16 %v537
        %v971 = vunpack.c.l.b16 %v538
        %v972 = vunpack.c.h.b16 %v538
        %v973 = vunpack.c.l.b16 %v539
        %v974 = vunpack.c.h.b16 %v539
        %v975 = vunpack.c.l.b16 %v540
        %v976 = vunpack.c.h.b16 %v540
        %v977 = vunpack.c.l.b16 %v541
        %v978 = vunpack.c.h.b16 %v541
        %v979 = vunpack.c.l.b16 %v542
        %v980 = vunpack.c.h.b16 %v542
        %v981 = vunpack.c.l.b16 %v543
        %v982 = vunpack.c.h.b16 %v543
        %v983 = vunpack.c.l.b16 %v544
        %v984 = vunpack.c.h.b16 %v544
        %v985 = vunpack.c.l.b16 %v545
        %v986 = vunpack.c.h.b16 %v545
        %v987 = vunpack.c.l.b16 %v546
        %v988 = vunpack.c.h.b16 %v546
        %v989 = vunpack.c.l.b16 %v547
        %v990 = vunpack.c.h.b16 %v547
        %v991 = vunpack.c.l.b16 %v548
        %v992 = vunpack.c.h.b16 %v548
        %v993 = vunpack.c.l.b16 %v549
        %v994 = vunpack.c.h.b16 %v549
        %v995 = vunpack.c.l.b16 %v550
        %v996 = vunpack.c.h.b16 %v550
        %v997 = vunpack.c.l.b16 %v551
        %v998 = vunpack.c.h.b16 %v551
        %v999 = vunpack.c.l.b16 %v552
        %v1000 = vunpack.c.h.b16 %v552
        %v1001 = vunpack.c.l.b16 %v553
        %v1002 = vunpack.c.h.b16 %v553
        %v1003 = vunpack.c.l.b16 %v554
        %v1004 = vunpack.c.h.b16 %v554
        %v1005 = vunpack.c.l.b16 %v555
        %v1006 = vunpack.c.h.b16 %v555
        %v1007 = vunpack.c.l.b16 %v556
        %v1008 = vunpack.c.h.b16 %v556
        %v1009 = vunpack.c.l.b16 %v557
        %v1010 = vunpack.c.h.b16 %v557
        %v1011 = vunpack.c.l.b16 %v558
        %v1012 = vunpack.c.h.b16 %v558
        %v1013 = vunpack.c.l.b16 %v559
        %v1014 = vunpack.c.h.b16 %v559
        %v1015 = vunpack.c.l.b16 %v560
        %v1016 = vunpack.c.h.b16 %v560
        %v1017 = vunpack.c.l.b16 %v561
        %v1018 = vunpack.c.h.b16 %v561
        %v1019 = vunpack.c.l.b16 %v562
        %v1020 = vunpack.c.h.b16 %v562
        %v1021 = vunpack.c.l.b16 %v563
        %v1022 = vunpack.c.h.b16 %v563
        %v1023 = vunpack.c.l.b16 %v564
        %v1024 = vunpack.c.h.b16 %v564
        %v1025 = vunpack.c.l.b16 %v565
        %v1026 = vunpack.c.h.b16 %v565
        %v1027 = vunpack.c.l.b16 %v566
        %v1028 = vunpack.c.h.b16 %v566
        %v1029 = vunpack.c.l.b16 %v567
        %v1030 = vunpack.c.h.b16 %v567
        %v1031 = vunpack.c.l.b16 %v568
        %v1032 = vunpack.c.h.b16 %v568
        %v1033 = vunpack.c.l.b16 %v569
        %v1034 = vunpack.c.h.b16 %v569
        %v1035 = vunpack.c.l.b16 %v570
        %v1036 = vunpack.c.h.b16 %v570
        %v1037 = vunpack.c.l.b16 %v571
        %v1038 = vunpack.c.h.b16 %v571
        %v1039 = vunpack.c.l.b16 %v572
        %v1040 = vunpack.c.h.b16 %v572
        %v1041 = vunpack.c.l.b16 %v573
        %v1042 = vunpack.c.h.b16 %v573
        %v1043 = vunpack.c.l.b16 %v574
        %v1044 = vunpack.c.h.b16 %v574
        %v1045 = vunpack.c.l.b16 %v575
        %v1046 = vunpack.c.h.b16 %v575
        %v1047 = vunpack.c.l.b16 %v576
        %v1048 = vunpack.c.h.b16 %v576
        %v1049 = vunpack.c.l.b16 %v577
        %v1050 = vunpack.c.h.b16 %v577
        %v1051 = vunpack.c.l.b16 %v578
        %v1052 = vunpack.c.h.b16 %v578
        %v1053 = vunpack.c.l.b16 %v579
        %v1054 = vunpack.c.h.b16 %v579
        %v1055 = vunpack.c.l.b16 %v580
        %v1056 = vunpack.c.h.b16 %v580
        %v1057 = vunpack.c.l.b16 %v581
        %v1058 = vunpack.c.h.b16 %v581
        %v1059 = vunpack.c.l.b16 %v582
        %v1060 = vunpack.c.h.b16 %v582
        %v1061 = vunpack.c.l.b16 %v583
        %v1062 = vunpack.c.h.b16 %v583
        %v1063 = vunpack.c.l.b16 %v584
        %v1064 = vunpack.c.h.b16 %v584
        %v1065 = vunpack.c.l.b16 %v585
        %v1066 = vunpack.c.h.b16 %v585
        %v1067 = vunpack.c.l.b16 %v586
        %v1068 = vunpack.c.h.b16 %v586
        %v1069 = vunpack.c.l.b16 %v587
        %v1070 = vunpack.c.h.b16 %v587
        %v1071 = vunpack.c.l.b16 %v588
        %v1072 = vunpack.c.h.b16 %v588
        %v1073 = vunpack.c.l.b16 %v589
        %v1074 = vunpack.c.h.b16 %v589
        %v1075 = vunpack.c.l.b16 %v590
        %v1076 = vunpack.c.h.b16 %v590
        %v1077 = vunpack.c.l.b16 %v591
        %v1078 = vunpack.c.h.b16 %v591
        %v1079 = vunpack.c.l.b16 %v592
        %v1080 = vunpack.c.h.b16 %v592
        %v1081 = vunpack.c.l.b16 %v593
        %v1082 = vunpack.c.h.b16 %v593
        %v1083 = vunpack.c.l.b16 %v594
        %v1084 = vunpack.c.h.b16 %v594
        %v1085 = vunpack.c.l.b16 %v595
        %v1086 = vunpack.c.h.b16 %v595
        %v1087 = vunpack.c.l.b16 %v596
        %v1088 = vunpack.c.h.b16 %v596
        %v1089 = vunpack.c.l.b16 %v597
        %v1090 = vunpack.c.h.b16 %v597
        %v1091 = vunpack.c.l.b16 %v598
        %v1092 = vunpack.c.h.b16 %v598
        %v1093 = vunpack.c.l.b16 %v599
        %v1094 = vunpack.c.h.b16 %v599
        %v1095 = vunpack.c.l.b16 %v600
        %v1096 = vunpack.c.h.b16 %v600
        %v1097 = vunpack.c.l.b16 %v601
        %v1098 = vunpack.c.h.b16 %v601
        %v1099 = vunpack.c.l.b16 %v602
        %v1100 = vunpack.c.h.b16 %v602
        %v1101 = vunpack.c.l.b16 %v603
        %v1102 = vunpack.c.h.b16 %v603
        %v1103 = vunpack.c.l.b16 %v604
        %v1104 = vunpack.c.h.b16 %v604
        %v1105 = vunpack.c.l.b16 %v605
        %v1106 = vunpack.c.h.b16 %v605
        %v1107 = vunpack.c.l.b16 %v606
        %v1108 = vunpack.c.h.b16 %v606
        %v1109 = vunpack.c.l.b16 %v607
        %v1110 = vunpack.c.h.b16 %v607
        %v1111 = vunpack.c.l.b16 %v608
        %v1112 = vunpack.c.h.b16 %v608
        %v1113 = vunpack.c.l.b16 %v609
        %v1114 = vunpack.c.h.b16 %v609
        %v1115 = vunpack.c.l.b16 %v610
        %v1116 = vunpack.c.h.b16 %v610
        %v1117 = vunpack.c.l.b16 %v611
        %v1118 = vunpack.c.h.b16 %v611
        %v1119 = vunpack.c.l.b16 %v612
        %v1120 = vunpack.c.h.b16 %v612
        %v1121 = vunpack.c.l.b16 %v613
        %v1122 = vunpack.c.h.b16 %v613
        %v1123 = vunpack.c.l.b16 %v614
        %v1124 = vunpack.c.h.b16 %v614
        %v1125 = vunpack.c.l.b16 %v615
        %v1126 = vunpack.c.h.b16 %v615
        %v1127 = vunpack.c.l.b16 %v616
        %v1128 = vunpack.c.h.b16 %v616
        %v1129 = vunpack.c.l.b16 %v617
        %v1130 = vunpack.c.h.b16 %v617
        %v1131 = vunpack.c.l.b16 %v618
        %v1132 = vunpack.c.h.b16 %v618
        %v1133 = vunpack.c.l.b16 %v619
        %v1134 = vunpack.c.h.b16 %v619
        %v1135 = vunpack.c.l.b16 %v620
        %v1136 = vunpack.c.h.b16 %v620
        %v1137 = vunpack.c.l.b16 %v621
        %v1138 = vunpack.c.h.b16 %v621
        %v1139 = vunpack.c.l.b16 %v622
        %v1140 = vunpack.c.h.b16 %v622
        %v1141 = vunpack.c.l.b16 %v623
        %v1142 = vunpack.c.h.b16 %v623
        %v1143 = vunpack.c.l.b16 %v624
        %v1144 = vunpack.c.h.b16 %v624
        %v1145 = vunpack.c.l.b16 %v625
        %v1146 = vunpack.c.h.b16 %v625
        %v1147 = vunpack.c.l.b16 %v626
        %v1148 = vunpack.c.h.b16 %v626
        %v1149 = vunpack.c.l.b16 %v627
        %v1150 = vunpack.c.h.b16 %v627
        %v1151 = vunpack.c.l.b16 %v628
        %v1152 = vunpack.c.h.b16 %v628
        %v1153 = vunpack.c.l.b16 %v629
        %v1154 = vunpack.c.h.b16 %v629
        %v1155 = vunpack.c.l.b16 %v630
        %v1156 = vunpack.c.h.b16 %v630
        %v1157 = vunpack.c.l.b16 %v631
        %v1158 = vunpack.c.h.b16 %v631
        %v1159 = vunpack.c.l.b16 %v632
        %v1160 = vunpack.c.h.b16 %v632
        %v1161 = vunpack.c.l.b16 %v633
        %v1162 = vunpack.c.h.b16 %v633
        %v1163 = vunpack.c.l.b16 %v634
        %v1164 = vunpack.c.h.b16 %v634
        %v1165 = vunpack.c.l.b16 %v635
        %v1166 = vunpack.c.h.b16 %v635
        %v1167 = vunpack.c.l.b16 %v636
        %v1168 = vunpack.c.h.b16 %v636
        %v1169 = vunpack.c.l.b16 %v637
        %v1170 = vunpack.c.h.b16 %v637
        %v1171 = vunpack.c.l.b16 %v638
        %v1172 = vunpack.c.h.b16 %v638
        %v1173 = vunpack.c.l.b16 %v639
        %v1174 = vunpack.c.h.b16 %v639
        %v1175 = vunpack.c.l.b16 %v640
        %v1176 = vunpack.c.h.b16 %v640
        %v1177 = vunpack.c.l.b16 %v641
        %v1178 = vunpack.c.h.b16 %v641
        %v1179 = vunpack.c.l.b16 %v642
        %v1180 = vunpack.c.h.b16 %v642
        %v1181 = vunpack.c.l.b16 %v643
        %v1182 = vunpack.c.h.b16 %v643
        %v1183 = vunpack.c.l.b16 %v644
        %v1184 = vunpack.c.h.b16 %v644
        %v1185 = vunpack.c.l.b16 %v645
        %v1186 = vunpack.c.h.b16 %v645
        %v1187 = vunpack.c.l.b16 %v646
        %v1188 = vunpack.c.h.b16 %v646
        %v1189 = vunpack.c.l.b16 %v647
        %v1190 = vunpack.c.h.b16 %v647
        %v1191 = vunpack.c.l.b16 %v648
        %v1192 = vunpack.c.h.b16 %v648
        %v1193 = vunpack.c.l.b16 %v649
        %v1194 = vunpack.c.h.b16 %v649
        %v1195 = vunpack.c.l.b16 %v650
        %v1196 = vunpack.c.h.b16 %v650
        %v1197 = vunpack.c.l.b16 %v651
        %v1198 = vunpack.c.h.b16 %v651
        %v1199 = vunpack.c.l.b16 %v652
        %v1200 = vunpack.c.h.b16 %v652
        %v1201 = vunpack.c.l.b16 %v653
        %v1202 = vunpack.c.h.b16 %v653
        %v1203 = vunpack.c.l.b16 %v654
        %v1204 = vunpack.c.h.b16 %v654
        %v1205 = vunpack.c.l.b16 %v655
        %v1206 = vunpack.c.h.b16 %v655
        %v1207 = vunpack.c.l.b16 %v656
        %v1208 = vunpack.c.h.b16 %v656
        %v1209 = vunpack.c.l.b16 %v657
        %v1210 = vunpack.c.h.b16 %v657
        %v1211 = vunpack.c.l.b16 %v658
        %v1212 = vunpack.c.h.b16 %v658
        %v1213 = vunpack.c.l.b16 %v659
        %v1214 = vunpack.c.h.b16 %v659
        %v1215 = vunpack.c.l.b16 %v660
        %v1216 = vunpack.c.h.b16 %v660
        %v1217 = vunpack.c.l.b16 %v661
        %v1218 = vunpack.c.h.b16 %v661
        %v1219 = vunpack.c.l.b16 %v662
        %v1220 = vunpack.c.h.b16 %v662
        %v1221 = vunpack.c.l.b16 %v663
        %v1222 = vunpack.c.h.b16 %v663
        %v1223 = vunpack.c.l.b16 %v664
        %v1224 = vunpack.c.h.b16 %v664
        %v1225 = vunpack.c.l.b16 %v665
        %v1226 = vunpack.c.h.b16 %v665
        %v1227 = vunpack.c.l.b16 %v666
        %v1228 = vunpack.c.h.b16 %v666
        %v1229 = vunpack.c.l.b16 %v667
        %v1230 = vunpack.c.h.b16 %v667
        %v1231 = vunpack.c.l.b16 %v668
        %v1232 = vunpack.c.h.b16 %v668
        %v1233 = vunpack.c.l.b16 %v669
        %v1234 = vunpack.c.h.b16 %v669
        %v1235 = vunpack.c.l.b16 %v670
        %v1236 = vunpack.c.h.b16 %v670
        %v1237 = vunpack.c.l.b16 %v671
        %v1238 = vunpack.c.h.b16 %v671
        %v1239 = vunpack.c.l.b16 %v672
        %v1240 = vunpack.c.h.b16 %v672
        %v1241 = vunpack.c.l.b16 %v673
        %v1242 = vunpack.c.h.b16 %v673
        %v1243 = vunpack.c.l.b16 %v674
        %v1244 = vunpack.c.h.b16 %v674
        %v1245 = vunpack.c.l.b16 %v675
        %v1246 = vunpack.c.h.b16 %v675
        %v1247 = vunpack.c.l.b16 %v676
        %v1248 = vunpack.c.h.b16 %v676
        %v1249 = vunpack.c.l.b16 %v677
        %v1250 = vunpack.c.h.b16 %v677
        %v1251 = vunpack.c.l.b16 %v678
        %v1252 = vunpack.c.h.b16 %v678
        %v1253 = vunpack.c.l.b16 %v679
        %v1254 = vunpack.c.h.b16 %v679
        %v1255 = vunpack.c.l.b16 %v680
        %v1256 = vunpack.c.h.b16 %v680
        %v1257 = vpack.c.b16 %v877, %v873
        %v1258 = vpack.c.b16 %v878, %v874
        %v1259 = vpack.c.b16 %v879, %v875
        %v1260 = vpack.c.b16 %v880, %v876
        %v1261 = vpack.c.b16 %v885, %v881
        %v1262 = vpack.c.b16 %v886, %v882
        %v1263 = vpack.c.b16 %v887, %v883
        %v1264 = vpack.c.b16 %v888, %v884
        %v1265 = vpack.c.b16 %v893, %v889
        %v1266 = vpack.c.b16 %v894, %v890
        %v1267 = vpack.c.b16 %v895, %v891
        %v1268 = vpack.c.b16 %v896, %v892
        %v1269 = vpack.c.b16 %v901, %v897
        %v1270 = vpack.c.b16 %v902, %v898
        %v1271 = vpack.c.b16 %v903, %v899
        %v1272 = vpack.c.b16 %v904, %v900
        %v1273 = vpack.c.b16 %v909, %v905
        %v1274 = vpack.c.b16 %v910, %v906
        %v1275 = vpack.c.b16 %v911, %v907
        %v1276 = vpack.c.b16 %v912, %v908
        %v1277 = vpack.c.b16 %v917, %v913
        %v1278 = vpack.c.b16 %v918, %v914
        %v1279 = vpack.c.b16 %v919, %v915
        %v1280 = vpack.c.b16 %v920, %v916
        %v1281 = vpack.c.b16 %v925, %v921
        %v1282 = vpack.c.b16 %v926, %v922
        %v1283 = vpack.c.b16 %v927, %v923
        %v1284 = vpack.c.b16 %v928, %v924
        %v1285 = vpack.c.b16 %v933, %v929
        %v1286 = vpack.c.b16 %v934, %v930
        %v1287 = vpack.c.b16 %v935, %v931
        %v1288 = vpack.c.b16 %v936, %v932
        %v1289 = vpack.c.b16 %v941, %v937
        %v1290 = vpack.c.b16 %v942, %v938
        %v1291 = vpack.c.b16 %v943, %v939
        %v1292 = vpack.c.b16 %v944, %v940
        %v1293 = vpack.c.b16 %v949, %v945
        %v1294 = vpack.c.b16 %v950, %v946
        %v1295 = vpack.c.b16 %v951, %v947
        %v1296 = vpack.c.b16 %v952, %v948
        %v1297 = vpack.c.b16 %v957, %v953
        %v1298 = vpack.c.b16 %v958, %v954
        %v1299 = vpack.c.b16 %v959, %v955
        %v1300 = vpack.c.b16 %v960, %v956
        %v1301 = vpack.c.b16 %v965, %v961
        %v1302 = vpack.c.b16 %v966, %v962
        %v1303 = vpack.c.b16 %v967, %v963
        %v1304 = vpack.c.b16 %v968, %v964
        %v1305 = vpack.c.b16 %v973, %v969
        %v1306 = vpack.c.b16 %v974, %v970
        %v1307 = vpack.c.b16 %v975, %v971
        %v1308 = vpack.c.b16 %v976, %v972
        %v1309 = vpack.c.b16 %v981, %v977
        %v1310 = vpack.c.b16 %v982, %v978
        %v1311 = vpack.c.b16 %v983, %v979
        %v1312 = vpack.c.b16 %v984, %v980
        %v1313 = vpack.c.b16 %v989, %v985
        %v1314 = vpack.c.b16 %v990, %v986
        %v1315 = vpack.c.b16 %v991, %v987
        %v1316 = vpack.c.b16 %v992, %v988
        %v1317 = vpack.c.b16 %v997, %v993
        %v1318 = vpack.c.b16 %v998, %v994
        %v1319 = vpack.c.b16 %v999, %v995
        %v1320 = vpack.c.b16 %v1000, %v996
        %v1321 = vpack.c.b16 %v1005, %v1001
        %v1322 = vpack.c.b16 %v1006, %v1002
        %v1323 = vpack.c.b16 %v1007, %v1003
        %v1324 = vpack.c.b16 %v1008, %v1004
        %v1325 = vpack.c.b16 %v1013, %v1009
        %v1326 = vpack.c.b16 %v1014, %v1010
        %v1327 = vpack.c.b16 %v1015, %v1011
        %v1328 = vpack.c.b16 %v1016, %v1012
        %v1329 = vpack.c.b16 %v1021, %v1017
        %v1330 = vpack.c.b16 %v1022, %v1018
        %v1331 = vpack.c.b16 %v1023, %v1019
        %v1332 = vpack.c.b16 %v1024, %v1020
        %v1333 = vpack.c.b16 %v1029, %v1025
        %v1334 = vpack.c.b16 %v1030, %v1026
        %v1335 = vpack.c.b16 %v1031, %v1027
        %v1336 = vpack.c.b16 %v1032, %v1028
        %v1337 = vpack.c.b16 %v1037, %v1033
        %v1338 = vpack.c.b16 %v1038, %v1034
        %v1339 = vpack.c.b16 %v1039, %v1035
        %v1340 = vpack.c.b16 %v1040, %v1036
        %v1341 = vpack.c.b16 %v1045, %v1041
        %v1342 = vpack.c.b16 %v1046, %v1042
        %v1343 = vpack.c.b16 %v1047, %v1043
        %v1344 = vpack.c.b16 %v1048, %v1044
        %v1345 = vpack.c.b16 %v1053, %v1049
        %v1346 = vpack.c.b16 %v1054, %v1050
        %v1347 = vpack.c.b16 %v1055, %v1051
        %v1348 = vpack.c.b16 %v1056, %v1052
        %v1349 = vpack.c.b16 %v1061, %v1057
        %v1350 = vpack.c.b16 %v1062, %v1058
        %v1351 = vpack.c.b16 %v1063, %v1059
        %v1352 = vpack.c.b16 %v1064, %v1060
        %v1353 = vpack.c.b16 %v1069, %v1065
        %v1354 = vpack.c.b16 %v1070, %v1066
        %v1355 = vpack.c.b16 %v1071, %v1067
        %v1356 = vpack.c.b16 %v1072, %v1068
        %v1357 = vpack.c.b16 %v1077, %v1073
        %v1358 = vpack.c.b16 %v1078, %v1074
        %v1359 = vpack.c.b16 %v1079, %v1075
        %v1360 = vpack.c.b16 %v1080, %v1076
        %v1361 = vpack.c.b16 %v1085, %v1081
        %v1362 = vpack.c.b16 %v1086, %v1082
        %v1363 = vpack.c.b16 %v1087, %v1083
        %v1364 = vpack.c.b16 %v1088, %v1084
        %v1365 = vpack.c.b16 %v1093, %v1089
        %v1366 = vpack.c.b16 %v1094, %v1090
        %v1367 = vpack.c.b16 %v1095, %v1091
        %v1368 = vpack.c.b16 %v1096, %v1092
        %v1369 = vpack.c.b16 %v1101, %v1097
        %v1370 = vpack.c.b16 %v1102, %v1098
        %v1371 = vpack.c.b16 %v1103, %v1099
        %v1372 = vpack.c.b16 %v1104, %v1100
        %v1373 = vpack.c.b16 %v1109, %v1105
        %v1374 = vpack.c.b16 %v1110, %v1106
        %v1375 = vpack.c.b16 %v1111, %v1107
        %v1376 = vpack.c.b16 %v1112, %v1108
        %v1377 = vpack.c.b16 %v1117, %v1113
        %v1378 = vpack.c.b16 %v1118, %v1114
        %v1379 = vpack.c.b16 %v1119, %v1115
        %v1380 = vpack.c.b16 %v1120, %v1116
        %v1381 = vpack.c.b16 %v1125, %v1121
        %v1382 = vpack.c.b16 %v1126, %v1122
        %v1383 = vpack.c.b16 %v1127, %v1123
        %v1384 = vpack.c.b16 %v1128, %v1124
        %v1385 = vpack.c.b16 %v1133, %v1129
        %v1386 = vpack.c.b16 %v1134, %v1130
        %v1387 = vpack.c.b16 %v1135, %v1131
        %v1388 = vpack.c.b16 %v1136, %v1132
        %v1389 = vpack.c.b16 %v1141, %v1137
        %v1390 = vpack.c.b16 %v1142, %v1138
        %v1391 = vpack.c.b16 %v1143, %v1139
        %v1392 = vpack.c.b16 %v1144, %v1140
        %v1393 = vpack.c.b16 %v1149, %v1145
        %v1394 = vpack.c.b16 %v1150, %v1146
        %v1395 = vpack.c.b16 %v1151, %v1147
        %v1396 = vpack.c.b16 %v1152, %v1148
        %v1397 = vpack.c.b16 %v1157, %v1153
        %v1398 = vpack.c.b16 %v1158, %v1154
        %v1399 = vpack.c.b16 %v1159, %v1155
        %v1400 = vpack.c.b16 %v1160, %v1156
        %v1401 = vpack.c.b16 %v1165, %v1161
        %v1402 = vpack.c.b16 %v1166, %v1162
        %v1403 = vpack.c.b16 %v1167, %v1163
        %v1404 = vpack.c.b16 %v1168, %v1164
        %v1405 = vpack.c.b16 %v1173, %v1169
        %v1406 = vpack.c.b16 %v1174, %v1170
        %v1407 = vpack.c.b16 %v1175, %v1171
        %v1408 = vpack.c.b16 %v1176, %v1172
        %v1409 = vpack.c.b16 %v1181, %v1177
        %v1410 = vpack.c.b16 %v1182, %v1178
        %v1411 = vpack.c.b16 %v1183, %v1179
        %v1412 = vpack.c.b16 %v1184, %v1180
        %v1413 = vpack.c.b16 %v1189, %v1185
        %v1414 = vpack.c.b16 %v1190, %v1186
        %v1415 = vpack.c.b16 %v1191, %v1187
        %v1416 = vpack.c.b16 %v1192, %v1188
        %v1417 = vpack.c.b16 %v1197, %v1193
        %v1418 = vpack.c.b16 %v1198, %v1194
        %v1419 = vpack.c.b16 %v1199, %v1195
        %v1420 = vpack.c.b16 %v1200, %v1196
        %v1421 = vpack.c.b16 %v1205, %v1201
        %v1422 = vpack.c.b16 %v1206, %v1202
        %v1423 = vpack.c.b16 %v1207, %v1203
        %v1424 = vpack.c.b16 %v1208, %v1204
        %v1425 = vpack.c.b16 %v1213, %v1209
        %v1426 = vpack.c.b16 %v1214, %v1210
        %v1427 = vpack.c.b16 %v1215, %v1211
        %v1428 = vpack.c.b16 %v1216, %v1212
        %v1429 = vpack.c.b16 %v1221, %v1217
        %v1430 = vpack.c.b16 %v1222, %v1218
        %v1431 = vpack.c.b16 %v1223, %v1219
        %v1432 = vpack.c.b16 %v1224, %v1220
        %v1433 = vpack.c.b16 %v1229, %v1225
        %v1434 = vpack.c.b16 %v1230, %v1226
        %v1435 = vpack.c.b16 %v1231, %v1227
        %v1436 = vpack.c.b16 %v1232, %v1228
        %v1437 = vpack.c.b16 %v1237, %v1233
        %v1438 = vpack.c.b16 %v1238, %v1234
        %v1439 = vpack.c.b16 %v1239, %v1235
        %v1440 = vpack.c.b16 %v1240, %v1236
        %v1441 = vpack.c.b16 %v1245, %v1241
        %v1442 = vpack.c.b16 %v1246, %v1242
        %v1443 = vpack.c.b16 %v1247, %v1243
        %v1444 = vpack.c.b16 %v1248, %v1244
        %v1445 = vpack.c.b16 %v1253, %v1249
        %v1446 = vpack.c.b16 %v1254, %v1250
        %v1447 = vpack.c.b16 %v1255, %v1251
        %v1448 = vpack.c.b16 %v1256, %v1252
        %1641 = vmatpush.bf16.msra.mxu0 %v1285
        %1642 = vmatpush.bf16.msra.mxu0 %v1281
        %1643 = vmatpush.bf16.msra.mxu0 %v1277
        %1644 = vmatpush.bf16.msra.mxu0 %v1273
        %1645 = vmatpush.bf16.msra.mxu0 %v1269
        %1646 = vmatpush.bf16.msra.mxu0 %v1265
        %1647 = vmatpush.bf16.msra.mxu0 %v1261
        %1648 = vmatpush.bf16.msra.mxu0 %v1257
        %1649 = vmatmul.bf16.gmra.mxu0 %v483
        %v1650 = vpop.f32.mrf.mxu0
        %v1651 = vadd.f32 0.0, %v1650
        %v1652 = vpop.f32.mrf.mxu0
        %v1653 = vadd.f32 0.0, %v1652
        %1654 = vdwg.mxu0
        %1655 = vmatpush.bf16.msra.mxu0 %v1317
        %1656 = vmatpush.bf16.msra.mxu0 %v1313
        %1657 = vmatpush.bf16.msra.mxu0 %v1309
        %1658 = vmatpush.bf16.msra.mxu0 %v1305
        %1659 = vmatpush.bf16.msra.mxu0 %v1301
        %1660 = vmatpush.bf16.msra.mxu0 %v1297
        %1661 = vmatpush.bf16.msra.mxu0 %v1293
        %1662 = vmatpush.bf16.msra.mxu0 %v1289
        %1663 = vmatmul.bf16.gmra.mxu0 %v484
        %v1664 = vpop.f32.mrf.mxu0
        %v1665 = vadd.f32 %v1651, %v1664
        %v1666 = vpop.f32.mrf.mxu0
        %v1667 = vadd.f32 %v1653, %v1666
        %1668 = vdwg.mxu0
        %1669 = vmatpush.bf16.msra.mxu0 %v1349
        %1670 = vmatpush.bf16.msra.mxu0 %v1345
        %1671 = vmatpush.bf16.msra.mxu0 %v1341
        %1672 = vmatpush.bf16.msra.mxu0 %v1337
        %1673 = vmatpush.bf16.msra.mxu0 %v1333
        %1674 = vmatpush.bf16.msra.mxu0 %v1329
        %1675 = vmatpush.bf16.msra.mxu0 %v1325
        %1676 = vmatpush.bf16.msra.mxu0 %v1321
        %1677 = vmatmul.bf16.gmra.mxu0 %v485
        %v1678 = vpop.f32.mrf.mxu0
        %v1679 = vadd.f32 %v1665, %v1678
        %v1680 = vpop.f32.mrf.mxu0
        %v1681 = vadd.f32 %v1667, %v1680
        %1682 = vdwg.mxu0
        %1683 = vmatpush.bf16.msra.mxu0 %v1381
        %1684 = vmatpush.bf16.msra.mxu0 %v1377
        %1685 = vmatpush.bf16.msra.mxu0 %v1373
        %1686 = vmatpush.bf16.msra.mxu0 %v1369
        %1687 = vmatpush.bf16.msra.mxu0 %v1365
        %1688 = vmatpush.bf16.msra.mxu0 %v1361
        %1689 = vmatpush.bf16.msra.mxu0 %v1357
        %1690 = vmatpush.bf16.msra.mxu0 %v1353
        %1691 = vmatmul.bf16.gmra.mxu0 %v486
        %v1692 = vpop.f32.mrf.mxu0
        %v1693 = vadd.f32 %v1679, %v1692
        %v1694 = vpop.f32.mrf.mxu0
        %v1695 = vadd.f32 %v1681, %v1694
        %1696 = vdwg.mxu0
        %1697 = vmatpush.bf16.msra.mxu0 %v1413
        %1698 = vmatpush.bf16.msra.mxu0 %v1409
        %1699 = vmatpush.bf16.msra.mxu0 %v1405
        %1700 = vmatpush.bf16.msra.mxu0 %v1401
        %1701 = vmatpush.bf16.msra.mxu0 %v1397
        %1702 = vmatpush.bf16.msra.mxu0 %v1393
        %1703 = vmatpush.bf16.msra.mxu0 %v1389
        %1704 = vmatpush.bf16.msra.mxu0 %v1385
        %1705 = vmatmul.bf16.gmra.mxu0 %v487
        %v1706 = vpop.f32.mrf.mxu0
        %v1707 = vadd.f32 %v1693, %v1706
        %v1708 = vpop.f32.mrf.mxu0
        %v1709 = vadd.f32 %v1695, %v1708
        %1710 = vdwg.mxu0
        %1711 = vmatpush.bf16.msra.mxu0 %v1445
        %1712 = vmatpush.bf16.msra.mxu0 %v1441
        %1713 = vmatpush.bf16.msra.mxu0 %v1437
        %1714 = vmatpush.bf16.msra.mxu0 %v1433
        %1715 = vmatpush.bf16.msra.mxu0 %v1429
        %1716 = vmatpush.bf16.msra.mxu0 %v1425
        %1717 = vmatpush.bf16.msra.mxu0 %v1421
        %1718 = vmatpush.bf16.msra.mxu0 %v1417
        %1719 = vmatmul.bf16.gmra.mxu0 %v488
        %v1720 = vpop.f32.mrf.mxu0
        %v1721 = vadd.f32 %v1707, %v1720
        %v1722 = vpop.f32.mrf.mxu0
        %v1723 = vadd.f32 %v1709, %v1722
        %1724 = vdwg.mxu0
        %1725 = vmatpush.bf16.msra.mxu0 %v1286
        %1726 = vmatpush.bf16.msra.mxu0 %v1282
        %1727 = vmatpush.bf16.msra.mxu0 %v1278
        %1728 = vmatpush.bf16.msra.mxu0 %v1274
        %1729 = vmatpush.bf16.msra.mxu0 %v1270
        %1730 = vmatpush.bf16.msra.mxu0 %v1266
        %1731 = vmatpush.bf16.msra.mxu0 %v1262
        %1732 = vmatpush.bf16.msra.mxu0 %v1258
        %1733 = vmatmul.bf16.gmra.mxu0 %v483
        %v1734 = vpop.f32.mrf.mxu0
        %v1735 = vadd.f32 0.0, %v1734
        %v1736 = vpop.f32.mrf.mxu0
        %v1737 = vadd.f32 0.0, %v1736
        %1738 = vdwg.mxu0
        %1739 = vmatpush.bf16.msra.mxu0 %v1318
        %1740 = vmatpush.bf16.msra.mxu0 %v1314
        %1741 = vmatpush.bf16.msra.mxu0 %v1310
        %1742 = vmatpush.bf16.msra.mxu0 %v1306
        %1743 = vmatpush.bf16.msra.mxu0 %v1302
        %1744 = vmatpush.bf16.msra.mxu0 %v1298
        %1745 = vmatpush.bf16.msra.mxu0 %v1294
        %1746 = vmatpush.bf16.msra.mxu0 %v1290
        %1747 = vmatmul.bf16.gmra.mxu0 %v484
        %v1748 = vpop.f32.mrf.mxu0
        %v1749 = vadd.f32 %v1735, %v1748
        %v1750 = vpop.f32.mrf.mxu0
        %v1751 = vadd.f32 %v1737, %v1750
        %1752 = vdwg.mxu0
        %1753 = vmatpush.bf16.msra.mxu0 %v1350
        %1754 = vmatpush.bf16.msra.mxu0 %v1346
        %1755 = vmatpush.bf16.msra.mxu0 %v1342
        %1756 = vmatpush.bf16.msra.mxu0 %v1338
        %1757 = vmatpush.bf16.msra.mxu0 %v1334
        %1758 = vmatpush.bf16.msra.mxu0 %v1330
        %1759 = vmatpush.bf16.msra.mxu0 %v1326
        %1760 = vmatpush.bf16.msra.mxu0 %v1322
        %1761 = vmatmul.bf16.gmra.mxu0 %v485
        %v1762 = vpop.f32.mrf.mxu0
        %v1763 = vadd.f32 %v1749, %v1762
        %v1764 = vpop.f32.mrf.mxu0
        %v1765 = vadd.f32 %v1751, %v1764
        %1766 = vdwg.mxu0
        %1767 = vmatpush.bf16.msra.mxu0 %v1382
        %1768 = vmatpush.bf16.msra.mxu0 %v1378
        %1769 = vmatpush.bf16.msra.mxu0 %v1374
        %1770 = vmatpush.bf16.msra.mxu0 %v1370
        %1771 = vmatpush.bf16.msra.mxu0 %v1366
        %1772 = vmatpush.bf16.msra.mxu0 %v1362
        %1773 = vmatpush.bf16.msra.mxu0 %v1358
        %1774 = vmatpush.bf16.msra.mxu0 %v1354
        %1775 = vmatmul.bf16.gmra.mxu0 %v486
        %v1776 = vpop.f32.mrf.mxu0
        %v1777 = vadd.f32 %v1763, %v1776
        %v1778 = vpop.f32.mrf.mxu0
        %v1779 = vadd.f32 %v1765, %v1778
        %1780 = vdwg.mxu0
        %1781 = vmatpush.bf16.msra.mxu0 %v1414
        %1782 = vmatpush.bf16.msra.mxu0 %v1410
        %1783 = vmatpush.bf16.msra.mxu0 %v1406
        %1784 = vmatpush.bf16.msra.mxu0 %v1402
        %1785 = vmatpush.bf16.msra.mxu0 %v1398
        %1786 = vmatpush.bf16.msra.mxu0 %v1394
        %1787 = vmatpush.bf16.msra.mxu0 %v1390
        %1788 = vmatpush.bf16.msra.mxu0 %v1386
        %1789 = vmatmul.bf16.gmra.mxu0 %v487
        %v1790 = vpop.f32.mrf.mxu0
        %v1791 = vadd.f32 %v1777, %v1790
        %v1792 = vpop.f32.mrf.mxu0
        %v1793 = vadd.f32 %v1779, %v1792
        %1794 = vdwg.mxu0
        %1795 = vmatpush.bf16.msra.mxu0 %v1446
        %1796 = vmatpush.bf16.msra.mxu0 %v1442
        %1797 = vmatpush.bf16.msra.mxu0 %v1438
        %1798 = vmatpush.bf16.msra.mxu0 %v1434
        %1799 = vmatpush.bf16.msra.mxu0 %v1430
        %1800 = vmatpush.bf16.msra.mxu0 %v1426
        %1801 = vmatpush.bf16.msra.mxu0 %v1422
        %1802 = vmatpush.bf16.msra.mxu0 %v1418
        %1803 = vmatmul.bf16.gmra.mxu0 %v488
        %v1804 = vpop.f32.mrf.mxu0
        %v1805 = vadd.f32 %v1791, %v1804
        %v1806 = vpop.f32.mrf.mxu0
        %v1807 = vadd.f32 %v1793, %v1806
        %1808 = vdwg.mxu0
        %1809 = vmatpush.bf16.msra.mxu0 %v1287
        %1810 = vmatpush.bf16.msra.mxu0 %v1283
        %1811 = vmatpush.bf16.msra.mxu0 %v1279
        %1812 = vmatpush.bf16.msra.mxu0 %v1275
        %1813 = vmatpush.bf16.msra.mxu0 %v1271
        %1814 = vmatpush.bf16.msra.mxu0 %v1267
        %1815 = vmatpush.bf16.msra.mxu0 %v1263
        %1816 = vmatpush.bf16.msra.mxu0 %v1259
        %1817 = vmatmul.bf16.gmra.mxu0 %v483
        %v1818 = vpop.f32.mrf.mxu0
        %v1819 = vadd.f32 0.0, %v1818
        %v1820 = vpop.f32.mrf.mxu0
        %v1821 = vadd.f32 0.0, %v1820
        %1822 = vdwg.mxu0
        %1823 = vmatpush.bf16.msra.mxu0 %v1319
        %1824 = vmatpush.bf16.msra.mxu0 %v1315
        %1825 = vmatpush.bf16.msra.mxu0 %v1311
        %1826 = vmatpush.bf16.msra.mxu0 %v1307
        %1827 = vmatpush.bf16.msra.mxu0 %v1303
        %1828 = vmatpush.bf16.msra.mxu0 %v1299
        %1829 = vmatpush.bf16.msra.mxu0 %v1295
        %1830 = vmatpush.bf16.msra.mxu0 %v1291
        %1831 = vmatmul.bf16.gmra.mxu0 %v484
        %v1832 = vpop.f32.mrf.mxu0
        %v1833 = vadd.f32 %v1819, %v1832
        %v1834 = vpop.f32.mrf.mxu0
        %v1835 = vadd.f32 %v1821, %v1834
        %1836 = vdwg.mxu0
        %1837 = vmatpush.bf16.msra.mxu0 %v1351
        %1838 = vmatpush.bf16.msra.mxu0 %v1347
        %1839 = vmatpush.bf16.msra.mxu0 %v1343
        %1840 = vmatpush.bf16.msra.mxu0 %v1339
        %1841 = vmatpush.bf16.msra.mxu0 %v1335
        %1842 = vmatpush.bf16.msra.mxu0 %v1331
        %1843 = vmatpush.bf16.msra.mxu0 %v1327
        %1844 = vmatpush.bf16.msra.mxu0 %v1323
        %1845 = vmatmul.bf16.gmra.mxu0 %v485
        %v1846 = vpop.f32.mrf.mxu0
        %v1847 = vadd.f32 %v1833, %v1846
        %v1848 = vpop.f32.mrf.mxu0
        %v1849 = vadd.f32 %v1835, %v1848
        %1850 = vdwg.mxu0
        %1851 = vmatpush.bf16.msra.mxu0 %v1383
        %1852 = vmatpush.bf16.msra.mxu0 %v1379
        %1853 = vmatpush.bf16.msra.mxu0 %v1375
        %1854 = vmatpush.bf16.msra.mxu0 %v1371
        %1855 = vmatpush.bf16.msra.mxu0 %v1367
        %1856 = vmatpush.bf16.msra.mxu0 %v1363
        %1857 = vmatpush.bf16.msra.mxu0 %v1359
        %1858 = vmatpush.bf16.msra.mxu0 %v1355
        %1859 = vmatmul.bf16.gmra.mxu0 %v486
        %v1860 = vpop.f32.mrf.mxu0
        %v1861 = vadd.f32 %v1847, %v1860
        %v1862 = vpop.f32.mrf.mxu0
        %v1863 = vadd.f32 %v1849, %v1862
        %1864 = vdwg.mxu0
        %1865 = vmatpush.bf16.msra.mxu0 %v1415
        %1866 = vmatpush.bf16.msra.mxu0 %v1411
        %1867 = vmatpush.bf16.msra.mxu0 %v1407
        %1868 = vmatpush.bf16.msra.mxu0 %v1403
        %1869 = vmatpush.bf16.msra.mxu0 %v1399
        %1870 = vmatpush.bf16.msra.mxu0 %v1395
        %1871 = vmatpush.bf16.msra.mxu0 %v1391
        %1872 = vmatpush.bf16.msra.mxu0 %v1387
        %1873 = vmatmul.bf16.gmra.mxu0 %v487
        %v1874 = vpop.f32.mrf.mxu0
        %v1875 = vadd.f32 %v1861, %v1874
        %v1876 = vpop.f32.mrf.mxu0
        %v1877 = vadd.f32 %v1863, %v1876
        %1878 = vdwg.mxu0
        %1879 = vmatpush.bf16.msra.mxu0 %v1447
        %1880 = vmatpush.bf16.msra.mxu0 %v1443
        %1881 = vmatpush.bf16.msra.mxu0 %v1439
        %1882 = vmatpush.bf16.msra.mxu0 %v1435
        %1883 = vmatpush.bf16.msra.mxu0 %v1431
        %1884 = vmatpush.bf16.msra.mxu0 %v1427
        %1885 = vmatpush.bf16.msra.mxu0 %v1423
        %1886 = vmatpush.bf16.msra.mxu0 %v1419
        %1887 = vmatmul.bf16.gmra.mxu0 %v488
        %v1888 = vpop.f32.mrf.mxu0
        %v1889 = vadd.f32 %v1875, %v1888
        %v1890 = vpop.f32.mrf.mxu0
        %v1891 = vadd.f32 %v1877, %v1890
        %1892 = vdwg.mxu0
        %1893 = vmatpush.bf16.msra.mxu0 %v1288
        %1894 = vmatpush.bf16.msra.mxu0 %v1284
        %1895 = vmatpush.bf16.msra.mxu0 %v1280
        %1896 = vmatpush.bf16.msra.mxu0 %v1276
        %1897 = vmatpush.bf16.msra.mxu0 %v1272
        %1898 = vmatpush.bf16.msra.mxu0 %v1268
        %1899 = vmatpush.bf16.msra.mxu0 %v1264
        %1900 = vmatpush.bf16.msra.mxu0 %v1260
        %1901 = vmatmul.bf16.gmra.mxu0 %v483
        %v1902 = vpop.f32.mrf.mxu0
        %v1903 = vadd.f32 0.0, %v1902
        %v1904 = vpop.f32.mrf.mxu0
        %v1905 = vadd.f32 0.0, %v1904
        %1906 = vdwg.mxu0
        %1907 = vmatpush.bf16.msra.mxu0 %v1320
        %1908 = vmatpush.bf16.msra.mxu0 %v1316
        %1909 = vmatpush.bf16.msra.mxu0 %v1312
        %1910 = vmatpush.bf16.msra.mxu0 %v1308
        %1911 = vmatpush.bf16.msra.mxu0 %v1304
        %1912 = vmatpush.bf16.msra.mxu0 %v1300
        %1913 = vmatpush.bf16.msra.mxu0 %v1296
        %1914 = vmatpush.bf16.msra.mxu0 %v1292
        %1915 = vmatmul.bf16.gmra.mxu0 %v484
        %v1916 = vpop.f32.mrf.mxu0
        %v1917 = vadd.f32 %v1903, %v1916
        %v1918 = vpop.f32.mrf.mxu0
        %v1919 = vadd.f32 %v1905, %v1918
        %1920 = vdwg.mxu0
        %1921 = vmatpush.bf16.msra.mxu0 %v1352
        %1922 = vmatpush.bf16.msra.mxu0 %v1348
        %1923 = vmatpush.bf16.msra.mxu0 %v1344
        %1924 = vmatpush.bf16.msra.mxu0 %v1340
        %1925 = vmatpush.bf16.msra.mxu0 %v1336
        %1926 = vmatpush.bf16.msra.mxu0 %v1332
        %1927 = vmatpush.bf16.msra.mxu0 %v1328
        %1928 = vmatpush.bf16.msra.mxu0 %v1324
        %1929 = vmatmul.bf16.gmra.mxu0 %v485
        %v1930 = vpop.f32.mrf.mxu0
        %v1931 = vadd.f32 %v1917, %v1930
        %v1932 = vpop.f32.mrf.mxu0
        %v1933 = vadd.f32 %v1919, %v1932
        %1934 = vdwg.mxu0
        %1935 = vmatpush.bf16.msra.mxu0 %v1384
        %1936 = vmatpush.bf16.msra.mxu0 %v1380
        %1937 = vmatpush.bf16.msra.mxu0 %v1376
        %1938 = vmatpush.bf16.msra.mxu0 %v1372
        %1939 = vmatpush.bf16.msra.mxu0 %v1368
        %1940 = vmatpush.bf16.msra.mxu0 %v1364
        %1941 = vmatpush.bf16.msra.mxu0 %v1360
        %1942 = vmatpush.bf16.msra.mxu0 %v1356
        %1943 = vmatmul.bf16.gmra.mxu0 %v486
        %v1944 = vpop.f32.mrf.mxu0
        %v1945 = vadd.f32 %v1931, %v1944
        %v1946 = vpop.f32.mrf.mxu0
        %v1947 = vadd.f32 %v1933, %v1946
        %1948 = vdwg.mxu0
        %1949 = vmatpush.bf16.msra.mxu0 %v1416
        %1950 = vmatpush.bf16.msra.mxu0 %v1412
        %1951 = vmatpush.bf16.msra.mxu0 %v1408
        %1952 = vmatpush.bf16.msra.mxu0 %v1404
        %1953 = vmatpush.bf16.msra.mxu0 %v1400
        %1954 = vmatpush.bf16.msra.mxu0 %v1396
        %1955 = vmatpush.bf16.msra.mxu0 %v1392
        %1956 = vmatpush.bf16.msra.mxu0 %v1388
        %1957 = vmatmul.bf16.gmra.mxu0 %v487
        %v1958 = vpop.f32.mrf.mxu0
        %v1959 = vadd.f32 %v1945, %v1958
        %v1960 = vpop.f32.mrf.mxu0
        %v1961 = vadd.f32 %v1947, %v1960
        %1962 = vdwg.mxu0
        %1963 = vmatpush.bf16.msra.mxu0 %v1448
        %1964 = vmatpush.bf16.msra.mxu0 %v1444
        %1965 = vmatpush.bf16.msra.mxu0 %v1440
        %1966 = vmatpush.bf16.msra.mxu0 %v1436
        %1967 = vmatpush.bf16.msra.mxu0 %v1432
        %1968 = vmatpush.bf16.msra.mxu0 %v1428
        %1969 = vmatpush.bf16.msra.mxu0 %v1424
        %1970 = vmatpush.bf16.msra.mxu0 %v1420
        %1971 = vmatmul.bf16.gmra.mxu0 %v488
        %v1972 = vpop.f32.mrf.mxu0
        %v1973 = vadd.f32 %v1959, %v1972
        %v1974 = vpop.f32.mrf.mxu0
        %v1975 = vadd.f32 %v1961, %v1974
        %1976 = vdwg.mxu0
        %1977 = vst [vmem:[#allocation2] sm:$0xff] %v1721
        %1978 = vst [vmem:[#allocation2 + $0x8] sm:$0xff] %v1805
        %1979 = vst [vmem:[#allocation2 + $0x10] sm:$0xff] %v1889
        %1980 = vst [vmem:[#allocation2 + $0x18] sm:$0xff] %v1973
        %1981 = vst [vmem:[#allocation2 + $0x20] sm:$0xff] %v1723
        %1982 = vst [vmem:[#allocation2 + $0x28] sm:$0xff] %v1807
        %1983 = vst [vmem:[#allocation2 + $0x30] sm:$0xff] %v1891
        %1984 = vst [vmem:[#allocation2 + $0x38] sm:$0xff] %v1975
        %v1985 = vld [vmem:[#allocation2] sm:$0xff]
        %v1986 = vld [vmem:[#allocation2 + $0x20] sm:$0xff]
        %1987 = vst [vmem:[#allocation3] sm:$0xff] %v1985
        %1988 = vst [vmem:[#allocation3 + $0x8] sm:$0xff] %v1986
        %1989 = vst [vmem:[#allocation3 + $0x10] sm:$0xff] 0.0
        %v1990 = vld [vmem:[#allocation3 + $0x1] sm:$0xff]
        %v1991 = vld [vmem:[#allocation3 + $0x9] sm:$0xff]
        %v1992 = vld [vmem:[#allocation2 + $0x8] sm:$0xff]
        %v1993 = vld [vmem:[#allocation2 + $0x28] sm:$0xff]
        %v1994 = vadd.f32 %v1990, %v1992
        %v1995 = vadd.f32 %v1991, %v1993
        %1996 = vst [vmem:[#allocation3 + $0x1] sm:$0xff] %v1994
        %1997 = vst [vmem:[#allocation3 + $0x9] sm:$0xff] %v1995
        %v1998 = vld [vmem:[#allocation3 + $0x2] sm:$0xff]
        %v1999 = vld [vmem:[#allocation3 + $0xa] sm:$0xff]
        %v2000 = vld [vmem:[#allocation2 + $0x10] sm:$0xff]
        %v2001 = vld [vmem:[#allocation2 + $0x30] sm:$0xff]
        %v2002 = vadd.f32 %v1998, %v2000
        %v2003 = vadd.f32 %v1999, %v2001
        %2004 = vst [vmem:[#allocation3 + $0x2] sm:$0xff] %v2002
        %2005 = vst [vmem:[#allocation3 + $0xa] sm:$0xff] %v2003
        %v2006 = vld [vmem:[#allocation3 + $0x3] sm:$0xff]
        %v2007 = vld [vmem:[#allocation3 + $0xb] sm:$0xff]
        %v2008 = vld [vmem:[#allocation2 + $0x18] sm:$0xff]
        %v2009 = vld [vmem:[#allocation2 + $0x38] sm:$0xff]
        %v2010 = vadd.f32 %v2006, %v2008
        %v2011 = vadd.f32 %v2007, %v2009
        %2012 = vst [vmem:[#allocation3 + $0x3] sm:$0xff] %v2010
        %2013 = vst [vmem:[#allocation3 + $0xb] sm:$0xff] %v2011
        %v2014 = vld [vmem:[#allocation3] sm:$0xff]
        %v2015 = vld [vmem:[#allocation3 + $0x8] sm:$0xff]
        %v2016 = vld [vmem:[%s3] sm:$0xff]
        %v2017 = vld [vmem:[%s3 + $0x8] sm:$0xff]
        %v2018 = vmul.f32 %v2014, %v2016
        %v2019 = vmul.f32 %v2015, %v2017
        %2020 = vst [vmem:[#allocation2] sm:$0xff] %v2018
        %2021 = vst [vmem:[#allocation2 + $0x20] sm:$0xff] %v2019
        %v2022 = vld [vmem:[#allocation3 + $0x1] sm:$0xff]
        %v2023 = vld [vmem:[#allocation3 + $0x9] sm:$0xff]
        %v2024 = vld [vmem:[%s3 + $0x1] sm:$0xff]
        %v2025 = vld [vmem:[%s3 + $0x9] sm:$0xff]
        %v2026 = vmul.f32 %v2022, %v2024
        %v2027 = vmul.f32 %v2023, %v2025
        %2028 = vst [vmem:[#allocation2 + $0x8] sm:$0xff] %v2026
        %2029 = vst [vmem:[#allocation2 + $0x28] sm:$0xff] %v2027
        %v2030 = vld [vmem:[#allocation3 + $0x2] sm:$0xff]
        %v2031 = vld [vmem:[#allocation3 + $0xa] sm:$0xff]
        %v2032 = vld [vmem:[%s3 + $0x2] sm:$0xff]
        %v2033 = vld [vmem:[%s3 + $0xa] sm:$0xff]
        %v2034 = vmul.f32 %v2030, %v2032
        %v2035 = vmul.f32 %v2031, %v2033
        %2036 = vst [vmem:[#allocation2 + $0x10] sm:$0xff] %v2034
        %2037 = vst [vmem:[#allocation2 + $0x30] sm:$0xff] %v2035
        %v2038 = vld [vmem:[#allocation3 + $0x3] sm:$0xff]
        %v2039 = vld [vmem:[#allocation3 + $0xb] sm:$0xff]
        %v2040 = vld [vmem:[%s3 + $0x3] sm:$0xff]
        %v2041 = vld [vmem:[%s3 + $0xb] sm:$0xff]
        %v2042 = vmul.f32 %v2038, %v2040
        %v2043 = vmul.f32 %v2039, %v2041
        %2044 = vst [vmem:[#allocation2 + $0x18] sm:$0xff] %v2042
        %2045 = vst [vmem:[#allocation2 + $0x38] sm:$0xff] %v2043
        %v2046 = vld [vmem:[#allocation2] sm:$0xff]
        %v2047 = vld [vmem:[#allocation2 + $0x8] sm:$0xff]
        %v2048 = vld [vmem:[#allocation2 + $0x10] sm:$0xff]
        %v2049 = vld [vmem:[#allocation2 + $0x18] sm:$0xff]
        %v2050 = vld [vmem:[#allocation2 + $0x20] sm:$0xff]
        %v2051 = vld [vmem:[#allocation2 + $0x28] sm:$0xff]
        %v2052 = vld [vmem:[#allocation2 + $0x30] sm:$0xff]
        %v2053 = vld [vmem:[#allocation2 + $0x38] sm:$0xff]
        %v2054 = vpack.c.bf16 %v2050, %v2046
        %v2055 = vpack.c.bf16 %v2051, %v2047
        %v2056 = vpack.c.bf16 %v2052, %v2048
        %v2057 = vpack.c.bf16 %v2053, %v2049
        %v2058 = vld [vmem:[#allocation6] sm:$0xff]
        %v2059 = vld [vmem:[#allocation6 + $0x8] sm:$0xff]
        %v2060 = vld [vmem:[#allocation6 + $0x10] sm:$0xff]
        %v2061 = vld [vmem:[#allocation6 + $0x18] sm:$0xff]
        %v2062 = vld [vmem:[#allocation6 + $0x20] sm:$0xff]
        %v2063 = vld [vmem:[#allocation6 + $0x28] sm:$0xff]
        %v2064 = vld [vmem:[#allocation6 + $0x30] sm:$0xff]
        %v2065 = vld [vmem:[#allocation6 + $0x38] sm:$0xff]
        %v2066 = vld [vmem:[#allocation6 + $0x40] sm:$0xff]
        %v2067 = vld [vmem:[#allocation6 + $0x48] sm:$0xff]
        %v2068 = vld [vmem:[#allocation6 + $0x50] sm:$0xff]
        %v2069 = vld [vmem:[#allocation6 + $0x58] sm:$0xff]
        %v2070 = vld [vmem:[#allocation6 + $0x60] sm:$0xff]
        %v2071 = vld [vmem:[#allocation6 + $0x68] sm:$0xff]
        %v2072 = vld [vmem:[#allocation6 + $0x70] sm:$0xff]
        %v2073 = vld [vmem:[#allocation6 + $0x78] sm:$0xff]
        %v2074 = vld [vmem:[#allocation6 + $0x80] sm:$0xff]
        %v2075 = vld [vmem:[#allocation6 + $0x88] sm:$0xff]
        %v2076 = vld [vmem:[#allocation6 + $0x90] sm:$0xff]
        %v2077 = vld [vmem:[#allocation6 + $0x98] sm:$0xff]
        %v2078 = vld [vmem:[#allocation6 + $0xa0] sm:$0xff]
        %v2079 = vld [vmem:[#allocation6 + $0xa8] sm:$0xff]
        %v2080 = vld [vmem:[#allocation6 + $0xb0] sm:$0xff]
        %v2081 = vld [vmem:[#allocation6 + $0xb8] sm:$0xff]
        %v2082 = vld [vmem:[#allocation6 + $0xc0] sm:$0xff]
        %v2083 = vld [vmem:[#allocation6 + $0xc8] sm:$0xff]
        %v2084 = vld [vmem:[#allocation6 + $0xd0] sm:$0xff]
        %v2085 = vld [vmem:[#allocation6 + $0xd8] sm:$0xff]
        %v2086 = vld [vmem:[#allocation6 + $0xe0] sm:$0xff]
        %v2087 = vld [vmem:[#allocation6 + $0xe8] sm:$0xff]
        %v2088 = vld [vmem:[#allocation6 + $0xf0] sm:$0xff]
        %v2089 = vld [vmem:[#allocation6 + $0xf8] sm:$0xff]
        %v2090 = vld [vmem:[#allocation6 + $0x100] sm:$0xff]
        %v2091 = vld [vmem:[#allocation6 + $0x108] sm:$0xff]
        %v2092 = vld [vmem:[#allocation6 + $0x110] sm:$0xff]
        %v2093 = vld [vmem:[#allocation6 + $0x118] sm:$0xff]
        %v2094 = vld [vmem:[#allocation6 + $0x120] sm:$0xff]
        %v2095 = vld [vmem:[#allocation6 + $0x128] sm:$0xff]
        %v2096 = vld [vmem:[#allocation6 + $0x130] sm:$0xff]
        %v2097 = vld [vmem:[#allocation6 + $0x138] sm:$0xff]
        %v2098 = vld [vmem:[#allocation6 + $0x140] sm:$0xff]
        %v2099 = vld [vmem:[#allocation6 + $0x148] sm:$0xff]
        %v2100 = vld [vmem:[#allocation6 + $0x150] sm:$0xff]
        %v2101 = vld [vmem:[#allocation6 + $0x158] sm:$0xff]
        %v2102 = vld [vmem:[#allocation6 + $0x160] sm:$0xff]
        %v2103 = vld [vmem:[#allocation6 + $0x168] sm:$0xff]
        %v2104 = vld [vmem:[#allocation6 + $0x170] sm:$0xff]
        %v2105 = vld [vmem:[#allocation6 + $0x178] sm:$0xff]
        %v2106 = vld [vmem:[#allocation6 + $0x180] sm:$0xff]
        %v2107 = vld [vmem:[#allocation6 + $0x188] sm:$0xff]
        %v2108 = vld [vmem:[#allocation6 + $0x190] sm:$0xff]
        %v2109 = vld [vmem:[#allocation6 + $0x198] sm:$0xff]
        %v2110 = vld [vmem:[#allocation6 + $0x1a0] sm:$0xff]
        %v2111 = vld [vmem:[#allocation6 + $0x1a8] sm:$0xff]
        %v2112 = vld [vmem:[#allocation6 + $0x1b0] sm:$0xff]
        %v2113 = vld [vmem:[#allocation6 + $0x1b8] sm:$0xff]
        %v2114 = vld [vmem:[#allocation6 + $0x1c0] sm:$0xff]
        %v2115 = vld [vmem:[#allocation6 + $0x1c8] sm:$0xff]
        %v2116 = vld [vmem:[#allocation6 + $0x1d0] sm:$0xff]
        %v2117 = vld [vmem:[#allocation6 + $0x1d8] sm:$0xff]
        %v2118 = vld [vmem:[#allocation6 + $0x1e0] sm:$0xff]
        %v2119 = vld [vmem:[#allocation6 + $0x1e8] sm:$0xff]
        %v2120 = vld [vmem:[#allocation6 + $0x1f0] sm:$0xff]
        %v2121 = vld [vmem:[#allocation6 + $0x1f8] sm:$0xff]
        %v2122 = vld [vmem:[#allocation6 + $0x200] sm:$0xff]
        %v2123 = vld [vmem:[#allocation6 + $0x208] sm:$0xff]
        %v2124 = vld [vmem:[#allocation6 + $0x210] sm:$0xff]
        %v2125 = vld [vmem:[#allocation6 + $0x218] sm:$0xff]
        %v2126 = vld [vmem:[#allocation6 + $0x220] sm:$0xff]
        %v2127 = vld [vmem:[#allocation6 + $0x228] sm:$0xff]
        %v2128 = vld [vmem:[#allocation6 + $0x230] sm:$0xff]
        %v2129 = vld [vmem:[#allocation6 + $0x238] sm:$0xff]
        %v2130 = vld [vmem:[#allocation6 + $0x240] sm:$0xff]
        %v2131 = vld [vmem:[#allocation6 + $0x248] sm:$0xff]
        %v2132 = vld [vmem:[#allocation6 + $0x250] sm:$0xff]
        %v2133 = vld [vmem:[#allocation6 + $0x258] sm:$0xff]
        %v2134 = vld [vmem:[#allocation6 + $0x260] sm:$0xff]
        %v2135 = vld [vmem:[#allocation6 + $0x268] sm:$0xff]
        %v2136 = vld [vmem:[#allocation6 + $0x270] sm:$0xff]
        %v2137 = vld [vmem:[#allocation6 + $0x278] sm:$0xff]
        %v2138 = vld [vmem:[#allocation6 + $0x280] sm:$0xff]
        %v2139 = vld [vmem:[#allocation6 + $0x288] sm:$0xff]
        %v2140 = vld [vmem:[#allocation6 + $0x290] sm:$0xff]
        %v2141 = vld [vmem:[#allocation6 + $0x298] sm:$0xff]
        %v2142 = vld [vmem:[#allocation6 + $0x2a0] sm:$0xff]
        %v2143 = vld [vmem:[#allocation6 + $0x2a8] sm:$0xff]
        %v2144 = vld [vmem:[#allocation6 + $0x2b0] sm:$0xff]
        %v2145 = vld [vmem:[#allocation6 + $0x2b8] sm:$0xff]
        %v2146 = vld [vmem:[#allocation6 + $0x2c0] sm:$0xff]
        %v2147 = vld [vmem:[#allocation6 + $0x2c8] sm:$0xff]
        %v2148 = vld [vmem:[#allocation6 + $0x2d0] sm:$0xff]
        %v2149 = vld [vmem:[#allocation6 + $0x2d8] sm:$0xff]
        %v2150 = vld [vmem:[#allocation6 + $0x2e0] sm:$0xff]
        %v2151 = vld [vmem:[#allocation6 + $0x2e8] sm:$0xff]
        %v2152 = vld [vmem:[#allocation6 + $0x2f0] sm:$0xff]
        %v2153 = vld [vmem:[#allocation6 + $0x2f8] sm:$0xff]
        %v2154 = vld [vmem:[#allocation6 + $0x300] sm:$0xff]
        %v2155 = vld [vmem:[#allocation6 + $0x308] sm:$0xff]
        %v2156 = vld [vmem:[#allocation6 + $0x310] sm:$0xff]
        %v2157 = vld [vmem:[#allocation6 + $0x318] sm:$0xff]
        %v2158 = vld [vmem:[#allocation6 + $0x320] sm:$0xff]
        %v2159 = vld [vmem:[#allocation6 + $0x328] sm:$0xff]
        %v2160 = vld [vmem:[#allocation6 + $0x330] sm:$0xff]
        %v2161 = vld [vmem:[#allocation6 + $0x338] sm:$0xff]
        %v2162 = vld [vmem:[#allocation6 + $0x340] sm:$0xff]
        %v2163 = vld [vmem:[#allocation6 + $0x348] sm:$0xff]
        %v2164 = vld [vmem:[#allocation6 + $0x350] sm:$0xff]
        %v2165 = vld [vmem:[#allocation6 + $0x358] sm:$0xff]
        %v2166 = vld [vmem:[#allocation6 + $0x360] sm:$0xff]
        %v2167 = vld [vmem:[#allocation6 + $0x368] sm:$0xff]
        %v2168 = vld [vmem:[#allocation6 + $0x370] sm:$0xff]
        %v2169 = vld [vmem:[#allocation6 + $0x378] sm:$0xff]
        %v2170 = vld [vmem:[#allocation6 + $0x380] sm:$0xff]
        %v2171 = vld [vmem:[#allocation6 + $0x388] sm:$0xff]
        %v2172 = vld [vmem:[#allocation6 + $0x390] sm:$0xff]
        %v2173 = vld [vmem:[#allocation6 + $0x398] sm:$0xff]
        %v2174 = vld [vmem:[#allocation6 + $0x3a0] sm:$0xff]
        %v2175 = vld [vmem:[#allocation6 + $0x3a8] sm:$0xff]
        %v2176 = vld [vmem:[#allocation6 + $0x3b0] sm:$0xff]
        %v2177 = vld [vmem:[#allocation6 + $0x3b8] sm:$0xff]
        %v2178 = vld [vmem:[#allocation6 + $0x3c0] sm:$0xff]
        %v2179 = vld [vmem:[#allocation6 + $0x3c8] sm:$0xff]
        %v2180 = vld [vmem:[#allocation6 + $0x3d0] sm:$0xff]
        %v2181 = vld [vmem:[#allocation6 + $0x3d8] sm:$0xff]
        %v2182 = vld [vmem:[#allocation6 + $0x3e0] sm:$0xff]
        %v2183 = vld [vmem:[#allocation6 + $0x3e8] sm:$0xff]
        %v2184 = vld [vmem:[#allocation6 + $0x3f0] sm:$0xff]
        %v2185 = vld [vmem:[#allocation6 + $0x3f8] sm:$0xff]
        %v2186 = vld [vmem:[#allocation6 + $0x400] sm:$0xff]
        %v2187 = vld [vmem:[#allocation6 + $0x408] sm:$0xff]
        %v2188 = vld [vmem:[#allocation6 + $0x410] sm:$0xff]
        %v2189 = vld [vmem:[#allocation6 + $0x418] sm:$0xff]
        %v2190 = vld [vmem:[#allocation6 + $0x420] sm:$0xff]
        %v2191 = vld [vmem:[#allocation6 + $0x428] sm:$0xff]
        %v2192 = vld [vmem:[#allocation6 + $0x430] sm:$0xff]
        %v2193 = vld [vmem:[#allocation6 + $0x438] sm:$0xff]
        %v2194 = vld [vmem:[#allocation6 + $0x440] sm:$0xff]
        %v2195 = vld [vmem:[#allocation6 + $0x448] sm:$0xff]
        %v2196 = vld [vmem:[#allocation6 + $0x450] sm:$0xff]
        %v2197 = vld [vmem:[#allocation6 + $0x458] sm:$0xff]
        %v2198 = vld [vmem:[#allocation6 + $0x460] sm:$0xff]
        %v2199 = vld [vmem:[#allocation6 + $0x468] sm:$0xff]
        %v2200 = vld [vmem:[#allocation6 + $0x470] sm:$0xff]
        %v2201 = vld [vmem:[#allocation6 + $0x478] sm:$0xff]
        %v2202 = vld [vmem:[#allocation6 + $0x480] sm:$0xff]
        %v2203 = vld [vmem:[#allocation6 + $0x488] sm:$0xff]
        %v2204 = vld [vmem:[#allocation6 + $0x490] sm:$0xff]
        %v2205 = vld [vmem:[#allocation6 + $0x498] sm:$0xff]
        %v2206 = vld [vmem:[#allocation6 + $0x4a0] sm:$0xff]
        %v2207 = vld [vmem:[#allocation6 + $0x4a8] sm:$0xff]
        %v2208 = vld [vmem:[#allocation6 + $0x4b0] sm:$0xff]
        %v2209 = vld [vmem:[#allocation6 + $0x4b8] sm:$0xff]
        %v2210 = vld [vmem:[#allocation6 + $0x4c0] sm:$0xff]
        %v2211 = vld [vmem:[#allocation6 + $0x4c8] sm:$0xff]
        %v2212 = vld [vmem:[#allocation6 + $0x4d0] sm:$0xff]
        %v2213 = vld [vmem:[#allocation6 + $0x4d8] sm:$0xff]
        %v2214 = vld [vmem:[#allocation6 + $0x4e0] sm:$0xff]
        %v2215 = vld [vmem:[#allocation6 + $0x4e8] sm:$0xff]
        %v2216 = vld [vmem:[#allocation6 + $0x4f0] sm:$0xff]
        %v2217 = vld [vmem:[#allocation6 + $0x4f8] sm:$0xff]
        %v2218 = vld [vmem:[#allocation6 + $0x500] sm:$0xff]
        %v2219 = vld [vmem:[#allocation6 + $0x508] sm:$0xff]
        %v2220 = vld [vmem:[#allocation6 + $0x510] sm:$0xff]
        %v2221 = vld [vmem:[#allocation6 + $0x518] sm:$0xff]
        %v2222 = vld [vmem:[#allocation6 + $0x520] sm:$0xff]
        %v2223 = vld [vmem:[#allocation6 + $0x528] sm:$0xff]
        %v2224 = vld [vmem:[#allocation6 + $0x530] sm:$0xff]
        %v2225 = vld [vmem:[#allocation6 + $0x538] sm:$0xff]
        %v2226 = vld [vmem:[#allocation6 + $0x540] sm:$0xff]
        %v2227 = vld [vmem:[#allocation6 + $0x548] sm:$0xff]
        %v2228 = vld [vmem:[#allocation6 + $0x550] sm:$0xff]
        %v2229 = vld [vmem:[#allocation6 + $0x558] sm:$0xff]
        %v2230 = vld [vmem:[#allocation6 + $0x560] sm:$0xff]
        %v2231 = vld [vmem:[#allocation6 + $0x568] sm:$0xff]
        %v2232 = vld [vmem:[#allocation6 + $0x570] sm:$0xff]
        %v2233 = vld [vmem:[#allocation6 + $0x578] sm:$0xff]
        %v2234 = vld [vmem:[#allocation6 + $0x580] sm:$0xff]
        %v2235 = vld [vmem:[#allocation6 + $0x588] sm:$0xff]
        %v2236 = vld [vmem:[#allocation6 + $0x590] sm:$0xff]
        %v2237 = vld [vmem:[#allocation6 + $0x598] sm:$0xff]
        %v2238 = vld [vmem:[#allocation6 + $0x5a0] sm:$0xff]
        %v2239 = vld [vmem:[#allocation6 + $0x5a8] sm:$0xff]
        %v2240 = vld [vmem:[#allocation6 + $0x5b0] sm:$0xff]
        %v2241 = vld [vmem:[#allocation6 + $0x5b8] sm:$0xff]
        %v2242 = vld [vmem:[#allocation6 + $0x5c0] sm:$0xff]
        %v2243 = vld [vmem:[#allocation6 + $0x5c8] sm:$0xff]
        %v2244 = vld [vmem:[#allocation6 + $0x5d0] sm:$0xff]
        %v2245 = vld [vmem:[#allocation6 + $0x5d8] sm:$0xff]
        %v2246 = vld [vmem:[#allocation6 + $0x5e0] sm:$0xff]
        %v2247 = vld [vmem:[#allocation6 + $0x5e8] sm:$0xff]
        %v2248 = vld [vmem:[#allocation6 + $0x5f0] sm:$0xff]
        %v2249 = vld [vmem:[#allocation6 + $0x5f8] sm:$0xff]
        %v2442 = vunpack.c.l.b16 %v2058
        %v2443 = vunpack.c.h.b16 %v2058
        %v2444 = vunpack.c.l.b16 %v2059
        %v2445 = vunpack.c.h.b16 %v2059
        %v2446 = vunpack.c.l.b16 %v2060
        %v2447 = vunpack.c.h.b16 %v2060
        %v2448 = vunpack.c.l.b16 %v2061
        %v2449 = vunpack.c.h.b16 %v2061
        %v2450 = vunpack.c.l.b16 %v2062
        %v2451 = vunpack.c.h.b16 %v2062
        %v2452 = vunpack.c.l.b16 %v2063
        %v2453 = vunpack.c.h.b16 %v2063
        %v2454 = vunpack.c.l.b16 %v2064
        %v2455 = vunpack.c.h.b16 %v2064
        %v2456 = vunpack.c.l.b16 %v2065
        %v2457 = vunpack.c.h.b16 %v2065
        %v2458 = vunpack.c.l.b16 %v2066
        %v2459 = vunpack.c.h.b16 %v2066
        %v2460 = vunpack.c.l.b16 %v2067
        %v2461 = vunpack.c.h.b16 %v2067
        %v2462 = vunpack.c.l.b16 %v2068
        %v2463 = vunpack.c.h.b16 %v2068
        %v2464 = vunpack.c.l.b16 %v2069
        %v2465 = vunpack.c.h.b16 %v2069
        %v2466 = vunpack.c.l.b16 %v2070
        %v2467 = vunpack.c.h.b16 %v2070
        %v2468 = vunpack.c.l.b16 %v2071
        %v2469 = vunpack.c.h.b16 %v2071
        %v2470 = vunpack.c.l.b16 %v2072
        %v2471 = vunpack.c.h.b16 %v2072
        %v2472 = vunpack.c.l.b16 %v2073
        %v2473 = vunpack.c.h.b16 %v2073
        %v2474 = vunpack.c.l.b16 %v2074
        %v2475 = vunpack.c.h.b16 %v2074
        %v2476 = vunpack.c.l.b16 %v2075
        %v2477 = vunpack.c.h.b16 %v2075
        %v2478 = vunpack.c.l.b16 %v2076
        %v2479 = vunpack.c.h.b16 %v2076
        %v2480 = vunpack.c.l.b16 %v2077
        %v2481 = vunpack.c.h.b16 %v2077
        %v2482 = vunpack.c.l.b16 %v2078
        %v2483 = vunpack.c.h.b16 %v2078
        %v2484 = vunpack.c.l.b16 %v2079
        %v2485 = vunpack.c.h.b16 %v2079
        %v2486 = vunpack.c.l.b16 %v2080
        %v2487 = vunpack.c.h.b16 %v2080
        %v2488 = vunpack.c.l.b16 %v2081
        %v2489 = vunpack.c.h.b16 %v2081
        %v2490 = vunpack.c.l.b16 %v2082
        %v2491 = vunpack.c.h.b16 %v2082
        %v2492 = vunpack.c.l.b16 %v2083
        %v2493 = vunpack.c.h.b16 %v2083
        %v2494 = vunpack.c.l.b16 %v2084
        %v2495 = vunpack.c.h.b16 %v2084
        %v2496 = vunpack.c.l.b16 %v2085
        %v2497 = vunpack.c.h.b16 %v2085
        %v2498 = vunpack.c.l.b16 %v2086
        %v2499 = vunpack.c.h.b16 %v2086
        %v2500 = vunpack.c.l.b16 %v2087
        %v2501 = vunpack.c.h.b16 %v2087
        %v2502 = vunpack.c.l.b16 %v2088
        %v2503 = vunpack.c.h.b16 %v2088
        %v2504 = vunpack.c.l.b16 %v2089
        %v2505 = vunpack.c.h.b16 %v2089
        %v2506 = vunpack.c.l.b16 %v2090
        %v2507 = vunpack.c.h.b16 %v2090
        %v2508 = vunpack.c.l.b16 %v2091
        %v2509 = vunpack.c.h.b16 %v2091
        %v2510 = vunpack.c.l.b16 %v2092
        %v2511 = vunpack.c.h.b16 %v2092
        %v2512 = vunpack.c.l.b16 %v2093
        %v2513 = vunpack.c.h.b16 %v2093
        %v2514 = vunpack.c.l.b16 %v2094
        %v2515 = vunpack.c.h.b16 %v2094
        %v2516 = vunpack.c.l.b16 %v2095
        %v2517 = vunpack.c.h.b16 %v2095
        %v2518 = vunpack.c.l.b16 %v2096
        %v2519 = vunpack.c.h.b16 %v2096
        %v2520 = vunpack.c.l.b16 %v2097
        %v2521 = vunpack.c.h.b16 %v2097
        %v2522 = vunpack.c.l.b16 %v2098
        %v2523 = vunpack.c.h.b16 %v2098
        %v2524 = vunpack.c.l.b16 %v2099
        %v2525 = vunpack.c.h.b16 %v2099
        %v2526 = vunpack.c.l.b16 %v2100
        %v2527 = vunpack.c.h.b16 %v2100
        %v2528 = vunpack.c.l.b16 %v2101
        %v2529 = vunpack.c.h.b16 %v2101
        %v2530 = vunpack.c.l.b16 %v2102
        %v2531 = vunpack.c.h.b16 %v2102
        %v2532 = vunpack.c.l.b16 %v2103
        %v2533 = vunpack.c.h.b16 %v2103
        %v2534 = vunpack.c.l.b16 %v2104
        %v2535 = vunpack.c.h.b16 %v2104
        %v2536 = vunpack.c.l.b16 %v2105
        %v2537 = vunpack.c.h.b16 %v2105
        %v2538 = vunpack.c.l.b16 %v2106
        %v2539 = vunpack.c.h.b16 %v2106
        %v2540 = vunpack.c.l.b16 %v2107
        %v2541 = vunpack.c.h.b16 %v2107
        %v2542 = vunpack.c.l.b16 %v2108
        %v2543 = vunpack.c.h.b16 %v2108
        %v2544 = vunpack.c.l.b16 %v2109
        %v2545 = vunpack.c.h.b16 %v2109
        %v2546 = vunpack.c.l.b16 %v2110
        %v2547 = vunpack.c.h.b16 %v2110
        %v2548 = vunpack.c.l.b16 %v2111
        %v2549 = vunpack.c.h.b16 %v2111
        %v2550 = vunpack.c.l.b16 %v2112
        %v2551 = vunpack.c.h.b16 %v2112
        %v2552 = vunpack.c.l.b16 %v2113
        %v2553 = vunpack.c.h.b16 %v2113
        %v2554 = vunpack.c.l.b16 %v2114
        %v2555 = vunpack.c.h.b16 %v2114
        %v2556 = vunpack.c.l.b16 %v2115
        %v2557 = vunpack.c.h.b16 %v2115
        %v2558 = vunpack.c.l.b16 %v2116
        %v2559 = vunpack.c.h.b16 %v2116
        %v2560 = vunpack.c.l.b16 %v2117
        %v2561 = vunpack.c.h.b16 %v2117
        %v2562 = vunpack.c.l.b16 %v2118
        %v2563 = vunpack.c.h.b16 %v2118
        %v2564 = vunpack.c.l.b16 %v2119
        %v2565 = vunpack.c.h.b16 %v2119
        %v2566 = vunpack.c.l.b16 %v2120
        %v2567 = vunpack.c.h.b16 %v2120
        %v2568 = vunpack.c.l.b16 %v2121
        %v2569 = vunpack.c.h.b16 %v2121
        %v2570 = vunpack.c.l.b16 %v2122
        %v2571 = vunpack.c.h.b16 %v2122
        %v2572 = vunpack.c.l.b16 %v2123
        %v2573 = vunpack.c.h.b16 %v2123
        %v2574 = vunpack.c.l.b16 %v2124
        %v2575 = vunpack.c.h.b16 %v2124
        %v2576 = vunpack.c.l.b16 %v2125
        %v2577 = vunpack.c.h.b16 %v2125
        %v2578 = vunpack.c.l.b16 %v2126
        %v2579 = vunpack.c.h.b16 %v2126
        %v2580 = vunpack.c.l.b16 %v2127
        %v2581 = vunpack.c.h.b16 %v2127
        %v2582 = vunpack.c.l.b16 %v2128
        %v2583 = vunpack.c.h.b16 %v2128
        %v2584 = vunpack.c.l.b16 %v2129
        %v2585 = vunpack.c.h.b16 %v2129
        %v2586 = vunpack.c.l.b16 %v2130
        %v2587 = vunpack.c.h.b16 %v2130
        %v2588 = vunpack.c.l.b16 %v2131
        %v2589 = vunpack.c.h.b16 %v2131
        %v2590 = vunpack.c.l.b16 %v2132
        %v2591 = vunpack.c.h.b16 %v2132
        %v2592 = vunpack.c.l.b16 %v2133
        %v2593 = vunpack.c.h.b16 %v2133
        %v2594 = vunpack.c.l.b16 %v2134
        %v2595 = vunpack.c.h.b16 %v2134
        %v2596 = vunpack.c.l.b16 %v2135
        %v2597 = vunpack.c.h.b16 %v2135
        %v2598 = vunpack.c.l.b16 %v2136
        %v2599 = vunpack.c.h.b16 %v2136
        %v2600 = vunpack.c.l.b16 %v2137
        %v2601 = vunpack.c.h.b16 %v2137
        %v2602 = vunpack.c.l.b16 %v2138
        %v2603 = vunpack.c.h.b16 %v2138
        %v2604 = vunpack.c.l.b16 %v2139
        %v2605 = vunpack.c.h.b16 %v2139
        %v2606 = vunpack.c.l.b16 %v2140
        %v2607 = vunpack.c.h.b16 %v2140
        %v2608 = vunpack.c.l.b16 %v2141
        %v2609 = vunpack.c.h.b16 %v2141
        %v2610 = vunpack.c.l.b16 %v2142
        %v2611 = vunpack.c.h.b16 %v2142
        %v2612 = vunpack.c.l.b16 %v2143
        %v2613 = vunpack.c.h.b16 %v2143
        %v2614 = vunpack.c.l.b16 %v2144
        %v2615 = vunpack.c.h.b16 %v2144
        %v2616 = vunpack.c.l.b16 %v2145
        %v2617 = vunpack.c.h.b16 %v2145
        %v2618 = vunpack.c.l.b16 %v2146
        %v2619 = vunpack.c.h.b16 %v2146
        %v2620 = vunpack.c.l.b16 %v2147
        %v2621 = vunpack.c.h.b16 %v2147
        %v2622 = vunpack.c.l.b16 %v2148
        %v2623 = vunpack.c.h.b16 %v2148
        %v2624 = vunpack.c.l.b16 %v2149
        %v2625 = vunpack.c.h.b16 %v2149
        %v2626 = vunpack.c.l.b16 %v2150
        %v2627 = vunpack.c.h.b16 %v2150
        %v2628 = vunpack.c.l.b16 %v2151
        %v2629 = vunpack.c.h.b16 %v2151
        %v2630 = vunpack.c.l.b16 %v2152
        %v2631 = vunpack.c.h.b16 %v2152
        %v2632 = vunpack.c.l.b16 %v2153
        %v2633 = vunpack.c.h.b16 %v2153
        %v2634 = vunpack.c.l.b16 %v2154
        %v2635 = vunpack.c.h.b16 %v2154
        %v2636 = vunpack.c.l.b16 %v2155
        %v2637 = vunpack.c.h.b16 %v2155
        %v2638 = vunpack.c.l.b16 %v2156
        %v2639 = vunpack.c.h.b16 %v2156
        %v2640 = vunpack.c.l.b16 %v2157
        %v2641 = vunpack.c.h.b16 %v2157
        %v2642 = vunpack.c.l.b16 %v2158
        %v2643 = vunpack.c.h.b16 %v2158
        %v2644 = vunpack.c.l.b16 %v2159
        %v2645 = vunpack.c.h.b16 %v2159
        %v2646 = vunpack.c.l.b16 %v2160
        %v2647 = vunpack.c.h.b16 %v2160
        %v2648 = vunpack.c.l.b16 %v2161
        %v2649 = vunpack.c.h.b16 %v2161
        %v2650 = vunpack.c.l.b16 %v2162
        %v2651 = vunpack.c.h.b16 %v2162
        %v2652 = vunpack.c.l.b16 %v2163
        %v2653 = vunpack.c.h.b16 %v2163
        %v2654 = vunpack.c.l.b16 %v2164
        %v2655 = vunpack.c.h.b16 %v2164
        %v2656 = vunpack.c.l.b16 %v2165
        %v2657 = vunpack.c.h.b16 %v2165
        %v2658 = vunpack.c.l.b16 %v2166
        %v2659 = vunpack.c.h.b16 %v2166
        %v2660 = vunpack.c.l.b16 %v2167
        %v2661 = vunpack.c.h.b16 %v2167
        %v2662 = vunpack.c.l.b16 %v2168
        %v2663 = vunpack.c.h.b16 %v2168
        %v2664 = vunpack.c.l.b16 %v2169
        %v2665 = vunpack.c.h.b16 %v2169
        %v2666 = vunpack.c.l.b16 %v2170
        %v2667 = vunpack.c.h.b16 %v2170
        %v2668 = vunpack.c.l.b16 %v2171
        %v2669 = vunpack.c.h.b16 %v2171
        %v2670 = vunpack.c.l.b16 %v2172
        %v2671 = vunpack.c.h.b16 %v2172
        %v2672 = vunpack.c.l.b16 %v2173
        %v2673 = vunpack.c.h.b16 %v2173
        %v2674 = vunpack.c.l.b16 %v2174
        %v2675 = vunpack.c.h.b16 %v2174
        %v2676 = vunpack.c.l.b16 %v2175
        %v2677 = vunpack.c.h.b16 %v2175
        %v2678 = vunpack.c.l.b16 %v2176
        %v2679 = vunpack.c.h.b16 %v2176
        %v2680 = vunpack.c.l.b16 %v2177
        %v2681 = vunpack.c.h.b16 %v2177
        %v2682 = vunpack.c.l.b16 %v2178
        %v2683 = vunpack.c.h.b16 %v2178
        %v2684 = vunpack.c.l.b16 %v2179
        %v2685 = vunpack.c.h.b16 %v2179
        %v2686 = vunpack.c.l.b16 %v2180
        %v2687 = vunpack.c.h.b16 %v2180
        %v2688 = vunpack.c.l.b16 %v2181
        %v2689 = vunpack.c.h.b16 %v2181
        %v2690 = vunpack.c.l.b16 %v2182
        %v2691 = vunpack.c.h.b16 %v2182
        %v2692 = vunpack.c.l.b16 %v2183
        %v2693 = vunpack.c.h.b16 %v2183
        %v2694 = vunpack.c.l.b16 %v2184
        %v2695 = vunpack.c.h.b16 %v2184
        %v2696 = vunpack.c.l.b16 %v2185
        %v2697 = vunpack.c.h.b16 %v2185
        %v2698 = vunpack.c.l.b16 %v2186
        %v2699 = vunpack.c.h.b16 %v2186
        %v2700 = vunpack.c.l.b16 %v2187
        %v2701 = vunpack.c.h.b16 %v2187
        %v2702 = vunpack.c.l.b16 %v2188
        %v2703 = vunpack.c.h.b16 %v2188
        %v2704 = vunpack.c.l.b16 %v2189
        %v2705 = vunpack.c.h.b16 %v2189
        %v2706 = vunpack.c.l.b16 %v2190
        %v2707 = vunpack.c.h.b16 %v2190
        %v2708 = vunpack.c.l.b16 %v2191
        %v2709 = vunpack.c.h.b16 %v2191
        %v2710 = vunpack.c.l.b16 %v2192
        %v2711 = vunpack.c.h.b16 %v2192
        %v2712 = vunpack.c.l.b16 %v2193
        %v2713 = vunpack.c.h.b16 %v2193
        %v2714 = vunpack.c.l.b16 %v2194
        %v2715 = vunpack.c.h.b16 %v2194
        %v2716 = vunpack.c.l.b16 %v2195
        %v2717 = vunpack.c.h.b16 %v2195
        %v2718 = vunpack.c.l.b16 %v2196
        %v2719 = vunpack.c.h.b16 %v2196
        %v2720 = vunpack.c.l.b16 %v2197
        %v2721 = vunpack.c.h.b16 %v2197
        %v2722 = vunpack.c.l.b16 %v2198
        %v2723 = vunpack.c.h.b16 %v2198
        %v2724 = vunpack.c.l.b16 %v2199
        %v2725 = vunpack.c.h.b16 %v2199
        %v2726 = vunpack.c.l.b16 %v2200
        %v2727 = vunpack.c.h.b16 %v2200
        %v2728 = vunpack.c.l.b16 %v2201
        %v2729 = vunpack.c.h.b16 %v2201
        %v2730 = vunpack.c.l.b16 %v2202
        %v2731 = vunpack.c.h.b16 %v2202
        %v2732 = vunpack.c.l.b16 %v2203
        %v2733 = vunpack.c.h.b16 %v2203
        %v2734 = vunpack.c.l.b16 %v2204
        %v2735 = vunpack.c.h.b16 %v2204
        %v2736 = vunpack.c.l.b16 %v2205
        %v2737 = vunpack.c.h.b16 %v2205
        %v2738 = vunpack.c.l.b16 %v2206
        %v2739 = vunpack.c.h.b16 %v2206
        %v2740 = vunpack.c.l.b16 %v2207
        %v2741 = vunpack.c.h.b16 %v2207
        %v2742 = vunpack.c.l.b16 %v2208
        %v2743 = vunpack.c.h.b16 %v2208
        %v2744 = vunpack.c.l.b16 %v2209
        %v2745 = vunpack.c.h.b16 %v2209
        %v2746 = vunpack.c.l.b16 %v2210
        %v2747 = vunpack.c.h.b16 %v2210
        %v2748 = vunpack.c.l.b16 %v2211
        %v2749 = vunpack.c.h.b16 %v2211
        %v2750 = vunpack.c.l.b16 %v2212
        %v2751 = vunpack.c.h.b16 %v2212
        %v2752 = vunpack.c.l.b16 %v2213
        %v2753 = vunpack.c.h.b16 %v2213
        %v2754 = vunpack.c.l.b16 %v2214
        %v2755 = vunpack.c.h.b16 %v2214
        %v2756 = vunpack.c.l.b16 %v2215
        %v2757 = vunpack.c.h.b16 %v2215
        %v2758 = vunpack.c.l.b16 %v2216
        %v2759 = vunpack.c.h.b16 %v2216
        %v2760 = vunpack.c.l.b16 %v2217
        %v2761 = vunpack.c.h.b16 %v2217
        %v2762 = vunpack.c.l.b16 %v2218
        %v2763 = vunpack.c.h.b16 %v2218
        %v2764 = vunpack.c.l.b16 %v2219
        %v2765 = vunpack.c.h.b16 %v2219
        %v2766 = vunpack.c.l.b16 %v2220
        %v2767 = vunpack.c.h.b16 %v2220
        %v2768 = vunpack.c.l.b16 %v2221
        %v2769 = vunpack.c.h.b16 %v2221
        %v2770 = vunpack.c.l.b16 %v2222
        %v2771 = vunpack.c.h.b16 %v2222
        %v2772 = vunpack.c.l.b16 %v2223
        %v2773 = vunpack.c.h.b16 %v2223
        %v2774 = vunpack.c.l.b16 %v2224
        %v2775 = vunpack.c.h.b16 %v2224
        %v2776 = vunpack.c.l.b16 %v2225
        %v2777 = vunpack.c.h.b16 %v2225
        %v2778 = vunpack.c.l.b16 %v2226
        %v2779 = vunpack.c.h.b16 %v2226
        %v2780 = vunpack.c.l.b16 %v2227
        %v2781 = vunpack.c.h.b16 %v2227
        %v2782 = vunpack.c.l.b16 %v2228
        %v2783 = vunpack.c.h.b16 %v2228
        %v2784 = vunpack.c.l.b16 %v2229
        %v2785 = vunpack.c.h.b16 %v2229
        %v2786 = vunpack.c.l.b16 %v2230
        %v2787 = vunpack.c.h.b16 %v2230
        %v2788 = vunpack.c.l.b16 %v2231
        %v2789 = vunpack.c.h.b16 %v2231
        %v2790 = vunpack.c.l.b16 %v2232
        %v2791 = vunpack.c.h.b16 %v2232
        %v2792 = vunpack.c.l.b16 %v2233
        %v2793 = vunpack.c.h.b16 %v2233
        %v2794 = vunpack.c.l.b16 %v2234
        %v2795 = vunpack.c.h.b16 %v2234
        %v2796 = vunpack.c.l.b16 %v2235
        %v2797 = vunpack.c.h.b16 %v2235
        %v2798 = vunpack.c.l.b16 %v2236
        %v2799 = vunpack.c.h.b16 %v2236
        %v2800 = vunpack.c.l.b16 %v2237
        %v2801 = vunpack.c.h.b16 %v2237
        %v2802 = vunpack.c.l.b16 %v2238
        %v2803 = vunpack.c.h.b16 %v2238
        %v2804 = vunpack.c.l.b16 %v2239
        %v2805 = vunpack.c.h.b16 %v2239
        %v2806 = vunpack.c.l.b16 %v2240
        %v2807 = vunpack.c.h.b16 %v2240
        %v2808 = vunpack.c.l.b16 %v2241
        %v2809 = vunpack.c.h.b16 %v2241
        %v2810 = vunpack.c.l.b16 %v2242
        %v2811 = vunpack.c.h.b16 %v2242
        %v2812 = vunpack.c.l.b16 %v2243
        %v2813 = vunpack.c.h.b16 %v2243
        %v2814 = vunpack.c.l.b16 %v2244
        %v2815 = vunpack.c.h.b16 %v2244
        %v2816 = vunpack.c.l.b16 %v2245
        %v2817 = vunpack.c.h.b16 %v2245
        %v2818 = vunpack.c.l.b16 %v2246
        %v2819 = vunpack.c.h.b16 %v2246
        %v2820 = vunpack.c.l.b16 %v2247
        %v2821 = vunpack.c.h.b16 %v2247
        %v2822 = vunpack.c.l.b16 %v2248
        %v2823 = vunpack.c.h.b16 %v2248
        %v2824 = vunpack.c.l.b16 %v2249
        %v2825 = vunpack.c.h.b16 %v2249
        %v2826 = vpack.c.b16 %v2448, %v2442
        %v2827 = vpack.c.b16 %v2449, %v2443
        %v2828 = vpack.c.b16 %v2450, %v2444
        %v2829 = vpack.c.b16 %v2451, %v2445
        %v2830 = vpack.c.b16 %v2452, %v2446
        %v2831 = vpack.c.b16 %v2453, %v2447
        %v2832 = vpack.c.b16 %v2460, %v2454
        %v2833 = vpack.c.b16 %v2461, %v2455
        %v2834 = vpack.c.b16 %v2462, %v2456
        %v2835 = vpack.c.b16 %v2463, %v2457
        %v2836 = vpack.c.b16 %v2464, %v2458
        %v2837 = vpack.c.b16 %v2465, %v2459
        %v2838 = vpack.c.b16 %v2472, %v2466
        %v2839 = vpack.c.b16 %v2473, %v2467
        %v2840 = vpack.c.b16 %v2474, %v2468
        %v2841 = vpack.c.b16 %v2475, %v2469
        %v2842 = vpack.c.b16 %v2476, %v2470
        %v2843 = vpack.c.b16 %v2477, %v2471
        %v2844 = vpack.c.b16 %v2484, %v2478
        %v2845 = vpack.c.b16 %v2485, %v2479
        %v2846 = vpack.c.b16 %v2486, %v2480
        %v2847 = vpack.c.b16 %v2487, %v2481
        %v2848 = vpack.c.b16 %v2488, %v2482
        %v2849 = vpack.c.b16 %v2489, %v2483
        %v2850 = vpack.c.b16 %v2496, %v2490
        %v2851 = vpack.c.b16 %v2497, %v2491
        %v2852 = vpack.c.b16 %v2498, %v2492
        %v2853 = vpack.c.b16 %v2499, %v2493
        %v2854 = vpack.c.b16 %v2500, %v2494
        %v2855 = vpack.c.b16 %v2501, %v2495
        %v2856 = vpack.c.b16 %v2508, %v2502
        %v2857 = vpack.c.b16 %v2509, %v2503
        %v2858 = vpack.c.b16 %v2510, %v2504
        %v2859 = vpack.c.b16 %v2511, %v2505
        %v2860 = vpack.c.b16 %v2512, %v2506
        %v2861 = vpack.c.b16 %v2513, %v2507
        %v2862 = vpack.c.b16 %v2520, %v2514
        %v2863 = vpack.c.b16 %v2521, %v2515
        %v2864 = vpack.c.b16 %v2522, %v2516
        %v2865 = vpack.c.b16 %v2523, %v2517
        %v2866 = vpack.c.b16 %v2524, %v2518
        %v2867 = vpack.c.b16 %v2525, %v2519
        %v2868 = vpack.c.b16 %v2532, %v2526
        %v2869 = vpack.c.b16 %v2533, %v2527
        %v2870 = vpack.c.b16 %v2534, %v2528
        %v2871 = vpack.c.b16 %v2535, %v2529
        %v2872 = vpack.c.b16 %v2536, %v2530
        %v2873 = vpack.c.b16 %v2537, %v2531
        %v2874 = vpack.c.b16 %v2544, %v2538
        %v2875 = vpack.c.b16 %v2545, %v2539
        %v2876 = vpack.c.b16 %v2546, %v2540
        %v2877 = vpack.c.b16 %v2547, %v2541
        %v2878 = vpack.c.b16 %v2548, %v2542
        %v2879 = vpack.c.b16 %v2549, %v2543
        %v2880 = vpack.c.b16 %v2556, %v2550
        %v2881 = vpack.c.b16 %v2557, %v2551
        %v2882 = vpack.c.b16 %v2558, %v2552
        %v2883 = vpack.c.b16 %v2559, %v2553
        %v2884 = vpack.c.b16 %v2560, %v2554
        %v2885 = vpack.c.b16 %v2561, %v2555
        %v2886 = vpack.c.b16 %v2568, %v2562
        %v2887 = vpack.c.b16 %v2569, %v2563
        %v2888 = vpack.c.b16 %v2570, %v2564
        %v2889 = vpack.c.b16 %v2571, %v2565
        %v2890 = vpack.c.b16 %v2572, %v2566
        %v2891 = vpack.c.b16 %v2573, %v2567
        %v2892 = vpack.c.b16 %v2580, %v2574
        %v2893 = vpack.c.b16 %v2581, %v2575
        %v2894 = vpack.c.b16 %v2582, %v2576
        %v2895 = vpack.c.b16 %v2583, %v2577
        %v2896 = vpack.c.b16 %v2584, %v2578
        %v2897 = vpack.c.b16 %v2585, %v2579
        %v2898 = vpack.c.b16 %v2592, %v2586
        %v2899 = vpack.c.b16 %v2593, %v2587
        %v2900 = vpack.c.b16 %v2594, %v2588
        %v2901 = vpack.c.b16 %v2595, %v2589
        %v2902 = vpack.c.b16 %v2596, %v2590
        %v2903 = vpack.c.b16 %v2597, %v2591
        %v2904 = vpack.c.b16 %v2604, %v2598
        %v2905 = vpack.c.b16 %v2605, %v2599
        %v2906 = vpack.c.b16 %v2606, %v2600
        %v2907 = vpack.c.b16 %v2607, %v2601
        %v2908 = vpack.c.b16 %v2608, %v2602
        %v2909 = vpack.c.b16 %v2609, %v2603
        %v2910 = vpack.c.b16 %v2616, %v2610
        %v2911 = vpack.c.b16 %v2617, %v2611
        %v2912 = vpack.c.b16 %v2618, %v2612
        %v2913 = vpack.c.b16 %v2619, %v2613
        %v2914 = vpack.c.b16 %v2620, %v2614
        %v2915 = vpack.c.b16 %v2621, %v2615
        %v2916 = vpack.c.b16 %v2628, %v2622
        %v2917 = vpack.c.b16 %v2629, %v2623
        %v2918 = vpack.c.b16 %v2630, %v2624
        %v2919 = vpack.c.b16 %v2631, %v2625
        %v2920 = vpack.c.b16 %v2632, %v2626
        %v2921 = vpack.c.b16 %v2633, %v2627
        %v2922 = vpack.c.b16 %v2640, %v2634
        %v2923 = vpack.c.b16 %v2641, %v2635
        %v2924 = vpack.c.b16 %v2642, %v2636
        %v2925 = vpack.c.b16 %v2643, %v2637
        %v2926 = vpack.c.b16 %v2644, %v2638
        %v2927 = vpack.c.b16 %v2645, %v2639
        %v2928 = vpack.c.b16 %v2652, %v2646
        %v2929 = vpack.c.b16 %v2653, %v2647
        %v2930 = vpack.c.b16 %v2654, %v2648
        %v2931 = vpack.c.b16 %v2655, %v2649
        %v2932 = vpack.c.b16 %v2656, %v2650
        %v2933 = vpack.c.b16 %v2657, %v2651
        %v2934 = vpack.c.b16 %v2664, %v2658
        %v2935 = vpack.c.b16 %v2665, %v2659
        %v2936 = vpack.c.b16 %v2666, %v2660
        %v2937 = vpack.c.b16 %v2667, %v2661
        %v2938 = vpack.c.b16 %v2668, %v2662
        %v2939 = vpack.c.b16 %v2669, %v2663
        %v2940 = vpack.c.b16 %v2676, %v2670
        %v2941 = vpack.c.b16 %v2677, %v2671
        %v2942 = vpack.c.b16 %v2678, %v2672
        %v2943 = vpack.c.b16 %v2679, %v2673
        %v2944 = vpack.c.b16 %v2680, %v2674
        %v2945 = vpack.c.b16 %v2681, %v2675
        %v2946 = vpack.c.b16 %v2688, %v2682
        %v2947 = vpack.c.b16 %v2689, %v2683
        %v2948 = vpack.c.b16 %v2690, %v2684
        %v2949 = vpack.c.b16 %v2691, %v2685
        %v2950 = vpack.c.b16 %v2692, %v2686
        %v2951 = vpack.c.b16 %v2693, %v2687
        %v2952 = vpack.c.b16 %v2700, %v2694
        %v2953 = vpack.c.b16 %v2701, %v2695
        %v2954 = vpack.c.b16 %v2702, %v2696
        %v2955 = vpack.c.b16 %v2703, %v2697
        %v2956 = vpack.c.b16 %v2704, %v2698
        %v2957 = vpack.c.b16 %v2705, %v2699
        %v2958 = vpack.c.b16 %v2712, %v2706
        %v2959 = vpack.c.b16 %v2713, %v2707
        %v2960 = vpack.c.b16 %v2714, %v2708
        %v2961 = vpack.c.b16 %v2715, %v2709
        %v2962 = vpack.c.b16 %v2716, %v2710
        %v2963 = vpack.c.b16 %v2717, %v2711
        %v2964 = vpack.c.b16 %v2724, %v2718
        %v2965 = vpack.c.b16 %v2725, %v2719
        %v2966 = vpack.c.b16 %v2726, %v2720
        %v2967 = vpack.c.b16 %v2727, %v2721
        %v2968 = vpack.c.b16 %v2728, %v2722
        %v2969 = vpack.c.b16 %v2729, %v2723
        %v2970 = vpack.c.b16 %v2736, %v2730
        %v2971 = vpack.c.b16 %v2737, %v2731
        %v2972 = vpack.c.b16 %v2738, %v2732
        %v2973 = vpack.c.b16 %v2739, %v2733
        %v2974 = vpack.c.b16 %v2740, %v2734
        %v2975 = vpack.c.b16 %v2741, %v2735
        %v2976 = vpack.c.b16 %v2748, %v2742
        %v2977 = vpack.c.b16 %v2749, %v2743
        %v2978 = vpack.c.b16 %v2750, %v2744
        %v2979 = vpack.c.b16 %v2751, %v2745
        %v2980 = vpack.c.b16 %v2752, %v2746
        %v2981 = vpack.c.b16 %v2753, %v2747
        %v2982 = vpack.c.b16 %v2760, %v2754
        %v2983 = vpack.c.b16 %v2761, %v2755
        %v2984 = vpack.c.b16 %v2762, %v2756
        %v2985 = vpack.c.b16 %v2763, %v2757
        %v2986 = vpack.c.b16 %v2764, %v2758
        %v2987 = vpack.c.b16 %v2765, %v2759
        %v2988 = vpack.c.b16 %v2772, %v2766
        %v2989 = vpack.c.b16 %v2773, %v2767
        %v2990 = vpack.c.b16 %v2774, %v2768
        %v2991 = vpack.c.b16 %v2775, %v2769
        %v2992 = vpack.c.b16 %v2776, %v2770
        %v2993 = vpack.c.b16 %v2777, %v2771
        %v2994 = vpack.c.b16 %v2784, %v2778
        %v2995 = vpack.c.b16 %v2785, %v2779
        %v2996 = vpack.c.b16 %v2786, %v2780
        %v2997 = vpack.c.b16 %v2787, %v2781
        %v2998 = vpack.c.b16 %v2788, %v2782
        %v2999 = vpack.c.b16 %v2789, %v2783
        %v3000 = vpack.c.b16 %v2796, %v2790
        %v3001 = vpack.c.b16 %v2797, %v2791
        %v3002 = vpack.c.b16 %v2798, %v2792
        %v3003 = vpack.c.b16 %v2799, %v2793
        %v3004 = vpack.c.b16 %v2800, %v2794
        %v3005 = vpack.c.b16 %v2801, %v2795
        %v3006 = vpack.c.b16 %v2808, %v2802
        %v3007 = vpack.c.b16 %v2809, %v2803
        %v3008 = vpack.c.b16 %v2810, %v2804
        %v3009 = vpack.c.b16 %v2811, %v2805
        %v3010 = vpack.c.b16 %v2812, %v2806
        %v3011 = vpack.c.b16 %v2813, %v2807
        %v3012 = vpack.c.b16 %v2820, %v2814
        %v3013 = vpack.c.b16 %v2821, %v2815
        %v3014 = vpack.c.b16 %v2822, %v2816
        %v3015 = vpack.c.b16 %v2823, %v2817
        %v3016 = vpack.c.b16 %v2824, %v2818
        %v3017 = vpack.c.b16 %v2825, %v2819
        %3210 = vmatpush.bf16.msra.mxu0 %v2868
        %3211 = vmatpush.bf16.msra.mxu0 %v2862
        %3212 = vmatpush.bf16.msra.mxu0 %v2856
        %3213 = vmatpush.bf16.msra.mxu0 %v2850
        %3214 = vmatpush.bf16.msra.mxu0 %v2844
        %3215 = vmatpush.bf16.msra.mxu0 %v2838
        %3216 = vmatpush.bf16.msra.mxu0 %v2832
        %3217 = vmatpush.bf16.msra.mxu0 %v2826
        %3218 = vmatmul.bf16.gmra.mxu0 %v2054
        %v3219 = vpop.f32.mrf.mxu0
        %v3220 = vadd.f32 0.0, %v3219
        %v3221 = vpop.f32.mrf.mxu0
        %v3222 = vadd.f32 0.0, %v3221
        %3223 = vdwg.mxu0
        %3224 = vmatpush.bf16.msra.mxu0 %v2916
        %3225 = vmatpush.bf16.msra.mxu0 %v2910
        %3226 = vmatpush.bf16.msra.mxu0 %v2904
        %3227 = vmatpush.bf16.msra.mxu0 %v2898
        %3228 = vmatpush.bf16.msra.mxu0 %v2892
        %3229 = vmatpush.bf16.msra.mxu0 %v2886
        %3230 = vmatpush.bf16.msra.mxu0 %v2880
        %3231 = vmatpush.bf16.msra.mxu0 %v2874
        %3232 = vmatmul.bf16.gmra.mxu0 %v2055
        %v3233 = vpop.f32.mrf.mxu0
        %v3234 = vadd.f32 %v3220, %v3233
        %v3235 = vpop.f32.mrf.mxu0
        %v3236 = vadd.f32 %v3222, %v3235
        %3237 = vdwg.mxu0
        %3238 = vmatpush.bf16.msra.mxu0 %v2964
        %3239 = vmatpush.bf16.msra.mxu0 %v2958
        %3240 = vmatpush.bf16.msra.mxu0 %v2952
        %3241 = vmatpush.bf16.msra.mxu0 %v2946
        %3242 = vmatpush.bf16.msra.mxu0 %v2940
        %3243 = vmatpush.bf16.msra.mxu0 %v2934
        %3244 = vmatpush.bf16.msra.mxu0 %v2928
        %3245 = vmatpush.bf16.msra.mxu0 %v2922
        %3246 = vmatmul.bf16.gmra.mxu0 %v2056
        %v3247 = vpop.f32.mrf.mxu0
        %v3248 = vadd.f32 %v3234, %v3247
        %v3249 = vpop.f32.mrf.mxu0
        %v3250 = vadd.f32 %v3236, %v3249
        %3251 = vdwg.mxu0
        %3252 = vmatpush.bf16.msra.mxu0 %v3012
        %3253 = vmatpush.bf16.msra.mxu0 %v3006
        %3254 = vmatpush.bf16.msra.mxu0 %v3000
        %3255 = vmatpush.bf16.msra.mxu0 %v2994
        %3256 = vmatpush.bf16.msra.mxu0 %v2988
        %3257 = vmatpush.bf16.msra.mxu0 %v2982
        %3258 = vmatpush.bf16.msra.mxu0 %v2976
        %3259 = vmatpush.bf16.msra.mxu0 %v2970
        %3260 = vmatmul.bf16.gmra.mxu0 %v2057
        %v3261 = vpop.f32.mrf.mxu0
        %v3262 = vadd.f32 %v3248, %v3261
        %v3263 = vpop.f32.mrf.mxu0
        %v3264 = vadd.f32 %v3250, %v3263
        %3265 = vdwg.mxu0
        %3266 = vmatpush.bf16.msra.mxu0 %v2869
        %3267 = vmatpush.bf16.msra.mxu0 %v2863
        %3268 = vmatpush.bf16.msra.mxu0 %v2857
        %3269 = vmatpush.bf16.msra.mxu0 %v2851
        %3270 = vmatpush.bf16.msra.mxu0 %v2845
        %3271 = vmatpush.bf16.msra.mxu0 %v2839
        %3272 = vmatpush.bf16.msra.mxu0 %v2833
        %3273 = vmatpush.bf16.msra.mxu0 %v2827
        %3274 = vmatmul.bf16.gmra.mxu0 %v2054
        %v3275 = vpop.f32.mrf.mxu0
        %v3276 = vadd.f32 0.0, %v3275
        %v3277 = vpop.f32.mrf.mxu0
        %v3278 = vadd.f32 0.0, %v3277
        %3279 = vdwg.mxu0
        %3280 = vmatpush.bf16.msra.mxu0 %v2917
        %3281 = vmatpush.bf16.msra.mxu0 %v2911
        %3282 = vmatpush.bf16.msra.mxu0 %v2905
        %3283 = vmatpush.bf16.msra.mxu0 %v2899
        %3284 = vmatpush.bf16.msra.mxu0 %v2893
        %3285 = vmatpush.bf16.msra.mxu0 %v2887
        %3286 = vmatpush.bf16.msra.mxu0 %v2881
        %3287 = vmatpush.bf16.msra.mxu0 %v2875
        %3288 = vmatmul.bf16.gmra.mxu0 %v2055
        %v3289 = vpop.f32.mrf.mxu0
        %v3290 = vadd.f32 %v3276, %v3289
        %v3291 = vpop.f32.mrf.mxu0
        %v3292 = vadd.f32 %v3278, %v3291
        %3293 = vdwg.mxu0
        %3294 = vmatpush.bf16.msra.mxu0 %v2965
        %3295 = vmatpush.bf16.msra.mxu0 %v2959
        %3296 = vmatpush.bf16.msra.mxu0 %v2953
        %3297 = vmatpush.bf16.msra.mxu0 %v2947
        %3298 = vmatpush.bf16.msra.mxu0 %v2941
        %3299 = vmatpush.bf16.msra.mxu0 %v2935
        %3300 = vmatpush.bf16.msra.mxu0 %v2929
        %3301 = vmatpush.bf16.msra.mxu0 %v2923
        %3302 = vmatmul.bf16.gmra.mxu0 %v2056
        %v3303 = vpop.f32.mrf.mxu0
        %v3304 = vadd.f32 %v3290, %v3303
        %v3305 = vpop.f32.mrf.mxu0
        %v3306 = vadd.f32 %v3292, %v3305
        %3307 = vdwg.mxu0
        %3308 = vmatpush.bf16.msra.mxu0 %v3013
        %3309 = vmatpush.bf16.msra.mxu0 %v3007
        %3310 = vmatpush.bf16.msra.mxu0 %v3001
        %3311 = vmatpush.bf16.msra.mxu0 %v2995
        %3312 = vmatpush.bf16.msra.mxu0 %v2989
        %3313 = vmatpush.bf16.msra.mxu0 %v2983
        %3314 = vmatpush.bf16.msra.mxu0 %v2977
        %3315 = vmatpush.bf16.msra.mxu0 %v2971
        %3316 = vmatmul.bf16.gmra.mxu0 %v2057
        %v3317 = vpop.f32.mrf.mxu0
        %v3318 = vadd.f32 %v3304, %v3317
        %v3319 = vpop.f32.mrf.mxu0
        %v3320 = vadd.f32 %v3306, %v3319
        %3321 = vdwg.mxu0
        %3322 = vmatpush.bf16.msra.mxu0 %v2870
        %3323 = vmatpush.bf16.msra.mxu0 %v2864
        %3324 = vmatpush.bf16.msra.mxu0 %v2858
        %3325 = vmatpush.bf16.msra.mxu0 %v2852
        %3326 = vmatpush.bf16.msra.mxu0 %v2846
        %3327 = vmatpush.bf16.msra.mxu0 %v2840
        %3328 = vmatpush.bf16.msra.mxu0 %v2834
        %3329 = vmatpush.bf16.msra.mxu0 %v2828
        %3330 = vmatmul.bf16.gmra.mxu0 %v2054
        %v3331 = vpop.f32.mrf.mxu0
        %v3332 = vadd.f32 0.0, %v3331
        %v3333 = vpop.f32.mrf.mxu0
        %v3334 = vadd.f32 0.0, %v3333
        %3335 = vdwg.mxu0
        %3336 = vmatpush.bf16.msra.mxu0 %v2918
        %3337 = vmatpush.bf16.msra.mxu0 %v2912
        %3338 = vmatpush.bf16.msra.mxu0 %v2906
        %3339 = vmatpush.bf16.msra.mxu0 %v2900
        %3340 = vmatpush.bf16.msra.mxu0 %v2894
        %3341 = vmatpush.bf16.msra.mxu0 %v2888
        %3342 = vmatpush.bf16.msra.mxu0 %v2882
        %3343 = vmatpush.bf16.msra.mxu0 %v2876
        %3344 = vmatmul.bf16.gmra.mxu0 %v2055
        %v3345 = vpop.f32.mrf.mxu0
        %v3346 = vadd.f32 %v3332, %v3345
        %v3347 = vpop.f32.mrf.mxu0
        %v3348 = vadd.f32 %v3334, %v3347
        %3349 = vdwg.mxu0
        %3350 = vmatpush.bf16.msra.mxu0 %v2966
        %3351 = vmatpush.bf16.msra.mxu0 %v2960
        %3352 = vmatpush.bf16.msra.mxu0 %v2954
        %3353 = vmatpush.bf16.msra.mxu0 %v2948
        %3354 = vmatpush.bf16.msra.mxu0 %v2942
        %3355 = vmatpush.bf16.msra.mxu0 %v2936
        %3356 = vmatpush.bf16.msra.mxu0 %v2930
        %3357 = vmatpush.bf16.msra.mxu0 %v2924
        %3358 = vmatmul.bf16.gmra.mxu0 %v2056
        %v3359 = vpop.f32.mrf.mxu0
        %v3360 = vadd.f32 %v3346, %v3359
        %v3361 = vpop.f32.mrf.mxu0
        %v3362 = vadd.f32 %v3348, %v3361
        %3363 = vdwg.mxu0
        %3364 = vmatpush.bf16.msra.mxu0 %v3014
        %3365 = vmatpush.bf16.msra.mxu0 %v3008
        %3366 = vmatpush.bf16.msra.mxu0 %v3002
        %3367 = vmatpush.bf16.msra.mxu0 %v2996
        %3368 = vmatpush.bf16.msra.mxu0 %v2990
        %3369 = vmatpush.bf16.msra.mxu0 %v2984
        %3370 = vmatpush.bf16.msra.mxu0 %v2978
        %3371 = vmatpush.bf16.msra.mxu0 %v2972
        %3372 = vmatmul.bf16.gmra.mxu0 %v2057
        %v3373 = vpop.f32.mrf.mxu0
        %v3374 = vadd.f32 %v3360, %v3373
        %v3375 = vpop.f32.mrf.mxu0
        %v3376 = vadd.f32 %v3362, %v3375
        %3377 = vdwg.mxu0
        %3378 = vmatpush.bf16.msra.mxu0 %v2871
        %3379 = vmatpush.bf16.msra.mxu0 %v2865
        %3380 = vmatpush.bf16.msra.mxu0 %v2859
        %3381 = vmatpush.bf16.msra.mxu0 %v2853
        %3382 = vmatpush.bf16.msra.mxu0 %v2847
        %3383 = vmatpush.bf16.msra.mxu0 %v2841
        %3384 = vmatpush.bf16.msra.mxu0 %v2835
        %3385 = vmatpush.bf16.msra.mxu0 %v2829
        %3386 = vmatmul.bf16.gmra.mxu0 %v2054
        %v3387 = vpop.f32.mrf.mxu0
        %v3388 = vadd.f32 0.0, %v3387
        %v3389 = vpop.f32.mrf.mxu0
        %v3390 = vadd.f32 0.0, %v3389
        %3391 = vdwg.mxu0
        %3392 = vmatpush.bf16.msra.mxu0 %v2919
        %3393 = vmatpush.bf16.msra.mxu0 %v2913
        %3394 = vmatpush.bf16.msra.mxu0 %v2907
        %3395 = vmatpush.bf16.msra.mxu0 %v2901
        %3396 = vmatpush.bf16.msra.mxu0 %v2895
        %3397 = vmatpush.bf16.msra.mxu0 %v2889
        %3398 = vmatpush.bf16.msra.mxu0 %v2883
        %3399 = vmatpush.bf16.msra.mxu0 %v2877
        %3400 = vmatmul.bf16.gmra.mxu0 %v2055
        %v3401 = vpop.f32.mrf.mxu0
        %v3402 = vadd.f32 %v3388, %v3401
        %v3403 = vpop.f32.mrf.mxu0
        %v3404 = vadd.f32 %v3390, %v3403
        %3405 = vdwg.mxu0
        %3406 = vmatpush.bf16.msra.mxu0 %v2967
        %3407 = vmatpush.bf16.msra.mxu0 %v2961
        %3408 = vmatpush.bf16.msra.mxu0 %v2955
        %3409 = vmatpush.bf16.msra.mxu0 %v2949
        %3410 = vmatpush.bf16.msra.mxu0 %v2943
        %3411 = vmatpush.bf16.msra.mxu0 %v2937
        %3412 = vmatpush.bf16.msra.mxu0 %v2931
        %3413 = vmatpush.bf16.msra.mxu0 %v2925
        %3414 = vmatmul.bf16.gmra.mxu0 %v2056
        %v3415 = vpop.f32.mrf.mxu0
        %v3416 = vadd.f32 %v3402, %v3415
        %v3417 = vpop.f32.mrf.mxu0
        %v3418 = vadd.f32 %v3404, %v3417
        %3419 = vdwg.mxu0
        %3420 = vmatpush.bf16.msra.mxu0 %v3015
        %3421 = vmatpush.bf16.msra.mxu0 %v3009
        %3422 = vmatpush.bf16.msra.mxu0 %v3003
        %3423 = vmatpush.bf16.msra.mxu0 %v2997
        %3424 = vmatpush.bf16.msra.mxu0 %v2991
        %3425 = vmatpush.bf16.msra.mxu0 %v2985
        %3426 = vmatpush.bf16.msra.mxu0 %v2979
        %3427 = vmatpush.bf16.msra.mxu0 %v2973
        %3428 = vmatmul.bf16.gmra.mxu0 %v2057
        %v3429 = vpop.f32.mrf.mxu0
        %v3430 = vadd.f32 %v3416, %v3429
        %v3431 = vpop.f32.mrf.mxu0
        %v3432 = vadd.f32 %v3418, %v3431
        %3433 = vdwg.mxu0
        %3434 = vmatpush.bf16.msra.mxu0 %v2872
        %3435 = vmatpush.bf16.msra.mxu0 %v2866
        %3436 = vmatpush.bf16.msra.mxu0 %v2860
        %3437 = vmatpush.bf16.msra.mxu0 %v2854
        %3438 = vmatpush.bf16.msra.mxu0 %v2848
        %3439 = vmatpush.bf16.msra.mxu0 %v2842
        %3440 = vmatpush.bf16.msra.mxu0 %v2836
        %3441 = vmatpush.bf16.msra.mxu0 %v2830
        %3442 = vmatmul.bf16.gmra.mxu0 %v2054
        %v3443 = vpop.f32.mrf.mxu0
        %v3444 = vadd.f32 0.0, %v3443
        %v3445 = vpop.f32.mrf.mxu0
        %v3446 = vadd.f32 0.0, %v3445
        %3447 = vdwg.mxu0
        %3448 = vmatpush.bf16.msra.mxu0 %v2920
        %3449 = vmatpush.bf16.msra.mxu0 %v2914
        %3450 = vmatpush.bf16.msra.mxu0 %v2908
        %3451 = vmatpush.bf16.msra.mxu0 %v2902
        %3452 = vmatpush.bf16.msra.mxu0 %v2896
        %3453 = vmatpush.bf16.msra.mxu0 %v2890
        %3454 = vmatpush.bf16.msra.mxu0 %v2884
        %3455 = vmatpush.bf16.msra.mxu0 %v2878
        %3456 = vmatmul.bf16.gmra.mxu0 %v2055
        %v3457 = vpop.f32.mrf.mxu0
        %v3458 = vadd.f32 %v3444, %v3457
        %v3459 = vpop.f32.mrf.mxu0
        %v3460 = vadd.f32 %v3446, %v3459
        %3461 = vdwg.mxu0
        %3462 = vmatpush.bf16.msra.mxu0 %v2968
        %3463 = vmatpush.bf16.msra.mxu0 %v2962
        %3464 = vmatpush.bf16.msra.mxu0 %v2956
        %3465 = vmatpush.bf16.msra.mxu0 %v2950
        %3466 = vmatpush.bf16.msra.mxu0 %v2944
        %3467 = vmatpush.bf16.msra.mxu0 %v2938
        %3468 = vmatpush.bf16.msra.mxu0 %v2932
        %3469 = vmatpush.bf16.msra.mxu0 %v2926
        %3470 = vmatmul.bf16.gmra.mxu0 %v2056
        %v3471 = vpop.f32.mrf.mxu0
        %v3472 = vadd.f32 %v3458, %v3471
        %v3473 = vpop.f32.mrf.mxu0
        %v3474 = vadd.f32 %v3460, %v3473
        %3475 = vdwg.mxu0
        %3476 = vmatpush.bf16.msra.mxu0 %v3016
        %3477 = vmatpush.bf16.msra.mxu0 %v3010
        %3478 = vmatpush.bf16.msra.mxu0 %v3004
        %3479 = vmatpush.bf16.msra.mxu0 %v2998
        %3480 = vmatpush.bf16.msra.mxu0 %v2992
        %3481 = vmatpush.bf16.msra.mxu0 %v2986
        %3482 = vmatpush.bf16.msra.mxu0 %v2980
        %3483 = vmatpush.bf16.msra.mxu0 %v2974
        %3484 = vmatmul.bf16.gmra.mxu0 %v2057
        %v3485 = vpop.f32.mrf.mxu0
        %v3486 = vadd.f32 %v3472, %v3485
        %v3487 = vpop.f32.mrf.mxu0
        %v3488 = vadd.f32 %v3474, %v3487
        %3489 = vdwg.mxu0
        %3490 = vmatpush.bf16.msra.mxu0 %v2873
        %3491 = vmatpush.bf16.msra.mxu0 %v2867
        %3492 = vmatpush.bf16.msra.mxu0 %v2861
        %3493 = vmatpush.bf16.msra.mxu0 %v2855
        %3494 = vmatpush.bf16.msra.mxu0 %v2849
        %3495 = vmatpush.bf16.msra.mxu0 %v2843
        %3496 = vmatpush.bf16.msra.mxu0 %v2837
        %3497 = vmatpush.bf16.msra.mxu0 %v2831
        %3498 = vmatmul.bf16.gmra.mxu0 %v2054
        %v3499 = vpop.f32.mrf.mxu0
        %v3500 = vadd.f32 0.0, %v3499
        %v3501 = vpop.f32.mrf.mxu0
        %v3502 = vadd.f32 0.0, %v3501
        %3503 = vdwg.mxu0
        %3504 = vmatpush.bf16.msra.mxu0 %v2921
        %3505 = vmatpush.bf16.msra.mxu0 %v2915
        %3506 = vmatpush.bf16.msra.mxu0 %v2909
        %3507 = vmatpush.bf16.msra.mxu0 %v2903
        %3508 = vmatpush.bf16.msra.mxu0 %v2897
        %3509 = vmatpush.bf16.msra.mxu0 %v2891
        %3510 = vmatpush.bf16.msra.mxu0 %v2885
        %3511 = vmatpush.bf16.msra.mxu0 %v2879
        %3512 = vmatmul.bf16.gmra.mxu0 %v2055
        %v3513 = vpop.f32.mrf.mxu0
        %v3514 = vadd.f32 %v3500, %v3513
        %v3515 = vpop.f32.mrf.mxu0
        %v3516 = vadd.f32 %v3502, %v3515
        %3517 = vdwg.mxu0
        %3518 = vmatpush.bf16.msra.mxu0 %v2969
        %3519 = vmatpush.bf16.msra.mxu0 %v2963
        %3520 = vmatpush.bf16.msra.mxu0 %v2957
        %3521 = vmatpush.bf16.msra.mxu0 %v2951
        %3522 = vmatpush.bf16.msra.mxu0 %v2945
        %3523 = vmatpush.bf16.msra.mxu0 %v2939
        %3524 = vmatpush.bf16.msra.mxu0 %v2933
        %3525 = vmatpush.bf16.msra.mxu0 %v2927
        %3526 = vmatmul.bf16.gmra.mxu0 %v2056
        %v3527 = vpop.f32.mrf.mxu0
        %v3528 = vadd.f32 %v3514, %v3527
        %v3529 = vpop.f32.mrf.mxu0
        %v3530 = vadd.f32 %v3516, %v3529
        %3531 = vdwg.mxu0
        %3532 = vmatpush.bf16.msra.mxu0 %v3017
        %3533 = vmatpush.bf16.msra.mxu0 %v3011
        %3534 = vmatpush.bf16.msra.mxu0 %v3005
        %3535 = vmatpush.bf16.msra.mxu0 %v2999
        %3536 = vmatpush.bf16.msra.mxu0 %v2993
        %3537 = vmatpush.bf16.msra.mxu0 %v2987
        %3538 = vmatpush.bf16.msra.mxu0 %v2981
        %3539 = vmatpush.bf16.msra.mxu0 %v2975
        %3540 = vmatmul.bf16.gmra.mxu0 %v2057
        %v3541 = vpop.f32.mrf.mxu0
        %v3542 = vadd.f32 %v3528, %v3541
        %v3543 = vpop.f32.mrf.mxu0
        %v3544 = vadd.f32 %v3530, %v3543
        %3545 = vdwg.mxu0
        %3546 = vst [vmem:[%s4] sm:$0xff] %v3262
        %3547 = vst [vmem:[%s4 + $0x8] sm:$0xff] %v3318
        %3548 = vst [vmem:[%s4 + $0x10] sm:$0xff] %v3374
        %3549 = vst [vmem:[%s4 + $0x18] sm:$0xff] %v3430
        %3550 = vst [vmem:[%s4 + $0x20] sm:$0xff] %v3486
        %3551 = vst [vmem:[%s4 + $0x28] sm:$0xff] %v3542
        %3552 = vst [vmem:[%s4 + $0x30] sm:$0xff] %v3264
        %3553 = vst [vmem:[%s4 + $0x38] sm:$0xff] %v3320
        %3554 = vst [vmem:[%s4 + $0x40] sm:$0xff] %v3376
        %3555 = vst [vmem:[%s4 + $0x48] sm:$0xff] %v3432
        %3556 = vst [vmem:[%s4 + $0x50] sm:$0xff] %v3488
        %3557 = vst [vmem:[%s4 + $0x58] sm:$0xff] %v3544
        // Predicated region
        $region49: #{_griffin_lim.1} parent=35 // pred_check
          %p3558 = pneg %p114
        $region50: #{_griffin_lim.1} parent=35 // pred_check_branch
          %3560 = sbr.rel (%p3558) target = $region52
        $region51: #{_griffin_lim.1} parent=35 // pred_region
          _
        $region52: #{_griffin_lim.1} parent=35 // pred_fallthru
          _
        // Predicated region
        $region53: #{_griffin_lim.1} parent=35 // pred_check
          %p3561 = pneg %p114
        $region54: #{_griffin_lim.1} parent=35 // pred_check_branch
          %3563 = sbr.rel (%p3561) target = $region56
        $region55: #{_griffin_lim.1} parent=35 // pred_region
          _
        $region56: #{_griffin_lim.1} parent=35 // pred_fallthru
          _
      $region36: #{_griffin_lim.1} parent=5 // pred_fallthru
        _
      %p3564 = scmp.le.s32.totalorder 2, %s12
      // Predicated region
      $region57: #{_griffin_lim.1} parent=5 // pred_check
        %p3565 = pneg %p3564
      $region58: #{_griffin_lim.1} parent=5 // pred_check_branch
        %3567 = sbr.rel (%p3565) target = $region60
      $region59: #{_griffin_lim.1} parent=5 // pred_region
        %s3568 = ssub.s32 %s12, 2
      $region60: #{_griffin_lim.1} parent=5 // pred_fallthru
        _
    $region6: #{_griffin_lim.1} parent=1 // loop_footer
      %s16 = sadd.s32 1, %s12
    $region7: #{_griffin_lim.1} parent=1 // loop_footer_branch
      %11 = sbr.rel target = $region3
    $region8: #{_griffin_lim.1} parent=1 // loop_exit
      _
    %3569 = vsyncpa [#allocation5], 1
    %s3570 = scalar_lea.sflag [#allocation5], 1
    %3571 = vsyncpa %s3570, 1
    %3572 = vsyncpa [#allocation7], 1

// kernel: _griffin_lim.1
$region0: #{_griffin_lim.1}
  #allocation0 [shape = 'u32[]', space=smem, size = 0x4, offset = 0x4, fixed_abs, tag = 'smem constant byte address 0x4 - core index']
  #allocation1 [shape = 'u32[72,128]{1,0:T(1,128)}', space=vmem, size = 0x9000, scoped, tag = 'internal scratch']
  #allocation2 [shape = 'f32[16,512]{1,0:T(8,128)}', space=vmem, size = 0x8000, scoped, tag = 'scratch operand']
  #allocation3 [shape = 'f32[24,128]{1,0:T(8,128)}', space=vmem, size = 0x3000, scoped, tag = 'scratch operand']
  %s0 = inlined_call_operand.vmem [shape: f32[16,768], index: 0, kind: input, shape index: {}]
  %s1 = inlined_call_operand.hbm [shape: bf16[768,512], index: 1, kind: input, shape index: {}]
  %s2 = inlined_call_operand.hbm [shape: bf16[512,768], index: 2, kind: input, shape index: {}]
  %s3 = inlined_call_operand.vmem [shape: f32[24,128], index: 3, kind: input, shape index: {}]
  %s4 = inlined_call_operand.vmem [shape: f32[16,768], index: 4, kind: output, shape index: {}]
  %s5 = sld [smem:[#allocation0]]
  $region61: #{_griffin_lim.1} parent=0
    _
  %s7 = ssub.s32 1, %s5
  %s8 = scalar_select 0, %s7, %s5
  $region1: #{_griffin_lim.1} parent=0
    #allocation4 [shape = 'u8[786432]{0}', space=vmem, size = 0xc0000, scoped, tag = 'input window, operand 1, single buffered']
    #allocation5 [shape = 's32[2]{0}', space=sflag, size = 0x8, scoped, tag = 'scoped memory for _griffin_lim.1']
    #allocation6 [shape = 'u8[786432]{0}', space=vmem, size = 0xc0000, scoped, tag = 'input window, operand 2, single buffered']
    #allocation7 [shape = 's32[1]{0}', space=sflag, size = 0x4, scoped, tag = 'scoped memory for _griffin_lim.1']
    %9 = vsyncpa [#allocation5], 0
    %10 = vsyncpa [#allocation7], 0
    loop: start=0, step=1, limit=12
    $region2: #{_griffin_lim.1} parent=1 // loop_pre_header
      _
    $region3: #{_griffin_lim.1} parent=1 // loop_header
      %s12 = sphi 0, %s16
      %p13 = scmp.ge.s32.totalorder %s12, 12
      %s20 = sphi 0, %s20
      %s22 = sphi 0, %s20
      %s23 = sphi 0, %s22
      %s37 = sphi 0, %s23
      %s41 = sphi 0, %s41
      %s43 = sphi 0, %s41
      %s44 = sphi 0, %s43
      %s58 = sphi 0, %s44
      %s62 = sphi 0, %s62
      %s64 = sphi 0, %s62
      %s65 = sphi 0, %s64
      %s79 = sphi 0, %s65
      %s83 = sphi 0, %s83
      %s85 = sphi 0, %s83
      %s86 = sphi 0, %s85
      %s100 = sphi 0, %s86
      %s104 = sphi 0, %s104
      %s106 = sphi 0, %s104
      %s107 = sphi 0, %s106
      %s121 = sphi 0, %s107
    $region4: #{_griffin_lim.1} parent=1 // loop_header_branch
      %15 = sbr.rel (%p13) target = $region8
    $region5: #{_griffin_lim.1} parent=1 // loop_body
      %s17 = ssub.s32 %s12, 1
      %s18 = ssub.s32 %s12, 2
      %s19 = sadd.s32 %s12, 1
      %s21 = sadd.s32 %s20, 1
      %p24 = scmp.eq.s32.totalorder %s12, 9
      %p25 = scmp.ne.s32.totalorder %s20, %s22
      %p26 = scmp.eq.s32.totalorder %s12, 0
      %p27 = por %p25, %p26
      %p28 = scmp.ne.s32.totalorder %s20, %s22
      %p29 = scmp.eq.s32.totalorder %s17, 9
      %p30 = por %p28, %p29
      %p31 = scmp.ne.s32.totalorder %s22, %s23
      %p32 = scmp.eq.s32.totalorder %s17, 0
      %p33 = por %p31, %p32
      %p34 = scmp.ne.s32.totalorder %s22, %s23
      %p35 = scmp.eq.s32.totalorder %s18, 9
      %p36 = por %p34, %p35
      %p38 = scmp.ne.s32.totalorder %s23, %s37
      %p39 = scmp.eq.s32.totalorder %s18, 0
      %p40 = por %p38, %p39
      %s42 = sadd.s32 %s41, 1
      %p45 = scmp.eq.s32.totalorder %s12, 9
      %p46 = scmp.ne.s32.totalorder %s41, %s43
      %p47 = scmp.eq.s32.totalorder %s12, 0
      %p48 = por %p46, %p47
      %p49 = scmp.ne.s32.totalorder %s41, %s43
      %p50 = scmp.eq.s32.totalorder %s17, 9
      %p51 = por %p49, %p50
      %p52 = scmp.ne.s32.totalorder %s43, %s44
      %p53 = scmp.eq.s32.totalorder %s17, 0
      %p54 = por %p52, %p53
      %p55 = scmp.ne.s32.totalorder %s43, %s44
      %p56 = scmp.eq.s32.totalorder %s18, 9
      %p57 = por %p55, %p56
      %p59 = scmp.ne.s32.totalorder %s44, %s58
      %p60 = scmp.eq.s32.totalorder %s18, 0
      %p61 = por %p59, %p60
      %s63 = sadd.s32 %s62, 1
      %p66 = scmp.eq.s32.totalorder %s12, 9
      %p67 = scmp.ne.s32.totalorder %s62, %s64
      %p68 = scmp.eq.s32.totalorder %s12, 0
      %p69 = por %p67, %p68
      %p70 = scmp.ne.s32.totalorder %s62, %s64
      %p71 = scmp.eq.s32.totalorder %s17, 9
      %p72 = por %p70, %p71
      %p73 = scmp.ne.s32.totalorder %s64, %s65
      %p74 = scmp.eq.s32.totalorder %s17, 0
      %p75 = por %p73, %p74
      %p76 = scmp.ne.s32.totalorder %s64, %s65
      %p77 = scmp.eq.s32.totalorder %s18, 9
      %p78 = por %p76, %p77
      %p80 = scmp.ne.s32.totalorder %s65, %s79
      %p81 = scmp.eq.s32.totalorder %s18, 0
      %p82 = por %p80, %p81
      %s84 = sadd.s32 %s83, 1
      %p87 = scmp.eq.s32.totalorder %s12, 9
      %p88 = scmp.ne.s32.totalorder %s83, %s85
      %p89 = scmp.eq.s32.totalorder %s12, 0
      %p90 = por %p88, %p89
      %p91 = scmp.ne.s32.totalorder %s83, %s85
      %p92 = scmp.eq.s32.totalorder %s17, 9
      %p93 = por %p91, %p92
      %p94 = scmp.ne.s32.totalorder %s85, %s86
      %p95 = scmp.eq.s32.totalorder %s17, 0
      %p96 = por %p94, %p95
      %p97 = scmp.ne.s32.totalorder %s85, %s86
      %p98 = scmp.eq.s32.totalorder %s18, 9
      %p99 = por %p97, %p98
      %p101 = scmp.ne.s32.totalorder %s86, %s100
      %p102 = scmp.eq.s32.totalorder %s18, 0
      %p103 = por %p101, %p102
      %s105 = sadd.s32 %s104, 1
      %p108 = scmp.eq.s32.totalorder %s12, 9
      %p109 = scmp.ne.s32.totalorder %s104, %s106
      %p110 = scmp.eq.s32.totalorder %s12, 0
      %p111 = por %p109, %p110
      %p112 = scmp.ne.s32.totalorder %s104, %s106
      %p113 = scmp.eq.s32.totalorder %s17, 9
      %p114 = por %p112, %p113
      %p115 = scmp.ne.s32.totalorder %s106, %s107
      %p116 = scmp.eq.s32.totalorder %s17, 0
      %p117 = por %p115, %p116
      %p118 = scmp.ne.s32.totalorder %s106, %s107
      %p119 = scmp.eq.s32.totalorder %s18, 9
      %p120 = por %p118, %p119
      %p122 = scmp.ne.s32.totalorder %s107, %s121
      %p123 = scmp.eq.s32.totalorder %s18, 0
      %p124 = por %p122, %p123
      %p125 = scmp.le.s32.totalorder 1, %s12
      %p126 = scmp.lt.s32.totalorder %s12, 11
      %p127 = pnand %p125, %p126
      %p128 = pneg %p127
      // Predicated region
      $region9: #{_griffin_lim.1} parent=5 // pred_check
        _
      $region10: #{_griffin_lim.1} parent=5 // pred_check_branch
        %130 = sbr.rel (%p127) target = $region12
      $region11: #{_griffin_lim.1} parent=5 // pred_region
        %s131 = ssub.s32 %s12, 1
        // Predicated region
        $region13: #{_griffin_lim.1} parent=11 // pred_check
          %p132 = pneg %p33
        $region14: #{_griffin_lim.1} parent=11 // pred_check_branch
          %134 = sbr.rel (%p132) target = $region16
        $region15: #{_griffin_lim.1} parent=11 // pred_region
          _
        $region16: #{_griffin_lim.1} parent=11 // pred_fallthru
          _
        // Predicated region
        $region17: #{_griffin_lim.1} parent=11 // pred_check
          %p135 = pneg %p54
        $region18: #{_griffin_lim.1} parent=11 // pred_check_branch
          %137 = sbr.rel (%p135) target = $region20
        $region19: #{_griffin_lim.1} parent=11 // pred_region
          %139 = vsyncadd [#allocation5], 0
          %s140 = sshll.u32 %s1, 4
          %s141 = int_to_ptr.hbm [resolvable:$true] %s140
          %s142 = sshll.u32 [#allocation4], 4
          %s143 = int_to_ptr.vmem [resolvable:$true] %s142
          %148 = dma.hbm_to_vmem [thread:$0]  %s141, 24576, %s143, [#allocation5], 256, 256, 16
        $region20: #{_griffin_lim.1} parent=11 // pred_fallthru
          _
        // Predicated region
        $region21: #{_griffin_lim.1} parent=11 // pred_check
          %p149 = pneg %p75
        $region22: #{_griffin_lim.1} parent=11 // pred_check_branch
          %151 = sbr.rel (%p149) target = $region24
        $region23: #{_griffin_lim.1} parent=11 // pred_region
          %153 = vsyncadd [#allocation7], 0
          %s154 = sshll.u32 %s2, 4
          %s155 = int_to_ptr.hbm [resolvable:$true] %s154
          %s156 = sshll.u32 [#allocation6], 4
          %s157 = int_to_ptr.vmem [resolvable:$true] %s156
          %162 = dma.hbm_to_vmem [thread:$0]  %s155, 24576, %s157, [#allocation7], 384, 384, 24
        $region24: #{_griffin_lim.1} parent=11 // pred_fallthru
          _
        // Predicated region
        $region25: #{_griffin_lim.1} parent=11 // pred_check
          %p163 = pneg %p96
        $region26: #{_griffin_lim.1} parent=11 // pred_check_branch
          %165 = sbr.rel (%p163) target = $region28
        $region27: #{_griffin_lim.1} parent=11 // pred_region
          _
        $region28: #{_griffin_lim.1} parent=11 // pred_fallthru
          _
      $region12: #{_griffin_lim.1} parent=5 // pred_fallthru
        _
      %p166 = scmp.lt.s32.totalorder %s12, 10
      // Predicated region
      $region29: #{_griffin_lim.1} parent=5 // pred_check
        %p167 = pneg %p166
      $region30: #{_griffin_lim.1} parent=5 // pred_check_branch
        %169 = sbr.rel (%p167) target = $region32
      $region31: #{_griffin_lim.1} parent=5 // pred_region
        _
      $region32: #{_griffin_lim.1} parent=5 // pred_fallthru
        _
      %p170 = scmp.le.s32.totalorder 1, %s12
      %p171 = scmp.lt.s32.totalorder %s12, 11
      %p172 = pnand %p170, %p171
      %p173 = pneg %p172
      // Predicated region
      $region33: #{_griffin_lim.1} parent=5 // pred_check
        _
      $region34: #{_griffin_lim.1} parent=5 // pred_check_branch
        %175 = sbr.rel (%p172) target = $region36
      $region35: #{_griffin_lim.1} parent=5 // pred_region
        %s176 = ssub.s32 %s12, 1
        // Predicated region
        $region37: #{_griffin_lim.1} parent=35 // pred_check
          %p177 = pneg %p54
        $region38: #{_griffin_lim.1} parent=35 // pred_check_branch
          %179 = sbr.rel (%p177) target = $region40
        $region39: #{_griffin_lim.1} parent=35 // pred_region
          %181 = dma.done [#allocation5], 24576
        $region40: #{_griffin_lim.1} parent=35 // pred_fallthru
          _
        // Predicated region
        $region41: #{_griffin_lim.1} parent=35 // pred_check
          %p182 = pneg %p75
        $region42: #{_griffin_lim.1} parent=35 // pred_check_branch
          %184 = sbr.rel (%p182) target = $region44
        $region43: #{_griffin_lim.1} parent=35 // pred_region
          %186 = dma.done [#allocation7], 24576
        $region44: #{_griffin_lim.1} parent=35 // pred_fallthru
          _
        %p187 = pneg %p33
        %p188 = pneg %p30
        %p189 = pneg %p54
        %p190 = pneg %p51
        %p191 = pneg %p75
        %p192 = pneg %p72
        %p193 = pneg %p96
        %p194 = pneg %p93
        %p195 = pneg %p117
        %p196 = pneg %p114
        %p197 = scmp.eq.s32.totalorder %s17, 0
        // Predicated region
        $region45: #{_griffin_lim.1} parent=35 // pred_check
          %p198 = pneg %p197
        $region46: #{_griffin_lim.1} parent=35 // pred_check_branch
          %200 = sbr.rel (%p198) target = $region48
        $region47: #{_griffin_lim.1} parent=35 // pred_region
          %v201 = vld [vmem:[%s0] sm:$0xff]
          %v202 = vld [vmem:[%s0 + $0x8] sm:$0xff]
          %v203 = vld [vmem:[%s0 + $0x10] sm:$0xff]
          %v204 = vld [vmem:[%s0 + $0x18] sm:$0xff]
          %v205 = vld [vmem:[%s0 + $0x20] sm:$0xff]
          %v206 = vld [vmem:[%s0 + $0x28] sm:$0xff]
          %v207 = vld [vmem:[%s0 + $0x30] sm:$0xff]
          %v208 = vld [vmem:[%s0 + $0x38] sm:$0xff]
          %v209 = vld [vmem:[%s0 + $0x40] sm:$0xff]
          %v210 = vld [vmem:[%s0 + $0x48] sm:$0xff]
          %v211 = vld [vmem:[%s0 + $0x50] sm:$0xff]
          %v212 = vld [vmem:[%s0 + $0x58] sm:$0xff]
          %213 = vst [vmem:[%s4] sm:$0xff] %v201
          %214 = vst [vmem:[%s4 + $0x8] sm:$0xff] %v202
          %215 = vst [vmem:[%s4 + $0x10] sm:$0xff] %v203
          %216 = vst [vmem:[%s4 + $0x18] sm:$0xff] %v204
          %217 = vst [vmem:[%s4 + $0x20] sm:$0xff] %v205
          %218 = vst [vmem:[%s4 + $0x28] sm:$0xff] %v206
          %219 = vst [vmem:[%s4 + $0x30] sm:$0xff] %v207
          %220 = vst [vmem:[%s4 + $0x38] sm:$0xff] %v208
          %221 = vst [vmem:[%s4 + $0x40] sm:$0xff] %v209
          %222 = vst [vmem:[%s4 + $0x48] sm:$0xff] %v210
          %223 = vst [vmem:[%s4 + $0x50] sm:$0xff] %v211
          %224 = vst [vmem:[%s4 + $0x58] sm:$0xff] %v212
        $region48: #{_griffin_lim.1} parent=35 // pred_fallthru
          _
        %v225 = vld [vmem:[%s0] sm:$0xff]
        %v226 = vld [vmem:[%s0 + $0x8] sm:$0xff]
        %v227 = vld [vmem:[%s0 + $0x10] sm:$0xff]
        %v228 = vld [vmem:[%s0 + $0x30] sm:$0xff]
        %v229 = vld [vmem:[%s0 + $0x38] sm:$0xff]
        %v230 = vld [vmem:[%s0 + $0x40] sm:$0xff]
        %v231 = vld [vmem:[%s0 + $0x18] sm:$0xff]
        %v232 = vld [vmem:[%s0 + $0x20] sm:$0xff]
        %v233 = vld [vmem:[%s0 + $0x28] sm:$0xff]
        %v234 = vld [vmem:[%s0 + $0x48] sm:$0xff]
        %v235 = vld [vmem:[%s0 + $0x50] sm:$0xff]
        %v236 = vld [vmem:[%s0 + $0x58] sm:$0xff]
        %v237 = vmul.f32 %v225, %v225
        %v238 = vmul.f32 %v226, %v226
        %v239 = vmul.f32 %v227, %v227
        %v240 = vmul.f32 %v228, %v228
        %v241 = vmul.f32 %v229, %v229
        %v242 = vmul.f32 %v230, %v230
        %v243 = vmul.f32 %v231, %v231
        %v244 = vmul.f32 %v232, %v232
        %v245 = vmul.f32 %v233, %v233
        %v246 = vmul.f32 %v234, %v234
        %v247 = vmul.f32 %v235, %v235
        %v248 = vmul.f32 %v236, %v236
        %v249 = vadd.f32 %v237, %v243
        %v250 = vadd.f32 %v238, %v244
        %v251 = vadd.f32 %v239, %v245
        %v252 = vadd.f32 %v240, %v246
        %v253 = vadd.f32 %v241, %v247
        %v254 = vadd.f32 %v242, %v248
        %v255 = vrsqrt.pop %v249
        %v256 = vmul.f32 %v255, %v249
        %v257 = vmul.f32 %v256, %v255
        %v258 = vmul.f32 0.5, %v257
        %v259 = vsub.f32 1.5, %v258
        %v260 = vmul.f32 %v255, %v259
        %v261 = vmul.f32 %v249, %v260
        %vm262 = vcmp.eq.f32.partialorder %v249, inf
        %v263 = vsel %vm262, %v249, %v261
        %vm264 = vcmp.eq.f32.partialorder %v249, 0.0
        %v265 = vand.u32 %v249, 2147483648
        %v266 = vsel %vm264, %v265, %v263
        %v267 = vrsqrt.pop %v250
        %v268 = vmul.f32 %v267, %v250
        %v269 = vmul.f32 %v268, %v267
        %v270 = vmul.f32 0.5, %v269
        %v271 = vsub.f32 1.5, %v270
        %v272 = vmul.f32 %v267, %v271
        %v273 = vmul.f32 %v250, %v272
        %vm274 = vcmp.eq.f32.partialorder %v250, inf
        %v275 = vsel %vm274, %v250, %v273
        %vm276 = vcmp.eq.f32.partialorder %v250, 0.0
        %v277 = vand.u32 %v250, 2147483648
        %v278 = vsel %vm276, %v277, %v275
        %v279 = vrsqrt.pop %v251
        %v280 = vmul.f32 %v279, %v251
        %v281 = vmul.f32 %v280, %v279
        %v282 = vmul.f32 0.5, %v281
        %v283 = vsub.f32 1.5, %v282
        %v284 = vmul.f32 %v279, %v283
        %v285 = vmul.f32 %v251, %v284
        %vm286 = vcmp.eq.f32.partialorder %v251, inf
        %v287 = vsel %vm286, %v251, %v285
        %vm288 = vcmp.eq.f32.partialorder %v251, 0.0
        %v289 = vand.u32 %v251, 2147483648
        %v290 = vsel %vm288, %v289, %v287
        %v291 = vrsqrt.pop %v252
        %v292 = vmul.f32 %v291, %v252
        %v293 = vmul.f32 %v292, %v291
        %v294 = vmul.f32 0.5, %v293
        %v295 = vsub.f32 1.5, %v294
        %v296 = vmul.f32 %v291, %v295
        %v297 = vmul.f32 %v252, %v296
        %vm298 = vcmp.eq.f32.partialorder %v252, inf
        %v299 = vsel %vm298, %v252, %v297
        %vm300 = vcmp.eq.f32.partialorder %v252, 0.0
        %v301 = vand.u32 %v252, 2147483648
        %v302 = vsel %vm300, %v301, %v299
        %v303 = vrsqrt.pop %v253
        %v304 = vmul.f32 %v303, %v253
        %v305 = vmul.f32 %v304, %v303
        %v306 = vmul.f32 0.5, %v305
        %v307 = vsub.f32 1.5, %v306
        %v308 = vmul.f32 %v303, %v307
        %v309 = vmul.f32 %v253, %v308
        %vm310 = vcmp.eq.f32.partialorder %v253, inf
        %v311 = vsel %vm310, %v253, %v309
        %vm312 = vcmp.eq.f32.partialorder %v253, 0.0
        %v313 = vand.u32 %v253, 2147483648
        %v314 = vsel %vm312, %v313, %v311
        %v315 = vrsqrt.pop %v254
        %v316 = vmul.f32 %v315, %v254
        %v317 = vmul.f32 %v316, %v315
        %v318 = vmul.f32 0.5, %v317
        %v319 = vsub.f32 1.5, %v318
        %v320 = vmul.f32 %v315, %v319
        %v321 = vmul.f32 %v254, %v320
        %vm322 = vcmp.eq.f32.partialorder %v254, inf
        %v323 = vsel %vm322, %v254, %v321
        %vm324 = vcmp.eq.f32.partialorder %v254, 0.0
        %v325 = vand.u32 %v254, 2147483648
        %v326 = vsel %vm324, %v325, %v323
        %v327 = vld [vmem:[%s4] sm:$0xff]
        %v328 = vld [vmem:[%s4 + $0x8] sm:$0xff]
        %v329 = vld [vmem:[%s4 + $0x10] sm:$0xff]
        %v330 = vld [vmem:[%s4 + $0x30] sm:$0xff]
        %v331 = vld [vmem:[%s4 + $0x38] sm:$0xff]
        %v332 = vld [vmem:[%s4 + $0x40] sm:$0xff]
        %v333 = vld [vmem:[%s4 + $0x18] sm:$0xff]
        %v334 = vld [vmem:[%s4 + $0x20] sm:$0xff]
        %v335 = vld [vmem:[%s4 + $0x28] sm:$0xff]
        %v336 = vld [vmem:[%s4 + $0x48] sm:$0xff]
        %v337 = vld [vmem:[%s4 + $0x50] sm:$0xff]
        %v338 = vld [vmem:[%s4 + $0x58] sm:$0xff]
        %v339 = vmul.f32 %v327, %v327
        %v340 = vmul.f32 %v328, %v328
        %v341 = vmul.f32 %v329, %v329
        %v342 = vmul.f32 %v330, %v330
        %v343 = vmul.f32 %v331, %v331
        %v344 = vmul.f32 %v332, %v332
        %v345 = vmul.f32 %v333, %v333
        %v346 = vmul.f32 %v334, %v334
        %v347 = vmul.f32 %v335, %v335
        %v348 = vmul.f32 %v336, %v336
        %v349 = vmul.f32 %v337, %v337
        %v350 = vmul.f32 %v338, %v338
        %v351 = vadd.f32 %v339, %v345
        %v352 = vadd.f32 %v340, %v346
        %v353 = vadd.f32 %v341, %v347
        %v354 = vadd.f32 %v342, %v348
        %v355 = vadd.f32 %v343, %v349
        %v356 = vadd.f32 %v344, %v350
        %vm357 = vcmp.gt.f32.partialorder %v351, 1e-12
        %vm358 = vcmp.gt.f32.partialorder %v352, 1e-12
        %vm359 = vcmp.gt.f32.partialorder %v353, 1e-12
        %vm360 = vcmp.gt.f32.partialorder %v354, 1e-12
        %vm361 = vcmp.gt.f32.partialorder %v355, 1e-12
        %vm362 = vcmp.gt.f32.partialorder %v356, 1e-12
        %v363 = vmax.f32 %v351, 1e-12
        %v364 = vmax.f32 %v352, 1e-12
        %v365 = vmax.f32 %v353, 1e-12
        %v366 = vmax.f32 %v354, 1e-12
        %v367 = vmax.f32 %v355, 1e-12
        %v368 = vmax.f32 %v356, 1e-12
        %v369 = vrsqrt.pop %v363
        %v370 = vmul.f32 %v369, %v363
        %v371 = vmul.f32 %v370, %v369
        %v372 = vmul.f32 0.5, %v371
        %v373 = vsub.f32 1.5, %v372
        %v374 = vmul.f32 %v369, %v373
        %vm375 = vweird.f32 %v363
        %vm376 = vweird.f32 %v369
        %vm377 = vmor %vm375, %vm376
        %v378 = vsel %vm377, %v369, %v374
        %v379 = vrsqrt.pop %v364
        %v380 = vmul.f32 %v379, %v364
        %v381 = vmul.f32 %v380, %v379
        %v382 = vmul.f32 0.5, %v381
        %v383 = vsub.f32 1.5, %v382
        %v384 = vmul.f32 %v379, %v383
        %vm385 = vweird.f32 %v364
        %vm386 = vweird.f32 %v379
        %vm387 = vmor %vm385, %vm386
        %v388 = vsel %vm387, %v379, %v384
        %v389 = vrsqrt.pop %v365
        %v390 = vmul.f32 %v389, %v365
        %v391 = vmul.f32 %v390, %v389
        %v392 = vmul.f32 0.5, %v391
        %v393 = vsub.f32 1.5, %v392
        %v394 = vmul.f32 %v389, %v393
        %vm395 = vweird.f32 %v365
        %vm396 = vweird.f32 %v389
        %vm397 = vmor %vm395, %vm396
        %v398 = vsel %vm397, %v389, %v394
        %v399 = vrsqrt.pop %v366
        %v400 = vmul.f32 %v399, %v366
        %v401 = vmul.f32 %v400, %v399
        %v402 = vmul.f32 0.5, %v401
        %v403 = vsub.f32 1.5, %v402
        %v404 = vmul.f32 %v399, %v403
        %vm405 = vweird.f32 %v366
        %vm406 = vweird.f32 %v399
        %vm407 = vmor %vm405, %vm406
        %v408 = vsel %vm407, %v399, %v404
        %v409 = vrsqrt.pop %v367
        %v410 = vmul.f32 %v409, %v367
        %v411 = vmul.f32 %v410, %v409
        %v412 = vmul.f32 0.5, %v411
        %v413 = vsub.f32 1.5, %v412
        %v414 = vmul.f32 %v409, %v413
        %vm415 = vweird.f32 %v367
        %vm416 = vweird.f32 %v409
        %vm417 = vmor %vm415, %vm416
        %v418 = vsel %vm417, %v409, %v414
        %v419 = vrsqrt.pop %v368
        %v420 = vmul.f32 %v419, %v368
        %v421 = vmul.f32 %v420, %v419
        %v422 = vmul.f32 0.5, %v421
        %v423 = vsub.f32 1.5, %v422
        %v424 = vmul.f32 %v419, %v423
        %vm425 = vweird.f32 %v368
        %vm426 = vweird.f32 %v419
        %vm427 = vmor %vm425, %vm426
        %v428 = vsel %vm427, %v419, %v424
        %v429 = vmul.f32 %v266, %v378
        %v430 = vmul.f32 %v278, %v388
        %v431 = vmul.f32 %v290, %v398
        %v432 = vmul.f32 %v302, %v408
        %v433 = vmul.f32 %v314, %v418
        %v434 = vmul.f32 %v326, %v428
        %v435 = vsel %vm357, %v429, 0.0
        %v436 = vsel %vm358, %v430, 0.0
        %v437 = vsel %vm359, %v431, 0.0
        %v438 = vsel %vm360, %v432, 0.0
        %v439 = vsel %vm361, %v433, 0.0
        %v440 = vsel %vm362, %v434, 0.0
        %v441 = vmul.f32 %v327, %v435
        %v442 = vmul.f32 %v328, %v436
        %v443 = vmul.f32 %v329, %v437
        %v444 = vmul.f32 %v330, %v438
        %v445 = vmul.f32 %v331, %v439
        %v446 = vmul.f32 %v332, %v440
        %v447 = vsel %vm357, %v441, %v266
        %v448 = vsel %vm358, %v442, %v278
        %v449 = vsel %vm359, %v443, %v290
        %v450 = vsel %vm360, %v444, %v302
        %v451 = vsel %vm361, %v445, %v314
        %v452 = vsel %vm362, %v446, %v326
        %453 = vst [vmem:[%s4] sm:$0xff] %v447
        %454 = vst [vmem:[%s4 + $0x8] sm:$0xff] %v448
        %455 = vst [vmem:[%s4 + $0x10] sm:$0xff] %v449
        %456 = vst [vmem:[%s4 + $0x30] sm:$0xff] %v450
        %457 = vst [vmem:[%s4 + $0x38] sm:$0xff] %v451
        %458 = vst [vmem:[%s4 + $0x40] sm:$0xff] %v452
        %v459 = vmul.f32 %v333, %v435
        %v460 = vmul.f32 %v334, %v436
        %v461 = vmul.f32 %v335, %v437
        %v462 = vmul.f32 %v336, %v438
        %v463 = vmul.f32 %v337, %v439
        %v464 = vmul.f32 %v338, %v440
        %465 = vst [vmem:[%s4 + $0x18] sm:$0xff] %v459
        %466 = vst [vmem:[%s4 + $0x20] sm:$0xff] %v460
        %467 = vst [vmem:[%s4 + $0x28] sm:$0xff] %v461
        %468 = vst [vmem:[%s4 + $0x48] sm:$0xff] %v462
        %469 = vst [vmem:[%s4 + $0x50] sm:$0xff] %v463
        %470 = vst [vmem:[%s4 + $0x58] sm:$0xff] %v464
        %v471 = vld [vmem:[%s4] sm:$0xff]
        %v472 = vld [vmem:[%s4 + $0x8] sm:$0xff]
        %v473 = vld [vmem:[%s4 + $0x10] sm:$0xff]
        %v474 = vld [vmem:[%s4 + $0x18] sm:$0xff]
        %v475 = vld [vmem:[%s4 + $0x20] sm:$0xff]
        %v476 = vld [vmem:[%s4 + $0x28] sm:$0xff]
        %v477 = vld [vmem:[%s4 + $0x30] sm:$0xff]
        %v478 = vld [vmem:[%s4 + $0x38] sm:$0xff]
        %v479 = vld [vmem:[%s4 + $0x40] sm:$0xff]
        %v480 = vld [vmem:[%s4 + $0x48] sm:$0xff]
        %v481 = vld [vmem:[%s4 + $0x50] sm:$0xff]
        %v482 = vld [vmem:[%s4 + $0x58] sm:$0xff]
        %v483 = vpack.c.bf16 %v477, %v471
        %v484 = vpack.c.bf16 %v478, %v472
        %v485 = vpack.c.bf16 %v479, %v473
        %v486 = vpack.c.bf16 %v480, %v474
        %v487 = vpack.c.bf16 %v481, %v475
        %v488 = vpack.c.bf16 %v482, %v476
        %v489 = vld [vmem:[#allocation4] sm:$0xff]
        %v490 = vld [vmem:[#allocation4 + $0x8] sm:$0xff]
        %v491 = vld [vmem:[#allocation4 + $0x10] sm:$0xff]
        %v492 = vld [vmem:[#allocation4 + $0x18] sm:$0xff]
        %v493 = vld [vmem:[#allocation4 + $0x20] sm:$0xff]
        %v494 = vld [vmem:[#allocation4 + $0x28] sm:$0xff]
        %v495 = vld [vmem:[#allocation4 + $0x30] sm:$0xff]
        %v496 = vld [vmem:[#allocation4 + $0x38] sm:$0xff]
        %v497 = vld [vmem:[#allocation4 + $0x40] sm:$0xff]
        %v498 = vld [vmem:[#allocation4 + $0x48] sm:$0xff]
        %v499 = vld [vmem:[#allocation4 + $0x50] sm:$0xff]
        %v500 = vld [vmem:[#allocation4 + $0x58] sm:$0xff]
        %v501 = vld [vmem:[#allocation4 + $0x60] sm:$0xff]
        %v502 = vld [vmem:[#allocation4 + $0x68] sm:$0xff]
        %v503 = vld [vmem:[#allocation4 + $0x70] sm:$0xff]
        %v504 = vld [vmem:[#allocation4 + $0x78] sm:$0xff]
        %v505 = vld [vmem:[#allocation4 + $0x80] sm:$0xff]
        %v506 = vld [vmem:[#allocation4 + $0x88] sm:$0xff]
        %v507 = vld [vmem:[#allocation4 + $0x90] sm:$0xff]
        %v508 = vld [vmem:[#allocation4 + $0x98] sm:$0xff]
        %v509 = vld [vmem:[#allocation4 + $0xa0] sm:$0xff]
        %v510 = vld [vmem:[#allocation4 + $0xa8] sm:$0xff]
        %v511 = vld [vmem:[#allocation4 + $0xb0] sm:$0xff]
        %v512 = vld [vmem:[#allocation4 + $0xb8] sm:$0xff]
        %v513 = vld [vmem:[#allocation4 + $0xc0] sm:$0xff]
        %v514 = vld [vmem:[#allocation4 + $0xc8] sm:$0xff]
        %v515 = vld [vmem:[#allocation4 + $0xd0] sm:$0xff]
        %v516 = vld [vmem:[#allocation4 + $0xd8] sm:$0xff]
        %v517 = vld [vmem:[#allocation4 + $0xe0] sm:$0xff]
        %v518 = vld [vmem:[#allocation4 + $0xe8] sm:$0xff]
        %v519 = vld [vmem:[#allocation4 + $0xf0] sm:$0xff]
        %v520 = vld [vmem:[#allocation4 + $0xf8] sm:$0xff]
        %v521 = vld [vmem:[#allocation4 + $0x100] sm:$0xff]
        %v522 = vld [vmem:[#allocation4 + $0x108] sm:$0xff]
        %v523 = vld [vmem:[#allocation4 + $0x110] sm:$0xff]
        %v524 = vld [vmem:[#allocation4 + $0x118] sm:$0xff]
        %v525 = vld [vmem:[#allocation4 + $0x120] sm:$0xff]
        %v526 = vld [vmem:[#allocation4 + $0x128] sm:$0xff]
        %v527 = vld [vmem:[#allocation4 + $0x130] sm:$0xff]
        %v528 = vld [vmem:[#allocation4 + $0x138] sm:$0xff]
        %v529 = vld [vmem:[#allocation4 + $0x140] sm:$0xff]
        %v530 = vld [vmem:[#allocation4 + $0x148] sm:$0xff]
        %v531 = vld [vmem:[#allocation4 + $0x150] sm:$0xff]
        %v532 = vld [vmem:[#allocation4 + $0x158] sm:$0xff]
        %v533 = vld [vmem:[#allocation4 + $0x160] sm:$0xff]
        %v534 = vld [vmem:[#allocation4 + $0x168] sm:$0xff]
        %v535 = vld [vmem:[#allocation4 + $0x170] sm:$0xff]
        %v536 = vld [vmem:[#allocation4 + $0x178] sm:$0xff]
        %v537 = vld [vmem:[#allocation4 + $0x180] sm:$0xff]
        %v538 = vld [vmem:[#allocation4 + $0x188] sm:$0xff]
        %v539 = vld [vmem:[#allocation4 + $0x190] sm:$0xff]
        %v540 = vld [vmem:[#allocation4 + $0x198] sm:$0xff]
        %v541 = vld [vmem:[#allocation4 + $0x1a0] sm:$0xff]
        %v542 = vld [vmem:[#allocation4 + $0x1a8] sm:$0xff]
        %v543 = vld [vmem:[#allocation4 + $0x1b0] sm:$0xff]
        %v544 = vld [vmem:[#allocation4 + $0x1b8] sm:$0xff]
        %v545 = vld [vmem:[#allocation4 + $0x1c0] sm:$0xff]
        %v546 = vld [vmem:[#allocation4 + $0x1c8] sm:$0xff]
        %v547 = vld [vmem:[#allocation4 + $0x1d0] sm:$0xff]
        %v548 = vld [vmem:[#allocation4 + $0x1d8] sm:$0xff]
        %v549 = vld [vmem:[#allocation4 + $0x1e0] sm:$0xff]
        %v550 = vld [vmem:[#allocation4 + $0x1e8] sm:$0xff]
        %v551 = vld [vmem:[#allocation4 + $0x1f0] sm:$0xff]
        %v552 = vld [vmem:[#allocation4 + $0x1f8] sm:$0xff]
        %v553 = vld [vmem:[#allocation4 + $0x200] sm:$0xff]
        %v554 = vld [vmem:[#allocation4 + $0x208] sm:$0xff]
        %v555 = vld [vmem:[#allocation4 + $0x210] sm:$0xff]
        %v556 = vld [vmem:[#allocation4 + $0x218] sm:$0xff]
        %v557 = vld [vmem:[#allocation4 + $0x220] sm:$0xff]
        %v558 = vld [vmem:[#allocation4 + $0x228] sm:$0xff]
        %v559 = vld [vmem:[#allocation4 + $0x230] sm:$0xff]
        %v560 = vld [vmem:[#allocation4 + $0x238] sm:$0xff]
        %v561 = vld [vmem:[#allocation4 + $0x240] sm:$0xff]
        %v562 = vld [vmem:[#allocation4 + $0x248] sm:$0xff]
        %v563 = vld [vmem:[#allocation4 + $0x250] sm:$0xff]
        %v564 = vld [vmem:[#allocation4 + $0x258] sm:$0xff]
        %v565 = vld [vmem:[#allocation4 + $0x260] sm:$0xff]
        %v566 = vld [vmem:[#allocation4 + $0x268] sm:$0xff]
        %v567 = vld [vmem:[#allocation4 + $0x270] sm:$0xff]
        %v568 = vld [vmem:[#allocation4 + $0x278] sm:$0xff]
        %v569 = vld [vmem:[#allocation4 + $0x280] sm:$0xff]
        %v570 = vld [vmem:[#allocation4 + $0x288] sm:$0xff]
        %v571 = vld [vmem:[#allocation4 + $0x290] sm:$0xff]
        %v572 = vld [vmem:[#allocation4 + $0x298] sm:$0xff]
        %v573 = vld [vmem:[#allocation4 + $0x2a0] sm:$0xff]
        %v574 = vld [vmem:[#allocation4 + $0x2a8] sm:$0xff]
        %v575 = vld [vmem:[#allocation4 + $0x2b0] sm:$0xff]
        %v576 = vld [vmem:[#allocation4 + $0x2b8] sm:$0xff]
        %v577 = vld [vmem:[#allocation4 + $0x2c0] sm:$0xff]
        %v578 = vld [vmem:[#allocation4 + $0x2c8] sm:$0xff]
        %v579 = vld [vmem:[#allocation4 + $0x2d0] sm:$0xff]
        %v580 = vld [vmem:[#allocation4 + $0x2d8] sm:$0xff]
        %v581 = vld [vmem:[#allocation4 + $0x2e0] sm:$0xff]
        %v582 = vld [vmem:[#allocation4 + $0x2e8] sm:$0xff]
        %v583 = vld [vmem:[#allocation4 + $0x2f0] sm:$0xff]
        %v584 = vld [vmem:[#allocation4 + $0x2f8] sm:$0xff]
        %v585 = vld [vmem:[#allocation4 + $0x300] sm:$0xff]
        %v586 = vld [vmem:[#allocation4 + $0x308] sm:$0xff]
        %v587 = vld [vmem:[#allocation4 + $0x310] sm:$0xff]
        %v588 = vld [vmem:[#allocation4 + $0x318] sm:$0xff]
        %v589 = vld [vmem:[#allocation4 + $0x320] sm:$0xff]
        %v590 = vld [vmem:[#allocation4 + $0x328] sm:$0xff]
        %v591 = vld [vmem:[#allocation4 + $0x330] sm:$0xff]
        %v592 = vld [vmem:[#allocation4 + $0x338] sm:$0xff]
        %v593 = vld [vmem:[#allocation4 + $0x340] sm:$0xff]
        %v594 = vld [vmem:[#allocation4 + $0x348] sm:$0xff]
        %v595 = vld [vmem:[#allocation4 + $0x350] sm:$0xff]
        %v596 = vld [vmem:[#allocation4 + $0x358] sm:$0xff]
        %v597 = vld [vmem:[#allocation4 + $0x360] sm:$0xff]
        %v598 = vld [vmem:[#allocation4 + $0x368] sm:$0xff]
        %v599 = vld [vmem:[#allocation4 + $0x370] sm:$0xff]
        %v600 = vld [vmem:[#allocation4 + $0x378] sm:$0xff]
        %v601 = vld [vmem:[#allocation4 + $0x380] sm:$0xff]
        %v602 = vld [vmem:[#allocation4 + $0x388] sm:$0xff]
        %v603 = vld [vmem:[#allocation4 + $0x390] sm:$0xff]
        %v604 = vld [vmem:[#allocation4 + $0x398] sm:$0xff]
        %v605 = vld [vmem:[#allocation4 + $0x3a0] sm:$0xff]
        %v606 = vld [vmem:[#allocation4 + $0x3a8] sm:$0xff]
        %v607 = vld [vmem:[#allocation4 + $0x3b0] sm:$0xff]
        %v608 = vld [vmem:[#allocation4 + $0x3b8] sm:$0xff]
        %v609 = vld [vmem:[#allocation4 + $0x3c0] sm:$0xff]
        %v610 = vld [vmem:[#allocation4 + $0x3c8] sm:$0xff]
        %v611 = vld [vmem:[#allocation4 + $0x3d0] sm:$0xff]
        %v612 = vld [vmem:[#allocation4 + $0x3d8] sm:$0xff]
        %v613 = vld [vmem:[#allocation4 + $0x3e0] sm:$0xff]
        %v614 = vld [vmem:[#allocation4 + $0x3e8] sm:$0xff]
        %v615 = vld [vmem:[#allocation4 + $0x3f0] sm:$0xff]
        %v616 = vld [vmem:[#allocation4 + $0x3f8] sm:$0xff]
        %v617 = vld [vmem:[#allocation4 + $0x400] sm:$0xff]
        %v618 = vld [vmem:[#allocation4 + $0x408] sm:$0xff]
        %v619 = vld [vmem:[#allocation4 + $0x410] sm:$0xff]
        %v620 = vld [vmem:[#allocation4 + $0x418] sm:$0xff]
        %v621 = vld [vmem:[#allocation4 + $0x420] sm:$0xff]
        %v622 = vld [vmem:[#allocation4 + $0x428] sm:$0xff]
        %v623 = vld [vmem:[#allocation4 + $0x430] sm:$0xff]
        %v624 = vld [vmem:[#allocation4 + $0x438] sm:$0xff]
        %v625 = vld [vmem:[#allocation4 + $0x440] sm:$0xff]
        %v626 = vld [vmem:[#allocation4 + $0x448] sm:$0xff]
        %v627 = vld [vmem:[#allocation4 + $0x450] sm:$0xff]
        %v628 = vld [vmem:[#allocation4 + $0x458] sm:$0xff]
        %v629 = vld [vmem:[#allocation4 + $0x460] sm:$0xff]
        %v630 = vld [vmem:[#allocation4 + $0x468] sm:$0xff]
        %v631 = vld [vmem:[#allocation4 + $0x470] sm:$0xff]
        %v632 = vld [vmem:[#allocation4 + $0x478] sm:$0xff]
        %v633 = vld [vmem:[#allocation4 + $0x480] sm:$0xff]
        %v634 = vld [vmem:[#allocation4 + $0x488] sm:$0xff]
        %v635 = vld [vmem:[#allocation4 + $0x490] sm:$0xff]
        %v636 = vld [vmem:[#allocation4 + $0x498] sm:$0xff]
        %v637 = vld [vmem:[#allocation4 + $0x4a0] sm:$0xff]
        %v638 = vld [vmem:[#allocation4 + $0x4a8] sm:$0xff]
        %v639 = vld [vmem:[#allocation4 + $0x4b0] sm:$0xff]
        %v640 = vld [vmem:[#allocation4 + $0x4b8] sm:$0xff]
        %v641 = vld [vmem:[#allocation4 + $0x4c0] sm:$0xff]
        %v642 = vld [vmem:[#allocation4 + $0x4c8] sm:$0xff]
        %v643 = vld [vmem:[#allocation4 + $0x4d0] sm:$0xff]
        %v644 = vld [vmem:[#allocation4 + $0x4d8] sm:$0xff]
        %v645 = vld [vmem:[#allocation4 + $0x4e0] sm:$0xff]
        %v646 = vld [vmem:[#allocation4 + $0x4e8] sm:$0xff]
        %v647 = vld [vmem:[#allocation4 + $0x4f0] sm:$0xff]
        %v648 = vld [vmem:[#allocation4 + $0x4f8] sm:$0xff]
        %v649 = vld [vmem:[#allocation4 + $0x500] sm:$0xff]
        %v650 = vld [vmem:[#allocation4 + $0x508] sm:$0xff]
        %v651 = vld [vmem:[#allocation4 + $0x510] sm:$0xff]
        %v652 = vld [vmem:[#allocation4 + $0x518] sm:$0xff]
        %v653 = vld [vmem:[#allocation4 + $0x520] sm:$0xff]
        %v654 = vld [vmem:[#allocation4 + $0x528] sm:$0xff]
        %v655 = vld [vmem:[#allocation4 + $0x530] sm:$0xff]
        %v656 = vld [vmem:[#allocation4 + $0x538] sm:$0xff]
        %v657 = vld [vmem:[#allocation4 + $0x540] sm:$0xff]
        %v658 = vld [vmem:[#allocation4 + $0x548] sm:$0xff]
        %v659 = vld [vmem:[#allocation4 + $0x550] sm:$0xff]
        %v660 = vld [vmem:[#allocation4 + $0x558] sm:$0xff]
        %v661 = vld [vmem:[#allocation4 + $0x560] sm:$0xff]
        %v662 = vld [vmem:[#allocation4 + $0x568] sm:$0xff]
        %v663 = vld [vmem:[#allocation4 + $0x570] sm:$0xff]
        %v664 = vld [vmem:[#allocation4 + $0x578] sm:$0xff]
        %v665 = vld [vmem:[#allocation4 + $0x580] sm:$0xff]
        %v666 = vld [vmem:[#allocation4 + $0x588] sm:$0xff]
        %v667 = vld [vmem:[#allocation4 + $0x590] sm:$0xff]
        %v668 = vld [vmem:[#allocation4 + $0x598] sm:$0xff]
        %v669 = vld [vmem:[#allocation4 + $0x5a0] sm:$0xff]
        %v670 = vld [vmem:[#allocation4 + $0x5a8] sm:$0xff]
        %v671 = vld [vmem:[#allocation4 + $0x5b0] sm:$0xff]
        %v672 = vld [vmem:[#allocation4 + $0x5b8] sm:$0xff]
        %v673 = vld [vmem:[#allocation4 + $0x5c0] sm:$0xff]
        %v674 = vld [vmem:[#allocation4 + $0x5c8] sm:$0xff]
        %v675 = vld [vmem:[#allocation4 + $0x5d0] sm:$0xff]
        %v676 = vld [vmem:[#allocation4 + $0x5d8] sm:$0xff]
        %v677 = vld [vmem:[#allocation4 + $0x5e0] sm:$0xff]
        %v678 = vld [vmem:[#allocation4 + $0x5e8] sm:$0xff]
        %v679 = vld [vmem:[#allocation4 + $0x5f0] sm:$0xff]
        %v680 = vld [vmem:[#allocation4 + $0x5f8] sm:$0xff]
        %v873 = vunpack.c.l.b16 %v489
        %v874 = vunpack.c.h.b16 %v489
        %v875 = vunpack.c.l.b16 %v490
        %v876 = vunpack.c.h.b16 %v490
        %v877 = vunpack.c.l.b16 %v491
        %v878 = vunpack.c.h.b16 %v491
        %v879 = vunpack.c.l.b16 %v492
        %v880 = vunpack.c.h.b16 %v492
        %v881 = vunpack.c.l.b16 %v493
        %v882 = vunpack.c.h.b16 %v493
        %v883 = vunpack.c.l.b16 %v494
        %v884 = vunpack.c.h.b16 %v494
        %v885 = vunpack.c.l.b16 %v495
        %v886 = vunpack.c.h.b16 %v495
        %v887 = vunpack.c.l.b16 %v496
        %v888 = vunpack.c.h.b16 %v496
        %v889 = vunpack.c.l.b16 %v497
        %v890 = vunpack.c.h.b16 %v497
        %v891 = vunpack.c.l.b16 %v498
        %v892 = vunpack.c.h.b16 %v498
        %v893 = vunpack.c.l.b16 %v499
        %v894 = vunpack.c.h.b16 %v499
        %v895 = vunpack.c.l.b16 %v500
        %v896 = vunpack.c.h.b16 %v500
        %v897 = vunpack.c.l.b16 %v501
        %v898 = vunpack.c.h.b16 %v501
        %v899 = vunpack.c.l.b16 %v502
        %v900 = vunpack.c.h.b16 %v502
        %v901 = vunpack.c.l.b16 %v503
        %v902 = vunpack.c.h.b16 %v503
        %v903 = vunpack.c.l.b16 %v504
        %v904 = vunpack.c.h.b16 %v504
        %v905 = vunpack.c.l.b16 %v505
        %v906 = vunpack.c.h.b16 %v505
        %v907 = vunpack.c.l.b16 %v506
        %v908 = vunpack.c.h.b16 %v506
        %v909 = vunpack.c.l.b16 %v507
        %v910 = vunpack.c.h.b16 %v507
        %v911 = vunpack.c.l.b16 %v508
        %v912 = vunpack.c.h.b16 %v508
        %v913 = vunpack.c.l.b16 %v509
        %v914 = vunpack.c.h.b16 %v509
        %v915 = vunpack.c.l.b16 %v510
        %v916 = vunpack.c.h.b16 %v510
        %v917 = vunpack.c.l.b16 %v511
        %v918 = vunpack.c.h.b16 %v511
        %v919 = vunpack.c.l.b16 %v512
        %v920 = vunpack.c.h.b16 %v512
        %v921 = vunpack.c.l.b16 %v513
        %v922 = vunpack.c.h.b16 %v513
        %v923 = vunpack.c.l.b16 %v514
        %v924 = vunpack.c.h.b16 %v514
        %v925 = vunpack.c.l.b16 %v515
        %v926 = vunpack.c.h.b16 %v515
        %v927 = vunpack.c.l.b16 %v516
        %v928 = vunpack.c.h.b16 %v516
        %v929 = vunpack.c.l.b16 %v517
        %v930 = vunpack.c.h.b16 %v517
        %v931 = vunpack.c.l.b16 %v518
        %v932 = vunpack.c.h.b16 %v518
        %v933 = vunpack.c.l.b16 %v519
        %v934 = vunpack.c.h.b16 %v519
        %v935 = vunpack.c.l.b16 %v520
        %v936 = vunpack.c.h.b16 %v520
        %v937 = vunpack.c.l.b16 %v521
        %v938 = vunpack.c.h.b16 %v521
        %v939 = vunpack.c.l.b16 %v522
        %v940 = vunpack.c.h.b16 %v522
        %v941 = vunpack.c.l.b16 %v523
        %v942 = vunpack.c.h.b16 %v523
        %v943 = vunpack.c.l.b16 %v524
        %v944 = vunpack.c.h.b16 %v524
        %v945 = vunpack.c.l.b16 %v525
        %v946 = vunpack.c.h.b16 %v525
        %v947 = vunpack.c.l.b16 %v526
        %v948 = vunpack.c.h.b16 %v526
        %v949 = vunpack.c.l.b16 %v527
        %v950 = vunpack.c.h.b16 %v527
        %v951 = vunpack.c.l.b16 %v528
        %v952 = vunpack.c.h.b16 %v528
        %v953 = vunpack.c.l.b16 %v529
        %v954 = vunpack.c.h.b16 %v529
        %v955 = vunpack.c.l.b16 %v530
        %v956 = vunpack.c.h.b16 %v530
        %v957 = vunpack.c.l.b16 %v531
        %v958 = vunpack.c.h.b16 %v531
        %v959 = vunpack.c.l.b16 %v532
        %v960 = vunpack.c.h.b16 %v532
        %v961 = vunpack.c.l.b16 %v533
        %v962 = vunpack.c.h.b16 %v533
        %v963 = vunpack.c.l.b16 %v534
        %v964 = vunpack.c.h.b16 %v534
        %v965 = vunpack.c.l.b16 %v535
        %v966 = vunpack.c.h.b16 %v535
        %v967 = vunpack.c.l.b16 %v536
        %v968 = vunpack.c.h.b16 %v536
        %v969 = vunpack.c.l.b16 %v537
        %v970 = vunpack.c.h.b16 %v537
        %v971 = vunpack.c.l.b16 %v538
        %v972 = vunpack.c.h.b16 %v538
        %v973 = vunpack.c.l.b16 %v539
        %v974 = vunpack.c.h.b16 %v539
        %v975 = vunpack.c.l.b16 %v540
        %v976 = vunpack.c.h.b16 %v540
        %v977 = vunpack.c.l.b16 %v541
        %v978 = vunpack.c.h.b16 %v541
        %v979 = vunpack.c.l.b16 %v542
        %v980 = vunpack.c.h.b16 %v542
        %v981 = vunpack.c.l.b16 %v543
        %v982 = vunpack.c.h.b16 %v543
        %v983 = vunpack.c.l.b16 %v544
        %v984 = vunpack.c.h.b16 %v544
        %v985 = vunpack.c.l.b16 %v545
        %v986 = vunpack.c.h.b16 %v545
        %v987 = vunpack.c.l.b16 %v546
        %v988 = vunpack.c.h.b16 %v546
        %v989 = vunpack.c.l.b16 %v547
        %v990 = vunpack.c.h.b16 %v547
        %v991 = vunpack.c.l.b16 %v548
        %v992 = vunpack.c.h.b16 %v548
        %v993 = vunpack.c.l.b16 %v549
        %v994 = vunpack.c.h.b16 %v549
        %v995 = vunpack.c.l.b16 %v550
        %v996 = vunpack.c.h.b16 %v550
        %v997 = vunpack.c.l.b16 %v551
        %v998 = vunpack.c.h.b16 %v551
        %v999 = vunpack.c.l.b16 %v552
        %v1000 = vunpack.c.h.b16 %v552
        %v1001 = vunpack.c.l.b16 %v553
        %v1002 = vunpack.c.h.b16 %v553
        %v1003 = vunpack.c.l.b16 %v554
        %v1004 = vunpack.c.h.b16 %v554
        %v1005 = vunpack.c.l.b16 %v555
        %v1006 = vunpack.c.h.b16 %v555
        %v1007 = vunpack.c.l.b16 %v556
        %v1008 = vunpack.c.h.b16 %v556
        %v1009 = vunpack.c.l.b16 %v557
        %v1010 = vunpack.c.h.b16 %v557
        %v1011 = vunpack.c.l.b16 %v558
        %v1012 = vunpack.c.h.b16 %v558
        %v1013 = vunpack.c.l.b16 %v559
        %v1014 = vunpack.c.h.b16 %v559
        %v1015 = vunpack.c.l.b16 %v560
        %v1016 = vunpack.c.h.b16 %v560
        %v1017 = vunpack.c.l.b16 %v561
        %v1018 = vunpack.c.h.b16 %v561
        %v1019 = vunpack.c.l.b16 %v562
        %v1020 = vunpack.c.h.b16 %v562
        %v1021 = vunpack.c.l.b16 %v563
        %v1022 = vunpack.c.h.b16 %v563
        %v1023 = vunpack.c.l.b16 %v564
        %v1024 = vunpack.c.h.b16 %v564
        %v1025 = vunpack.c.l.b16 %v565
        %v1026 = vunpack.c.h.b16 %v565
        %v1027 = vunpack.c.l.b16 %v566
        %v1028 = vunpack.c.h.b16 %v566
        %v1029 = vunpack.c.l.b16 %v567
        %v1030 = vunpack.c.h.b16 %v567
        %v1031 = vunpack.c.l.b16 %v568
        %v1032 = vunpack.c.h.b16 %v568
        %v1033 = vunpack.c.l.b16 %v569
        %v1034 = vunpack.c.h.b16 %v569
        %v1035 = vunpack.c.l.b16 %v570
        %v1036 = vunpack.c.h.b16 %v570
        %v1037 = vunpack.c.l.b16 %v571
        %v1038 = vunpack.c.h.b16 %v571
        %v1039 = vunpack.c.l.b16 %v572
        %v1040 = vunpack.c.h.b16 %v572
        %v1041 = vunpack.c.l.b16 %v573
        %v1042 = vunpack.c.h.b16 %v573
        %v1043 = vunpack.c.l.b16 %v574
        %v1044 = vunpack.c.h.b16 %v574
        %v1045 = vunpack.c.l.b16 %v575
        %v1046 = vunpack.c.h.b16 %v575
        %v1047 = vunpack.c.l.b16 %v576
        %v1048 = vunpack.c.h.b16 %v576
        %v1049 = vunpack.c.l.b16 %v577
        %v1050 = vunpack.c.h.b16 %v577
        %v1051 = vunpack.c.l.b16 %v578
        %v1052 = vunpack.c.h.b16 %v578
        %v1053 = vunpack.c.l.b16 %v579
        %v1054 = vunpack.c.h.b16 %v579
        %v1055 = vunpack.c.l.b16 %v580
        %v1056 = vunpack.c.h.b16 %v580
        %v1057 = vunpack.c.l.b16 %v581
        %v1058 = vunpack.c.h.b16 %v581
        %v1059 = vunpack.c.l.b16 %v582
        %v1060 = vunpack.c.h.b16 %v582
        %v1061 = vunpack.c.l.b16 %v583
        %v1062 = vunpack.c.h.b16 %v583
        %v1063 = vunpack.c.l.b16 %v584
        %v1064 = vunpack.c.h.b16 %v584
        %v1065 = vunpack.c.l.b16 %v585
        %v1066 = vunpack.c.h.b16 %v585
        %v1067 = vunpack.c.l.b16 %v586
        %v1068 = vunpack.c.h.b16 %v586
        %v1069 = vunpack.c.l.b16 %v587
        %v1070 = vunpack.c.h.b16 %v587
        %v1071 = vunpack.c.l.b16 %v588
        %v1072 = vunpack.c.h.b16 %v588
        %v1073 = vunpack.c.l.b16 %v589
        %v1074 = vunpack.c.h.b16 %v589
        %v1075 = vunpack.c.l.b16 %v590
        %v1076 = vunpack.c.h.b16 %v590
        %v1077 = vunpack.c.l.b16 %v591
        %v1078 = vunpack.c.h.b16 %v591
        %v1079 = vunpack.c.l.b16 %v592
        %v1080 = vunpack.c.h.b16 %v592
        %v1081 = vunpack.c.l.b16 %v593
        %v1082 = vunpack.c.h.b16 %v593
        %v1083 = vunpack.c.l.b16 %v594
        %v1084 = vunpack.c.h.b16 %v594
        %v1085 = vunpack.c.l.b16 %v595
        %v1086 = vunpack.c.h.b16 %v595
        %v1087 = vunpack.c.l.b16 %v596
        %v1088 = vunpack.c.h.b16 %v596
        %v1089 = vunpack.c.l.b16 %v597
        %v1090 = vunpack.c.h.b16 %v597
        %v1091 = vunpack.c.l.b16 %v598
        %v1092 = vunpack.c.h.b16 %v598
        %v1093 = vunpack.c.l.b16 %v599
        %v1094 = vunpack.c.h.b16 %v599
        %v1095 = vunpack.c.l.b16 %v600
        %v1096 = vunpack.c.h.b16 %v600
        %v1097 = vunpack.c.l.b16 %v601
        %v1098 = vunpack.c.h.b16 %v601
        %v1099 = vunpack.c.l.b16 %v602
        %v1100 = vunpack.c.h.b16 %v602
        %v1101 = vunpack.c.l.b16 %v603
        %v1102 = vunpack.c.h.b16 %v603
        %v1103 = vunpack.c.l.b16 %v604
        %v1104 = vunpack.c.h.b16 %v604
        %v1105 = vunpack.c.l.b16 %v605
        %v1106 = vunpack.c.h.b16 %v605
        %v1107 = vunpack.c.l.b16 %v606
        %v1108 = vunpack.c.h.b16 %v606
        %v1109 = vunpack.c.l.b16 %v607
        %v1110 = vunpack.c.h.b16 %v607
        %v1111 = vunpack.c.l.b16 %v608
        %v1112 = vunpack.c.h.b16 %v608
        %v1113 = vunpack.c.l.b16 %v609
        %v1114 = vunpack.c.h.b16 %v609
        %v1115 = vunpack.c.l.b16 %v610
        %v1116 = vunpack.c.h.b16 %v610
        %v1117 = vunpack.c.l.b16 %v611
        %v1118 = vunpack.c.h.b16 %v611
        %v1119 = vunpack.c.l.b16 %v612
        %v1120 = vunpack.c.h.b16 %v612
        %v1121 = vunpack.c.l.b16 %v613
        %v1122 = vunpack.c.h.b16 %v613
        %v1123 = vunpack.c.l.b16 %v614
        %v1124 = vunpack.c.h.b16 %v614
        %v1125 = vunpack.c.l.b16 %v615
        %v1126 = vunpack.c.h.b16 %v615
        %v1127 = vunpack.c.l.b16 %v616
        %v1128 = vunpack.c.h.b16 %v616
        %v1129 = vunpack.c.l.b16 %v617
        %v1130 = vunpack.c.h.b16 %v617
        %v1131 = vunpack.c.l.b16 %v618
        %v1132 = vunpack.c.h.b16 %v618
        %v1133 = vunpack.c.l.b16 %v619
        %v1134 = vunpack.c.h.b16 %v619
        %v1135 = vunpack.c.l.b16 %v620
        %v1136 = vunpack.c.h.b16 %v620
        %v1137 = vunpack.c.l.b16 %v621
        %v1138 = vunpack.c.h.b16 %v621
        %v1139 = vunpack.c.l.b16 %v622
        %v1140 = vunpack.c.h.b16 %v622
        %v1141 = vunpack.c.l.b16 %v623
        %v1142 = vunpack.c.h.b16 %v623
        %v1143 = vunpack.c.l.b16 %v624
        %v1144 = vunpack.c.h.b16 %v624
        %v1145 = vunpack.c.l.b16 %v625
        %v1146 = vunpack.c.h.b16 %v625
        %v1147 = vunpack.c.l.b16 %v626
        %v1148 = vunpack.c.h.b16 %v626
        %v1149 = vunpack.c.l.b16 %v627
        %v1150 = vunpack.c.h.b16 %v627
        %v1151 = vunpack.c.l.b16 %v628
        %v1152 = vunpack.c.h.b16 %v628
        %v1153 = vunpack.c.l.b16 %v629
        %v1154 = vunpack.c.h.b16 %v629
        %v1155 = vunpack.c.l.b16 %v630
        %v1156 = vunpack.c.h.b16 %v630
        %v1157 = vunpack.c.l.b16 %v631
        %v1158 = vunpack.c.h.b16 %v631
        %v1159 = vunpack.c.l.b16 %v632
        %v1160 = vunpack.c.h.b16 %v632
        %v1161 = vunpack.c.l.b16 %v633
        %v1162 = vunpack.c.h.b16 %v633
        %v1163 = vunpack.c.l.b16 %v634
        %v1164 = vunpack.c.h.b16 %v634
        %v1165 = vunpack.c.l.b16 %v635
        %v1166 = vunpack.c.h.b16 %v635
        %v1167 = vunpack.c.l.b16 %v636
        %v1168 = vunpack.c.h.b16 %v636
        %v1169 = vunpack.c.l.b16 %v637
        %v1170 = vunpack.c.h.b16 %v637
        %v1171 = vunpack.c.l.b16 %v638
        %v1172 = vunpack.c.h.b16 %v638
        %v1173 = vunpack.c.l.b16 %v639
        %v1174 = vunpack.c.h.b16 %v639
        %v1175 = vunpack.c.l.b16 %v640
        %v1176 = vunpack.c.h.b16 %v640
        %v1177 = vunpack.c.l.b16 %v641
        %v1178 = vunpack.c.h.b16 %v641
        %v1179 = vunpack.c.l.b16 %v642
        %v1180 = vunpack.c.h.b16 %v642
        %v1181 = vunpack.c.l.b16 %v643
        %v1182 = vunpack.c.h.b16 %v643
        %v1183 = vunpack.c.l.b16 %v644
        %v1184 = vunpack.c.h.b16 %v644
        %v1185 = vunpack.c.l.b16 %v645
        %v1186 = vunpack.c.h.b16 %v645
        %v1187 = vunpack.c.l.b16 %v646
        %v1188 = vunpack.c.h.b16 %v646
        %v1189 = vunpack.c.l.b16 %v647
        %v1190 = vunpack.c.h.b16 %v647
        %v1191 = vunpack.c.l.b16 %v648
        %v1192 = vunpack.c.h.b16 %v648
        %v1193 = vunpack.c.l.b16 %v649
        %v1194 = vunpack.c.h.b16 %v649
        %v1195 = vunpack.c.l.b16 %v650
        %v1196 = vunpack.c.h.b16 %v650
        %v1197 = vunpack.c.l.b16 %v651
        %v1198 = vunpack.c.h.b16 %v651
        %v1199 = vunpack.c.l.b16 %v652
        %v1200 = vunpack.c.h.b16 %v652
        %v1201 = vunpack.c.l.b16 %v653
        %v1202 = vunpack.c.h.b16 %v653
        %v1203 = vunpack.c.l.b16 %v654
        %v1204 = vunpack.c.h.b16 %v654
        %v1205 = vunpack.c.l.b16 %v655
        %v1206 = vunpack.c.h.b16 %v655
        %v1207 = vunpack.c.l.b16 %v656
        %v1208 = vunpack.c.h.b16 %v656
        %v1209 = vunpack.c.l.b16 %v657
        %v1210 = vunpack.c.h.b16 %v657
        %v1211 = vunpack.c.l.b16 %v658
        %v1212 = vunpack.c.h.b16 %v658
        %v1213 = vunpack.c.l.b16 %v659
        %v1214 = vunpack.c.h.b16 %v659
        %v1215 = vunpack.c.l.b16 %v660
        %v1216 = vunpack.c.h.b16 %v660
        %v1217 = vunpack.c.l.b16 %v661
        %v1218 = vunpack.c.h.b16 %v661
        %v1219 = vunpack.c.l.b16 %v662
        %v1220 = vunpack.c.h.b16 %v662
        %v1221 = vunpack.c.l.b16 %v663
        %v1222 = vunpack.c.h.b16 %v663
        %v1223 = vunpack.c.l.b16 %v664
        %v1224 = vunpack.c.h.b16 %v664
        %v1225 = vunpack.c.l.b16 %v665
        %v1226 = vunpack.c.h.b16 %v665
        %v1227 = vunpack.c.l.b16 %v666
        %v1228 = vunpack.c.h.b16 %v666
        %v1229 = vunpack.c.l.b16 %v667
        %v1230 = vunpack.c.h.b16 %v667
        %v1231 = vunpack.c.l.b16 %v668
        %v1232 = vunpack.c.h.b16 %v668
        %v1233 = vunpack.c.l.b16 %v669
        %v1234 = vunpack.c.h.b16 %v669
        %v1235 = vunpack.c.l.b16 %v670
        %v1236 = vunpack.c.h.b16 %v670
        %v1237 = vunpack.c.l.b16 %v671
        %v1238 = vunpack.c.h.b16 %v671
        %v1239 = vunpack.c.l.b16 %v672
        %v1240 = vunpack.c.h.b16 %v672
        %v1241 = vunpack.c.l.b16 %v673
        %v1242 = vunpack.c.h.b16 %v673
        %v1243 = vunpack.c.l.b16 %v674
        %v1244 = vunpack.c.h.b16 %v674
        %v1245 = vunpack.c.l.b16 %v675
        %v1246 = vunpack.c.h.b16 %v675
        %v1247 = vunpack.c.l.b16 %v676
        %v1248 = vunpack.c.h.b16 %v676
        %v1249 = vunpack.c.l.b16 %v677
        %v1250 = vunpack.c.h.b16 %v677
        %v1251 = vunpack.c.l.b16 %v678
        %v1252 = vunpack.c.h.b16 %v678
        %v1253 = vunpack.c.l.b16 %v679
        %v1254 = vunpack.c.h.b16 %v679
        %v1255 = vunpack.c.l.b16 %v680
        %v1256 = vunpack.c.h.b16 %v680
        %v1257 = vpack.c.b16 %v877, %v873
        %v1258 = vpack.c.b16 %v878, %v874
        %v1259 = vpack.c.b16 %v879, %v875
        %v1260 = vpack.c.b16 %v880, %v876
        %v1261 = vpack.c.b16 %v885, %v881
        %v1262 = vpack.c.b16 %v886, %v882
        %v1263 = vpack.c.b16 %v887, %v883
        %v1264 = vpack.c.b16 %v888, %v884
        %v1265 = vpack.c.b16 %v893, %v889
        %v1266 = vpack.c.b16 %v894, %v890
        %v1267 = vpack.c.b16 %v895, %v891
        %v1268 = vpack.c.b16 %v896, %v892
        %v1269 = vpack.c.b16 %v901, %v897
        %v1270 = vpack.c.b16 %v902, %v898
        %v1271 = vpack.c.b16 %v903, %v899
        %v1272 = vpack.c.b16 %v904, %v900
        %v1273 = vpack.c.b16 %v909, %v905
        %v1274 = vpack.c.b16 %v910, %v906
        %v1275 = vpack.c.b16 %v911, %v907
        %v1276 = vpack.c.b16 %v912, %v908
        %v1277 = vpack.c.b16 %v917, %v913
        %v1278 = vpack.c.b16 %v918, %v914
        %v1279 = vpack.c.b16 %v919, %v915
        %v1280 = vpack.c.b16 %v920, %v916
        %v1281 = vpack.c.b16 %v925, %v921
        %v1282 = vpack.c.b16 %v926, %v922
        %v1283 = vpack.c.b16 %v927, %v923
        %v1284 = vpack.c.b16 %v928, %v924
        %v1285 = vpack.c.b16 %v933, %v929
        %v1286 = vpack.c.b16 %v934, %v930
        %v1287 = vpack.c.b16 %v935, %v931
        %v1288 = vpack.c.b16 %v936, %v932
        %v1289 = vpack.c.b16 %v941, %v937
        %v1290 = vpack.c.b16 %v942, %v938
        %v1291 = vpack.c.b16 %v943, %v939
        %v1292 = vpack.c.b16 %v944, %v940
        %v1293 = vpack.c.b16 %v949, %v945
        %v1294 = vpack.c.b16 %v950, %v946
        %v1295 = vpack.c.b16 %v951, %v947
        %v1296 = vpack.c.b16 %v952, %v948
        %v1297 = vpack.c.b16 %v957, %v953
        %v1298 = vpack.c.b16 %v958, %v954
        %v1299 = vpack.c.b16 %v959, %v955
        %v1300 = vpack.c.b16 %v960, %v956
        %v1301 = vpack.c.b16 %v965, %v961
        %v1302 = vpack.c.b16 %v966, %v962
        %v1303 = vpack.c.b16 %v967, %v963
        %v1304 = vpack.c.b16 %v968, %v964
        %v1305 = vpack.c.b16 %v973, %v969
        %v1306 = vpack.c.b16 %v974, %v970
        %v1307 = vpack.c.b16 %v975, %v971
        %v1308 = vpack.c.b16 %v976, %v972
        %v1309 = vpack.c.b16 %v981, %v977
        %v1310 = vpack.c.b16 %v982, %v978
        %v1311 = vpack.c.b16 %v983, %v979
        %v1312 = vpack.c.b16 %v984, %v980
        %v1313 = vpack.c.b16 %v989, %v985
        %v1314 = vpack.c.b16 %v990, %v986
        %v1315 = vpack.c.b16 %v991, %v987
        %v1316 = vpack.c.b16 %v992, %v988
        %v1317 = vpack.c.b16 %v997, %v993
        %v1318 = vpack.c.b16 %v998, %v994
        %v1319 = vpack.c.b16 %v999, %v995
        %v1320 = vpack.c.b16 %v1000, %v996
        %v1321 = vpack.c.b16 %v1005, %v1001
        %v1322 = vpack.c.b16 %v1006, %v1002
        %v1323 = vpack.c.b16 %v1007, %v1003
        %v1324 = vpack.c.b16 %v1008, %v1004
        %v1325 = vpack.c.b16 %v1013, %v1009
        %v1326 = vpack.c.b16 %v1014, %v1010
        %v1327 = vpack.c.b16 %v1015, %v1011
        %v1328 = vpack.c.b16 %v1016, %v1012
        %v1329 = vpack.c.b16 %v1021, %v1017
        %v1330 = vpack.c.b16 %v1022, %v1018
        %v1331 = vpack.c.b16 %v1023, %v1019
        %v1332 = vpack.c.b16 %v1024, %v1020
        %v1333 = vpack.c.b16 %v1029, %v1025
        %v1334 = vpack.c.b16 %v1030, %v1026
        %v1335 = vpack.c.b16 %v1031, %v1027
        %v1336 = vpack.c.b16 %v1032, %v1028
        %v1337 = vpack.c.b16 %v1037, %v1033
        %v1338 = vpack.c.b16 %v1038, %v1034
        %v1339 = vpack.c.b16 %v1039, %v1035
        %v1340 = vpack.c.b16 %v1040, %v1036
        %v1341 = vpack.c.b16 %v1045, %v1041
        %v1342 = vpack.c.b16 %v1046, %v1042
        %v1343 = vpack.c.b16 %v1047, %v1043
        %v1344 = vpack.c.b16 %v1048, %v1044
        %v1345 = vpack.c.b16 %v1053, %v1049
        %v1346 = vpack.c.b16 %v1054, %v1050
        %v1347 = vpack.c.b16 %v1055, %v1051
        %v1348 = vpack.c.b16 %v1056, %v1052
        %v1349 = vpack.c.b16 %v1061, %v1057
        %v1350 = vpack.c.b16 %v1062, %v1058
        %v1351 = vpack.c.b16 %v1063, %v1059
        %v1352 = vpack.c.b16 %v1064, %v1060
        %v1353 = vpack.c.b16 %v1069, %v1065
        %v1354 = vpack.c.b16 %v1070, %v1066
        %v1355 = vpack.c.b16 %v1071, %v1067
        %v1356 = vpack.c.b16 %v1072, %v1068
        %v1357 = vpack.c.b16 %v1077, %v1073
        %v1358 = vpack.c.b16 %v1078, %v1074
        %v1359 = vpack.c.b16 %v1079, %v1075
        %v1360 = vpack.c.b16 %v1080, %v1076
        %v1361 = vpack.c.b16 %v1085, %v1081
        %v1362 = vpack.c.b16 %v1086, %v1082
        %v1363 = vpack.c.b16 %v1087, %v1083
        %v1364 = vpack.c.b16 %v1088, %v1084
        %v1365 = vpack.c.b16 %v1093, %v1089
        %v1366 = vpack.c.b16 %v1094, %v1090
        %v1367 = vpack.c.b16 %v1095, %v1091
        %v1368 = vpack.c.b16 %v1096, %v1092
        %v1369 = vpack.c.b16 %v1101, %v1097
        %v1370 = vpack.c.b16 %v1102, %v1098
        %v1371 = vpack.c.b16 %v1103, %v1099
        %v1372 = vpack.c.b16 %v1104, %v1100
        %v1373 = vpack.c.b16 %v1109, %v1105
        %v1374 = vpack.c.b16 %v1110, %v1106
        %v1375 = vpack.c.b16 %v1111, %v1107
        %v1376 = vpack.c.b16 %v1112, %v1108
        %v1377 = vpack.c.b16 %v1117, %v1113
        %v1378 = vpack.c.b16 %v1118, %v1114
        %v1379 = vpack.c.b16 %v1119, %v1115
        %v1380 = vpack.c.b16 %v1120, %v1116
        %v1381 = vpack.c.b16 %v1125, %v1121
        %v1382 = vpack.c.b16 %v1126, %v1122
        %v1383 = vpack.c.b16 %v1127, %v1123
        %v1384 = vpack.c.b16 %v1128, %v1124
        %v1385 = vpack.c.b16 %v1133, %v1129
        %v1386 = vpack.c.b16 %v1134, %v1130
        %v1387 = vpack.c.b16 %v1135, %v1131
        %v1388 = vpack.c.b16 %v1136, %v1132
        %v1389 = vpack.c.b16 %v1141, %v1137
        %v1390 = vpack.c.b16 %v1142, %v1138
        %v1391 = vpack.c.b16 %v1143, %v1139
        %v1392 = vpack.c.b16 %v1144, %v1140
        %v1393 = vpack.c.b16 %v1149, %v1145
        %v1394 = vpack.c.b16 %v1150, %v1146
        %v1395 = vpack.c.b16 %v1151, %v1147
        %v1396 = vpack.c.b16 %v1152, %v1148
        %v1397 = vpack.c.b16 %v1157, %v1153
        %v1398 = vpack.c.b16 %v1158, %v1154
        %v1399 = vpack.c.b16 %v1159, %v1155
        %v1400 = vpack.c.b16 %v1160, %v1156
        %v1401 = vpack.c.b16 %v1165, %v1161
        %v1402 = vpack.c.b16 %v1166, %v1162
        %v1403 = vpack.c.b16 %v1167, %v1163
        %v1404 = vpack.c.b16 %v1168, %v1164
        %v1405 = vpack.c.b16 %v1173, %v1169
        %v1406 = vpack.c.b16 %v1174, %v1170
        %v1407 = vpack.c.b16 %v1175, %v1171
        %v1408 = vpack.c.b16 %v1176, %v1172
        %v1409 = vpack.c.b16 %v1181, %v1177
        %v1410 = vpack.c.b16 %v1182, %v1178
        %v1411 = vpack.c.b16 %v1183, %v1179
        %v1412 = vpack.c.b16 %v1184, %v1180
        %v1413 = vpack.c.b16 %v1189, %v1185
        %v1414 = vpack.c.b16 %v1190, %v1186
        %v1415 = vpack.c.b16 %v1191, %v1187
        %v1416 = vpack.c.b16 %v1192, %v1188
        %v1417 = vpack.c.b16 %v1197, %v1193
        %v1418 = vpack.c.b16 %v1198, %v1194
        %v1419 = vpack.c.b16 %v1199, %v1195
        %v1420 = vpack.c.b16 %v1200, %v1196
        %v1421 = vpack.c.b16 %v1205, %v1201
        %v1422 = vpack.c.b16 %v1206, %v1202
        %v1423 = vpack.c.b16 %v1207, %v1203
        %v1424 = vpack.c.b16 %v1208, %v1204
        %v1425 = vpack.c.b16 %v1213, %v1209
        %v1426 = vpack.c.b16 %v1214, %v1210
        %v1427 = vpack.c.b16 %v1215, %v1211
        %v1428 = vpack.c.b16 %v1216, %v1212
        %v1429 = vpack.c.b16 %v1221, %v1217
        %v1430 = vpack.c.b16 %v1222, %v1218
        %v1431 = vpack.c.b16 %v1223, %v1219
        %v1432 = vpack.c.b16 %v1224, %v1220
        %v1433 = vpack.c.b16 %v1229, %v1225
        %v1434 = vpack.c.b16 %v1230, %v1226
        %v1435 = vpack.c.b16 %v1231, %v1227
        %v1436 = vpack.c.b16 %v1232, %v1228
        %v1437 = vpack.c.b16 %v1237, %v1233
        %v1438 = vpack.c.b16 %v1238, %v1234
        %v1439 = vpack.c.b16 %v1239, %v1235
        %v1440 = vpack.c.b16 %v1240, %v1236
        %v1441 = vpack.c.b16 %v1245, %v1241
        %v1442 = vpack.c.b16 %v1246, %v1242
        %v1443 = vpack.c.b16 %v1247, %v1243
        %v1444 = vpack.c.b16 %v1248, %v1244
        %v1445 = vpack.c.b16 %v1253, %v1249
        %v1446 = vpack.c.b16 %v1254, %v1250
        %v1447 = vpack.c.b16 %v1255, %v1251
        %v1448 = vpack.c.b16 %v1256, %v1252
        %1641 = vmatpush.bf16.msra.mxu0 %v1285
        %1642 = vmatpush.bf16.msra.mxu0 %v1281
        %1643 = vmatpush.bf16.msra.mxu0 %v1277
        %1644 = vmatpush.bf16.msra.mxu0 %v1273
        %1645 = vmatpush.bf16.msra.mxu0 %v1269
        %1646 = vmatpush.bf16.msra.mxu0 %v1265
        %1647 = vmatpush.bf16.msra.mxu0 %v1261
        %1648 = vmatpush.bf16.msra.mxu0 %v1257
        %1649 = vmatmul.bf16.gmra.mxu0 %v483
        %v1650 = vpop.f32.mrf.mxu0
        %v1651 = vadd.f32 0.0, %v1650
        %v1652 = vpop.f32.mrf.mxu0
        %v1653 = vadd.f32 0.0, %v1652
        %1654 = vdwg.mxu0
        %1655 = vmatpush.bf16.msra.mxu0 %v1317
        %1656 = vmatpush.bf16.msra.mxu0 %v1313
        %1657 = vmatpush.bf16.msra.mxu0 %v1309
        %1658 = vmatpush.bf16.msra.mxu0 %v1305
        %1659 = vmatpush.bf16.msra.mxu0 %v1301
        %1660 = vmatpush.bf16.msra.mxu0 %v1297
        %1661 = vmatpush.bf16.msra.mxu0 %v1293
        %1662 = vmatpush.bf16.msra.mxu0 %v1289
        %1663 = vmatmul.bf16.gmra.mxu0 %v484
        %v1664 = vpop.f32.mrf.mxu0
        %v1665 = vadd.f32 %v1651, %v1664
        %v1666 = vpop.f32.mrf.mxu0
        %v1667 = vadd.f32 %v1653, %v1666
        %1668 = vdwg.mxu0
        %1669 = vmatpush.bf16.msra.mxu0 %v1349
        %1670 = vmatpush.bf16.msra.mxu0 %v1345
        %1671 = vmatpush.bf16.msra.mxu0 %v1341
        %1672 = vmatpush.bf16.msra.mxu0 %v1337
        %1673 = vmatpush.bf16.msra.mxu0 %v1333
        %1674 = vmatpush.bf16.msra.mxu0 %v1329
        %1675 = vmatpush.bf16.msra.mxu0 %v1325
        %1676 = vmatpush.bf16.msra.mxu0 %v1321
        %1677 = vmatmul.bf16.gmra.mxu0 %v485
        %v1678 = vpop.f32.mrf.mxu0
        %v1679 = vadd.f32 %v1665, %v1678
        %v1680 = vpop.f32.mrf.mxu0
        %v1681 = vadd.f32 %v1667, %v1680
        %1682 = vdwg.mxu0
        %1683 = vmatpush.bf16.msra.mxu0 %v1381
        %1684 = vmatpush.bf16.msra.mxu0 %v1377
        %1685 = vmatpush.bf16.msra.mxu0 %v1373
        %1686 = vmatpush.bf16.msra.mxu0 %v1369
        %1687 = vmatpush.bf16.msra.mxu0 %v1365
        %1688 = vmatpush.bf16.msra.mxu0 %v1361
        %1689 = vmatpush.bf16.msra.mxu0 %v1357
        %1690 = vmatpush.bf16.msra.mxu0 %v1353
        %1691 = vmatmul.bf16.gmra.mxu0 %v486
        %v1692 = vpop.f32.mrf.mxu0
        %v1693 = vadd.f32 %v1679, %v1692
        %v1694 = vpop.f32.mrf.mxu0
        %v1695 = vadd.f32 %v1681, %v1694
        %1696 = vdwg.mxu0
        %1697 = vmatpush.bf16.msra.mxu0 %v1413
        %1698 = vmatpush.bf16.msra.mxu0 %v1409
        %1699 = vmatpush.bf16.msra.mxu0 %v1405
        %1700 = vmatpush.bf16.msra.mxu0 %v1401
        %1701 = vmatpush.bf16.msra.mxu0 %v1397
        %1702 = vmatpush.bf16.msra.mxu0 %v1393
        %1703 = vmatpush.bf16.msra.mxu0 %v1389
        %1704 = vmatpush.bf16.msra.mxu0 %v1385
        %1705 = vmatmul.bf16.gmra.mxu0 %v487
        %v1706 = vpop.f32.mrf.mxu0
        %v1707 = vadd.f32 %v1693, %v1706
        %v1708 = vpop.f32.mrf.mxu0
        %v1709 = vadd.f32 %v1695, %v1708
        %1710 = vdwg.mxu0
        %1711 = vmatpush.bf16.msra.mxu0 %v1445
        %1712 = vmatpush.bf16.msra.mxu0 %v1441
        %1713 = vmatpush.bf16.msra.mxu0 %v1437
        %1714 = vmatpush.bf16.msra.mxu0 %v1433
        %1715 = vmatpush.bf16.msra.mxu0 %v1429
        %1716 = vmatpush.bf16.msra.mxu0 %v1425
        %1717 = vmatpush.bf16.msra.mxu0 %v1421
        %1718 = vmatpush.bf16.msra.mxu0 %v1417
        %1719 = vmatmul.bf16.gmra.mxu0 %v488
        %v1720 = vpop.f32.mrf.mxu0
        %v1721 = vadd.f32 %v1707, %v1720
        %v1722 = vpop.f32.mrf.mxu0
        %v1723 = vadd.f32 %v1709, %v1722
        %1724 = vdwg.mxu0
        %1725 = vmatpush.bf16.msra.mxu0 %v1286
        %1726 = vmatpush.bf16.msra.mxu0 %v1282
        %1727 = vmatpush.bf16.msra.mxu0 %v1278
        %1728 = vmatpush.bf16.msra.mxu0 %v1274
        %1729 = vmatpush.bf16.msra.mxu0 %v1270
        %1730 = vmatpush.bf16.msra.mxu0 %v1266
        %1731 = vmatpush.bf16.msra.mxu0 %v1262
        %1732 = vmatpush.bf16.msra.mxu0 %v1258
        %1733 = vmatmul.bf16.gmra.mxu0 %v483
        %v1734 = vpop.f32.mrf.mxu0
        %v1735 = vadd.f32 0.0, %v1734
        %v1736 = vpop.f32.mrf.mxu0
        %v1737 = vadd.f32 0.0, %v1736
        %1738 = vdwg.mxu0
        %1739 = vmatpush.bf16.msra.mxu0 %v1318
        %1740 = vmatpush.bf16.msra.mxu0 %v1314
        %1741 = vmatpush.bf16.msra.mxu0 %v1310
        %1742 = vmatpush.bf16.msra.mxu0 %v1306
        %1743 = vmatpush.bf16.msra.mxu0 %v1302
        %1744 = vmatpush.bf16.msra.mxu0 %v1298
        %1745 = vmatpush.bf16.msra.mxu0 %v1294
        %1746 = vmatpush.bf16.msra.mxu0 %v1290
        %1747 = vmatmul.bf16.gmra.mxu0 %v484
        %v1748 = vpop.f32.mrf.mxu0
        %v1749 = vadd.f32 %v1735, %v1748
        %v1750 = vpop.f32.mrf.mxu0
        %v1751 = vadd.f32 %v1737, %v1750
        %1752 = vdwg.mxu0
        %1753 = vmatpush.bf16.msra.mxu0 %v1350
        %1754 = vmatpush.bf16.msra.mxu0 %v1346
        %1755 = vmatpush.bf16.msra.mxu0 %v1342
        %1756 = vmatpush.bf16.msra.mxu0 %v1338
        %1757 = vmatpush.bf16.msra.mxu0 %v1334
        %1758 = vmatpush.bf16.msra.mxu0 %v1330
        %1759 = vmatpush.bf16.msra.mxu0 %v1326
        %1760 = vmatpush.bf16.msra.mxu0 %v1322
        %1761 = vmatmul.bf16.gmra.mxu0 %v485
        %v1762 = vpop.f32.mrf.mxu0
        %v1763 = vadd.f32 %v1749, %v1762
        %v1764 = vpop.f32.mrf.mxu0
        %v1765 = vadd.f32 %v1751, %v1764
        %1766 = vdwg.mxu0
        %1767 = vmatpush.bf16.msra.mxu0 %v1382
        %1768 = vmatpush.bf16.msra.mxu0 %v1378
        %1769 = vmatpush.bf16.msra.mxu0 %v1374
        %1770 = vmatpush.bf16.msra.mxu0 %v1370
        %1771 = vmatpush.bf16.msra.mxu0 %v1366
        %1772 = vmatpush.bf16.msra.mxu0 %v1362
        %1773 = vmatpush.bf16.msra.mxu0 %v1358
        %1774 = vmatpush.bf16.msra.mxu0 %v1354
        %1775 = vmatmul.bf16.gmra.mxu0 %v486
        %v1776 = vpop.f32.mrf.mxu0
        %v1777 = vadd.f32 %v1763, %v1776
        %v1778 = vpop.f32.mrf.mxu0
        %v1779 = vadd.f32 %v1765, %v1778
        %1780 = vdwg.mxu0
        %1781 = vmatpush.bf16.msra.mxu0 %v1414
        %1782 = vmatpush.bf16.msra.mxu0 %v1410
        %1783 = vmatpush.bf16.msra.mxu0 %v1406
        %1784 = vmatpush.bf16.msra.mxu0 %v1402
        %1785 = vmatpush.bf16.msra.mxu0 %v1398
        %1786 = vmatpush.bf16.msra.mxu0 %v1394
        %1787 = vmatpush.bf16.msra.mxu0 %v1390
        %1788 = vmatpush.bf16.msra.mxu0 %v1386
        %1789 = vmatmul.bf16.gmra.mxu0 %v487
        %v1790 = vpop.f32.mrf.mxu0
        %v1791 = vadd.f32 %v1777, %v1790
        %v1792 = vpop.f32.mrf.mxu0
        %v1793 = vadd.f32 %v1779, %v1792
        %1794 = vdwg.mxu0
        %1795 = vmatpush.bf16.msra.mxu0 %v1446
        %1796 = vmatpush.bf16.msra.mxu0 %v1442
        %1797 = vmatpush.bf16.msra.mxu0 %v1438
        %1798 = vmatpush.bf16.msra.mxu0 %v1434
        %1799 = vmatpush.bf16.msra.mxu0 %v1430
        %1800 = vmatpush.bf16.msra.mxu0 %v1426
        %1801 = vmatpush.bf16.msra.mxu0 %v1422
        %1802 = vmatpush.bf16.msra.mxu0 %v1418
        %1803 = vmatmul.bf16.gmra.mxu0 %v488
        %v1804 = vpop.f32.mrf.mxu0
        %v1805 = vadd.f32 %v1791, %v1804
        %v1806 = vpop.f32.mrf.mxu0
        %v1807 = vadd.f32 %v1793, %v1806
        %1808 = vdwg.mxu0
        %1809 = vmatpush.bf16.msra.mxu0 %v1287
        %1810 = vmatpush.bf16.msra.mxu0 %v1283
        %1811 = vmatpush.bf16.msra.mxu0 %v1279
        %1812 = vmatpush.bf16.msra.mxu0 %v1275
        %1813 = vmatpush.bf16.msra.mxu0 %v1271
        %1814 = vmatpush.bf16.msra.mxu0 %v1267
        %1815 = vmatpush.bf16.msra.mxu0 %v1263
        %1816 = vmatpush.bf16.msra.mxu0 %v1259
        %1817 = vmatmul.bf16.gmra.mxu0 %v483
        %v1818 = vpop.f32.mrf.mxu0
        %v1819 = vadd.f32 0.0, %v1818
        %v1820 = vpop.f32.mrf.mxu0
        %v1821 = vadd.f32 0.0, %v1820
        %1822 = vdwg.mxu0
        %1823 = vmatpush.bf16.msra.mxu0 %v1319
        %1824 = vmatpush.bf16.msra.mxu0 %v1315
        %1825 = vmatpush.bf16.msra.mxu0 %v1311
        %1826 = vmatpush.bf16.msra.mxu0 %v1307
        %1827 = vmatpush.bf16.msra.mxu0 %v1303
        %1828 = vmatpush.bf16.msra.mxu0 %v1299
        %1829 = vmatpush.bf16.msra.mxu0 %v1295
        %1830 = vmatpush.bf16.msra.mxu0 %v1291
        %1831 = vmatmul.bf16.gmra.mxu0 %v484
        %v1832 = vpop.f32.mrf.mxu0
        %v1833 = vadd.f32 %v1819, %v1832
        %v1834 = vpop.f32.mrf.mxu0
        %v1835 = vadd.f32 %v1821, %v1834
        %1836 = vdwg.mxu0
        %1837 = vmatpush.bf16.msra.mxu0 %v1351
        %1838 = vmatpush.bf16.msra.mxu0 %v1347
        %1839 = vmatpush.bf16.msra.mxu0 %v1343
        %1840 = vmatpush.bf16.msra.mxu0 %v1339
        %1841 = vmatpush.bf16.msra.mxu0 %v1335
        %1842 = vmatpush.bf16.msra.mxu0 %v1331
        %1843 = vmatpush.bf16.msra.mxu0 %v1327
        %1844 = vmatpush.bf16.msra.mxu0 %v1323
        %1845 = vmatmul.bf16.gmra.mxu0 %v485
        %v1846 = vpop.f32.mrf.mxu0
        %v1847 = vadd.f32 %v1833, %v1846
        %v1848 = vpop.f32.mrf.mxu0
        %v1849 = vadd.f32 %v1835, %v1848
        %1850 = vdwg.mxu0
        %1851 = vmatpush.bf16.msra.mxu0 %v1383
        %1852 = vmatpush.bf16.msra.mxu0 %v1379
        %1853 = vmatpush.bf16.msra.mxu0 %v1375
        %1854 = vmatpush.bf16.msra.mxu0 %v1371
        %1855 = vmatpush.bf16.msra.mxu0 %v1367
        %1856 = vmatpush.bf16.msra.mxu0 %v1363
        %1857 = vmatpush.bf16.msra.mxu0 %v1359
        %1858 = vmatpush.bf16.msra.mxu0 %v1355
        %1859 = vmatmul.bf16.gmra.mxu0 %v486
        %v1860 = vpop.f32.mrf.mxu0
        %v1861 = vadd.f32 %v1847, %v1860
        %v1862 = vpop.f32.mrf.mxu0
        %v1863 = vadd.f32 %v1849, %v1862
        %1864 = vdwg.mxu0
        %1865 = vmatpush.bf16.msra.mxu0 %v1415
        %1866 = vmatpush.bf16.msra.mxu0 %v1411
        %1867 = vmatpush.bf16.msra.mxu0 %v1407
        %1868 = vmatpush.bf16.msra.mxu0 %v1403
        %1869 = vmatpush.bf16.msra.mxu0 %v1399
        %1870 = vmatpush.bf16.msra.mxu0 %v1395
        %1871 = vmatpush.bf16.msra.mxu0 %v1391
        %1872 = vmatpush.bf16.msra.mxu0 %v1387
        %1873 = vmatmul.bf16.gmra.mxu0 %v487
        %v1874 = vpop.f32.mrf.mxu0
        %v1875 = vadd.f32 %v1861, %v1874
        %v1876 = vpop.f32.mrf.mxu0
        %v1877 = vadd.f32 %v1863, %v1876
        %1878 = vdwg.mxu0
        %1879 = vmatpush.bf16.msra.mxu0 %v1447
        %1880 = vmatpush.bf16.msra.mxu0 %v1443
        %1881 = vmatpush.bf16.msra.mxu0 %v1439
        %1882 = vmatpush.bf16.msra.mxu0 %v1435
        %1883 = vmatpush.bf16.msra.mxu0 %v1431
        %1884 = vmatpush.bf16.msra.mxu0 %v1427
        %1885 = vmatpush.bf16.msra.mxu0 %v1423
        %1886 = vmatpush.bf16.msra.mxu0 %v1419
        %1887 = vmatmul.bf16.gmra.mxu0 %v488
        %v1888 = vpop.f32.mrf.mxu0
        %v1889 = vadd.f32 %v1875, %v1888
        %v1890 = vpop.f32.mrf.mxu0
        %v1891 = vadd.f32 %v1877, %v1890
        %1892 = vdwg.mxu0
        %1893 = vmatpush.bf16.msra.mxu0 %v1288
        %1894 = vmatpush.bf16.msra.mxu0 %v1284
        %1895 = vmatpush.bf16.msra.mxu0 %v1280
        %1896 = vmatpush.bf16.msra.mxu0 %v1276
        %1897 = vmatpush.bf16.msra.mxu0 %v1272
        %1898 = vmatpush.bf16.msra.mxu0 %v1268
        %1899 = vmatpush.bf16.msra.mxu0 %v1264
        %1900 = vmatpush.bf16.msra.mxu0 %v1260
        %1901 = vmatmul.bf16.gmra.mxu0 %v483
        %v1902 = vpop.f32.mrf.mxu0
        %v1903 = vadd.f32 0.0, %v1902
        %v1904 = vpop.f32.mrf.mxu0
        %v1905 = vadd.f32 0.0, %v1904
        %1906 = vdwg.mxu0
        %1907 = vmatpush.bf16.msra.mxu0 %v1320
        %1908 = vmatpush.bf16.msra.mxu0 %v1316
        %1909 = vmatpush.bf16.msra.mxu0 %v1312
        %1910 = vmatpush.bf16.msra.mxu0 %v1308
        %1911 = vmatpush.bf16.msra.mxu0 %v1304
        %1912 = vmatpush.bf16.msra.mxu0 %v1300
        %1913 = vmatpush.bf16.msra.mxu0 %v1296
        %1914 = vmatpush.bf16.msra.mxu0 %v1292
        %1915 = vmatmul.bf16.gmra.mxu0 %v484
        %v1916 = vpop.f32.mrf.mxu0
        %v1917 = vadd.f32 %v1903, %v1916
        %v1918 = vpop.f32.mrf.mxu0
        %v1919 = vadd.f32 %v1905, %v1918
        %1920 = vdwg.mxu0
        %1921 = vmatpush.bf16.msra.mxu0 %v1352
        %1922 = vmatpush.bf16.msra.mxu0 %v1348
        %1923 = vmatpush.bf16.msra.mxu0 %v1344
        %1924 = vmatpush.bf16.msra.mxu0 %v1340
        %1925 = vmatpush.bf16.msra.mxu0 %v1336
        %1926 = vmatpush.bf16.msra.mxu0 %v1332
        %1927 = vmatpush.bf16.msra.mxu0 %v1328
        %1928 = vmatpush.bf16.msra.mxu0 %v1324
        %1929 = vmatmul.bf16.gmra.mxu0 %v485
        %v1930 = vpop.f32.mrf.mxu0
        %v1931 = vadd.f32 %v1917, %v1930
        %v1932 = vpop.f32.mrf.mxu0
        %v1933 = vadd.f32 %v1919, %v1932
        %1934 = vdwg.mxu0
        %1935 = vmatpush.bf16.msra.mxu0 %v1384
        %1936 = vmatpush.bf16.msra.mxu0 %v1380
        %1937 = vmatpush.bf16.msra.mxu0 %v1376
        %1938 = vmatpush.bf16.msra.mxu0 %v1372
        %1939 = vmatpush.bf16.msra.mxu0 %v1368
        %1940 = vmatpush.bf16.msra.mxu0 %v1364
        %1941 = vmatpush.bf16.msra.mxu0 %v1360
        %1942 = vmatpush.bf16.msra.mxu0 %v1356
        %1943 = vmatmul.bf16.gmra.mxu0 %v486
        %v1944 = vpop.f32.mrf.mxu0
        %v1945 = vadd.f32 %v1931, %v1944
        %v1946 = vpop.f32.mrf.mxu0
        %v1947 = vadd.f32 %v1933, %v1946
        %1948 = vdwg.mxu0
        %1949 = vmatpush.bf16.msra.mxu0 %v1416
        %1950 = vmatpush.bf16.msra.mxu0 %v1412
        %1951 = vmatpush.bf16.msra.mxu0 %v1408
        %1952 = vmatpush.bf16.msra.mxu0 %v1404
        %1953 = vmatpush.bf16.msra.mxu0 %v1400
        %1954 = vmatpush.bf16.msra.mxu0 %v1396
        %1955 = vmatpush.bf16.msra.mxu0 %v1392
        %1956 = vmatpush.bf16.msra.mxu0 %v1388
        %1957 = vmatmul.bf16.gmra.mxu0 %v487
        %v1958 = vpop.f32.mrf.mxu0
        %v1959 = vadd.f32 %v1945, %v1958
        %v1960 = vpop.f32.mrf.mxu0
        %v1961 = vadd.f32 %v1947, %v1960
        %1962 = vdwg.mxu0
        %1963 = vmatpush.bf16.msra.mxu0 %v1448
        %1964 = vmatpush.bf16.msra.mxu0 %v1444
        %1965 = vmatpush.bf16.msra.mxu0 %v1440
        %1966 = vmatpush.bf16.msra.mxu0 %v1436
        %1967 = vmatpush.bf16.msra.mxu0 %v1432
        %1968 = vmatpush.bf16.msra.mxu0 %v1428
        %1969 = vmatpush.bf16.msra.mxu0 %v1424
        %1970 = vmatpush.bf16.msra.mxu0 %v1420
        %1971 = vmatmul.bf16.gmra.mxu0 %v488
        %v1972 = vpop.f32.mrf.mxu0
        %v1973 = vadd.f32 %v1959, %v1972
        %v1974 = vpop.f32.mrf.mxu0
        %v1975 = vadd.f32 %v1961, %v1974
        %1976 = vdwg.mxu0
        %1977 = vst [vmem:[#allocation2] sm:$0xff] %v1721
        %1978 = vst [vmem:[#allocation2 + $0x8] sm:$0xff] %v1805
        %1979 = vst [vmem:[#allocation2 + $0x10] sm:$0xff] %v1889
        %1980 = vst [vmem:[#allocation2 + $0x18] sm:$0xff] %v1973
        %1981 = vst [vmem:[#allocation2 + $0x20] sm:$0xff] %v1723
        %1982 = vst [vmem:[#allocation2 + $0x28] sm:$0xff] %v1807
        %1983 = vst [vmem:[#allocation2 + $0x30] sm:$0xff] %v1891
        %1984 = vst [vmem:[#allocation2 + $0x38] sm:$0xff] %v1975
        %v1985 = vld [vmem:[#allocation2] sm:$0xff]
        %v1986 = vld [vmem:[#allocation2 + $0x20] sm:$0xff]
        %1987 = vst [vmem:[#allocation3] sm:$0xff] %v1985
        %1988 = vst [vmem:[#allocation3 + $0x8] sm:$0xff] %v1986
        %1989 = vst [vmem:[#allocation3 + $0x10] sm:$0xff] 0.0
        %v1990 = vld [vmem:[#allocation3 + $0x1] sm:$0xff]
        %v1991 = vld [vmem:[#allocation3 + $0x9] sm:$0xff]
        %v1992 = vld [vmem:[#allocation2 + $0x8] sm:$0xff]
        %v1993 = vld [vmem:[#allocation2 + $0x28] sm:$0xff]
        %v1994 = vadd.f32 %v1990, %v1992
        %v1995 = vadd.f32 %v1991, %v1993
        %1996 = vst [vmem:[#allocation3 + $0x1] sm:$0xff] %v1994
        %1997 = vst [vmem:[#allocation3 + $0x9] sm:$0xff] %v1995
        %v1998 = vld [vmem:[#allocation3 + $0x2] sm:$0xff]
        %v1999 = vld [vmem:[#allocation3 + $0xa] sm:$0xff]
        %v2000 = vld [vmem:[#allocation2 + $0x10] sm:$0xff]
        %v2001 = vld [vmem:[#allocation2 + $0x30] sm:$0xff]
        %v2002 = vadd.f32 %v1998, %v2000
        %v2003 = vadd.f32 %v1999, %v2001
        %2004 = vst [vmem:[#allocation3 + $0x2] sm:$0xff] %v2002
        %2005 = vst [vmem:[#allocation3 + $0xa] sm:$0xff] %v2003
        %v2006 = vld [vmem:[#allocation3 + $0x3] sm:$0xff]
        %v2007 = vld [vmem:[#allocation3 + $0xb] sm:$0xff]
        %v2008 = vld [vmem:[#allocation2 + $0x18] sm:$0xff]
        %v2009 = vld [vmem:[#allocation2 + $0x38] sm:$0xff]
        %v2010 = vadd.f32 %v2006, %v2008
        %v2011 = vadd.f32 %v2007, %v2009
        %2012 = vst [vmem:[#allocation3 + $0x3] sm:$0xff] %v2010
        %2013 = vst [vmem:[#allocation3 + $0xb] sm:$0xff] %v2011
        %v2014 = vld [vmem:[#allocation3] sm:$0xff]
        %v2015 = vld [vmem:[#allocation3 + $0x8] sm:$0xff]
        %v2016 = vld [vmem:[%s3] sm:$0xff]
        %v2017 = vld [vmem:[%s3 + $0x8] sm:$0xff]
        %v2018 = vmul.f32 %v2014, %v2016
        %v2019 = vmul.f32 %v2015, %v2017
        %2020 = vst [vmem:[#allocation2] sm:$0xff] %v2018
        %2021 = vst [vmem:[#allocation2 + $0x20] sm:$0xff] %v2019
        %v2022 = vld [vmem:[#allocation3 + $0x1] sm:$0xff]
        %v2023 = vld [vmem:[#allocation3 + $0x9] sm:$0xff]
        %v2024 = vld [vmem:[%s3 + $0x1] sm:$0xff]
        %v2025 = vld [vmem:[%s3 + $0x9] sm:$0xff]
        %v2026 = vmul.f32 %v2022, %v2024
        %v2027 = vmul.f32 %v2023, %v2025
        %2028 = vst [vmem:[#allocation2 + $0x8] sm:$0xff] %v2026
        %2029 = vst [vmem:[#allocation2 + $0x28] sm:$0xff] %v2027
        %v2030 = vld [vmem:[#allocation3 + $0x2] sm:$0xff]
        %v2031 = vld [vmem:[#allocation3 + $0xa] sm:$0xff]
        %v2032 = vld [vmem:[%s3 + $0x2] sm:$0xff]
        %v2033 = vld [vmem:[%s3 + $0xa] sm:$0xff]
        %v2034 = vmul.f32 %v2030, %v2032
        %v2035 = vmul.f32 %v2031, %v2033
        %2036 = vst [vmem:[#allocation2 + $0x10] sm:$0xff] %v2034
        %2037 = vst [vmem:[#allocation2 + $0x30] sm:$0xff] %v2035
        %v2038 = vld [vmem:[#allocation3 + $0x3] sm:$0xff]
        %v2039 = vld [vmem:[#allocation3 + $0xb] sm:$0xff]
        %v2040 = vld [vmem:[%s3 + $0x3] sm:$0xff]
        %v2041 = vld [vmem:[%s3 + $0xb] sm:$0xff]
        %v2042 = vmul.f32 %v2038, %v2040
        %v2043 = vmul.f32 %v2039, %v2041
        %2044 = vst [vmem:[#allocation2 + $0x18] sm:$0xff] %v2042
        %2045 = vst [vmem:[#allocation2 + $0x38] sm:$0xff] %v2043
        %v2046 = vld [vmem:[#allocation2] sm:$0xff]
        %v2047 = vld [vmem:[#allocation2 + $0x8] sm:$0xff]
        %v2048 = vld [vmem:[#allocation2 + $0x10] sm:$0xff]
        %v2049 = vld [vmem:[#allocation2 + $0x18] sm:$0xff]
        %v2050 = vld [vmem:[#allocation2 + $0x20] sm:$0xff]
        %v2051 = vld [vmem:[#allocation2 + $0x28] sm:$0xff]
        %v2052 = vld [vmem:[#allocation2 + $0x30] sm:$0xff]
        %v2053 = vld [vmem:[#allocation2 + $0x38] sm:$0xff]
        %v2054 = vpack.c.bf16 %v2050, %v2046
        %v2055 = vpack.c.bf16 %v2051, %v2047
        %v2056 = vpack.c.bf16 %v2052, %v2048
        %v2057 = vpack.c.bf16 %v2053, %v2049
        %v2058 = vld [vmem:[#allocation6] sm:$0xff]
        %v2059 = vld [vmem:[#allocation6 + $0x8] sm:$0xff]
        %v2060 = vld [vmem:[#allocation6 + $0x10] sm:$0xff]
        %v2061 = vld [vmem:[#allocation6 + $0x18] sm:$0xff]
        %v2062 = vld [vmem:[#allocation6 + $0x20] sm:$0xff]
        %v2063 = vld [vmem:[#allocation6 + $0x28] sm:$0xff]
        %v2064 = vld [vmem:[#allocation6 + $0x30] sm:$0xff]
        %v2065 = vld [vmem:[#allocation6 + $0x38] sm:$0xff]
        %v2066 = vld [vmem:[#allocation6 + $0x40] sm:$0xff]
        %v2067 = vld [vmem:[#allocation6 + $0x48] sm:$0xff]
        %v2068 = vld [vmem:[#allocation6 + $0x50] sm:$0xff]
        %v2069 = vld [vmem:[#allocation6 + $0x58] sm:$0xff]
        %v2070 = vld [vmem:[#allocation6 + $0x60] sm:$0xff]
        %v2071 = vld [vmem:[#allocation6 + $0x68] sm:$0xff]
        %v2072 = vld [vmem:[#allocation6 + $0x70] sm:$0xff]
        %v2073 = vld [vmem:[#allocation6 + $0x78] sm:$0xff]
        %v2074 = vld [vmem:[#allocation6 + $0x80] sm:$0xff]
        %v2075 = vld [vmem:[#allocation6 + $0x88] sm:$0xff]
        %v2076 = vld [vmem:[#allocation6 + $0x90] sm:$0xff]
        %v2077 = vld [vmem:[#allocation6 + $0x98] sm:$0xff]
        %v2078 = vld [vmem:[#allocation6 + $0xa0] sm:$0xff]
        %v2079 = vld [vmem:[#allocation6 + $0xa8] sm:$0xff]
        %v2080 = vld [vmem:[#allocation6 + $0xb0] sm:$0xff]
        %v2081 = vld [vmem:[#allocation6 + $0xb8] sm:$0xff]
        %v2082 = vld [vmem:[#allocation6 + $0xc0] sm:$0xff]
        %v2083 = vld [vmem:[#allocation6 + $0xc8] sm:$0xff]
        %v2084 = vld [vmem:[#allocation6 + $0xd0] sm:$0xff]
        %v2085 = vld [vmem:[#allocation6 + $0xd8] sm:$0xff]
        %v2086 = vld [vmem:[#allocation6 + $0xe0] sm:$0xff]
        %v2087 = vld [vmem:[#allocation6 + $0xe8] sm:$0xff]
        %v2088 = vld [vmem:[#allocation6 + $0xf0] sm:$0xff]
        %v2089 = vld [vmem:[#allocation6 + $0xf8] sm:$0xff]
        %v2090 = vld [vmem:[#allocation6 + $0x100] sm:$0xff]
        %v2091 = vld [vmem:[#allocation6 + $0x108] sm:$0xff]
        %v2092 = vld [vmem:[#allocation6 + $0x110] sm:$0xff]
        %v2093 = vld [vmem:[#allocation6 + $0x118] sm:$0xff]
        %v2094 = vld [vmem:[#allocation6 + $0x120] sm:$0xff]
        %v2095 = vld [vmem:[#allocation6 + $0x128] sm:$0xff]
        %v2096 = vld [vmem:[#allocation6 + $0x130] sm:$0xff]
        %v2097 = vld [vmem:[#allocation6 + $0x138] sm:$0xff]
        %v2098 = vld [vmem:[#allocation6 + $0x140] sm:$0xff]
        %v2099 = vld [vmem:[#allocation6 + $0x148] sm:$0xff]
        %v2100 = vld [vmem:[#allocation6 + $0x150] sm:$0xff]
        %v2101 = vld [vmem:[#allocation6 + $0x158] sm:$0xff]
        %v2102 = vld [vmem:[#allocation6 + $0x160] sm:$0xff]
        %v2103 = vld [vmem:[#allocation6 + $0x168] sm:$0xff]
        %v2104 = vld [vmem:[#allocation6 + $0x170] sm:$0xff]
        %v2105 = vld [vmem:[#allocation6 + $0x178] sm:$0xff]
        %v2106 = vld [vmem:[#allocation6 + $0x180] sm:$0xff]
        %v2107 = vld [vmem:[#allocation6 + $0x188] sm:$0xff]
        %v2108 = vld [vmem:[#allocation6 + $0x190] sm:$0xff]
        %v2109 = vld [vmem:[#allocation6 + $0x198] sm:$0xff]
        %v2110 = vld [vmem:[#allocation6 + $0x1a0] sm:$0xff]
        %v2111 = vld [vmem:[#allocation6 + $0x1a8] sm:$0xff]
        %v2112 = vld [vmem:[#allocation6 + $0x1b0] sm:$0xff]
        %v2113 = vld [vmem:[#allocation6 + $0x1b8] sm:$0xff]
        %v2114 = vld [vmem:[#allocation6 + $0x1c0] sm:$0xff]
        %v2115 = vld [vmem:[#allocation6 + $0x1c8] sm:$0xff]
        %v2116 = vld [vmem:[#allocation6 + $0x1d0] sm:$0xff]
        %v2117 = vld [vmem:[#allocation6 + $0x1d8] sm:$0xff]
        %v2118 = vld [vmem:[#allocation6 + $0x1e0] sm:$0xff]
        %v2119 = vld [vmem:[#allocation6 + $0x1e8] sm:$0xff]
        %v2120 = vld [vmem:[#allocation6 + $0x1f0] sm:$0xff]
        %v2121 = vld [vmem:[#allocation6 + $0x1f8] sm:$0xff]
        %v2122 = vld [vmem:[#allocation6 + $0x200] sm:$0xff]
        %v2123 = vld [vmem:[#allocation6 + $0x208] sm:$0xff]
        %v2124 = vld [vmem:[#allocation6 + $0x210] sm:$0xff]
        %v2125 = vld [vmem:[#allocation6 + $0x218] sm:$0xff]
        %v2126 = vld [vmem:[#allocation6 + $0x220] sm:$0xff]
        %v2127 = vld [vmem:[#allocation6 + $0x228] sm:$0xff]
        %v2128 = vld [vmem:[#allocation6 + $0x230] sm:$0xff]
        %v2129 = vld [vmem:[#allocation6 + $0x238] sm:$0xff]
        %v2130 = vld [vmem:[#allocation6 + $0x240] sm:$0xff]
        %v2131 = vld [vmem:[#allocation6 + $0x248] sm:$0xff]
        %v2132 = vld [vmem:[#allocation6 + $0x250] sm:$0xff]
        %v2133 = vld [vmem:[#allocation6 + $0x258] sm:$0xff]
        %v2134 = vld [vmem:[#allocation6 + $0x260] sm:$0xff]
        %v2135 = vld [vmem:[#allocation6 + $0x268] sm:$0xff]
        %v2136 = vld [vmem:[#allocation6 + $0x270] sm:$0xff]
        %v2137 = vld [vmem:[#allocation6 + $0x278] sm:$0xff]
        %v2138 = vld [vmem:[#allocation6 + $0x280] sm:$0xff]
        %v2139 = vld [vmem:[#allocation6 + $0x288] sm:$0xff]
        %v2140 = vld [vmem:[#allocation6 + $0x290] sm:$0xff]
        %v2141 = vld [vmem:[#allocation6 + $0x298] sm:$0xff]
        %v2142 = vld [vmem:[#allocation6 + $0x2a0] sm:$0xff]
        %v2143 = vld [vmem:[#allocation6 + $0x2a8] sm:$0xff]
        %v2144 = vld [vmem:[#allocation6 + $0x2b0] sm:$0xff]
        %v2145 = vld [vmem:[#allocation6 + $0x2b8] sm:$0xff]
        %v2146 = vld [vmem:[#allocation6 + $0x2c0] sm:$0xff]
        %v2147 = vld [vmem:[#allocation6 + $0x2c8] sm:$0xff]
        %v2148 = vld [vmem:[#allocation6 + $0x2d0] sm:$0xff]
        %v2149 = vld [vmem:[#allocation6 + $0x2d8] sm:$0xff]
        %v2150 = vld [vmem:[#allocation6 + $0x2e0] sm:$0xff]
        %v2151 = vld [vmem:[#allocation6 + $0x2e8] sm:$0xff]
        %v2152 = vld [vmem:[#allocation6 + $0x2f0] sm:$0xff]
        %v2153 = vld [vmem:[#allocation6 + $0x2f8] sm:$0xff]
        %v2154 = vld [vmem:[#allocation6 + $0x300] sm:$0xff]
        %v2155 = vld [vmem:[#allocation6 + $0x308] sm:$0xff]
        %v2156 = vld [vmem:[#allocation6 + $0x310] sm:$0xff]
        %v2157 = vld [vmem:[#allocation6 + $0x318] sm:$0xff]
        %v2158 = vld [vmem:[#allocation6 + $0x320] sm:$0xff]
        %v2159 = vld [vmem:[#allocation6 + $0x328] sm:$0xff]
        %v2160 = vld [vmem:[#allocation6 + $0x330] sm:$0xff]
        %v2161 = vld [vmem:[#allocation6 + $0x338] sm:$0xff]
        %v2162 = vld [vmem:[#allocation6 + $0x340] sm:$0xff]
        %v2163 = vld [vmem:[#allocation6 + $0x348] sm:$0xff]
        %v2164 = vld [vmem:[#allocation6 + $0x350] sm:$0xff]
        %v2165 = vld [vmem:[#allocation6 + $0x358] sm:$0xff]
        %v2166 = vld [vmem:[#allocation6 + $0x360] sm:$0xff]
        %v2167 = vld [vmem:[#allocation6 + $0x368] sm:$0xff]
        %v2168 = vld [vmem:[#allocation6 + $0x370] sm:$0xff]
        %v2169 = vld [vmem:[#allocation6 + $0x378] sm:$0xff]
        %v2170 = vld [vmem:[#allocation6 + $0x380] sm:$0xff]
        %v2171 = vld [vmem:[#allocation6 + $0x388] sm:$0xff]
        %v2172 = vld [vmem:[#allocation6 + $0x390] sm:$0xff]
        %v2173 = vld [vmem:[#allocation6 + $0x398] sm:$0xff]
        %v2174 = vld [vmem:[#allocation6 + $0x3a0] sm:$0xff]
        %v2175 = vld [vmem:[#allocation6 + $0x3a8] sm:$0xff]
        %v2176 = vld [vmem:[#allocation6 + $0x3b0] sm:$0xff]
        %v2177 = vld [vmem:[#allocation6 + $0x3b8] sm:$0xff]
        %v2178 = vld [vmem:[#allocation6 + $0x3c0] sm:$0xff]
        %v2179 = vld [vmem:[#allocation6 + $0x3c8] sm:$0xff]
        %v2180 = vld [vmem:[#allocation6 + $0x3d0] sm:$0xff]
        %v2181 = vld [vmem:[#allocation6 + $0x3d8] sm:$0xff]
        %v2182 = vld [vmem:[#allocation6 + $0x3e0] sm:$0xff]
        %v2183 = vld [vmem:[#allocation6 + $0x3e8] sm:$0xff]
        %v2184 = vld [vmem:[#allocation6 + $0x3f0] sm:$0xff]
        %v2185 = vld [vmem:[#allocation6 + $0x3f8] sm:$0xff]
        %v2186 = vld [vmem:[#allocation6 + $0x400] sm:$0xff]
        %v2187 = vld [vmem:[#allocation6 + $0x408] sm:$0xff]
        %v2188 = vld [vmem:[#allocation6 + $0x410] sm:$0xff]
        %v2189 = vld [vmem:[#allocation6 + $0x418] sm:$0xff]
        %v2190 = vld [vmem:[#allocation6 + $0x420] sm:$0xff]
        %v2191 = vld [vmem:[#allocation6 + $0x428] sm:$0xff]
        %v2192 = vld [vmem:[#allocation6 + $0x430] sm:$0xff]
        %v2193 = vld [vmem:[#allocation6 + $0x438] sm:$0xff]
        %v2194 = vld [vmem:[#allocation6 + $0x440] sm:$0xff]
        %v2195 = vld [vmem:[#allocation6 + $0x448] sm:$0xff]
        %v2196 = vld [vmem:[#allocation6 + $0x450] sm:$0xff]
        %v2197 = vld [vmem:[#allocation6 + $0x458] sm:$0xff]
        %v2198 = vld [vmem:[#allocation6 + $0x460] sm:$0xff]
        %v2199 = vld [vmem:[#allocation6 + $0x468] sm:$0xff]
        %v2200 = vld [vmem:[#allocation6 + $0x470] sm:$0xff]
        %v2201 = vld [vmem:[#allocation6 + $0x478] sm:$0xff]
        %v2202 = vld [vmem:[#allocation6 + $0x480] sm:$0xff]
        %v2203 = vld [vmem:[#allocation6 + $0x488] sm:$0xff]
        %v2204 = vld [vmem:[#allocation6 + $0x490] sm:$0xff]
        %v2205 = vld [vmem:[#allocation6 + $0x498] sm:$0xff]
        %v2206 = vld [vmem:[#allocation6 + $0x4a0] sm:$0xff]
        %v2207 = vld [vmem:[#allocation6 + $0x4a8] sm:$0xff]
        %v2208 = vld [vmem:[#allocation6 + $0x4b0] sm:$0xff]
        %v2209 = vld [vmem:[#allocation6 + $0x4b8] sm:$0xff]
        %v2210 = vld [vmem:[#allocation6 + $0x4c0] sm:$0xff]
        %v2211 = vld [vmem:[#allocation6 + $0x4c8] sm:$0xff]
        %v2212 = vld [vmem:[#allocation6 + $0x4d0] sm:$0xff]
        %v2213 = vld [vmem:[#allocation6 + $0x4d8] sm:$0xff]
        %v2214 = vld [vmem:[#allocation6 + $0x4e0] sm:$0xff]
        %v2215 = vld [vmem:[#allocation6 + $0x4e8] sm:$0xff]
        %v2216 = vld [vmem:[#allocation6 + $0x4f0] sm:$0xff]
        %v2217 = vld [vmem:[#allocation6 + $0x4f8] sm:$0xff]
        %v2218 = vld [vmem:[#allocation6 + $0x500] sm:$0xff]
        %v2219 = vld [vmem:[#allocation6 + $0x508] sm:$0xff]
        %v2220 = vld [vmem:[#allocation6 + $0x510] sm:$0xff]
        %v2221 = vld [vmem:[#allocation6 + $0x518] sm:$0xff]
        %v2222 = vld [vmem:[#allocation6 + $0x520] sm:$0xff]
        %v2223 = vld [vmem:[#allocation6 + $0x528] sm:$0xff]
        %v2224 = vld [vmem:[#allocation6 + $0x530] sm:$0xff]
        %v2225 = vld [vmem:[#allocation6 + $0x538] sm:$0xff]
        %v2226 = vld [vmem:[#allocation6 + $0x540] sm:$0xff]
        %v2227 = vld [vmem:[#allocation6 + $0x548] sm:$0xff]
        %v2228 = vld [vmem:[#allocation6 + $0x550] sm:$0xff]
        %v2229 = vld [vmem:[#allocation6 + $0x558] sm:$0xff]
        %v2230 = vld [vmem:[#allocation6 + $0x560] sm:$0xff]
        %v2231 = vld [vmem:[#allocation6 + $0x568] sm:$0xff]
        %v2232 = vld [vmem:[#allocation6 + $0x570] sm:$0xff]
        %v2233 = vld [vmem:[#allocation6 + $0x578] sm:$0xff]
        %v2234 = vld [vmem:[#allocation6 + $0x580] sm:$0xff]
        %v2235 = vld [vmem:[#allocation6 + $0x588] sm:$0xff]
        %v2236 = vld [vmem:[#allocation6 + $0x590] sm:$0xff]
        %v2237 = vld [vmem:[#allocation6 + $0x598] sm:$0xff]
        %v2238 = vld [vmem:[#allocation6 + $0x5a0] sm:$0xff]
        %v2239 = vld [vmem:[#allocation6 + $0x5a8] sm:$0xff]
        %v2240 = vld [vmem:[#allocation6 + $0x5b0] sm:$0xff]
        %v2241 = vld [vmem:[#allocation6 + $0x5b8] sm:$0xff]
        %v2242 = vld [vmem:[#allocation6 + $0x5c0] sm:$0xff]
        %v2243 = vld [vmem:[#allocation6 + $0x5c8] sm:$0xff]
        %v2244 = vld [vmem:[#allocation6 + $0x5d0] sm:$0xff]
        %v2245 = vld [vmem:[#allocation6 + $0x5d8] sm:$0xff]
        %v2246 = vld [vmem:[#allocation6 + $0x5e0] sm:$0xff]
        %v2247 = vld [vmem:[#allocation6 + $0x5e8] sm:$0xff]
        %v2248 = vld [vmem:[#allocation6 + $0x5f0] sm:$0xff]
        %v2249 = vld [vmem:[#allocation6 + $0x5f8] sm:$0xff]
        %v2442 = vunpack.c.l.b16 %v2058
        %v2443 = vunpack.c.h.b16 %v2058
        %v2444 = vunpack.c.l.b16 %v2059
        %v2445 = vunpack.c.h.b16 %v2059
        %v2446 = vunpack.c.l.b16 %v2060
        %v2447 = vunpack.c.h.b16 %v2060
        %v2448 = vunpack.c.l.b16 %v2061
        %v2449 = vunpack.c.h.b16 %v2061
        %v2450 = vunpack.c.l.b16 %v2062
        %v2451 = vunpack.c.h.b16 %v2062
        %v2452 = vunpack.c.l.b16 %v2063
        %v2453 = vunpack.c.h.b16 %v2063
        %v2454 = vunpack.c.l.b16 %v2064
        %v2455 = vunpack.c.h.b16 %v2064
        %v2456 = vunpack.c.l.b16 %v2065
        %v2457 = vunpack.c.h.b16 %v2065
        %v2458 = vunpack.c.l.b16 %v2066
        %v2459 = vunpack.c.h.b16 %v2066
        %v2460 = vunpack.c.l.b16 %v2067
        %v2461 = vunpack.c.h.b16 %v2067
        %v2462 = vunpack.c.l.b16 %v2068
        %v2463 = vunpack.c.h.b16 %v2068
        %v2464 = vunpack.c.l.b16 %v2069
        %v2465 = vunpack.c.h.b16 %v2069
        %v2466 = vunpack.c.l.b16 %v2070
        %v2467 = vunpack.c.h.b16 %v2070
        %v2468 = vunpack.c.l.b16 %v2071
        %v2469 = vunpack.c.h.b16 %v2071
        %v2470 = vunpack.c.l.b16 %v2072
        %v2471 = vunpack.c.h.b16 %v2072
        %v2472 = vunpack.c.l.b16 %v2073
        %v2473 = vunpack.c.h.b16 %v2073
        %v2474 = vunpack.c.l.b16 %v2074
        %v2475 = vunpack.c.h.b16 %v2074
        %v2476 = vunpack.c.l.b16 %v2075
        %v2477 = vunpack.c.h.b16 %v2075
        %v2478 = vunpack.c.l.b16 %v2076
        %v2479 = vunpack.c.h.b16 %v2076
        %v2480 = vunpack.c.l.b16 %v2077
        %v2481 = vunpack.c.h.b16 %v2077
        %v2482 = vunpack.c.l.b16 %v2078
        %v2483 = vunpack.c.h.b16 %v2078
        %v2484 = vunpack.c.l.b16 %v2079
        %v2485 = vunpack.c.h.b16 %v2079
        %v2486 = vunpack.c.l.b16 %v2080
        %v2487 = vunpack.c.h.b16 %v2080
        %v2488 = vunpack.c.l.b16 %v2081
        %v2489 = vunpack.c.h.b16 %v2081
        %v2490 = vunpack.c.l.b16 %v2082
        %v2491 = vunpack.c.h.b16 %v2082
        %v2492 = vunpack.c.l.b16 %v2083
        %v2493 = vunpack.c.h.b16 %v2083
        %v2494 = vunpack.c.l.b16 %v2084
        %v2495 = vunpack.c.h.b16 %v2084
        %v2496 = vunpack.c.l.b16 %v2085
        %v2497 = vunpack.c.h.b16 %v2085
        %v2498 = vunpack.c.l.b16 %v2086
        %v2499 = vunpack.c.h.b16 %v2086
        %v2500 = vunpack.c.l.b16 %v2087
        %v2501 = vunpack.c.h.b16 %v2087
        %v2502 = vunpack.c.l.b16 %v2088
        %v2503 = vunpack.c.h.b16 %v2088
        %v2504 = vunpack.c.l.b16 %v2089
        %v2505 = vunpack.c.h.b16 %v2089
        %v2506 = vunpack.c.l.b16 %v2090
        %v2507 = vunpack.c.h.b16 %v2090
        %v2508 = vunpack.c.l.b16 %v2091
        %v2509 = vunpack.c.h.b16 %v2091
        %v2510 = vunpack.c.l.b16 %v2092
        %v2511 = vunpack.c.h.b16 %v2092
        %v2512 = vunpack.c.l.b16 %v2093
        %v2513 = vunpack.c.h.b16 %v2093
        %v2514 = vunpack.c.l.b16 %v2094
        %v2515 = vunpack.c.h.b16 %v2094
        %v2516 = vunpack.c.l.b16 %v2095
        %v2517 = vunpack.c.h.b16 %v2095
        %v2518 = vunpack.c.l.b16 %v2096
        %v2519 = vunpack.c.h.b16 %v2096
        %v2520 = vunpack.c.l.b16 %v2097
        %v2521 = vunpack.c.h.b16 %v2097
        %v2522 = vunpack.c.l.b16 %v2098
        %v2523 = vunpack.c.h.b16 %v2098
        %v2524 = vunpack.c.l.b16 %v2099
        %v2525 = vunpack.c.h.b16 %v2099
        %v2526 = vunpack.c.l.b16 %v2100
        %v2527 = vunpack.c.h.b16 %v2100
        %v2528 = vunpack.c.l.b16 %v2101
        %v2529 = vunpack.c.h.b16 %v2101
        %v2530 = vunpack.c.l.b16 %v2102
        %v2531 = vunpack.c.h.b16 %v2102
        %v2532 = vunpack.c.l.b16 %v2103
        %v2533 = vunpack.c.h.b16 %v2103
        %v2534 = vunpack.c.l.b16 %v2104
        %v2535 = vunpack.c.h.b16 %v2104
        %v2536 = vunpack.c.l.b16 %v2105
        %v2537 = vunpack.c.h.b16 %v2105
        %v2538 = vunpack.c.l.b16 %v2106
        %v2539 = vunpack.c.h.b16 %v2106
        %v2540 = vunpack.c.l.b16 %v2107
        %v2541 = vunpack.c.h.b16 %v2107
        %v2542 = vunpack.c.l.b16 %v2108
        %v2543 = vunpack.c.h.b16 %v2108
        %v2544 = vunpack.c.l.b16 %v2109
        %v2545 = vunpack.c.h.b16 %v2109
        %v2546 = vunpack.c.l.b16 %v2110
        %v2547 = vunpack.c.h.b16 %v2110
        %v2548 = vunpack.c.l.b16 %v2111
        %v2549 = vunpack.c.h.b16 %v2111
        %v2550 = vunpack.c.l.b16 %v2112
        %v2551 = vunpack.c.h.b16 %v2112
        %v2552 = vunpack.c.l.b16 %v2113
        %v2553 = vunpack.c.h.b16 %v2113
        %v2554 = vunpack.c.l.b16 %v2114
        %v2555 = vunpack.c.h.b16 %v2114
        %v2556 = vunpack.c.l.b16 %v2115
        %v2557 = vunpack.c.h.b16 %v2115
        %v2558 = vunpack.c.l.b16 %v2116
        %v2559 = vunpack.c.h.b16 %v2116
        %v2560 = vunpack.c.l.b16 %v2117
        %v2561 = vunpack.c.h.b16 %v2117
        %v2562 = vunpack.c.l.b16 %v2118
        %v2563 = vunpack.c.h.b16 %v2118
        %v2564 = vunpack.c.l.b16 %v2119
        %v2565 = vunpack.c.h.b16 %v2119
        %v2566 = vunpack.c.l.b16 %v2120
        %v2567 = vunpack.c.h.b16 %v2120
        %v2568 = vunpack.c.l.b16 %v2121
        %v2569 = vunpack.c.h.b16 %v2121
        %v2570 = vunpack.c.l.b16 %v2122
        %v2571 = vunpack.c.h.b16 %v2122
        %v2572 = vunpack.c.l.b16 %v2123
        %v2573 = vunpack.c.h.b16 %v2123
        %v2574 = vunpack.c.l.b16 %v2124
        %v2575 = vunpack.c.h.b16 %v2124
        %v2576 = vunpack.c.l.b16 %v2125
        %v2577 = vunpack.c.h.b16 %v2125
        %v2578 = vunpack.c.l.b16 %v2126
        %v2579 = vunpack.c.h.b16 %v2126
        %v2580 = vunpack.c.l.b16 %v2127
        %v2581 = vunpack.c.h.b16 %v2127
        %v2582 = vunpack.c.l.b16 %v2128
        %v2583 = vunpack.c.h.b16 %v2128
        %v2584 = vunpack.c.l.b16 %v2129
        %v2585 = vunpack.c.h.b16 %v2129
        %v2586 = vunpack.c.l.b16 %v2130
        %v2587 = vunpack.c.h.b16 %v2130
        %v2588 = vunpack.c.l.b16 %v2131
        %v2589 = vunpack.c.h.b16 %v2131
        %v2590 = vunpack.c.l.b16 %v2132
        %v2591 = vunpack.c.h.b16 %v2132
        %v2592 = vunpack.c.l.b16 %v2133
        %v2593 = vunpack.c.h.b16 %v2133
        %v2594 = vunpack.c.l.b16 %v2134
        %v2595 = vunpack.c.h.b16 %v2134
        %v2596 = vunpack.c.l.b16 %v2135
        %v2597 = vunpack.c.h.b16 %v2135
        %v2598 = vunpack.c.l.b16 %v2136
        %v2599 = vunpack.c.h.b16 %v2136
        %v2600 = vunpack.c.l.b16 %v2137
        %v2601 = vunpack.c.h.b16 %v2137
        %v2602 = vunpack.c.l.b16 %v2138
        %v2603 = vunpack.c.h.b16 %v2138
        %v2604 = vunpack.c.l.b16 %v2139
        %v2605 = vunpack.c.h.b16 %v2139
        %v2606 = vunpack.c.l.b16 %v2140
        %v2607 = vunpack.c.h.b16 %v2140
        %v2608 = vunpack.c.l.b16 %v2141
        %v2609 = vunpack.c.h.b16 %v2141
        %v2610 = vunpack.c.l.b16 %v2142
        %v2611 = vunpack.c.h.b16 %v2142
        %v2612 = vunpack.c.l.b16 %v2143
        %v2613 = vunpack.c.h.b16 %v2143
        %v2614 = vunpack.c.l.b16 %v2144
        %v2615 = vunpack.c.h.b16 %v2144
        %v2616 = vunpack.c.l.b16 %v2145
        %v2617 = vunpack.c.h.b16 %v2145
        %v2618 = vunpack.c.l.b16 %v2146
        %v2619 = vunpack.c.h.b16 %v2146
        %v2620 = vunpack.c.l.b16 %v2147
        %v2621 = vunpack.c.h.b16 %v2147
        %v2622 = vunpack.c.l.b16 %v2148
        %v2623 = vunpack.c.h.b16 %v2148
        %v2624 = vunpack.c.l.b16 %v2149
        %v2625 = vunpack.c.h.b16 %v2149
        %v2626 = vunpack.c.l.b16 %v2150
        %v2627 = vunpack.c.h.b16 %v2150
        %v2628 = vunpack.c.l.b16 %v2151
        %v2629 = vunpack.c.h.b16 %v2151
        %v2630 = vunpack.c.l.b16 %v2152
        %v2631 = vunpack.c.h.b16 %v2152
        %v2632 = vunpack.c.l.b16 %v2153
        %v2633 = vunpack.c.h.b16 %v2153
        %v2634 = vunpack.c.l.b16 %v2154
        %v2635 = vunpack.c.h.b16 %v2154
        %v2636 = vunpack.c.l.b16 %v2155
        %v2637 = vunpack.c.h.b16 %v2155
        %v2638 = vunpack.c.l.b16 %v2156
        %v2639 = vunpack.c.h.b16 %v2156
        %v2640 = vunpack.c.l.b16 %v2157
        %v2641 = vunpack.c.h.b16 %v2157
        %v2642 = vunpack.c.l.b16 %v2158
        %v2643 = vunpack.c.h.b16 %v2158
        %v2644 = vunpack.c.l.b16 %v2159
        %v2645 = vunpack.c.h.b16 %v2159
        %v2646 = vunpack.c.l.b16 %v2160
        %v2647 = vunpack.c.h.b16 %v2160
        %v2648 = vunpack.c.l.b16 %v2161
        %v2649 = vunpack.c.h.b16 %v2161
        %v2650 = vunpack.c.l.b16 %v2162
        %v2651 = vunpack.c.h.b16 %v2162
        %v2652 = vunpack.c.l.b16 %v2163
        %v2653 = vunpack.c.h.b16 %v2163
        %v2654 = vunpack.c.l.b16 %v2164
        %v2655 = vunpack.c.h.b16 %v2164
        %v2656 = vunpack.c.l.b16 %v2165
        %v2657 = vunpack.c.h.b16 %v2165
        %v2658 = vunpack.c.l.b16 %v2166
        %v2659 = vunpack.c.h.b16 %v2166
        %v2660 = vunpack.c.l.b16 %v2167
        %v2661 = vunpack.c.h.b16 %v2167
        %v2662 = vunpack.c.l.b16 %v2168
        %v2663 = vunpack.c.h.b16 %v2168
        %v2664 = vunpack.c.l.b16 %v2169
        %v2665 = vunpack.c.h.b16 %v2169
        %v2666 = vunpack.c.l.b16 %v2170
        %v2667 = vunpack.c.h.b16 %v2170
        %v2668 = vunpack.c.l.b16 %v2171
        %v2669 = vunpack.c.h.b16 %v2171
        %v2670 = vunpack.c.l.b16 %v2172
        %v2671 = vunpack.c.h.b16 %v2172
        %v2672 = vunpack.c.l.b16 %v2173
        %v2673 = vunpack.c.h.b16 %v2173
        %v2674 = vunpack.c.l.b16 %v2174
        %v2675 = vunpack.c.h.b16 %v2174
        %v2676 = vunpack.c.l.b16 %v2175
        %v2677 = vunpack.c.h.b16 %v2175
        %v2678 = vunpack.c.l.b16 %v2176
        %v2679 = vunpack.c.h.b16 %v2176
        %v2680 = vunpack.c.l.b16 %v2177
        %v2681 = vunpack.c.h.b16 %v2177
        %v2682 = vunpack.c.l.b16 %v2178
        %v2683 = vunpack.c.h.b16 %v2178
        %v2684 = vunpack.c.l.b16 %v2179
        %v2685 = vunpack.c.h.b16 %v2179
        %v2686 = vunpack.c.l.b16 %v2180
        %v2687 = vunpack.c.h.b16 %v2180
        %v2688 = vunpack.c.l.b16 %v2181
        %v2689 = vunpack.c.h.b16 %v2181
        %v2690 = vunpack.c.l.b16 %v2182
        %v2691 = vunpack.c.h.b16 %v2182
        %v2692 = vunpack.c.l.b16 %v2183
        %v2693 = vunpack.c.h.b16 %v2183
        %v2694 = vunpack.c.l.b16 %v2184
        %v2695 = vunpack.c.h.b16 %v2184
        %v2696 = vunpack.c.l.b16 %v2185
        %v2697 = vunpack.c.h.b16 %v2185
        %v2698 = vunpack.c.l.b16 %v2186
        %v2699 = vunpack.c.h.b16 %v2186
        %v2700 = vunpack.c.l.b16 %v2187
        %v2701 = vunpack.c.h.b16 %v2187
        %v2702 = vunpack.c.l.b16 %v2188
        %v2703 = vunpack.c.h.b16 %v2188
        %v2704 = vunpack.c.l.b16 %v2189
        %v2705 = vunpack.c.h.b16 %v2189
        %v2706 = vunpack.c.l.b16 %v2190
        %v2707 = vunpack.c.h.b16 %v2190
        %v2708 = vunpack.c.l.b16 %v2191
        %v2709 = vunpack.c.h.b16 %v2191
        %v2710 = vunpack.c.l.b16 %v2192
        %v2711 = vunpack.c.h.b16 %v2192
        %v2712 = vunpack.c.l.b16 %v2193
        %v2713 = vunpack.c.h.b16 %v2193
        %v2714 = vunpack.c.l.b16 %v2194
        %v2715 = vunpack.c.h.b16 %v2194
        %v2716 = vunpack.c.l.b16 %v2195
        %v2717 = vunpack.c.h.b16 %v2195
        %v2718 = vunpack.c.l.b16 %v2196
        %v2719 = vunpack.c.h.b16 %v2196
        %v2720 = vunpack.c.l.b16 %v2197
        %v2721 = vunpack.c.h.b16 %v2197
        %v2722 = vunpack.c.l.b16 %v2198
        %v2723 = vunpack.c.h.b16 %v2198
        %v2724 = vunpack.c.l.b16 %v2199
        %v2725 = vunpack.c.h.b16 %v2199
        %v2726 = vunpack.c.l.b16 %v2200
        %v2727 = vunpack.c.h.b16 %v2200
        %v2728 = vunpack.c.l.b16 %v2201
        %v2729 = vunpack.c.h.b16 %v2201
        %v2730 = vunpack.c.l.b16 %v2202
        %v2731 = vunpack.c.h.b16 %v2202
        %v2732 = vunpack.c.l.b16 %v2203
        %v2733 = vunpack.c.h.b16 %v2203
        %v2734 = vunpack.c.l.b16 %v2204
        %v2735 = vunpack.c.h.b16 %v2204
        %v2736 = vunpack.c.l.b16 %v2205
        %v2737 = vunpack.c.h.b16 %v2205
        %v2738 = vunpack.c.l.b16 %v2206
        %v2739 = vunpack.c.h.b16 %v2206
        %v2740 = vunpack.c.l.b16 %v2207
        %v2741 = vunpack.c.h.b16 %v2207
        %v2742 = vunpack.c.l.b16 %v2208
        %v2743 = vunpack.c.h.b16 %v2208
        %v2744 = vunpack.c.l.b16 %v2209
        %v2745 = vunpack.c.h.b16 %v2209
        %v2746 = vunpack.c.l.b16 %v2210
        %v2747 = vunpack.c.h.b16 %v2210
        %v2748 = vunpack.c.l.b16 %v2211
        %v2749 = vunpack.c.h.b16 %v2211
        %v2750 = vunpack.c.l.b16 %v2212
        %v2751 = vunpack.c.h.b16 %v2212
        %v2752 = vunpack.c.l.b16 %v2213
        %v2753 = vunpack.c.h.b16 %v2213
        %v2754 = vunpack.c.l.b16 %v2214
        %v2755 = vunpack.c.h.b16 %v2214
        %v2756 = vunpack.c.l.b16 %v2215
        %v2757 = vunpack.c.h.b16 %v2215
        %v2758 = vunpack.c.l.b16 %v2216
        %v2759 = vunpack.c.h.b16 %v2216
        %v2760 = vunpack.c.l.b16 %v2217
        %v2761 = vunpack.c.h.b16 %v2217
        %v2762 = vunpack.c.l.b16 %v2218
        %v2763 = vunpack.c.h.b16 %v2218
        %v2764 = vunpack.c.l.b16 %v2219
        %v2765 = vunpack.c.h.b16 %v2219
        %v2766 = vunpack.c.l.b16 %v2220
        %v2767 = vunpack.c.h.b16 %v2220
        %v2768 = vunpack.c.l.b16 %v2221
        %v2769 = vunpack.c.h.b16 %v2221
        %v2770 = vunpack.c.l.b16 %v2222
        %v2771 = vunpack.c.h.b16 %v2222
        %v2772 = vunpack.c.l.b16 %v2223
        %v2773 = vunpack.c.h.b16 %v2223
        %v2774 = vunpack.c.l.b16 %v2224
        %v2775 = vunpack.c.h.b16 %v2224
        %v2776 = vunpack.c.l.b16 %v2225
        %v2777 = vunpack.c.h.b16 %v2225
        %v2778 = vunpack.c.l.b16 %v2226
        %v2779 = vunpack.c.h.b16 %v2226
        %v2780 = vunpack.c.l.b16 %v2227
        %v2781 = vunpack.c.h.b16 %v2227
        %v2782 = vunpack.c.l.b16 %v2228
        %v2783 = vunpack.c.h.b16 %v2228
        %v2784 = vunpack.c.l.b16 %v2229
        %v2785 = vunpack.c.h.b16 %v2229
        %v2786 = vunpack.c.l.b16 %v2230
        %v2787 = vunpack.c.h.b16 %v2230
        %v2788 = vunpack.c.l.b16 %v2231
        %v2789 = vunpack.c.h.b16 %v2231
        %v2790 = vunpack.c.l.b16 %v2232
        %v2791 = vunpack.c.h.b16 %v2232
        %v2792 = vunpack.c.l.b16 %v2233
        %v2793 = vunpack.c.h.b16 %v2233
        %v2794 = vunpack.c.l.b16 %v2234
        %v2795 = vunpack.c.h.b16 %v2234
        %v2796 = vunpack.c.l.b16 %v2235
        %v2797 = vunpack.c.h.b16 %v2235
        %v2798 = vunpack.c.l.b16 %v2236
        %v2799 = vunpack.c.h.b16 %v2236
        %v2800 = vunpack.c.l.b16 %v2237
        %v2801 = vunpack.c.h.b16 %v2237
        %v2802 = vunpack.c.l.b16 %v2238
        %v2803 = vunpack.c.h.b16 %v2238
        %v2804 = vunpack.c.l.b16 %v2239
        %v2805 = vunpack.c.h.b16 %v2239
        %v2806 = vunpack.c.l.b16 %v2240
        %v2807 = vunpack.c.h.b16 %v2240
        %v2808 = vunpack.c.l.b16 %v2241
        %v2809 = vunpack.c.h.b16 %v2241
        %v2810 = vunpack.c.l.b16 %v2242
        %v2811 = vunpack.c.h.b16 %v2242
        %v2812 = vunpack.c.l.b16 %v2243
        %v2813 = vunpack.c.h.b16 %v2243
        %v2814 = vunpack.c.l.b16 %v2244
        %v2815 = vunpack.c.h.b16 %v2244
        %v2816 = vunpack.c.l.b16 %v2245
        %v2817 = vunpack.c.h.b16 %v2245
        %v2818 = vunpack.c.l.b16 %v2246
        %v2819 = vunpack.c.h.b16 %v2246
        %v2820 = vunpack.c.l.b16 %v2247
        %v2821 = vunpack.c.h.b16 %v2247
        %v2822 = vunpack.c.l.b16 %v2248
        %v2823 = vunpack.c.h.b16 %v2248
        %v2824 = vunpack.c.l.b16 %v2249
        %v2825 = vunpack.c.h.b16 %v2249
        %v2826 = vpack.c.b16 %v2448, %v2442
        %v2827 = vpack.c.b16 %v2449, %v2443
        %v2828 = vpack.c.b16 %v2450, %v2444
        %v2829 = vpack.c.b16 %v2451, %v2445
        %v2830 = vpack.c.b16 %v2452, %v2446
        %v2831 = vpack.c.b16 %v2453, %v2447
        %v2832 = vpack.c.b16 %v2460, %v2454
        %v2833 = vpack.c.b16 %v2461, %v2455
        %v2834 = vpack.c.b16 %v2462, %v2456
        %v2835 = vpack.c.b16 %v2463, %v2457
        %v2836 = vpack.c.b16 %v2464, %v2458
        %v2837 = vpack.c.b16 %v2465, %v2459
        %v2838 = vpack.c.b16 %v2472, %v2466
        %v2839 = vpack.c.b16 %v2473, %v2467
        %v2840 = vpack.c.b16 %v2474, %v2468
        %v2841 = vpack.c.b16 %v2475, %v2469
        %v2842 = vpack.c.b16 %v2476, %v2470
        %v2843 = vpack.c.b16 %v2477, %v2471
        %v2844 = vpack.c.b16 %v2484, %v2478
        %v2845 = vpack.c.b16 %v2485, %v2479
        %v2846 = vpack.c.b16 %v2486, %v2480
        %v2847 = vpack.c.b16 %v2487, %v2481
        %v2848 = vpack.c.b16 %v2488, %v2482
        %v2849 = vpack.c.b16 %v2489, %v2483
        %v2850 = vpack.c.b16 %v2496, %v2490
        %v2851 = vpack.c.b16 %v2497, %v2491
        %v2852 = vpack.c.b16 %v2498, %v2492
        %v2853 = vpack.c.b16 %v2499, %v2493
        %v2854 = vpack.c.b16 %v2500, %v2494
        %v2855 = vpack.c.b16 %v2501, %v2495
        %v2856 = vpack.c.b16 %v2508, %v2502
        %v2857 = vpack.c.b16 %v2509, %v2503
        %v2858 = vpack.c.b16 %v2510, %v2504
        %v2859 = vpack.c.b16 %v2511, %v2505
        %v2860 = vpack.c.b16 %v2512, %v2506
        %v2861 = vpack.c.b16 %v2513, %v2507
        %v2862 = vpack.c.b16 %v2520, %v2514
        %v2863 = vpack.c.b16 %v2521, %v2515
        %v2864 = vpack.c.b16 %v2522, %v2516
        %v2865 = vpack.c.b16 %v2523, %v2517
        %v2866 = vpack.c.b16 %v2524, %v2518
        %v2867 = vpack.c.b16 %v2525, %v2519
        %v2868 = vpack.c.b16 %v2532, %v2526
        %v2869 = vpack.c.b16 %v2533, %v2527
        %v2870 = vpack.c.b16 %v2534, %v2528
        %v2871 = vpack.c.b16 %v2535, %v2529
        %v2872 = vpack.c.b16 %v2536, %v2530
        %v2873 = vpack.c.b16 %v2537, %v2531
        %v2874 = vpack.c.b16 %v2544, %v2538
        %v2875 = vpack.c.b16 %v2545, %v2539
        %v2876 = vpack.c.b16 %v2546, %v2540
        %v2877 = vpack.c.b16 %v2547, %v2541
        %v2878 = vpack.c.b16 %v2548, %v2542
        %v2879 = vpack.c.b16 %v2549, %v2543
        %v2880 = vpack.c.b16 %v2556, %v2550
        %v2881 = vpack.c.b16 %v2557, %v2551
        %v2882 = vpack.c.b16 %v2558, %v2552
        %v2883 = vpack.c.b16 %v2559, %v2553
        %v2884 = vpack.c.b16 %v2560, %v2554
        %v2885 = vpack.c.b16 %v2561, %v2555
        %v2886 = vpack.c.b16 %v2568, %v2562
        %v2887 = vpack.c.b16 %v2569, %v2563
        %v2888 = vpack.c.b16 %v2570, %v2564
        %v2889 = vpack.c.b16 %v2571, %v2565
        %v2890 = vpack.c.b16 %v2572, %v2566
        %v2891 = vpack.c.b16 %v2573, %v2567
        %v2892 = vpack.c.b16 %v2580, %v2574
        %v2893 = vpack.c.b16 %v2581, %v2575
        %v2894 = vpack.c.b16 %v2582, %v2576
        %v2895 = vpack.c.b16 %v2583, %v2577
        %v2896 = vpack.c.b16 %v2584, %v2578
        %v2897 = vpack.c.b16 %v2585, %v2579
        %v2898 = vpack.c.b16 %v2592, %v2586
        %v2899 = vpack.c.b16 %v2593, %v2587
        %v2900 = vpack.c.b16 %v2594, %v2588
        %v2901 = vpack.c.b16 %v2595, %v2589
        %v2902 = vpack.c.b16 %v2596, %v2590
        %v2903 = vpack.c.b16 %v2597, %v2591
        %v2904 = vpack.c.b16 %v2604, %v2598
        %v2905 = vpack.c.b16 %v2605, %v2599
        %v2906 = vpack.c.b16 %v2606, %v2600
        %v2907 = vpack.c.b16 %v2607, %v2601
        %v2908 = vpack.c.b16 %v2608, %v2602
        %v2909 = vpack.c.b16 %v2609, %v2603
        %v2910 = vpack.c.b16 %v2616, %v2610
        %v2911 = vpack.c.b16 %v2617, %v2611
        %v2912 = vpack.c.b16 %v2618, %v2612
        %v2913 = vpack.c.b16 %v2619, %v2613
        %v2914 = vpack.c.b16 %v2620, %v2614
        %v2915 = vpack.c.b16 %v2621, %v2615
        %v2916 = vpack.c.b16 %v2628, %v2622
        %v2917 = vpack.c.b16 %v2629, %v2623
        %v2918 = vpack.c.b16 %v2630, %v2624
        %v2919 = vpack.c.b16 %v2631, %v2625
        %v2920 = vpack.c.b16 %v2632, %v2626
        %v2921 = vpack.c.b16 %v2633, %v2627
        %v2922 = vpack.c.b16 %v2640, %v2634
        %v2923 = vpack.c.b16 %v2641, %v2635
        %v2924 = vpack.c.b16 %v2642, %v2636
        %v2925 = vpack.c.b16 %v2643, %v2637
        %v2926 = vpack.c.b16 %v2644, %v2638
        %v2927 = vpack.c.b16 %v2645, %v2639
        %v2928 = vpack.c.b16 %v2652, %v2646
        %v2929 = vpack.c.b16 %v2653, %v2647
        %v2930 = vpack.c.b16 %v2654, %v2648
        %v2931 = vpack.c.b16 %v2655, %v2649
        %v2932 = vpack.c.b16 %v2656, %v2650
        %v2933 = vpack.c.b16 %v2657, %v2651
        %v2934 = vpack.c.b16 %v2664, %v2658
        %v2935 = vpack.c.b16 %v2665, %v2659
        %v2936 = vpack.c.b16 %v2666, %v2660
        %v2937 = vpack.c.b16 %v2667, %v2661
        %v2938 = vpack.c.b16 %v2668, %v2662
        %v2939 = vpack.c.b16 %v2669, %v2663
        %v2940 = vpack.c.b16 %v2676, %v2670
        %v2941 = vpack.c.b16 %v2677, %v2671
        %v2942 = vpack.c.b16 %v2678, %v2672
        %v2943 = vpack.c.b16 %v2679, %v2673
        %v2944 = vpack.c.b16 %v2680, %v2674
        %v2945 = vpack.c.b16 %v2681, %v2675
        %v2946 = vpack.c.b16 %v2688, %v2682
        %v2947 = vpack.c.b16 %v2689, %v2683
        %v2948 = vpack.c.b16 %v2690, %v2684
        %v2949 = vpack.c.b16 %v2691, %v2685
        %v2950 = vpack.c.b16 %v2692, %v2686
        %v2951 = vpack.c.b16 %v2693, %v2687
        %v2952 = vpack.c.b16 %v2700, %v2694
        %v2953 = vpack.c.b16 %v2701, %v2695
        %v2954 = vpack.c.b16 %v2702, %v2696
        %v2955 = vpack.c.b16 %v2703, %v2697
        %v2956 = vpack.c.b16 %v2704, %v2698
        %v2957 = vpack.c.b16 %v2705, %v2699
        %v2958 = vpack.c.b16 %v2712, %v2706
        %v2959 = vpack.c.b16 %v2713, %v2707
        %v2960 = vpack.c.b16 %v2714, %v2708
        %v2961 = vpack.c.b16 %v2715, %v2709
        %v2962 = vpack.c.b16 %v2716, %v2710
        %v2963 = vpack.c.b16 %v2717, %v2711
        %v2964 = vpack.c.b16 %v2724, %v2718
        %v2965 = vpack.c.b16 %v2725, %v2719
        %v2966 = vpack.c.b16 %v2726, %v2720
        %v2967 = vpack.c.b16 %v2727, %v2721
        %v2968 = vpack.c.b16 %v2728, %v2722
        %v2969 = vpack.c.b16 %v2729, %v2723
        %v2970 = vpack.c.b16 %v2736, %v2730
        %v2971 = vpack.c.b16 %v2737, %v2731
        %v2972 = vpack.c.b16 %v2738, %v2732
        %v2973 = vpack.c.b16 %v2739, %v2733
        %v2974 = vpack.c.b16 %v2740, %v2734
        %v2975 = vpack.c.b16 %v2741, %v2735
        %v2976 = vpack.c.b16 %v2748, %v2742
        %v2977 = vpack.c.b16 %v2749, %v2743
        %v2978 = vpack.c.b16 %v2750, %v2744
        %v2979 = vpack.c.b16 %v2751, %v2745
        %v2980 = vpack.c.b16 %v2752, %v2746
        %v2981 = vpack.c.b16 %v2753, %v2747
        %v2982 = vpack.c.b16 %v2760, %v2754
        %v2983 = vpack.c.b16 %v2761, %v2755
        %v2984 = vpack.c.b16 %v2762, %v2756
        %v2985 = vpack.c.b16 %v2763, %v2757
        %v2986 = vpack.c.b16 %v2764, %v2758
        %v2987 = vpack.c.b16 %v2765, %v2759
        %v2988 = vpack.c.b16 %v2772, %v2766
        %v2989 = vpack.c.b16 %v2773, %v2767
        %v2990 = vpack.c.b16 %v2774, %v2768
        %v2991 = vpack.c.b16 %v2775, %v2769
        %v2992 = vpack.c.b16 %v2776, %v2770
        %v2993 = vpack.c.b16 %v2777, %v2771
        %v2994 = vpack.c.b16 %v2784, %v2778
        %v2995 = vpack.c.b16 %v2785, %v2779
        %v2996 = vpack.c.b16 %v2786, %v2780
        %v2997 = vpack.c.b16 %v2787, %v2781
        %v2998 = vpack.c.b16 %v2788, %v2782
        %v2999 = vpack.c.b16 %v2789, %v2783
        %v3000 = vpack.c.b16 %v2796, %v2790
        %v3001 = vpack.c.b16 %v2797, %v2791
        %v3002 = vpack.c.b16 %v2798, %v2792
        %v3003 = vpack.c.b16 %v2799, %v2793
        %v3004 = vpack.c.b16 %v2800, %v2794
        %v3005 = vpack.c.b16 %v2801, %v2795
        %v3006 = vpack.c.b16 %v2808, %v2802
        %v3007 = vpack.c.b16 %v2809, %v2803
        %v3008 = vpack.c.b16 %v2810, %v2804
        %v3009 = vpack.c.b16 %v2811, %v2805
        %v3010 = vpack.c.b16 %v2812, %v2806
        %v3011 = vpack.c.b16 %v2813, %v2807
        %v3012 = vpack.c.b16 %v2820, %v2814
        %v3013 = vpack.c.b16 %v2821, %v2815
        %v3014 = vpack.c.b16 %v2822, %v2816
        %v3015 = vpack.c.b16 %v2823, %v2817
        %v3016 = vpack.c.b16 %v2824, %v2818
        %v3017 = vpack.c.b16 %v2825, %v2819
        %3210 = vmatpush.bf16.msra.mxu0 %v2868
        %3211 = vmatpush.bf16.msra.mxu0 %v2862
        %3212 = vmatpush.bf16.msra.mxu0 %v2856
        %3213 = vmatpush.bf16.msra.mxu0 %v2850
        %3214 = vmatpush.bf16.msra.mxu0 %v2844
        %3215 = vmatpush.bf16.msra.mxu0 %v2838
        %3216 = vmatpush.bf16.msra.mxu0 %v2832
        %3217 = vmatpush.bf16.msra.mxu0 %v2826
        %3218 = vmatmul.bf16.gmra.mxu0 %v2054
        %v3219 = vpop.f32.mrf.mxu0
        %v3220 = vadd.f32 0.0, %v3219
        %v3221 = vpop.f32.mrf.mxu0
        %v3222 = vadd.f32 0.0, %v3221
        %3223 = vdwg.mxu0
        %3224 = vmatpush.bf16.msra.mxu0 %v2916
        %3225 = vmatpush.bf16.msra.mxu0 %v2910
        %3226 = vmatpush.bf16.msra.mxu0 %v2904
        %3227 = vmatpush.bf16.msra.mxu0 %v2898
        %3228 = vmatpush.bf16.msra.mxu0 %v2892
        %3229 = vmatpush.bf16.msra.mxu0 %v2886
        %3230 = vmatpush.bf16.msra.mxu0 %v2880
        %3231 = vmatpush.bf16.msra.mxu0 %v2874
        %3232 = vmatmul.bf16.gmra.mxu0 %v2055
        %v3233 = vpop.f32.mrf.mxu0
        %v3234 = vadd.f32 %v3220, %v3233
        %v3235 = vpop.f32.mrf.mxu0
        %v3236 = vadd.f32 %v3222, %v3235
        %3237 = vdwg.mxu0
        %3238 = vmatpush.bf16.msra.mxu0 %v2964
        %3239 = vmatpush.bf16.msra.mxu0 %v2958
        %3240 = vmatpush.bf16.msra.mxu0 %v2952
        %3241 = vmatpush.bf16.msra.mxu0 %v2946
        %3242 = vmatpush.bf16.msra.mxu0 %v2940
        %3243 = vmatpush.bf16.msra.mxu0 %v2934
        %3244 = vmatpush.bf16.msra.mxu0 %v2928
        %3245 = vmatpush.bf16.msra.mxu0 %v2922
        %3246 = vmatmul.bf16.gmra.mxu0 %v2056
        %v3247 = vpop.f32.mrf.mxu0
        %v3248 = vadd.f32 %v3234, %v3247
        %v3249 = vpop.f32.mrf.mxu0
        %v3250 = vadd.f32 %v3236, %v3249
        %3251 = vdwg.mxu0
        %3252 = vmatpush.bf16.msra.mxu0 %v3012
        %3253 = vmatpush.bf16.msra.mxu0 %v3006
        %3254 = vmatpush.bf16.msra.mxu0 %v3000
        %3255 = vmatpush.bf16.msra.mxu0 %v2994
        %3256 = vmatpush.bf16.msra.mxu0 %v2988
        %3257 = vmatpush.bf16.msra.mxu0 %v2982
        %3258 = vmatpush.bf16.msra.mxu0 %v2976
        %3259 = vmatpush.bf16.msra.mxu0 %v2970
        %3260 = vmatmul.bf16.gmra.mxu0 %v2057
        %v3261 = vpop.f32.mrf.mxu0
        %v3262 = vadd.f32 %v3248, %v3261
        %v3263 = vpop.f32.mrf.mxu0
        %v3264 = vadd.f32 %v3250, %v3263
        %3265 = vdwg.mxu0
        %3266 = vmatpush.bf16.msra.mxu0 %v2869
        %3267 = vmatpush.bf16.msra.mxu0 %v2863
        %3268 = vmatpush.bf16.msra.mxu0 %v2857
        %3269 = vmatpush.bf16.msra.mxu0 %v2851
        %3270 = vmatpush.bf16.msra.mxu0 %v2845
        %3271 = vmatpush.bf16.msra.mxu0 %v2839
        %3272 = vmatpush.bf16.msra.mxu0 %v2833
        %3273 = vmatpush.bf16.msra.mxu0 %v2827
        %3274 = vmatmul.bf16.gmra.mxu0 %v2054
        %v3275 = vpop.f32.mrf.mxu0
        %v3276 = vadd.f32 0.0, %v3275
        %v3277 = vpop.f32.mrf.mxu0
        %v3278 = vadd.f32 0.0, %v3277
        %3279 = vdwg.mxu0
        %3280 = vmatpush.bf16.msra.mxu0 %v2917
        %3281 = vmatpush.bf16.msra.mxu0 %v2911
        %3282 = vmatpush.bf16.msra.mxu0 %v2905
        %3283 = vmatpush.bf16.msra.mxu0 %v2899
        %3284 = vmatpush.bf16.msra.mxu0 %v2893
        %3285 = vmatpush.bf16.msra.mxu0 %v2887
        %3286 = vmatpush.bf16.msra.mxu0 %v2881
        %3287 = vmatpush.bf16.msra.mxu0 %v2875
        %3288 = vmatmul.bf16.gmra.mxu0 %v2055
        %v3289 = vpop.f32.mrf.mxu0
        %v3290 = vadd.f32 %v3276, %v3289
        %v3291 = vpop.f32.mrf.mxu0
        %v3292 = vadd.f32 %v3278, %v3291
        %3293 = vdwg.mxu0
        %3294 = vmatpush.bf16.msra.mxu0 %v2965
        %3295 = vmatpush.bf16.msra.mxu0 %v2959
        %3296 = vmatpush.bf16.msra.mxu0 %v2953
        %3297 = vmatpush.bf16.msra.mxu0 %v2947
        %3298 = vmatpush.bf16.msra.mxu0 %v2941
        %3299 = vmatpush.bf16.msra.mxu0 %v2935
        %3300 = vmatpush.bf16.msra.mxu0 %v2929
        %3301 = vmatpush.bf16.msra.mxu0 %v2923
        %3302 = vmatmul.bf16.gmra.mxu0 %v2056
        %v3303 = vpop.f32.mrf.mxu0
        %v3304 = vadd.f32 %v3290, %v3303
        %v3305 = vpop.f32.mrf.mxu0
        %v3306 = vadd.f32 %v3292, %v3305
        %3307 = vdwg.mxu0
        %3308 = vmatpush.bf16.msra.mxu0 %v3013
        %3309 = vmatpush.bf16.msra.mxu0 %v3007
        %3310 = vmatpush.bf16.msra.mxu0 %v3001
        %3311 = vmatpush.bf16.msra.mxu0 %v2995
        %3312 = vmatpush.bf16.msra.mxu0 %v2989
        %3313 = vmatpush.bf16.msra.mxu0 %v2983
        %3314 = vmatpush.bf16.msra.mxu0 %v2977
        %3315 = vmatpush.bf16.msra.mxu0 %v2971
        %3316 = vmatmul.bf16.gmra.mxu0 %v2057
        %v3317 = vpop.f32.mrf.mxu0
        %v3318 = vadd.f32 %v3304, %v3317
        %v3319 = vpop.f32.mrf.mxu0
        %v3320 = vadd.f32 %v3306, %v3319
        %3321 = vdwg.mxu0
        %3322 = vmatpush.bf16.msra.mxu0 %v2870
        %3323 = vmatpush.bf16.msra.mxu0 %v2864
        %3324 = vmatpush.bf16.msra.mxu0 %v2858
        %3325 = vmatpush.bf16.msra.mxu0 %v2852
        %3326 = vmatpush.bf16.msra.mxu0 %v2846
        %3327 = vmatpush.bf16.msra.mxu0 %v2840
        %3328 = vmatpush.bf16.msra.mxu0 %v2834
        %3329 = vmatpush.bf16.msra.mxu0 %v2828
        %3330 = vmatmul.bf16.gmra.mxu0 %v2054
        %v3331 = vpop.f32.mrf.mxu0
        %v3332 = vadd.f32 0.0, %v3331
        %v3333 = vpop.f32.mrf.mxu0
        %v3334 = vadd.f32 0.0, %v3333
        %3335 = vdwg.mxu0
        %3336 = vmatpush.bf16.msra.mxu0 %v2918
        %3337 = vmatpush.bf16.msra.mxu0 %v2912
        %3338 = vmatpush.bf16.msra.mxu0 %v2906
        %3339 = vmatpush.bf16.msra.mxu0 %v2900
        %3340 = vmatpush.bf16.msra.mxu0 %v2894
        %3341 = vmatpush.bf16.msra.mxu0 %v2888
        %3342 = vmatpush.bf16.msra.mxu0 %v2882
        %3343 = vmatpush.bf16.msra.mxu0 %v2876
        %3344 = vmatmul.bf16.gmra.mxu0 %v2055
        %v3345 = vpop.f32.mrf.mxu0
        %v3346 = vadd.f32 %v3332, %v3345
        %v3347 = vpop.f32.mrf.mxu0
        %v3348 = vadd.f32 %v3334, %v3347
        %3349 = vdwg.mxu0
        %3350 = vmatpush.bf16.msra.mxu0 %v2966
        %3351 = vmatpush.bf16.msra.mxu0 %v2960
        %3352 = vmatpush.bf16.msra.mxu0 %v2954
        %3353 = vmatpush.bf16.msra.mxu0 %v2948
        %3354 = vmatpush.bf16.msra.mxu0 %v2942
        %3355 = vmatpush.bf16.msra.mxu0 %v2936
        %3356 = vmatpush.bf16.msra.mxu0 %v2930
        %3357 = vmatpush.bf16.msra.mxu0 %v2924
        %3358 = vmatmul.bf16.gmra.mxu0 %v2056
        %v3359 = vpop.f32.mrf.mxu0
        %v3360 = vadd.f32 %v3346, %v3359
        %v3361 = vpop.f32.mrf.mxu0
        %v3362 = vadd.f32 %v3348, %v3361
        %3363 = vdwg.mxu0
        %3364 = vmatpush.bf16.msra.mxu0 %v3014
        %3365 = vmatpush.bf16.msra.mxu0 %v3008
        %3366 = vmatpush.bf16.msra.mxu0 %v3002
        %3367 = vmatpush.bf16.msra.mxu0 %v2996
        %3368 = vmatpush.bf16.msra.mxu0 %v2990
        %3369 = vmatpush.bf16.msra.mxu0 %v2984
        %3370 = vmatpush.bf16.msra.mxu0 %v2978
        %3371 = vmatpush.bf16.msra.mxu0 %v2972
        %3372 = vmatmul.bf16.gmra.mxu0 %v2057
        %v3373 = vpop.f32.mrf.mxu0
        %v3374 = vadd.f32 %v3360, %v3373
        %v3375 = vpop.f32.mrf.mxu0
        %v3376 = vadd.f32 %v3362, %v3375
        %3377 = vdwg.mxu0
        %3378 = vmatpush.bf16.msra.mxu0 %v2871
        %3379 = vmatpush.bf16.msra.mxu0 %v2865
        %3380 = vmatpush.bf16.msra.mxu0 %v2859
        %3381 = vmatpush.bf16.msra.mxu0 %v2853
        %3382 = vmatpush.bf16.msra.mxu0 %v2847
        %3383 = vmatpush.bf16.msra.mxu0 %v2841
        %3384 = vmatpush.bf16.msra.mxu0 %v2835
        %3385 = vmatpush.bf16.msra.mxu0 %v2829
        %3386 = vmatmul.bf16.gmra.mxu0 %v2054
        %v3387 = vpop.f32.mrf.mxu0
        %v3388 = vadd.f32 0.0, %v3387
        %v3389 = vpop.f32.mrf.mxu0
        %v3390 = vadd.f32 0.0, %v3389
        %3391 = vdwg.mxu0
        %3392 = vmatpush.bf16.msra.mxu0 %v2919
        %3393 = vmatpush.bf16.msra.mxu0 %v2913
        %3394 = vmatpush.bf16.msra.mxu0 %v2907
        %3395 = vmatpush.bf16.msra.mxu0 %v2901
        %3396 = vmatpush.bf16.msra.mxu0 %v2895
        %3397 = vmatpush.bf16.msra.mxu0 %v2889
        %3398 = vmatpush.bf16.msra.mxu0 %v2883
        %3399 = vmatpush.bf16.msra.mxu0 %v2877
        %3400 = vmatmul.bf16.gmra.mxu0 %v2055
        %v3401 = vpop.f32.mrf.mxu0
        %v3402 = vadd.f32 %v3388, %v3401
        %v3403 = vpop.f32.mrf.mxu0
        %v3404 = vadd.f32 %v3390, %v3403
        %3405 = vdwg.mxu0
        %3406 = vmatpush.bf16.msra.mxu0 %v2967
        %3407 = vmatpush.bf16.msra.mxu0 %v2961
        %3408 = vmatpush.bf16.msra.mxu0 %v2955
        %3409 = vmatpush.bf16.msra.mxu0 %v2949
        %3410 = vmatpush.bf16.msra.mxu0 %v2943
        %3411 = vmatpush.bf16.msra.mxu0 %v2937
        %3412 = vmatpush.bf16.msra.mxu0 %v2931
        %3413 = vmatpush.bf16.msra.mxu0 %v2925
        %3414 = vmatmul.bf16.gmra.mxu0 %v2056
        %v3415 = vpop.f32.mrf.mxu0
        %v3416 = vadd.f32 %v3402, %v3415
        %v3417 = vpop.f32.mrf.mxu0
        %v3418 = vadd.f32 %v3404, %v3417
        %3419 = vdwg.mxu0
        %3420 = vmatpush.bf16.msra.mxu0 %v3015
        %3421 = vmatpush.bf16.msra.mxu0 %v3009
        %3422 = vmatpush.bf16.msra.mxu0 %v3003
        %3423 = vmatpush.bf16.msra.mxu0 %v2997
        %3424 = vmatpush.bf16.msra.mxu0 %v2991
        %3425 = vmatpush.bf16.msra.mxu0 %v2985
        %3426 = vmatpush.bf16.msra.mxu0 %v2979
        %3427 = vmatpush.bf16.msra.mxu0 %v2973
        %3428 = vmatmul.bf16.gmra.mxu0 %v2057
        %v3429 = vpop.f32.mrf.mxu0
        %v3430 = vadd.f32 %v3416, %v3429
        %v3431 = vpop.f32.mrf.mxu0
        %v3432 = vadd.f32 %v3418, %v3431
        %3433 = vdwg.mxu0
        %3434 = vmatpush.bf16.msra.mxu0 %v2872
        %3435 = vmatpush.bf16.msra.mxu0 %v2866
        %3436 = vmatpush.bf16.msra.mxu0 %v2860
        %3437 = vmatpush.bf16.msra.mxu0 %v2854
        %3438 = vmatpush.bf16.msra.mxu0 %v2848
        %3439 = vmatpush.bf16.msra.mxu0 %v2842
        %3440 = vmatpush.bf16.msra.mxu0 %v2836
        %3441 = vmatpush.bf16.msra.mxu0 %v2830
        %3442 = vmatmul.bf16.gmra.mxu0 %v2054
        %v3443 = vpop.f32.mrf.mxu0
        %v3444 = vadd.f32 0.0, %v3443
        %v3445 = vpop.f32.mrf.mxu0
        %v3446 = vadd.f32 0.0, %v3445
        %3447 = vdwg.mxu0
        %3448 = vmatpush.bf16.msra.mxu0 %v2920
        %3449 = vmatpush.bf16.msra.mxu0 %v2914
        %3450 = vmatpush.bf16.msra.mxu0 %v2908
        %3451 = vmatpush.bf16.msra.mxu0 %v2902
        %3452 = vmatpush.bf16.msra.mxu0 %v2896
        %3453 = vmatpush.bf16.msra.mxu0 %v2890
        %3454 = vmatpush.bf16.msra.mxu0 %v2884
        %3455 = vmatpush.bf16.msra.mxu0 %v2878
        %3456 = vmatmul.bf16.gmra.mxu0 %v2055
        %v3457 = vpop.f32.mrf.mxu0
        %v3458 = vadd.f32 %v3444, %v3457
        %v3459 = vpop.f32.mrf.mxu0
        %v3460 = vadd.f32 %v3446, %v3459
        %3461 = vdwg.mxu0
        %3462 = vmatpush.bf16.msra.mxu0 %v2968
        %3463 = vmatpush.bf16.msra.mxu0 %v2962
        %3464 = vmatpush.bf16.msra.mxu0 %v2956
        %3465 = vmatpush.bf16.msra.mxu0 %v2950
        %3466 = vmatpush.bf16.msra.mxu0 %v2944
        %3467 = vmatpush.bf16.msra.mxu0 %v2938
        %3468 = vmatpush.bf16.msra.mxu0 %v2932
        %3469 = vmatpush.bf16.msra.mxu0 %v2926
        %3470 = vmatmul.bf16.gmra.mxu0 %v2056
        %v3471 = vpop.f32.mrf.mxu0
        %v3472 = vadd.f32 %v3458, %v3471
        %v3473 = vpop.f32.mrf.mxu0
        %v3474 = vadd.f32 %v3460, %v3473
        %3475 = vdwg.mxu0
        %3476 = vmatpush.bf16.msra.mxu0 %v3016
        %3477 = vmatpush.bf16.msra.mxu0 %v3010
        %3478 = vmatpush.bf16.msra.mxu0 %v3004
        %3479 = vmatpush.bf16.msra.mxu0 %v2998
        %3480 = vmatpush.bf16.msra.mxu0 %v2992
        %3481 = vmatpush.bf16.msra.mxu0 %v2986
        %3482 = vmatpush.bf16.msra.mxu0 %v2980
        %3483 = vmatpush.bf16.msra.mxu0 %v2974
        %3484 = vmatmul.bf16.gmra.mxu0 %v2057
        %v3485 = vpop.f32.mrf.mxu0
        %v3486 = vadd.f32 %v3472, %v3485
        %v3487 = vpop.f32.mrf.mxu0
        %v3488 = vadd.f32 %v3474, %v3487
        %3489 = vdwg.mxu0
        %3490 = vmatpush.bf16.msra.mxu0 %v2873
        %3491 = vmatpush.bf16.msra.mxu0 %v2867
        %3492 = vmatpush.bf16.msra.mxu0 %v2861
        %3493 = vmatpush.bf16.msra.mxu0 %v2855
        %3494 = vmatpush.bf16.msra.mxu0 %v2849
        %3495 = vmatpush.bf16.msra.mxu0 %v2843
        %3496 = vmatpush.bf16.msra.mxu0 %v2837
        %3497 = vmatpush.bf16.msra.mxu0 %v2831
        %3498 = vmatmul.bf16.gmra.mxu0 %v2054
        %v3499 = vpop.f32.mrf.mxu0
        %v3500 = vadd.f32 0.0, %v3499
        %v3501 = vpop.f32.mrf.mxu0
        %v3502 = vadd.f32 0.0, %v3501
        %3503 = vdwg.mxu0
        %3504 = vmatpush.bf16.msra.mxu0 %v2921
        %3505 = vmatpush.bf16.msra.mxu0 %v2915
        %3506 = vmatpush.bf16.msra.mxu0 %v2909
        %3507 = vmatpush.bf16.msra.mxu0 %v2903
        %3508 = vmatpush.bf16.msra.mxu0 %v2897
        %3509 = vmatpush.bf16.msra.mxu0 %v2891
        %3510 = vmatpush.bf16.msra.mxu0 %v2885
        %3511 = vmatpush.bf16.msra.mxu0 %v2879
        %3512 = vmatmul.bf16.gmra.mxu0 %v2055
        %v3513 = vpop.f32.mrf.mxu0
        %v3514 = vadd.f32 %v3500, %v3513
        %v3515 = vpop.f32.mrf.mxu0
        %v3516 = vadd.f32 %v3502, %v3515
        %3517 = vdwg.mxu0
        %3518 = vmatpush.bf16.msra.mxu0 %v2969
        %3519 = vmatpush.bf16.msra.mxu0 %v2963
        %3520 = vmatpush.bf16.msra.mxu0 %v2957
        %3521 = vmatpush.bf16.msra.mxu0 %v2951
        %3522 = vmatpush.bf16.msra.mxu0 %v2945
        %3523 = vmatpush.bf16.msra.mxu0 %v2939
        %3524 = vmatpush.bf16.msra.mxu0 %v2933
        %3525 = vmatpush.bf16.msra.mxu0 %v2927
        %3526 = vmatmul.bf16.gmra.mxu0 %v2056
        %v3527 = vpop.f32.mrf.mxu0
        %v3528 = vadd.f32 %v3514, %v3527
        %v3529 = vpop.f32.mrf.mxu0
        %v3530 = vadd.f32 %v3516, %v3529
        %3531 = vdwg.mxu0
        %3532 = vmatpush.bf16.msra.mxu0 %v3017
        %3533 = vmatpush.bf16.msra.mxu0 %v3011
        %3534 = vmatpush.bf16.msra.mxu0 %v3005
        %3535 = vmatpush.bf16.msra.mxu0 %v2999
        %3536 = vmatpush.bf16.msra.mxu0 %v2993
        %3537 = vmatpush.bf16.msra.mxu0 %v2987
        %3538 = vmatpush.bf16.msra.mxu0 %v2981
        %3539 = vmatpush.bf16.msra.mxu0 %v2975
        %3540 = vmatmul.bf16.gmra.mxu0 %v2057
        %v3541 = vpop.f32.mrf.mxu0
        %v3542 = vadd.f32 %v3528, %v3541
        %v3543 = vpop.f32.mrf.mxu0
        %v3544 = vadd.f32 %v3530, %v3543
        %3545 = vdwg.mxu0
        %3546 = vst [vmem:[%s4] sm:$0xff] %v3262
        %3547 = vst [vmem:[%s4 + $0x8] sm:$0xff] %v3318
        %3548 = vst [vmem:[%s4 + $0x10] sm:$0xff] %v3374
        %3549 = vst [vmem:[%s4 + $0x18] sm:$0xff] %v3430
        %3550 = vst [vmem:[%s4 + $0x20] sm:$0xff] %v3486
        %3551 = vst [vmem:[%s4 + $0x28] sm:$0xff] %v3542
        %3552 = vst [vmem:[%s4 + $0x30] sm:$0xff] %v3264
        %3553 = vst [vmem:[%s4 + $0x38] sm:$0xff] %v3320
        %3554 = vst [vmem:[%s4 + $0x40] sm:$0xff] %v3376
        %3555 = vst [vmem:[%s4 + $0x48] sm:$0xff] %v3432
        %3556 = vst [vmem:[%s4 + $0x50] sm:$0xff] %v3488
        %3557 = vst [vmem:[%s4 + $0x58] sm:$0xff] %v3544
        // Predicated region
        $region49: #{_griffin_lim.1} parent=35 // pred_check
          %p3558 = pneg %p114
        $region50: #{_griffin_lim.1} parent=35 // pred_check_branch
          %3560 = sbr.rel (%p3558) target = $region52
        $region51: #{_griffin_lim.1} parent=35 // pred_region
          _
        $region52: #{_griffin_lim.1} parent=35 // pred_fallthru
          _
        // Predicated region
        $region53: #{_griffin_lim.1} parent=35 // pred_check
          %p3561 = pneg %p114
        $region54: #{_griffin_lim.1} parent=35 // pred_check_branch
          %3563 = sbr.rel (%p3561) target = $region56
        $region55: #{_griffin_lim.1} parent=35 // pred_region
          _
        $region56: #{_griffin_lim.1} parent=35 // pred_fallthru
          _
      $region36: #{_griffin_lim.1} parent=5 // pred_fallthru
        _
      %p3564 = scmp.le.s32.totalorder 2, %s12
      // Predicated region
      $region57: #{_griffin_lim.1} parent=5 // pred_check
        %p3565 = pneg %p3564
      $region58: #{_griffin_lim.1} parent=5 // pred_check_branch
        %3567 = sbr.rel (%p3565) target = $region60
      $region59: #{_griffin_lim.1} parent=5 // pred_region
        %s3568 = ssub.s32 %s12, 2
      $region60: #{_griffin_lim.1} parent=5 // pred_fallthru
        _
    $region6: #{_griffin_lim.1} parent=1 // loop_footer
      %s16 = sadd.s32 1, %s12
    $region7: #{_griffin_lim.1} parent=1 // loop_footer_branch
      %11 = sbr.rel target = $region3
    $region8: #{_griffin_lim.1} parent=1 // loop_exit
      _
    %3569 = vsyncpa [#allocation5], 1
    %s3570 = scalar_lea.sflag [#allocation5], 1
    %3571 = vsyncpa %s3570, 1
    %3572 = vsyncpa [#allocation7], 1

</llo_original>
